<compile_context>
chip_gen: v5e
topology: v5e:2x2
jax: 0.10.0
libtpu: 0.0.40
codegen_flags: <defaults>
</compile_context>

<pallas_src>
import functools
import math

import jax
import jax.numpy as jnp
import numpy as np
from jax.experimental import pallas as pl
from jax.experimental.pallas import tpu as pltpu

LANE = 128


def _round_up(n, m):
    return ((n + m - 1) // m) * m


def _basic_block_kernel(x_ref, w1_ref, b1_ref, w2_ref, b2_ref, o_ref, h_ref, *, H, W, K):
    """Fused BasicBlock on one image (stride 1, identity shortcut).

    Ref layouts (channels on lanes):
      x_ref : (NPx, Cin)          P-flat padded image, NPx = (H+2P)*Wp + 2P overrun rows
      w1_ref: (K*K, Cin,  CoutP)  per-tap conv1 weights (BN1 scale folded in)
      b1_ref: (1, CoutP)          folded BN1 bias (f32)
      w2_ref: (K*K, CoutP, CoutP) per-tap conv2 weights (BN2 scale folded in)
      b2_ref: (1, CoutP)          folded BN2 bias (f32)
      o_ref : (H*Wp, CoutP)       flat-row output (garbage at cols >= W, sliced off outside)
      h_ref : (NPx, CoutP)        VMEM scratch: conv1 output in P-flat padded layout
    """
    P = K // 2
    Wp = W + 2 * P
    rows = H * Wp
    lead = P * Wp + P
    f32 = jnp.float32
    npx, coutp = h_ref.shape
    cin = x_ref.shape[1]

    def conv_taps(src_ref, w_ref):
        # K*K statically-offset 2-D slices, one MXU matmul each, f32 accumulation.
        # TODO(synk): for Cin < 256 (v6e/v7x 256-deep MXU) fold the K*K taps into the
        #             contraction axis via an im2col VMEM tile to raise MXU occupancy.
        def tap(t):
            dy, dx = divmod(t, K)
            off = dy * Wp + dx              # static offset -> static 2-D slice, no reshape
            return jnp.dot(src_ref[off:off + rows, :], w_ref[t],
                           preferred_element_type=f32)

        acc = tap(0)
        for t in range(1, K * K):
            acc = acc + tap(t)
        return acc

    # ---- conv1 + folded BN1 + ReLU -> h scratch (P-flat padded layout, stays in VMEM) ----
    v1 = jnp.maximum(conv_taps(x_ref, w1_ref) + b1_ref[...].astype(f32), 0.0)
    # Columns w >= W of each flat row are wrap-around garbage; in the shifted padded layout
    # they land exactly on zero-padding positions of conv2's input, so mask them to zero.
    col = jax.lax.broadcasted_iota(jnp.int32, (rows, 1), 0) % Wp
    v1 = jnp.where(col < W, v1, 0.0)
    h_ref[0:lead, :] = jnp.zeros((lead, coutp), h_ref.dtype)
    h_ref[lead:lead + rows, :] = v1.astype(h_ref.dtype)
    h_ref[lead + rows:npx, :] = jnp.zeros((npx - lead - rows, coutp), h_ref.dtype)

    # ---- conv2 + folded BN2 + identity shortcut + ReLU ----
    acc = conv_taps(h_ref, w2_ref)
    # Identity shortcut derived from the x block already in VMEM: one extra MXU tap
    # x[lead:lead+rows] @ eye(cin -> coutp lanes); eye built from iotas (no constants).
    eye = (jax.lax.broadcasted_iota(jnp.int32, (cin, coutp), 0)
           == jax.lax.broadcasted_iota(jnp.int32, (cin, coutp), 1)).astype(x_ref.dtype)
    acc = acc + jnp.dot(x_ref[lead:lead + rows, :], eye, preferred_element_type=f32)
    v2 = jnp.maximum(acc + b2_ref[...].astype(f32), 0.0)
    o_ref[...] = v2.astype(o_ref.dtype)


def basic_block_forward(x, params, *, kernel_size=3, stride=1, eps=1e-5,
                        compute_dtype=jnp.bfloat16):
    """BasicBlock forward (eval-mode BN), NCHW in / NCHW out, one fused pallas_call."""
    B, Cin, H, W = x.shape
    planes = params["conv1_w"].shape[0]
    K = kernel_size
    assert K % 2 == 1, "only odd kernel_size supported"
    if stride != 1 or Cin != planes:
        # TODO(synk): downsample shortcut path (AvgPool2d(2,2) + 1x1 conv + BN) not implemented.
        raise NotImplementedError("Pallas BasicBlock supports stride=1 with identity shortcut")

    P = K // 2
    Wp = W + 2 * P
    NPx = (H + 2 * P) * Wp + 2 * P
    rows = H * Wp
    CoutP = _round_up(max(planes, LANE), LANE)
    f32 = jnp.float32
    cdt = jnp.dtype(compute_dtype)
    bpe = cdt.itemsize

    def fold_bn(conv_w, gamma, beta, mean, var):
        scale = gamma / jnp.sqrt(var + eps)
        return conv_w * scale[:, None, None, None], beta - mean * scale

    w1, b1 = fold_bn(params["conv1_w"], params["bn1_gamma"], params["bn1_beta"],
                     params["bn1_mean"], params["bn1_var"])
    w2, b2 = fold_bn(params["conv2_w"], params["bn2_gamma"], params["bn2_beta"],
                     params["bn2_mean"], params["bn2_var"])

    def prep_w(w, cin_pad, cout_pad):
        cout, cin = w.shape[0], w.shape[1]
        wt = jnp.transpose(w, (2, 3, 1, 0)).reshape(K * K, cin, cout).astype(f32)
        wt = jnp.pad(wt, ((0, 0), (0, cin_pad - cin), (0, cout_pad - cout)))
        return wt.astype(cdt)

    def prep_b(b, cout_pad):
        return jnp.pad(b.astype(f32), (0, cout_pad - b.shape[0])).reshape(1, cout_pad)

    w1_t = prep_w(w1, Cin, CoutP)          # (K*K, Cin,   CoutP)
    b1_t = prep_b(b1, CoutP)               # (1, CoutP) f32
    w2_t = prep_w(w2, CoutP, CoutP)        # (K*K, CoutP, CoutP)
    b2_t = prep_b(b2, CoutP)

    # NCHW -> channels-last "P-flat" layout (zero spatial padding flattened), +2P overrun rows.
    x_nhwc = jnp.transpose(x, (0, 2, 3, 1)).astype(cdt)
    x_pad = jnp.pad(x_nhwc, ((0, 0), (P, P), (P, P), (0, 0)))
    x_flat = jnp.pad(x_pad.reshape(B, (H + 2 * P) * Wp, Cin), ((0, 0), (0, 2 * P), (0, 0)))

    kernel = functools.partial(_basic_block_kernel, H=H, W=W, K=K)

    # Re-derived VMEM budget (double-buffered I/O blocks + weights + scratch + temp headroom),
    # capped at 64 MiB so it is also valid on v7x.
    need = (2 * NPx * Cin * bpe                      # x block (double-buffered)
            + 2 * K * K * Cin * CoutP * bpe          # w1
            + 2 * K * K * CoutP * CoutP * bpe        # w2
            + 2 * 2 * CoutP * 4                      # biases
            + 2 * rows * CoutP * 4                   # output block (f32)
            + NPx * CoutP * bpe                      # h scratch
            + 4 * rows * CoutP * 4)                  # f32 accumulators / temporaries
    vmem_limit = int(min(64 * 1024 * 1024, max(2 * need + (8 << 20), 32 * 1024 * 1024)))

    flops = 2 * B * rows * (K * K * (Cin * CoutP + CoutP * CoutP) + Cin * CoutP)
    bytes_accessed = (x_flat.size * bpe
                      + w1_t.size * bpe + w2_t.size * bpe
                      + b1_t.size * 4 + b2_t.size * 4
                      + B * rows * CoutP * 4)

    out_flat = pl.pallas_call(
        kernel,
        out_shape=jax.ShapeDtypeStruct((B, rows, CoutP), f32),
        grid=(B,),
        in_specs=[
            pl.BlockSpec((None, NPx, Cin), lambda b: (b, 0, 0)),
            pl.BlockSpec((K * K, Cin, CoutP), lambda b: (0, 0, 0)),
            pl.BlockSpec((1, CoutP), lambda b: (0, 0)),
            pl.BlockSpec((K * K, CoutP, CoutP), lambda b: (0, 0, 0)),
            pl.BlockSpec((1, CoutP), lambda b: (0, 0)),
        ],
        out_specs=pl.BlockSpec((None, rows, CoutP), lambda b: (b, 0, 0)),
        scratch_shapes=[pltpu.VMEM((NPx, CoutP), cdt)],
        compiler_params=pltpu.CompilerParams(
            dimension_semantics=("parallel",),
            vmem_limit_bytes=vmem_limit),
        cost_estimate=pl.CostEstimate(flops=flops, transcendentals=0,
                                      bytes_accessed=bytes_accessed),
    )(x_flat, w1_t, b1_t, w2_t, b2_t)

    out = out_flat.reshape(B, H, Wp, CoutP)[:, :, :W, :planes]
    return jnp.transpose(out, (0, 3, 1, 2)).astype(x.dtype)


def basic_block_reference(x, params, *, kernel_size=3, eps=1e-5):
    """Pure-JAX reference (eval-mode BN)."""
    K = kernel_size
    P = K // 2

    def conv(inp, w):
        return jax.lax.conv_general_dilated(
            inp, w, window_strides=(1, 1), padding=((P, P), (P, P)),
            dimension_numbers=("NCHW", "OIHW", "NCHW"))

    def bn(inp, g, b, m, v):
        s = g / jnp.sqrt(v + eps)
        return inp * s[None, :, None, None] + (b - m * s)[None, :, None, None]

    out = jax.nn.relu(bn(conv(x, params["conv1_w"]), params["bn1_gamma"],
                         params["bn1_beta"], params["bn1_mean"], params["bn1_var"]))
    out = bn(conv(out, params["conv2_w"]), params["bn2_gamma"],
             params["bn2_beta"], params["bn2_mean"], params["bn2_var"])
    out = out + x
    return jax.nn.relu(out)


if __name__ == "__main__":
    B, C, H, W = 2, 4, 16, 16      # stride=1, in_planes == planes -> identity shortcut
    planes = C
    K = 3

    key = jax.random.PRNGKey(0)
    keys = jax.random.split(key, 11)
    x = jax.random.normal(keys[0], (B, C, H, W), dtype=jnp.float32)

    bound = 1.0 / math.sqrt(C * K * K)
    params = {
        "conv1_w": jax.random.uniform(keys[1], (planes, C, K, K), jnp.float32, -bound, bound),
        "bn1_gamma": jax.random.uniform(keys[2], (planes,), jnp.float32, 0.5, 1.5),
        "bn1_beta": 0.1 * jax.random.normal(keys[3], (planes,), jnp.float32),
        "bn1_mean": 0.1 * jax.random.normal(keys[4], (planes,), jnp.float32),
        "bn1_var": jax.random.uniform(keys[5], (planes,), jnp.float32, 0.5, 1.5),
        "conv2_w": jax.random.uniform(keys[6], (planes, planes, K, K), jnp.float32, -bound, bound),
        "bn2_gamma": jax.random.uniform(keys[7], (planes,), jnp.float32, 0.5, 1.5),
        "bn2_beta": 0.1 * jax.random.normal(keys[8], (planes,), jnp.float32),
        "bn2_mean": 0.1 * jax.random.normal(keys[9], (planes,), jnp.float32),
        "bn2_var": jax.random.uniform(keys[10], (planes,), jnp.float32, 0.5, 1.5),
    }

    ref = basic_block_reference(x, params, kernel_size=K)

    # f32 path: tight structural check of the fused kernel.
    out_f32 = basic_block_forward(x, params, kernel_size=K, stride=1, compute_dtype=jnp.float32)
    out_f32 = jax.block_until_ready(out_f32)
    np.testing.assert_allclose(np.asarray(out_f32), np.asarray(ref), rtol=2e-4, atol=2e-4)

    # bf16 storage/matmul with f32 accumulation (default, perf path): loose tolerance.
    out_bf16 = basic_block_forward(x, params, kernel_size=K, stride=1)
    out_bf16 = jax.block_until_ready(out_bf16)
    np.testing.assert_allclose(np.asarray(out_bf16), np.asarray(ref), rtol=5e-2, atol=5e-2)

    assert out_bf16.shape == (B, planes, H, W)
    print("KERNEL_OK")
</pallas_src>

<mosaic_0001>
module attributes {stable_mosaic.version = 11 : i64} {
  func.func @_basic_block_kernel(%arg0: i32, %arg1: memref<1x326x4xf32, #tpu.memory_space<vmem>>, %arg2: memref<9x4x128xf32, #tpu.memory_space<vmem>>, %arg3: memref<1x128xf32, #tpu.memory_space<vmem>>, %arg4: memref<9x128x128xf32, #tpu.memory_space<vmem>>, %arg5: memref<1x128xf32, #tpu.memory_space<vmem>>, %arg6: memref<1x288x128xf32, #tpu.memory_space<vmem>>, %arg7: memref<326x128xf32, #tpu.memory_space<vmem>>) attributes {dimension_semantics = [#tpu.dimension_semantics<parallel>], iteration_bounds = array<i64: 2>, scalar_prefetch = 0 : i64, scratch_operands = 1 : i64, tpu.core_type = #tpu.core_type<tc>, window_params = [{transform_indices = @transform_0, window_bounds = array<i64: 1, 326, 4>}, {pipeline_mode = #tpu.pipeline_mode<synchronous>, transform_indices = @transform_1, window_bounds = array<i64: 9, 4, 128>}, {pipeline_mode = #tpu.pipeline_mode<synchronous>, transform_indices = @transform_2, window_bounds = array<i64: 1, 128>}, {pipeline_mode = #tpu.pipeline_mode<synchronous>, transform_indices = @transform_3, window_bounds = array<i64: 9, 128, 128>}, {pipeline_mode = #tpu.pipeline_mode<synchronous>, transform_indices = @transform_4, window_bounds = array<i64: 1, 128>}, {transform_indices = @transform_5, window_bounds = array<i64: 1, 288, 128>}]} {
    %c0 = arith.constant 0 : index
    %c0_0 = arith.constant 0 : index
    %c0_1 = arith.constant 0 : index
    %0 = vector.load %arg1[%c0, %c0_0, %c0_1] : memref<1x326x4xf32, #tpu.memory_space<vmem>>, vector<1x288x4xf32>
    %1 = vector.shape_cast %0 : vector<1x288x4xf32> to vector<288x4xf32>
    %c0_2 = arith.constant 0 : index
    %c0_3 = arith.constant 0 : index
    %c0_4 = arith.constant 0 : index
    %2 = vector.load %arg2[%c0_2, %c0_3, %c0_4] : memref<9x4x128xf32, #tpu.memory_space<vmem>>, vector<1x4x128xf32>
    %3 = vector.shape_cast %2 : vector<1x4x128xf32> to vector<4x128xf32>
    %cst = arith.constant dense<0.000000e+00> : vector<288x128xf32>
    %4 = tpu.matmul %1, %3, %cst {dimension_numbers = #tpu.dot_dimension_numbers<[1], [0], [0], [1], [0, 0, 1, 1], [], []>} : vector<288x4xf32>, vector<4x128xf32>, vector<288x128xf32> -> vector<288x128xf32>
    %c0_5 = arith.constant 0 : index
    %c1 = arith.constant 1 : index
    %c0_6 = arith.constant 0 : index
    %5 = vector.load %arg1[%c0_5, %c1, %c0_6] : memref<1x326x4xf32, #tpu.memory_space<vmem>>, vector<1x288x4xf32>
    %6 = vector.shape_cast %5 : vector<1x288x4xf32> to vector<288x4xf32>
    %c1_7 = arith.constant 1 : index
    %c0_8 = arith.constant 0 : index
    %c0_9 = arith.constant 0 : index
    %7 = vector.load %arg2[%c1_7, %c0_8, %c0_9] : memref<9x4x128xf32, #tpu.memory_space<vmem>>, vector<1x4x128xf32>
    %8 = vector.shape_cast %7 : vector<1x4x128xf32> to vector<4x128xf32>
    %cst_10 = arith.constant dense<0.000000e+00> : vector<288x128xf32>
    %9 = tpu.matmul %6, %8, %cst_10 {dimension_numbers = #tpu.dot_dimension_numbers<[1], [0], [0], [1], [0, 0, 1, 1], [], []>} : vector<288x4xf32>, vector<4x128xf32>, vector<288x128xf32> -> vector<288x128xf32>
    %10 = arith.addf %4, %9 : vector<288x128xf32>
    %c0_11 = arith.constant 0 : index
    %c2 = arith.constant 2 : index
    %c0_12 = arith.constant 0 : index
    %11 = vector.load %arg1[%c0_11, %c2, %c0_12] : memref<1x326x4xf32, #tpu.memory_space<vmem>>, vector<1x288x4xf32>
    %12 = vector.shape_cast %11 : vector<1x288x4xf32> to vector<288x4xf32>
    %c2_13 = arith.constant 2 : index
    %c0_14 = arith.constant 0 : index
    %c0_15 = arith.constant 0 : index
    %13 = vector.load %arg2[%c2_13, %c0_14, %c0_15] : memref<9x4x128xf32, #tpu.memory_space<vmem>>, vector<1x4x128xf32>
    %14 = vector.shape_cast %13 : vector<1x4x128xf32> to vector<4x128xf32>
    %cst_16 = arith.constant dense<0.000000e+00> : vector<288x128xf32>
    %15 = tpu.matmul %12, %14, %cst_16 {dimension_numbers = #tpu.dot_dimension_numbers<[1], [0], [0], [1], [0, 0, 1, 1], [], []>} : vector<288x4xf32>, vector<4x128xf32>, vector<288x128xf32> -> vector<288x128xf32>
    %16 = arith.addf %10, %15 : vector<288x128xf32>
    %c0_17 = arith.constant 0 : index
    %c18 = arith.constant 18 : index
    %c0_18 = arith.constant 0 : index
    %17 = vector.load %arg1[%c0_17, %c18, %c0_18] : memref<1x326x4xf32, #tpu.memory_space<vmem>>, vector<1x288x4xf32>
    %18 = vector.shape_cast %17 : vector<1x288x4xf32> to vector<288x4xf32>
    %c3 = arith.constant 3 : index
    %c0_19 = arith.constant 0 : index
    %c0_20 = arith.constant 0 : index
    %19 = vector.load %arg2[%c3, %c0_19, %c0_20] : memref<9x4x128xf32, #tpu.memory_space<vmem>>, vector<1x4x128xf32>
    %20 = vector.shape_cast %19 : vector<1x4x128xf32> to vector<4x128xf32>
    %cst_21 = arith.constant dense<0.000000e+00> : vector<288x128xf32>
    %21 = tpu.matmul %18, %20, %cst_21 {dimension_numbers = #tpu.dot_dimension_numbers<[1], [0], [0], [1], [0, 0, 1, 1], [], []>} : vector<288x4xf32>, vector<4x128xf32>, vector<288x128xf32> -> vector<288x128xf32>
    %22 = arith.addf %16, %21 : vector<288x128xf32>
    %c0_22 = arith.constant 0 : index
    %c19 = arith.constant 19 : index
    %c0_23 = arith.constant 0 : index
    %23 = vector.load %arg1[%c0_22, %c19, %c0_23] : memref<1x326x4xf32, #tpu.memory_space<vmem>>, vector<1x288x4xf32>
    %24 = vector.shape_cast %23 : vector<1x288x4xf32> to vector<288x4xf32>
    %c4 = arith.constant 4 : index
    %c0_24 = arith.constant 0 : index
    %c0_25 = arith.constant 0 : index
    %25 = vector.load %arg2[%c4, %c0_24, %c0_25] : memref<9x4x128xf32, #tpu.memory_space<vmem>>, vector<1x4x128xf32>
    %26 = vector.shape_cast %25 : vector<1x4x128xf32> to vector<4x128xf32>
    %cst_26 = arith.constant dense<0.000000e+00> : vector<288x128xf32>
    %27 = tpu.matmul %24, %26, %cst_26 {dimension_numbers = #tpu.dot_dimension_numbers<[1], [0], [0], [1], [0, 0, 1, 1], [], []>} : vector<288x4xf32>, vector<4x128xf32>, vector<288x128xf32> -> vector<288x128xf32>
    %28 = arith.addf %22, %27 : vector<288x128xf32>
    %c0_27 = arith.constant 0 : index
    %c20 = arith.constant 20 : index
    %c0_28 = arith.constant 0 : index
    %29 = vector.load %arg1[%c0_27, %c20, %c0_28] : memref<1x326x4xf32, #tpu.memory_space<vmem>>, vector<1x288x4xf32>
    %30 = vector.shape_cast %29 : vector<1x288x4xf32> to vector<288x4xf32>
    %c5 = arith.constant 5 : index
    %c0_29 = arith.constant 0 : index
    %c0_30 = arith.constant 0 : index
    %31 = vector.load %arg2[%c5, %c0_29, %c0_30] : memref<9x4x128xf32, #tpu.memory_space<vmem>>, vector<1x4x128xf32>
    %32 = vector.shape_cast %31 : vector<1x4x128xf32> to vector<4x128xf32>
    %cst_31 = arith.constant dense<0.000000e+00> : vector<288x128xf32>
    %33 = tpu.matmul %30, %32, %cst_31 {dimension_numbers = #tpu.dot_dimension_numbers<[1], [0], [0], [1], [0, 0, 1, 1], [], []>} : vector<288x4xf32>, vector<4x128xf32>, vector<288x128xf32> -> vector<288x128xf32>
    %34 = arith.addf %28, %33 : vector<288x128xf32>
    %c0_32 = arith.constant 0 : index
    %c36 = arith.constant 36 : index
    %c0_33 = arith.constant 0 : index
    %35 = vector.load %arg1[%c0_32, %c36, %c0_33] : memref<1x326x4xf32, #tpu.memory_space<vmem>>, vector<1x288x4xf32>
    %36 = vector.shape_cast %35 : vector<1x288x4xf32> to vector<288x4xf32>
    %c6 = arith.constant 6 : index
    %c0_34 = arith.constant 0 : index
    %c0_35 = arith.constant 0 : index
    %37 = vector.load %arg2[%c6, %c0_34, %c0_35] : memref<9x4x128xf32, #tpu.memory_space<vmem>>, vector<1x4x128xf32>
    %38 = vector.shape_cast %37 : vector<1x4x128xf32> to vector<4x128xf32>
    %cst_36 = arith.constant dense<0.000000e+00> : vector<288x128xf32>
    %39 = tpu.matmul %36, %38, %cst_36 {dimension_numbers = #tpu.dot_dimension_numbers<[1], [0], [0], [1], [0, 0, 1, 1], [], []>} : vector<288x4xf32>, vector<4x128xf32>, vector<288x128xf32> -> vector<288x128xf32>
    %40 = arith.addf %34, %39 : vector<288x128xf32>
    %c0_37 = arith.constant 0 : index
    %c37 = arith.constant 37 : index
    %c0_38 = arith.constant 0 : index
    %41 = vector.load %arg1[%c0_37, %c37, %c0_38] : memref<1x326x4xf32, #tpu.memory_space<vmem>>, vector<1x288x4xf32>
    %42 = vector.shape_cast %41 : vector<1x288x4xf32> to vector<288x4xf32>
    %c7 = arith.constant 7 : index
    %c0_39 = arith.constant 0 : index
    %c0_40 = arith.constant 0 : index
    %43 = vector.load %arg2[%c7, %c0_39, %c0_40] : memref<9x4x128xf32, #tpu.memory_space<vmem>>, vector<1x4x128xf32>
    %44 = vector.shape_cast %43 : vector<1x4x128xf32> to vector<4x128xf32>
    %cst_41 = arith.constant dense<0.000000e+00> : vector<288x128xf32>
    %45 = tpu.matmul %42, %44, %cst_41 {dimension_numbers = #tpu.dot_dimension_numbers<[1], [0], [0], [1], [0, 0, 1, 1], [], []>} : vector<288x4xf32>, vector<4x128xf32>, vector<288x128xf32> -> vector<288x128xf32>
    %46 = arith.addf %40, %45 : vector<288x128xf32>
    %c0_42 = arith.constant 0 : index
    %c38 = arith.constant 38 : index
    %c0_43 = arith.constant 0 : index
    %47 = vector.load %arg1[%c0_42, %c38, %c0_43] : memref<1x326x4xf32, #tpu.memory_space<vmem>>, vector<1x288x4xf32>
    %48 = vector.shape_cast %47 : vector<1x288x4xf32> to vector<288x4xf32>
    %c8 = arith.constant 8 : index
    %c0_44 = arith.constant 0 : index
    %c0_45 = arith.constant 0 : index
    %49 = vector.load %arg2[%c8, %c0_44, %c0_45] : memref<9x4x128xf32, #tpu.memory_space<vmem>>, vector<1x4x128xf32>
    %50 = vector.shape_cast %49 : vector<1x4x128xf32> to vector<4x128xf32>
    %cst_46 = arith.constant dense<0.000000e+00> : vector<288x128xf32>
    %51 = tpu.matmul %48, %50, %cst_46 {dimension_numbers = #tpu.dot_dimension_numbers<[1], [0], [0], [1], [0, 0, 1, 1], [], []>} : vector<288x4xf32>, vector<4x128xf32>, vector<288x128xf32> -> vector<288x128xf32>
    %52 = arith.addf %46, %51 : vector<288x128xf32>
    %c0_47 = arith.constant 0 : index
    %c0_48 = arith.constant 0 : index
    %53 = vector.load %arg3[%c0_47, %c0_48] : memref<1x128xf32, #tpu.memory_space<vmem>>, vector<1x128xf32>
    %54 = vector.broadcast %53 : vector<1x128xf32> to vector<288x128xf32>
    %55 = arith.addf %52, %54 : vector<288x128xf32>
    %cst_49 = arith.constant 0.000000e+00 : f32
    %56 = vector.broadcast %cst_49 : f32 to vector<288x128xf32>
    %57 = arith.maximumf %55, %56 : vector<288x128xf32>
    %58 = tpu.iota {dimensions = array<i32: 0>} : vector<288x1xi32>
    %c18_i32 = arith.constant 18 : i32
    %c0_i32 = arith.constant 0 : i32
    %59 = arith.cmpi eq, %c18_i32, %c0_i32 : i32
    %c1_i32 = arith.constant 1 : i32
    %60 = arith.select %59, %c1_i32, %c18_i32 : i32
    %61 = vector.broadcast %60 : i32 to vector<288x1xi32>
    %62 = arith.remsi %58, %61 : vector<288x1xi32>
    %c0_i32_50 = arith.constant 0 : i32
    %63 = vector.broadcast %c0_i32_50 : i32 to vector<288x1xi32>
    %64 = arith.cmpi ne, %62, %63 : vector<288x1xi32>
    %c0_i32_51 = arith.constant 0 : i32
    %65 = vector.broadcast %c0_i32_51 : i32 to vector<288x1xi32>
    %66 = arith.cmpi slt, %62, %65 : vector<288x1xi32>
    %c0_i32_52 = arith.constant 0 : i32
    %67 = arith.cmpi slt, %60, %c0_i32_52 : i32
    %68 = vector.broadcast %67 : i1 to vector<288x1xi1>
    %69 = vector.broadcast %68 : vector<288x1xi1> to vector<288x1xi1>
    %70 = arith.xori %66, %69 : vector<288x1xi1>
    %71 = arith.andi %70, %64 : vector<288x1xi1>
    %72 = vector.broadcast %60 : i32 to vector<288x1xi32>
    %73 = arith.addi %62, %72 : vector<288x1xi32>
    %74 = arith.select %71, %73, %62 : vector<288x1xi1>, vector<288x1xi32>
    %c16_i32 = arith.constant 16 : i32
    %75 = vector.broadcast %c16_i32 : i32 to vector<288x1xi32>
    %76 = arith.cmpi slt, %74, %75 : vector<288x1xi32>
    %cst_53 = arith.constant 0.000000e+00 : f32
    %77 = vector.shape_cast %76 : vector<288x1xi1> to vector<288x1xi1>
    %78 = vector.broadcast %77 : vector<288x1xi1> to vector<288x128xi1>
    %79 = vector.broadcast %cst_53 : f32 to vector<288x128xf32>
    %80 = arith.select %78, %57, %79 : vector<288x128xi1>, vector<288x128xf32>
    %cst_54 = arith.constant 0.000000e+00 : f32
    %81 = vector.broadcast %cst_54 : f32 to vector<19x128xf32>
    %c0_55 = arith.constant 0 : index
    %c0_56 = arith.constant 0 : index
    %82 = vector.load %arg7[%c0_55, %c0_56] : memref<326x128xf32, #tpu.memory_space<vmem>>, vector<19x128xf32>
    tpu.vector_store %arg7[%c0_55, %c0_56], %81 {strides = array<i32>} : memref<326x128xf32, #tpu.memory_space<vmem>>, vector<19x128xf32>,
    %c19_57 = arith.constant 19 : index
    %c0_58 = arith.constant 0 : index
    %83 = vector.load %arg7[%c19_57, %c0_58] : memref<326x128xf32, #tpu.memory_space<vmem>>, vector<288x128xf32>
    tpu.vector_store %arg7[%c19_57, %c0_58], %80 {strides = array<i32>} : memref<326x128xf32, #tpu.memory_space<vmem>>, vector<288x128xf32>,
    %cst_59 = arith.constant 0.000000e+00 : f32
    %84 = vector.broadcast %cst_59 : f32 to vector<19x128xf32>
    %c307 = arith.constant 307 : index
    %c0_60 = arith.constant 0 : index
    %85 = vector.load %arg7[%c307, %c0_60] : memref<326x128xf32, #tpu.memory_space<vmem>>, vector<19x128xf32>
    tpu.vector_store %arg7[%c307, %c0_60], %84 {strides = array<i32>} : memref<326x128xf32, #tpu.memory_space<vmem>>, vector<19x128xf32>,
    %c0_61 = arith.constant 0 : index
    %c0_62 = arith.constant 0 : index
    %86 = vector.load %arg7[%c0_61, %c0_62] : memref<326x128xf32, #tpu.memory_space<vmem>>, vector<288x128xf32>
    %c0_63 = arith.constant 0 : index
    %c0_64 = arith.constant 0 : index
    %c0_65 = arith.constant 0 : index
    %87 = vector.load %arg4[%c0_63, %c0_64, %c0_65] : memref<9x128x128xf32, #tpu.memory_space<vmem>>, vector<1x128x128xf32>
    %88 = vector.shape_cast %87 : vector<1x128x128xf32> to vector<128x128xf32>
    %cst_66 = arith.constant dense<0.000000e+00> : vector<288x128xf32>
    %89 = tpu.matmul %86, %88, %cst_66 {dimension_numbers = #tpu.dot_dimension_numbers<[1], [0], [0], [1], [0, 0, 1, 1], [], []>} : vector<288x128xf32>, vector<128x128xf32>, vector<288x128xf32> -> vector<288x128xf32>
    %c1_67 = arith.constant 1 : index
    %c0_68 = arith.constant 0 : index
    %90 = vector.load %arg7[%c1_67, %c0_68] : memref<326x128xf32, #tpu.memory_space<vmem>>, vector<288x128xf32>
    %c1_69 = arith.constant 1 : index
    %c0_70 = arith.constant 0 : index
    %c0_71 = arith.constant 0 : index
    %91 = vector.load %arg4[%c1_69, %c0_70, %c0_71] : memref<9x128x128xf32, #tpu.memory_space<vmem>>, vector<1x128x128xf32>
    %92 = vector.shape_cast %91 : vector<1x128x128xf32> to vector<128x128xf32>
    %cst_72 = arith.constant dense<0.000000e+00> : vector<288x128xf32>
    %93 = tpu.matmul %90, %92, %cst_72 {dimension_numbers = #tpu.dot_dimension_numbers<[1], [0], [0], [1], [0, 0, 1, 1], [], []>} : vector<288x128xf32>, vector<128x128xf32>, vector<288x128xf32> -> vector<288x128xf32>
    %94 = arith.addf %89, %93 : vector<288x128xf32>
    %c2_73 = arith.constant 2 : index
    %c0_74 = arith.constant 0 : index
    %95 = vector.load %arg7[%c2_73, %c0_74] : memref<326x128xf32, #tpu.memory_space<vmem>>, vector<288x128xf32>
    %c2_75 = arith.constant 2 : index
    %c0_76 = arith.constant 0 : index
    %c0_77 = arith.constant 0 : index
    %96 = vector.load %arg4[%c2_75, %c0_76, %c0_77] : memref<9x128x128xf32, #tpu.memory_space<vmem>>, vector<1x128x128xf32>
    %97 = vector.shape_cast %96 : vector<1x128x128xf32> to vector<128x128xf32>
    %cst_78 = arith.constant dense<0.000000e+00> : vector<288x128xf32>
    %98 = tpu.matmul %95, %97, %cst_78 {dimension_numbers = #tpu.dot_dimension_numbers<[1], [0], [0], [1], [0, 0, 1, 1], [], []>} : vector<288x128xf32>, vector<128x128xf32>, vector<288x128xf32> -> vector<288x128xf32>
    %99 = arith.addf %94, %98 : vector<288x128xf32>
    %c18_79 = arith.constant 18 : index
    %c0_80 = arith.constant 0 : index
    %100 = vector.load %arg7[%c18_79, %c0_80] : memref<326x128xf32, #tpu.memory_space<vmem>>, vector<288x128xf32>
    %c3_81 = arith.constant 3 : index
    %c0_82 = arith.constant 0 : index
    %c0_83 = arith.constant 0 : index
    %101 = vector.load %arg4[%c3_81, %c0_82, %c0_83] : memref<9x128x128xf32, #tpu.memory_space<vmem>>, vector<1x128x128xf32>
    %102 = vector.shape_cast %101 : vector<1x128x128xf32> to vector<128x128xf32>
    %cst_84 = arith.constant dense<0.000000e+00> : vector<288x128xf32>
    %103 = tpu.matmul %100, %102, %cst_84 {dimension_numbers = #tpu.dot_dimension_numbers<[1], [0], [0], [1], [0, 0, 1, 1], [], []>} : vector<288x128xf32>, vector<128x128xf32>, vector<288x128xf32> -> vector<288x128xf32>
    %104 = arith.addf %99, %103 : vector<288x128xf32>
    %c19_85 = arith.constant 19 : index
    %c0_86 = arith.constant 0 : index
    %105 = vector.load %arg7[%c19_85, %c0_86] : memref<326x128xf32, #tpu.memory_space<vmem>>, vector<288x128xf32>
    %c4_87 = arith.constant 4 : index
    %c0_88 = arith.constant 0 : index
    %c0_89 = arith.constant 0 : index
    %106 = vector.load %arg4[%c4_87, %c0_88, %c0_89] : memref<9x128x128xf32, #tpu.memory_space<vmem>>, vector<1x128x128xf32>
    %107 = vector.shape_cast %106 : vector<1x128x128xf32> to vector<128x128xf32>
    %cst_90 = arith.constant dense<0.000000e+00> : vector<288x128xf32>
    %108 = tpu.matmul %105, %107, %cst_90 {dimension_numbers = #tpu.dot_dimension_numbers<[1], [0], [0], [1], [0, 0, 1, 1], [], []>} : vector<288x128xf32>, vector<128x128xf32>, vector<288x128xf32> -> vector<288x128xf32>
    %109 = arith.addf %104, %108 : vector<288x128xf32>
    %c20_91 = arith.constant 20 : index
    %c0_92 = arith.constant 0 : index
    %110 = vector.load %arg7[%c20_91, %c0_92] : memref<326x128xf32, #tpu.memory_space<vmem>>, vector<288x128xf32>
    %c5_93 = arith.constant 5 : index
    %c0_94 = arith.constant 0 : index
    %c0_95 = arith.constant 0 : index
    %111 = vector.load %arg4[%c5_93, %c0_94, %c0_95] : memref<9x128x128xf32, #tpu.memory_space<vmem>>, vector<1x128x128xf32>
    %112 = vector.shape_cast %111 : vector<1x128x128xf32> to vector<128x128xf32>
    %cst_96 = arith.constant dense<0.000000e+00> : vector<288x128xf32>
    %113 = tpu.matmul %110, %112, %cst_96 {dimension_numbers = #tpu.dot_dimension_numbers<[1], [0], [0], [1], [0, 0, 1, 1], [], []>} : vector<288x128xf32>, vector<128x128xf32>, vector<288x128xf32> -> vector<288x128xf32>
    %114 = arith.addf %109, %113 : vector<288x128xf32>
    %c36_97 = arith.constant 36 : index
    %c0_98 = arith.constant 0 : index
    %115 = vector.load %arg7[%c36_97, %c0_98] : memref<326x128xf32, #tpu.memory_space<vmem>>, vector<288x128xf32>
    %c6_99 = arith.constant 6 : index
    %c0_100 = arith.constant 0 : index
    %c0_101 = arith.constant 0 : index
    %116 = vector.load %arg4[%c6_99, %c0_100, %c0_101] : memref<9x128x128xf32, #tpu.memory_space<vmem>>, vector<1x128x128xf32>
    %117 = vector.shape_cast %116 : vector<1x128x128xf32> to vector<128x128xf32>
    %cst_102 = arith.constant dense<0.000000e+00> : vector<288x128xf32>
    %118 = tpu.matmul %115, %117, %cst_102 {dimension_numbers = #tpu.dot_dimension_numbers<[1], [0], [0], [1], [0, 0, 1, 1], [], []>} : vector<288x128xf32>, vector<128x128xf32>, vector<288x128xf32> -> vector<288x128xf32>
    %119 = arith.addf %114, %118 : vector<288x128xf32>
    %c37_103 = arith.constant 37 : index
    %c0_104 = arith.constant 0 : index
    %120 = vector.load %arg7[%c37_103, %c0_104] : memref<326x128xf32, #tpu.memory_space<vmem>>, vector<288x128xf32>
    %c7_105 = arith.constant 7 : index
    %c0_106 = arith.constant 0 : index
    %c0_107 = arith.constant 0 : index
    %121 = vector.load %arg4[%c7_105, %c0_106, %c0_107] : memref<9x128x128xf32, #tpu.memory_space<vmem>>, vector<1x128x128xf32>
    %122 = vector.shape_cast %121 : vector<1x128x128xf32> to vector<128x128xf32>
    %cst_108 = arith.constant dense<0.000000e+00> : vector<288x128xf32>
    %123 = tpu.matmul %120, %122, %cst_108 {dimension_numbers = #tpu.dot_dimension_numbers<[1], [0], [0], [1], [0, 0, 1, 1], [], []>} : vector<288x128xf32>, vector<128x128xf32>, vector<288x128xf32> -> vector<288x128xf32>
    %124 = arith.addf %119, %123 : vector<288x128xf32>
    %c38_109 = arith.constant 38 : index
    %c0_110 = arith.constant 0 : index
    %125 = vector.load %arg7[%c38_109, %c0_110] : memref<326x128xf32, #tpu.memory_space<vmem>>, vector<288x128xf32>
    %c8_111 = arith.constant 8 : index
    %c0_112 = arith.constant 0 : index
    %c0_113 = arith.constant 0 : index
    %126 = vector.load %arg4[%c8_111, %c0_112, %c0_113] : memref<9x128x128xf32, #tpu.memory_space<vmem>>, vector<1x128x128xf32>
    %127 = vector.shape_cast %126 : vector<1x128x128xf32> to vector<128x128xf32>
    %cst_114 = arith.constant dense<0.000000e+00> : vector<288x128xf32>
    %128 = tpu.matmul %125, %127, %cst_114 {dimension_numbers = #tpu.dot_dimension_numbers<[1], [0], [0], [1], [0, 0, 1, 1], [], []>} : vector<288x128xf32>, vector<128x128xf32>, vector<288x128xf32> -> vector<288x128xf32>
    %129 = arith.addf %124, %128 : vector<288x128xf32>
    %130 = tpu.iota {dimensions = array<i32: 0>} : vector<4x128xi32>
    %131 = tpu.iota {dimensions = array<i32: 1>} : vector<4x128xi32>
    %132 = arith.cmpi eq, %130, %131 : vector<4x128xi32>
    %133 = arith.extui %132 : vector<4x128xi1> to vector<4x128xi32>
    %134 = arith.sitofp %133 : vector<4x128xi32> to vector<4x128xf32>
    %c0_115 = arith.constant 0 : index
    %c19_116 = arith.constant 19 : index
    %c0_117 = arith.constant 0 : index
    %135 = vector.load %arg1[%c0_115, %c19_116, %c0_117] : memref<1x326x4xf32, #tpu.memory_space<vmem>>, vector<1x288x4xf32>
    %136 = vector.shape_cast %135 : vector<1x288x4xf32> to vector<288x4xf32>
    %cst_118 = arith.constant dense<0.000000e+00> : vector<288x128xf32>
    %137 = tpu.matmul %136, %134, %cst_118 {dimension_numbers = #tpu.dot_dimension_numbers<[1], [0], [0], [1], [0, 0, 1, 1], [], []>} : vector<288x4xf32>, vector<4x128xf32>, vector<288x128xf32> -> vector<288x128xf32>
    %138 = arith.addf %129, %137 : vector<288x128xf32>
    %c0_119 = arith.constant 0 : index
    %c0_120 = arith.constant 0 : index
    %139 = vector.load %arg5[%c0_119, %c0_120] : memref<1x128xf32, #tpu.memory_space<vmem>>, vector<1x128xf32>
    %140 = vector.broadcast %139 : vector<1x128xf32> to vector<288x128xf32>
    %141 = arith.addf %138, %140 : vector<288x128xf32>
    %cst_121 = arith.constant 0.000000e+00 : f32
    %142 = vector.broadcast %cst_121 : f32 to vector<288x128xf32>
    %143 = arith.maximumf %141, %142 : vector<288x128xf32>
    %c0_122 = arith.constant 0 : index
    %c0_123 = arith.constant 0 : index
    %c0_124 = arith.constant 0 : index
    %144 = vector.load %arg6[%c0_122, %c0_123, %c0_124] : memref<1x288x128xf32, #tpu.memory_space<vmem>>, vector<1x288x128xf32>
    %145 = vector.shape_cast %144 : vector<1x288x128xf32> to vector<288x128xf32>
    %146 = vector.shape_cast %143 : vector<288x128xf32> to vector<1x288x128xf32>
    tpu.vector_store %arg6[%c0_122, %c0_123, %c0_124], %146 {strides = array<i32>} : memref<1x288x128xf32, #tpu.memory_space<vmem>>, vector<1x288x128xf32>,
    return
  }
  func.func @transform_0(%arg0: i32) -> (i32, i32, i32) {
    %c0_i32 = arith.constant 0 : i32
    %c0_i32_0 = arith.constant 0 : i32
    %c0_i32_1 = arith.constant 0 : i32
    return %arg0, %c0_i32, %c0_i32_0 : i32, i32, i32
  }
  func.func @transform_1(%arg0: i32) -> (i32, i32, i32) {
    %c0_i32 = arith.constant 0 : i32
    %c0_i32_0 = arith.constant 0 : i32
    %c0_i32_1 = arith.constant 0 : i32
    %c0_i32_2 = arith.constant 0 : i32
    return %c0_i32, %c0_i32_0, %c0_i32_1 : i32, i32, i32
  }
  func.func @transform_2(%arg0: i32) -> (i32, i32) {
    %c0_i32 = arith.constant 0 : i32
    %c0_i32_0 = arith.constant 0 : i32
    %c0_i32_1 = arith.constant 0 : i32
    return %c0_i32, %c0_i32_0 : i32, i32
  }
  func.func @transform_3(%arg0: i32) -> (i32, i32, i32) {
    %c0_i32 = arith.constant 0 : i32
    %c0_i32_0 = arith.constant 0 : i32
    %c0_i32_1 = arith.constant 0 : i32
    %c0_i32_2 = arith.constant 0 : i32
    return %c0_i32, %c0_i32_0, %c0_i32_1 : i32, i32, i32
  }
  func.func @transform_4(%arg0: i32) -> (i32, i32) {
    %c0_i32 = arith.constant 0 : i32
    %c0_i32_0 = arith.constant 0 : i32
    %c0_i32_1 = arith.constant 0 : i32
    return %c0_i32, %c0_i32_0 : i32, i32
  }
  func.func @transform_5(%arg0: i32) -> (i32, i32, i32) {
    %c0_i32 = arith.constant 0 : i32
    %c0_i32_0 = arith.constant 0 : i32
    %c0_i32_1 = arith.constant 0 : i32
    return %arg0, %c0_i32, %c0_i32_0 : i32, i32, i32
  }
}

</mosaic_0001>

<llo_original>
// kernel: tpu_custom_call.1
$region0: #{tpu_custom_call.1}
  #allocation0 [shape = 'u32[]', space=smem, size = 0x4, offset = 0x4, fixed_abs, tag = 'smem constant byte address 0x4 - core index']
  #allocation1 [shape = 'u32[72,128]{1,0:T(1,128)}', space=vmem, size = 0x9000, scoped, tag = 'internal scratch']
  #allocation2 [shape = 'f32[326,128]{1,0:T(8,128)}', space=vmem, size = 0x29000, scoped, tag = 'scratch operand']
  %s0 = inlined_call_operand.vmem [shape: f32[2,326,4], index: 0, kind: input, shape index: {}]
  %s1 = inlined_call_operand.vmem [shape: f32[9,4,128], index: 1, kind: input, shape index: {}]
  %s2 = inlined_call_operand.vmem [shape: f32[1,128], index: 2, kind: input, shape index: {}]
  %s3 = inlined_call_operand.hbm [shape: f32[9,128,128], index: 3, kind: input, shape index: {}]
  %s4 = inlined_call_operand.vmem [shape: f32[1,128], index: 4, kind: input, shape index: {}]
  %s5 = inlined_call_operand.hbm [shape: f32[2,288,128], index: 5, kind: output, shape index: {}]
  %s6 = sld [smem:[#allocation0]]
  $region57: #{tpu_custom_call.1} parent=0
    _
  %s8 = ssub.s32 1, %s6
  %s9 = scalar_select 0, %s8, %s6
  $region1: #{tpu_custom_call.1} parent=0
    #allocation3 [shape = 'u8[589824]{0}', space=vmem, size = 0x90000, scoped, tag = 'input window, operand 3, single buffered']
    #allocation4 [shape = 's32[2]{0}', space=sflag, size = 0x8, scoped, tag = 'scoped memory for tpu_custom_call.1']
    #allocation5 [shape = 's32[2]{0}', space=sflag, size = 0x8, scoped, tag = 'scoped memory for tpu_custom_call.1']
    #allocation6 [shape = 'u8[294912]{0}', space=vmem, size = 0x48000, scoped, tag = 'output window, operand 0']
    %10 = vsyncpa [#allocation4], 0
    %11 = vsyncpa [#allocation5], 0
    %s12 = scalar_lea.sflag [#allocation5], 1
    %13 = vsyncpa %s12, 0
    loop: start=0, step=1, limit=4
    $region2: #{tpu_custom_call.1} parent=1 // loop_pre_header
      _
    $region3: #{tpu_custom_call.1} parent=1 // loop_header
      %s15 = sphi 0, %s19
      %p16 = scmp.ge.s32.totalorder %s15, 4
      %s25 = sphi 0, %s27
      %s28 = sphi 0, %s25
      %s29 = sphi 0, %s28
      %s45 = sphi 0, %s29
      %s49 = sphi 0, %s49
      %s51 = sphi 0, %s49
      %s52 = sphi 0, %s51
      %s66 = sphi 0, %s52
      %s70 = sphi 0, %s70
      %s72 = sphi 0, %s70
      %s73 = sphi 0, %s72
      %s87 = sphi 0, %s73
      %s91 = sphi 0, %s91
      %s93 = sphi 0, %s91
      %s94 = sphi 0, %s93
      %s108 = sphi 0, %s94
      %s112 = sphi 0, %s112
      %s114 = sphi 0, %s112
      %s115 = sphi 0, %s114
      %s129 = sphi 0, %s115
      %s135 = sphi 0, %s137
      %s138 = sphi 0, %s135
      %s139 = sphi 0, %s138
      %s155 = sphi 0, %s139
    $region4: #{tpu_custom_call.1} parent=1 // loop_header_branch
      %18 = sbr.rel (%p16) target = $region8
    $region5: #{tpu_custom_call.1} parent=1 // loop_body
      %s20 = ssub.s32 %s15, 1
      %s21 = ssub.s32 %s15, 2
      %s22 = sadd.s32 %s15, 1
      %s23 = ssub.s32 %s15, %s22
      %p24 = scmp.eq.s32.totalorder %s23, 0
      %s26 = sadd.s32 %s25, 1
      %s27 = scalar_select %p24, %s25, %s26
      %p30 = pneg %p24
      %p31 = scmp.eq.s32.totalorder %s15, 1
      %p32 = por %p30, %p31
      %p33 = scmp.ne.s32.totalorder %s25, %s28
      %p34 = scmp.eq.s32.totalorder %s15, 0
      %p35 = por %p33, %p34
      %p36 = scmp.ne.s32.totalorder %s25, %s28
      %p37 = scmp.eq.s32.totalorder %s20, 1
      %p38 = por %p36, %p37
      %p39 = scmp.ne.s32.totalorder %s28, %s29
      %p40 = scmp.eq.s32.totalorder %s20, 0
      %p41 = por %p39, %p40
      %p42 = scmp.ne.s32.totalorder %s28, %s29
      %p43 = scmp.eq.s32.totalorder %s21, 1
      %p44 = por %p42, %p43
      %p46 = scmp.ne.s32.totalorder %s29, %s45
      %p47 = scmp.eq.s32.totalorder %s21, 0
      %p48 = por %p46, %p47
      %s50 = sadd.s32 %s49, 1
      %p53 = scmp.eq.s32.totalorder %s15, 1
      %p54 = scmp.ne.s32.totalorder %s49, %s51
      %p55 = scmp.eq.s32.totalorder %s15, 0
      %p56 = por %p54, %p55
      %p57 = scmp.ne.s32.totalorder %s49, %s51
      %p58 = scmp.eq.s32.totalorder %s20, 1
      %p59 = por %p57, %p58
      %p60 = scmp.ne.s32.totalorder %s51, %s52
      %p61 = scmp.eq.s32.totalorder %s20, 0
      %p62 = por %p60, %p61
      %p63 = scmp.ne.s32.totalorder %s51, %s52
      %p64 = scmp.eq.s32.totalorder %s21, 1
      %p65 = por %p63, %p64
      %p67 = scmp.ne.s32.totalorder %s52, %s66
      %p68 = scmp.eq.s32.totalorder %s21, 0
      %p69 = por %p67, %p68
      %s71 = sadd.s32 %s70, 1
      %p74 = scmp.eq.s32.totalorder %s15, 1
      %p75 = scmp.ne.s32.totalorder %s70, %s72
      %p76 = scmp.eq.s32.totalorder %s15, 0
      %p77 = por %p75, %p76
      %p78 = scmp.ne.s32.totalorder %s70, %s72
      %p79 = scmp.eq.s32.totalorder %s20, 1
      %p80 = por %p78, %p79
      %p81 = scmp.ne.s32.totalorder %s72, %s73
      %p82 = scmp.eq.s32.totalorder %s20, 0
      %p83 = por %p81, %p82
      %p84 = scmp.ne.s32.totalorder %s72, %s73
      %p85 = scmp.eq.s32.totalorder %s21, 1
      %p86 = por %p84, %p85
      %p88 = scmp.ne.s32.totalorder %s73, %s87
      %p89 = scmp.eq.s32.totalorder %s21, 0
      %p90 = por %p88, %p89
      %s92 = sadd.s32 %s91, 1
      %p95 = scmp.eq.s32.totalorder %s15, 1
      %p96 = scmp.ne.s32.totalorder %s91, %s93
      %p97 = scmp.eq.s32.totalorder %s15, 0
      %p98 = por %p96, %p97
      %p99 = scmp.ne.s32.totalorder %s91, %s93
      %p100 = scmp.eq.s32.totalorder %s20, 1
      %p101 = por %p99, %p100
      %p102 = scmp.ne.s32.totalorder %s93, %s94
      %p103 = scmp.eq.s32.totalorder %s20, 0
      %p104 = por %p102, %p103
      %p105 = scmp.ne.s32.totalorder %s93, %s94
      %p106 = scmp.eq.s32.totalorder %s21, 1
      %p107 = por %p105, %p106
      %p109 = scmp.ne.s32.totalorder %s94, %s108
      %p110 = scmp.eq.s32.totalorder %s21, 0
      %p111 = por %p109, %p110
      %s113 = sadd.s32 %s112, 1
      %p116 = scmp.eq.s32.totalorder %s15, 1
      %p117 = scmp.ne.s32.totalorder %s112, %s114
      %p118 = scmp.eq.s32.totalorder %s15, 0
      %p119 = por %p117, %p118
      %p120 = scmp.ne.s32.totalorder %s112, %s114
      %p121 = scmp.eq.s32.totalorder %s20, 1
      %p122 = por %p120, %p121
      %p123 = scmp.ne.s32.totalorder %s114, %s115
      %p124 = scmp.eq.s32.totalorder %s20, 0
      %p125 = por %p123, %p124
      %p126 = scmp.ne.s32.totalorder %s114, %s115
      %p127 = scmp.eq.s32.totalorder %s21, 1
      %p128 = por %p126, %p127
      %p130 = scmp.ne.s32.totalorder %s115, %s129
      %p131 = scmp.eq.s32.totalorder %s21, 0
      %p132 = por %p130, %p131
      %s133 = ssub.s32 %s15, %s22
      %p134 = scmp.eq.s32.totalorder %s133, 0
      %s136 = sadd.s32 %s135, 1
      %s137 = scalar_select %p134, %s135, %s136
      %p140 = pneg %p134
      %p141 = scmp.eq.s32.totalorder %s15, 1
      %p142 = por %p140, %p141
      %p143 = scmp.ne.s32.totalorder %s135, %s138
      %p144 = scmp.eq.s32.totalorder %s15, 0
      %p145 = por %p143, %p144
      %p146 = scmp.ne.s32.totalorder %s135, %s138
      %p147 = scmp.eq.s32.totalorder %s20, 1
      %p148 = por %p146, %p147
      %p149 = scmp.ne.s32.totalorder %s138, %s139
      %p150 = scmp.eq.s32.totalorder %s20, 0
      %p151 = por %p149, %p150
      %p152 = scmp.ne.s32.totalorder %s138, %s139
      %p153 = scmp.eq.s32.totalorder %s21, 1
      %p154 = por %p152, %p153
      %p156 = scmp.ne.s32.totalorder %s139, %s155
      %p157 = scmp.eq.s32.totalorder %s21, 0
      %p158 = por %p156, %p157
      %p159 = scmp.le.s32.totalorder 1, %s15
      %p160 = scmp.lt.s32.totalorder %s15, 3
      %p161 = pnand %p159, %p160
      %p162 = pneg %p161
      // Predicated region
      $region9: #{tpu_custom_call.1} parent=5 // pred_check
        _
      $region10: #{tpu_custom_call.1} parent=5 // pred_check_branch
        %164 = sbr.rel (%p161) target = $region12
      $region11: #{tpu_custom_call.1} parent=5 // pred_region
        %s165 = ssub.s32 %s15, 1
        // Predicated region
        $region13: #{tpu_custom_call.1} parent=11 // pred_check
          %p166 = pneg %p62
        $region14: #{tpu_custom_call.1} parent=11 // pred_check_branch
          %168 = sbr.rel (%p166) target = $region16
        $region15: #{tpu_custom_call.1} parent=11 // pred_region
          _
        $region16: #{tpu_custom_call.1} parent=11 // pred_fallthru
          _
        // Predicated region
        $region17: #{tpu_custom_call.1} parent=11 // pred_check
          %p169 = pneg %p83
        $region18: #{tpu_custom_call.1} parent=11 // pred_check_branch
          %171 = sbr.rel (%p169) target = $region20
        $region19: #{tpu_custom_call.1} parent=11 // pred_region
          _
        $region20: #{tpu_custom_call.1} parent=11 // pred_fallthru
          _
        // Predicated region
        $region21: #{tpu_custom_call.1} parent=11 // pred_check
          %p172 = pneg %p104
        $region22: #{tpu_custom_call.1} parent=11 // pred_check_branch
          %174 = sbr.rel (%p172) target = $region24
        $region23: #{tpu_custom_call.1} parent=11 // pred_region
          %176 = vsyncadd [#allocation4], 0
          %s177 = sshll.u32 %s3, 4
          %s178 = int_to_ptr.hbm [resolvable:$true] %s177
          %s179 = sshll.u32 [#allocation3], 4
          %s180 = int_to_ptr.vmem [resolvable:$true] %s179
          %185 = dma.hbm_to_vmem [thread:$0]  %s178, 18432, %s180, [#allocation4], 128, 128, 8
        $region24: #{tpu_custom_call.1} parent=11 // pred_fallthru
          _
        // Predicated region
        $region25: #{tpu_custom_call.1} parent=11 // pred_check
          %p186 = pneg %p125
        $region26: #{tpu_custom_call.1} parent=11 // pred_check_branch
          %188 = sbr.rel (%p186) target = $region28
        $region27: #{tpu_custom_call.1} parent=11 // pred_region
          _
        $region28: #{tpu_custom_call.1} parent=11 // pred_fallthru
          _
      $region12: #{tpu_custom_call.1} parent=5 // pred_fallthru
        _
      %p189 = scmp.lt.s32.totalorder %s15, 2
      // Predicated region
      $region29: #{tpu_custom_call.1} parent=5 // pred_check
        %p190 = pneg %p189
      $region30: #{tpu_custom_call.1} parent=5 // pred_check_branch
        %192 = sbr.rel (%p190) target = $region32
      $region31: #{tpu_custom_call.1} parent=5 // pred_region
        // Predicated region
        $region33: #{tpu_custom_call.1} parent=31 // pred_check
          %p193 = pneg %p35
        $region34: #{tpu_custom_call.1} parent=31 // pred_check_branch
          %195 = sbr.rel (%p193) target = $region36
        $region35: #{tpu_custom_call.1} parent=31 // pred_region
          %p196 = scmp.lt.s32.totalorder %s15, 1
          %s197 = scalar_select %p196, %s15, 1
          %s198 = smul.addr %s197, 41
          %s199 = smul.addr %s198, 8
          %s200 = scalar_lea.vmem %s0, %s199
        $region36: #{tpu_custom_call.1} parent=31 // pred_fallthru
          _
      $region32: #{tpu_custom_call.1} parent=5 // pred_fallthru
        _
      %p201 = scmp.le.s32.totalorder 1, %s15
      %p202 = scmp.lt.s32.totalorder %s15, 3
      %p203 = pnand %p201, %p202
      %p204 = pneg %p203
      // Predicated region
      $region37: #{tpu_custom_call.1} parent=5 // pred_check
        _
      $region38: #{tpu_custom_call.1} parent=5 // pred_check_branch
        %206 = sbr.rel (%p203) target = $region40
      $region39: #{tpu_custom_call.1} parent=5 // pred_region
        %s207 = ssub.s32 %s15, 1
        // Predicated region
        $region41: #{tpu_custom_call.1} parent=39 // pred_check
          %p208 = pneg %p104
        $region42: #{tpu_custom_call.1} parent=39 // pred_check_branch
          %210 = sbr.rel (%p208) target = $region44
        $region43: #{tpu_custom_call.1} parent=39 // pred_region
          %212 = dma.done [#allocation4], 18432
        $region44: #{tpu_custom_call.1} parent=39 // pred_fallthru
          _
        %p213 = scmp.lt.s32.totalorder %s20, 1
        %s214 = scalar_select %p213, %s20, 1
        %s215 = smul.addr %s214, 41
        %s216 = smul.addr %s215, 8
        %s217 = scalar_lea.vmem %s0, %s216
        %p218 = pneg %p41
        %p219 = pneg %p38
        %p220 = pneg %p62
        %p221 = pneg %p59
        %p222 = pneg %p83
        %p223 = pneg %p80
        %p224 = pneg %p104
        %p225 = pneg %p101
        %p226 = pneg %p125
        %p227 = pneg %p122
        %p228 = pneg %p151
        %p229 = pneg %p148
        %s230 = sand.u32 %s138, 1
        %s231 = scalar_lea.sflag [#allocation5], %s230
        %s232 = sand.u32 %s138, 1
        %s233 = smul.addr %s232, 288
        %s234 = scalar_lea.vmem [#allocation6], %s233
        %p235 = scmp.lt.s32.totalorder %s20, 1
        %s236 = scalar_select %p235, %s20, 1
        %s237 = smul.addr %s236, 41
        %s238 = smul.addr %s237, 8
        %s239 = scalar_lea.vmem %s0, %s238
        %v240 = vld [vmem:[%s239] sm:$0xff]
        %v241 = vld [vmem:[%s239 + $0x8] sm:$0xff]
        %v242 = vld [vmem:[%s239 + $0x10] sm:$0xff]
        %v243 = vld [vmem:[%s239 + $0x18] sm:$0xff]
        %v244 = vld [vmem:[%s239 + $0x20] sm:$0xff]
        %v245 = vld [vmem:[%s239 + $0x28] sm:$0xff]
        %v246 = vld [vmem:[%s239 + $0x30] sm:$0xff]
        %v247 = vld [vmem:[%s239 + $0x38] sm:$0xff]
        %v248 = vld [vmem:[%s239 + $0x40] sm:$0xff]
        %v249 = vld [vmem:[%s239 + $0x48] sm:$0xff]
        %v250 = vld [vmem:[%s239 + $0x50] sm:$0xff]
        %v251 = vld [vmem:[%s239 + $0x58] sm:$0xff]
        %v252 = vld [vmem:[%s239 + $0x60] sm:$0xff]
        %v253 = vld [vmem:[%s239 + $0x68] sm:$0xff]
        %v254 = vld [vmem:[%s239 + $0x70] sm:$0xff]
        %v255 = vld [vmem:[%s239 + $0x78] sm:$0xff]
        %v256 = vld [vmem:[%s239 + $0x80] sm:$0xff]
        %v257 = vld [vmem:[%s239 + $0x88] sm:$0xff]
        %v258 = vld [vmem:[%s239 + $0x90] sm:$0xff]
        %v259 = vld [vmem:[%s239 + $0x98] sm:$0xff]
        %v260 = vld [vmem:[%s239 + $0xa0] sm:$0xff]
        %v261 = vld [vmem:[%s239 + $0xa8] sm:$0xff]
        %v262 = vld [vmem:[%s239 + $0xb0] sm:$0xff]
        %v263 = vld [vmem:[%s239 + $0xb8] sm:$0xff]
        %v264 = vld [vmem:[%s239 + $0xc0] sm:$0xff]
        %v265 = vld [vmem:[%s239 + $0xc8] sm:$0xff]
        %v266 = vld [vmem:[%s239 + $0xd0] sm:$0xff]
        %v267 = vld [vmem:[%s239 + $0xd8] sm:$0xff]
        %v268 = vld [vmem:[%s239 + $0xe0] sm:$0xff]
        %v269 = vld [vmem:[%s239 + $0xe8] sm:$0xff]
        %v270 = vld [vmem:[%s239 + $0xf0] sm:$0xff]
        %v271 = vld [vmem:[%s239 + $0xf8] sm:$0xff]
        %v272 = vld [vmem:[%s239 + $0x100] sm:$0xff]
        %v273 = vld [vmem:[%s239 + $0x108] sm:$0xff]
        %v274 = vld [vmem:[%s239 + $0x110] sm:$0xff]
        %v275 = vld [vmem:[%s239 + $0x118] sm:$0xff]
        %v276 = vld [vmem:[%s1] sm:$0xf]
        %v277 = vld [vmem:[%s239 + $0x1] sm:$0xff]
        %v278 = vld [vmem:[%s239 + $0x9] sm:$0xff]
        %v279 = vld [vmem:[%s239 + $0x11] sm:$0xff]
        %v280 = vld [vmem:[%s239 + $0x19] sm:$0xff]
        %v281 = vld [vmem:[%s239 + $0x21] sm:$0xff]
        %v282 = vld [vmem:[%s239 + $0x29] sm:$0xff]
        %v283 = vld [vmem:[%s239 + $0x31] sm:$0xff]
        %v284 = vld [vmem:[%s239 + $0x39] sm:$0xff]
        %v285 = vld [vmem:[%s239 + $0x41] sm:$0xff]
        %v286 = vld [vmem:[%s239 + $0x49] sm:$0xff]
        %v287 = vld [vmem:[%s239 + $0x51] sm:$0xff]
        %v288 = vld [vmem:[%s239 + $0x59] sm:$0xff]
        %v289 = vld [vmem:[%s239 + $0x61] sm:$0xff]
        %v290 = vld [vmem:[%s239 + $0x69] sm:$0xff]
        %v291 = vld [vmem:[%s239 + $0x71] sm:$0xff]
        %v292 = vld [vmem:[%s239 + $0x79] sm:$0xff]
        %v293 = vld [vmem:[%s239 + $0x81] sm:$0xff]
        %v294 = vld [vmem:[%s239 + $0x89] sm:$0xff]
        %v295 = vld [vmem:[%s239 + $0x91] sm:$0xff]
        %v296 = vld [vmem:[%s239 + $0x99] sm:$0xff]
        %v297 = vld [vmem:[%s239 + $0xa1] sm:$0xff]
        %v298 = vld [vmem:[%s239 + $0xa9] sm:$0xff]
        %v299 = vld [vmem:[%s239 + $0xb1] sm:$0xff]
        %v300 = vld [vmem:[%s239 + $0xb9] sm:$0xff]
        %v301 = vld [vmem:[%s239 + $0xc1] sm:$0xff]
        %v302 = vld [vmem:[%s239 + $0xc9] sm:$0xff]
        %v303 = vld [vmem:[%s239 + $0xd1] sm:$0xff]
        %v304 = vld [vmem:[%s239 + $0xd9] sm:$0xff]
        %v305 = vld [vmem:[%s239 + $0xe1] sm:$0xff]
        %v306 = vld [vmem:[%s239 + $0xe9] sm:$0xff]
        %v307 = vld [vmem:[%s239 + $0xf1] sm:$0xff]
        %v308 = vld [vmem:[%s239 + $0xf9] sm:$0xff]
        %v309 = vld [vmem:[%s239 + $0x101] sm:$0xff]
        %v310 = vld [vmem:[%s239 + $0x109] sm:$0xff]
        %v311 = vld [vmem:[%s239 + $0x111] sm:$0xff]
        %v312 = vld [vmem:[%s239 + $0x119] sm:$0xff]
        %s313 = scalar_lea.vmem %s1, 4
        %v314 = vld [vmem:[%s313] sm:$0xf]
        %vm315 = vcmask 31744
        %v317 = vsel %vm315, %v277, 0
        %v320 = vsel %vm315, %v278, 0
        %v323 = vsel %vm315, %v279, 0
        %v326 = vsel %vm315, %v280, 0
        %v329 = vsel %vm315, %v281, 0
        %v332 = vsel %vm315, %v282, 0
        %v335 = vsel %vm315, %v283, 0
        %v338 = vsel %vm315, %v284, 0
        %v341 = vsel %vm315, %v285, 0
        %v344 = vsel %vm315, %v286, 0
        %v347 = vsel %vm315, %v287, 0
        %v350 = vsel %vm315, %v288, 0
        %v353 = vsel %vm315, %v289, 0
        %v356 = vsel %vm315, %v290, 0
        %v359 = vsel %vm315, %v291, 0
        %v362 = vsel %vm315, %v292, 0
        %v365 = vsel %vm315, %v293, 0
        %v368 = vsel %vm315, %v294, 0
        %v371 = vsel %vm315, %v295, 0
        %v374 = vsel %vm315, %v296, 0
        %v377 = vsel %vm315, %v297, 0
        %v380 = vsel %vm315, %v298, 0
        %v383 = vsel %vm315, %v299, 0
        %v386 = vsel %vm315, %v300, 0
        %v389 = vsel %vm315, %v301, 0
        %v392 = vsel %vm315, %v302, 0
        %v395 = vsel %vm315, %v303, 0
        %v398 = vsel %vm315, %v304, 0
        %v401 = vsel %vm315, %v305, 0
        %v404 = vsel %vm315, %v306, 0
        %v407 = vsel %vm315, %v307, 0
        %v410 = vsel %vm315, %v308, 0
        %v413 = vsel %vm315, %v309, 0
        %v416 = vsel %vm315, %v310, 0
        %v419 = vsel %vm315, %v311, 0
        %v422 = vsel %vm315, %v312, 0
        %vm424 = vcmask 1043456
        %v426 = vsel %vm424, %v314, 0
        %428 = vmatpush.msra.mxu0 0.0
        %429 = vmatpush.msra.mxu0 0.0
        %430 = vmatpush.msra.mxu0 0.0
        %431 = vmatpush.msra.mxu0 0.0
        %432 = vmatpush.msra.mxu0 0.0
        %433 = vmatpush.msra.mxu0 0.0
        %434 = vmatpush.msra.mxu0 0.0
        %435 = vmatpush.msra.mxu0 0.0
        %436 = vmatpush.msra.mxu0 0.0
        %437 = vmatpush.msra.mxu0 0.0
        %438 = vmatpush.msra.mxu0 0.0
        %439 = vmatpush.msra.mxu0 0.0
        %440 = vmatpush.msra.mxu0 0.0
        %441 = vmatpush.msra.mxu0 0.0
        %442 = vmatpush.msra.mxu0 0.0
        %443 = vmatpush.msra.mxu0 %v426
        %444 = vmatmul.f32.gmra.mxu0 %v317
        %v445 = vpop.f32.mrf.mxu0
        %v446 = vadd.f32 0.0, %v445
        %447 = vmatmul.f32.gmra.mxu0 %v320
        %v448 = vpop.f32.mrf.mxu0
        %v449 = vadd.f32 0.0, %v448
        %450 = vmatmul.f32.gmra.mxu0 %v323
        %v451 = vpop.f32.mrf.mxu0
        %v452 = vadd.f32 0.0, %v451
        %453 = vmatmul.f32.gmra.mxu0 %v326
        %v454 = vpop.f32.mrf.mxu0
        %v455 = vadd.f32 0.0, %v454
        %456 = vmatmul.f32.gmra.mxu0 %v329
        %v457 = vpop.f32.mrf.mxu0
        %v458 = vadd.f32 0.0, %v457
        %459 = vmatmul.f32.gmra.mxu0 %v332
        %v460 = vpop.f32.mrf.mxu0
        %v461 = vadd.f32 0.0, %v460
        %462 = vmatmul.f32.gmra.mxu0 %v335
        %v463 = vpop.f32.mrf.mxu0
        %v464 = vadd.f32 0.0, %v463
        %465 = vmatmul.f32.gmra.mxu0 %v338
        %v466 = vpop.f32.mrf.mxu0
        %v467 = vadd.f32 0.0, %v466
        %468 = vmatmul.f32.gmra.mxu0 %v341
        %v469 = vpop.f32.mrf.mxu0
        %v470 = vadd.f32 0.0, %v469
        %471 = vmatmul.f32.gmra.mxu0 %v344
        %v472 = vpop.f32.mrf.mxu0
        %v473 = vadd.f32 0.0, %v472
        %474 = vmatmul.f32.gmra.mxu0 %v347
        %v475 = vpop.f32.mrf.mxu0
        %v476 = vadd.f32 0.0, %v475
        %477 = vmatmul.f32.gmra.mxu0 %v350
        %v478 = vpop.f32.mrf.mxu0
        %v479 = vadd.f32 0.0, %v478
        %480 = vmatmul.f32.gmra.mxu0 %v353
        %v481 = vpop.f32.mrf.mxu0
        %v482 = vadd.f32 0.0, %v481
        %483 = vmatmul.f32.gmra.mxu0 %v356
        %v484 = vpop.f32.mrf.mxu0
        %v485 = vadd.f32 0.0, %v484
        %486 = vmatmul.f32.gmra.mxu0 %v359
        %v487 = vpop.f32.mrf.mxu0
        %v488 = vadd.f32 0.0, %v487
        %489 = vmatmul.f32.gmra.mxu0 %v362
        %v490 = vpop.f32.mrf.mxu0
        %v491 = vadd.f32 0.0, %v490
        %492 = vmatmul.f32.gmra.mxu0 %v365
        %v493 = vpop.f32.mrf.mxu0
        %v494 = vadd.f32 0.0, %v493
        %495 = vmatmul.f32.gmra.mxu0 %v368
        %v496 = vpop.f32.mrf.mxu0
        %v497 = vadd.f32 0.0, %v496
        %498 = vmatmul.f32.gmra.mxu0 %v371
        %v499 = vpop.f32.mrf.mxu0
        %v500 = vadd.f32 0.0, %v499
        %501 = vmatmul.f32.gmra.mxu0 %v374
        %v502 = vpop.f32.mrf.mxu0
        %v503 = vadd.f32 0.0, %v502
        %504 = vmatmul.f32.gmra.mxu0 %v377
        %v505 = vpop.f32.mrf.mxu0
        %v506 = vadd.f32 0.0, %v505
        %507 = vmatmul.f32.gmra.mxu0 %v380
        %v508 = vpop.f32.mrf.mxu0
        %v509 = vadd.f32 0.0, %v508
        %510 = vmatmul.f32.gmra.mxu0 %v383
        %v511 = vpop.f32.mrf.mxu0
        %v512 = vadd.f32 0.0, %v511
        %513 = vmatmul.f32.gmra.mxu0 %v386
        %v514 = vpop.f32.mrf.mxu0
        %v515 = vadd.f32 0.0, %v514
        %516 = vmatmul.f32.gmra.mxu0 %v389
        %v517 = vpop.f32.mrf.mxu0
        %v518 = vadd.f32 0.0, %v517
        %519 = vmatmul.f32.gmra.mxu0 %v392
        %v520 = vpop.f32.mrf.mxu0
        %v521 = vadd.f32 0.0, %v520
        %522 = vmatmul.f32.gmra.mxu0 %v395
        %v523 = vpop.f32.mrf.mxu0
        %v524 = vadd.f32 0.0, %v523
        %525 = vmatmul.f32.gmra.mxu0 %v398
        %v526 = vpop.f32.mrf.mxu0
        %v527 = vadd.f32 0.0, %v526
        %528 = vmatmul.f32.gmra.mxu0 %v401
        %v529 = vpop.f32.mrf.mxu0
        %v530 = vadd.f32 0.0, %v529
        %531 = vmatmul.f32.gmra.mxu0 %v404
        %v532 = vpop.f32.mrf.mxu0
        %v533 = vadd.f32 0.0, %v532
        %534 = vmatmul.f32.gmra.mxu0 %v407
        %v535 = vpop.f32.mrf.mxu0
        %v536 = vadd.f32 0.0, %v535
        %537 = vmatmul.f32.gmra.mxu0 %v410
        %v538 = vpop.f32.mrf.mxu0
        %v539 = vadd.f32 0.0, %v538
        %540 = vmatmul.f32.gmra.mxu0 %v413
        %v541 = vpop.f32.mrf.mxu0
        %v542 = vadd.f32 0.0, %v541
        %543 = vmatmul.f32.gmra.mxu0 %v416
        %v544 = vpop.f32.mrf.mxu0
        %v545 = vadd.f32 0.0, %v544
        %546 = vmatmul.f32.gmra.mxu0 %v419
        %v547 = vpop.f32.mrf.mxu0
        %v548 = vadd.f32 0.0, %v547
        %549 = vmatmul.f32.gmra.mxu0 %v422
        %v550 = vpop.f32.mrf.mxu0
        %v551 = vadd.f32 0.0, %v550
        %552 = vdwg.mxu0
        %v554 = vsel %vm315, %v240, 0
        %v557 = vsel %vm315, %v241, 0
        %v560 = vsel %vm315, %v242, 0
        %v563 = vsel %vm315, %v243, 0
        %v566 = vsel %vm315, %v244, 0
        %v569 = vsel %vm315, %v245, 0
        %v572 = vsel %vm315, %v246, 0
        %v575 = vsel %vm315, %v247, 0
        %v578 = vsel %vm315, %v248, 0
        %v581 = vsel %vm315, %v249, 0
        %v584 = vsel %vm315, %v250, 0
        %v587 = vsel %vm315, %v251, 0
        %v590 = vsel %vm315, %v252, 0
        %v593 = vsel %vm315, %v253, 0
        %v596 = vsel %vm315, %v254, 0
        %v599 = vsel %vm315, %v255, 0
        %v602 = vsel %vm315, %v256, 0
        %v605 = vsel %vm315, %v257, 0
        %v608 = vsel %vm315, %v258, 0
        %v611 = vsel %vm315, %v259, 0
        %v614 = vsel %vm315, %v260, 0
        %v617 = vsel %vm315, %v261, 0
        %v620 = vsel %vm315, %v262, 0
        %v623 = vsel %vm315, %v263, 0
        %v626 = vsel %vm315, %v264, 0
        %v629 = vsel %vm315, %v265, 0
        %v632 = vsel %vm315, %v266, 0
        %v635 = vsel %vm315, %v267, 0
        %v638 = vsel %vm315, %v268, 0
        %v641 = vsel %vm315, %v269, 0
        %v644 = vsel %vm315, %v270, 0
        %v647 = vsel %vm315, %v271, 0
        %v650 = vsel %vm315, %v272, 0
        %v653 = vsel %vm315, %v273, 0
        %v656 = vsel %vm315, %v274, 0
        %v659 = vsel %vm315, %v275, 0
        %v662 = vsel %vm424, %v276, 0
        %664 = vmatpush.msra.mxu0 0.0
        %665 = vmatpush.msra.mxu0 0.0
        %666 = vmatpush.msra.mxu0 0.0
        %667 = vmatpush.msra.mxu0 0.0
        %668 = vmatpush.msra.mxu0 0.0
        %669 = vmatpush.msra.mxu0 0.0
        %670 = vmatpush.msra.mxu0 0.0
        %671 = vmatpush.msra.mxu0 0.0
        %672 = vmatpush.msra.mxu0 0.0
        %673 = vmatpush.msra.mxu0 0.0
        %674 = vmatpush.msra.mxu0 0.0
        %675 = vmatpush.msra.mxu0 0.0
        %676 = vmatpush.msra.mxu0 0.0
        %677 = vmatpush.msra.mxu0 0.0
        %678 = vmatpush.msra.mxu0 0.0
        %679 = vmatpush.msra.mxu0 %v662
        %680 = vmatmul.f32.gmra.mxu0 %v554
        %v681 = vpop.f32.mrf.mxu0
        %v682 = vadd.f32 %v446, %v681
        %683 = vmatmul.f32.gmra.mxu0 %v557
        %v684 = vpop.f32.mrf.mxu0
        %v685 = vadd.f32 %v449, %v684
        %686 = vmatmul.f32.gmra.mxu0 %v560
        %v687 = vpop.f32.mrf.mxu0
        %v688 = vadd.f32 %v452, %v687
        %689 = vmatmul.f32.gmra.mxu0 %v563
        %v690 = vpop.f32.mrf.mxu0
        %v691 = vadd.f32 %v455, %v690
        %692 = vmatmul.f32.gmra.mxu0 %v566
        %v693 = vpop.f32.mrf.mxu0
        %v694 = vadd.f32 %v458, %v693
        %695 = vmatmul.f32.gmra.mxu0 %v569
        %v696 = vpop.f32.mrf.mxu0
        %v697 = vadd.f32 %v461, %v696
        %698 = vmatmul.f32.gmra.mxu0 %v572
        %v699 = vpop.f32.mrf.mxu0
        %v700 = vadd.f32 %v464, %v699
        %701 = vmatmul.f32.gmra.mxu0 %v575
        %v702 = vpop.f32.mrf.mxu0
        %v703 = vadd.f32 %v467, %v702
        %704 = vmatmul.f32.gmra.mxu0 %v578
        %v705 = vpop.f32.mrf.mxu0
        %v706 = vadd.f32 %v470, %v705
        %707 = vmatmul.f32.gmra.mxu0 %v581
        %v708 = vpop.f32.mrf.mxu0
        %v709 = vadd.f32 %v473, %v708
        %710 = vmatmul.f32.gmra.mxu0 %v584
        %v711 = vpop.f32.mrf.mxu0
        %v712 = vadd.f32 %v476, %v711
        %713 = vmatmul.f32.gmra.mxu0 %v587
        %v714 = vpop.f32.mrf.mxu0
        %v715 = vadd.f32 %v479, %v714
        %716 = vmatmul.f32.gmra.mxu0 %v590
        %v717 = vpop.f32.mrf.mxu0
        %v718 = vadd.f32 %v482, %v717
        %719 = vmatmul.f32.gmra.mxu0 %v593
        %v720 = vpop.f32.mrf.mxu0
        %v721 = vadd.f32 %v485, %v720
        %722 = vmatmul.f32.gmra.mxu0 %v596
        %v723 = vpop.f32.mrf.mxu0
        %v724 = vadd.f32 %v488, %v723
        %725 = vmatmul.f32.gmra.mxu0 %v599
        %v726 = vpop.f32.mrf.mxu0
        %v727 = vadd.f32 %v491, %v726
        %728 = vmatmul.f32.gmra.mxu0 %v602
        %v729 = vpop.f32.mrf.mxu0
        %v730 = vadd.f32 %v494, %v729
        %731 = vmatmul.f32.gmra.mxu0 %v605
        %v732 = vpop.f32.mrf.mxu0
        %v733 = vadd.f32 %v497, %v732
        %734 = vmatmul.f32.gmra.mxu0 %v608
        %v735 = vpop.f32.mrf.mxu0
        %v736 = vadd.f32 %v500, %v735
        %737 = vmatmul.f32.gmra.mxu0 %v611
        %v738 = vpop.f32.mrf.mxu0
        %v739 = vadd.f32 %v503, %v738
        %740 = vmatmul.f32.gmra.mxu0 %v614
        %v741 = vpop.f32.mrf.mxu0
        %v742 = vadd.f32 %v506, %v741
        %743 = vmatmul.f32.gmra.mxu0 %v617
        %v744 = vpop.f32.mrf.mxu0
        %v745 = vadd.f32 %v509, %v744
        %746 = vmatmul.f32.gmra.mxu0 %v620
        %v747 = vpop.f32.mrf.mxu0
        %v748 = vadd.f32 %v512, %v747
        %749 = vmatmul.f32.gmra.mxu0 %v623
        %v750 = vpop.f32.mrf.mxu0
        %v751 = vadd.f32 %v515, %v750
        %752 = vmatmul.f32.gmra.mxu0 %v626
        %v753 = vpop.f32.mrf.mxu0
        %v754 = vadd.f32 %v518, %v753
        %755 = vmatmul.f32.gmra.mxu0 %v629
        %v756 = vpop.f32.mrf.mxu0
        %v757 = vadd.f32 %v521, %v756
        %758 = vmatmul.f32.gmra.mxu0 %v632
        %v759 = vpop.f32.mrf.mxu0
        %v760 = vadd.f32 %v524, %v759
        %761 = vmatmul.f32.gmra.mxu0 %v635
        %v762 = vpop.f32.mrf.mxu0
        %v763 = vadd.f32 %v527, %v762
        %764 = vmatmul.f32.gmra.mxu0 %v638
        %v765 = vpop.f32.mrf.mxu0
        %v766 = vadd.f32 %v530, %v765
        %767 = vmatmul.f32.gmra.mxu0 %v641
        %v768 = vpop.f32.mrf.mxu0
        %v769 = vadd.f32 %v533, %v768
        %770 = vmatmul.f32.gmra.mxu0 %v644
        %v771 = vpop.f32.mrf.mxu0
        %v772 = vadd.f32 %v536, %v771
        %773 = vmatmul.f32.gmra.mxu0 %v647
        %v774 = vpop.f32.mrf.mxu0
        %v775 = vadd.f32 %v539, %v774
        %776 = vmatmul.f32.gmra.mxu0 %v650
        %v777 = vpop.f32.mrf.mxu0
        %v778 = vadd.f32 %v542, %v777
        %779 = vmatmul.f32.gmra.mxu0 %v653
        %v780 = vpop.f32.mrf.mxu0
        %v781 = vadd.f32 %v545, %v780
        %782 = vmatmul.f32.gmra.mxu0 %v656
        %v783 = vpop.f32.mrf.mxu0
        %v784 = vadd.f32 %v548, %v783
        %785 = vmatmul.f32.gmra.mxu0 %v659
        %v786 = vpop.f32.mrf.mxu0
        %v787 = vadd.f32 %v551, %v786
        %788 = vdwg.mxu0
        %v789 = vld [vmem:[%s239 + $0x2] sm:$0xff]
        %v790 = vld [vmem:[%s239 + $0xa] sm:$0xff]
        %v791 = vld [vmem:[%s239 + $0x12] sm:$0xff]
        %v792 = vld [vmem:[%s239 + $0x1a] sm:$0xff]
        %v793 = vld [vmem:[%s239 + $0x22] sm:$0xff]
        %v794 = vld [vmem:[%s239 + $0x2a] sm:$0xff]
        %v795 = vld [vmem:[%s239 + $0x32] sm:$0xff]
        %v796 = vld [vmem:[%s239 + $0x3a] sm:$0xff]
        %v797 = vld [vmem:[%s239 + $0x42] sm:$0xff]
        %v798 = vld [vmem:[%s239 + $0x4a] sm:$0xff]
        %v799 = vld [vmem:[%s239 + $0x52] sm:$0xff]
        %v800 = vld [vmem:[%s239 + $0x5a] sm:$0xff]
        %v801 = vld [vmem:[%s239 + $0x62] sm:$0xff]
        %v802 = vld [vmem:[%s239 + $0x6a] sm:$0xff]
        %v803 = vld [vmem:[%s239 + $0x72] sm:$0xff]
        %v804 = vld [vmem:[%s239 + $0x7a] sm:$0xff]
        %v805 = vld [vmem:[%s239 + $0x82] sm:$0xff]
        %v806 = vld [vmem:[%s239 + $0x8a] sm:$0xff]
        %v807 = vld [vmem:[%s239 + $0x92] sm:$0xff]
        %v808 = vld [vmem:[%s239 + $0x9a] sm:$0xff]
        %v809 = vld [vmem:[%s239 + $0xa2] sm:$0xff]
        %v810 = vld [vmem:[%s239 + $0xaa] sm:$0xff]
        %v811 = vld [vmem:[%s239 + $0xb2] sm:$0xff]
        %v812 = vld [vmem:[%s239 + $0xba] sm:$0xff]
        %v813 = vld [vmem:[%s239 + $0xc2] sm:$0xff]
        %v814 = vld [vmem:[%s239 + $0xca] sm:$0xff]
        %v815 = vld [vmem:[%s239 + $0xd2] sm:$0xff]
        %v816 = vld [vmem:[%s239 + $0xda] sm:$0xff]
        %v817 = vld [vmem:[%s239 + $0xe2] sm:$0xff]
        %v818 = vld [vmem:[%s239 + $0xea] sm:$0xff]
        %v819 = vld [vmem:[%s239 + $0xf2] sm:$0xff]
        %v820 = vld [vmem:[%s239 + $0xfa] sm:$0xff]
        %v821 = vld [vmem:[%s239 + $0x102] sm:$0xff]
        %v822 = vld [vmem:[%s239 + $0x10a] sm:$0xff]
        %v823 = vld [vmem:[%s239 + $0x112] sm:$0xff]
        %v824 = vld [vmem:[%s239 + $0x11a] sm:$0xff]
        %s825 = scalar_lea.vmem %s1, 8
        %v826 = vld [vmem:[%s825] sm:$0xf]
        %v828 = vsel %vm315, %v789, 0
        %v831 = vsel %vm315, %v790, 0
        %v834 = vsel %vm315, %v791, 0
        %v837 = vsel %vm315, %v792, 0
        %v840 = vsel %vm315, %v793, 0
        %v843 = vsel %vm315, %v794, 0
        %v846 = vsel %vm315, %v795, 0
        %v849 = vsel %vm315, %v796, 0
        %v852 = vsel %vm315, %v797, 0
        %v855 = vsel %vm315, %v798, 0
        %v858 = vsel %vm315, %v799, 0
        %v861 = vsel %vm315, %v800, 0
        %v864 = vsel %vm315, %v801, 0
        %v867 = vsel %vm315, %v802, 0
        %v870 = vsel %vm315, %v803, 0
        %v873 = vsel %vm315, %v804, 0
        %v876 = vsel %vm315, %v805, 0
        %v879 = vsel %vm315, %v806, 0
        %v882 = vsel %vm315, %v807, 0
        %v885 = vsel %vm315, %v808, 0
        %v888 = vsel %vm315, %v809, 0
        %v891 = vsel %vm315, %v810, 0
        %v894 = vsel %vm315, %v811, 0
        %v897 = vsel %vm315, %v812, 0
        %v900 = vsel %vm315, %v813, 0
        %v903 = vsel %vm315, %v814, 0
        %v906 = vsel %vm315, %v815, 0
        %v909 = vsel %vm315, %v816, 0
        %v912 = vsel %vm315, %v817, 0
        %v915 = vsel %vm315, %v818, 0
        %v918 = vsel %vm315, %v819, 0
        %v921 = vsel %vm315, %v820, 0
        %v924 = vsel %vm315, %v821, 0
        %v927 = vsel %vm315, %v822, 0
        %v930 = vsel %vm315, %v823, 0
        %v933 = vsel %vm315, %v824, 0
        %v936 = vsel %vm424, %v826, 0
        %938 = vmatpush.msra.mxu0 0.0
        %939 = vmatpush.msra.mxu0 0.0
        %940 = vmatpush.msra.mxu0 0.0
        %941 = vmatpush.msra.mxu0 0.0
        %942 = vmatpush.msra.mxu0 0.0
        %943 = vmatpush.msra.mxu0 0.0
        %944 = vmatpush.msra.mxu0 0.0
        %945 = vmatpush.msra.mxu0 0.0
        %946 = vmatpush.msra.mxu0 0.0
        %947 = vmatpush.msra.mxu0 0.0
        %948 = vmatpush.msra.mxu0 0.0
        %949 = vmatpush.msra.mxu0 0.0
        %950 = vmatpush.msra.mxu0 0.0
        %951 = vmatpush.msra.mxu0 0.0
        %952 = vmatpush.msra.mxu0 0.0
        %953 = vmatpush.msra.mxu0 %v936
        %954 = vmatmul.f32.gmra.mxu0 %v828
        %v955 = vpop.f32.mrf.mxu0
        %v956 = vadd.f32 0.0, %v955
        %957 = vmatmul.f32.gmra.mxu0 %v831
        %v958 = vpop.f32.mrf.mxu0
        %v959 = vadd.f32 0.0, %v958
        %960 = vmatmul.f32.gmra.mxu0 %v834
        %v961 = vpop.f32.mrf.mxu0
        %v962 = vadd.f32 0.0, %v961
        %963 = vmatmul.f32.gmra.mxu0 %v837
        %v964 = vpop.f32.mrf.mxu0
        %v965 = vadd.f32 0.0, %v964
        %966 = vmatmul.f32.gmra.mxu0 %v840
        %v967 = vpop.f32.mrf.mxu0
        %v968 = vadd.f32 0.0, %v967
        %969 = vmatmul.f32.gmra.mxu0 %v843
        %v970 = vpop.f32.mrf.mxu0
        %v971 = vadd.f32 0.0, %v970
        %972 = vmatmul.f32.gmra.mxu0 %v846
        %v973 = vpop.f32.mrf.mxu0
        %v974 = vadd.f32 0.0, %v973
        %975 = vmatmul.f32.gmra.mxu0 %v849
        %v976 = vpop.f32.mrf.mxu0
        %v977 = vadd.f32 0.0, %v976
        %978 = vmatmul.f32.gmra.mxu0 %v852
        %v979 = vpop.f32.mrf.mxu0
        %v980 = vadd.f32 0.0, %v979
        %981 = vmatmul.f32.gmra.mxu0 %v855
        %v982 = vpop.f32.mrf.mxu0
        %v983 = vadd.f32 0.0, %v982
        %984 = vmatmul.f32.gmra.mxu0 %v858
        %v985 = vpop.f32.mrf.mxu0
        %v986 = vadd.f32 0.0, %v985
        %987 = vmatmul.f32.gmra.mxu0 %v861
        %v988 = vpop.f32.mrf.mxu0
        %v989 = vadd.f32 0.0, %v988
        %990 = vmatmul.f32.gmra.mxu0 %v864
        %v991 = vpop.f32.mrf.mxu0
        %v992 = vadd.f32 0.0, %v991
        %993 = vmatmul.f32.gmra.mxu0 %v867
        %v994 = vpop.f32.mrf.mxu0
        %v995 = vadd.f32 0.0, %v994
        %996 = vmatmul.f32.gmra.mxu0 %v870
        %v997 = vpop.f32.mrf.mxu0
        %v998 = vadd.f32 0.0, %v997
        %999 = vmatmul.f32.gmra.mxu0 %v873
        %v1000 = vpop.f32.mrf.mxu0
        %v1001 = vadd.f32 0.0, %v1000
        %1002 = vmatmul.f32.gmra.mxu0 %v876
        %v1003 = vpop.f32.mrf.mxu0
        %v1004 = vadd.f32 0.0, %v1003
        %1005 = vmatmul.f32.gmra.mxu0 %v879
        %v1006 = vpop.f32.mrf.mxu0
        %v1007 = vadd.f32 0.0, %v1006
        %1008 = vmatmul.f32.gmra.mxu0 %v882
        %v1009 = vpop.f32.mrf.mxu0
        %v1010 = vadd.f32 0.0, %v1009
        %1011 = vmatmul.f32.gmra.mxu0 %v885
        %v1012 = vpop.f32.mrf.mxu0
        %v1013 = vadd.f32 0.0, %v1012
        %1014 = vmatmul.f32.gmra.mxu0 %v888
        %v1015 = vpop.f32.mrf.mxu0
        %v1016 = vadd.f32 0.0, %v1015
        %1017 = vmatmul.f32.gmra.mxu0 %v891
        %v1018 = vpop.f32.mrf.mxu0
        %v1019 = vadd.f32 0.0, %v1018
        %1020 = vmatmul.f32.gmra.mxu0 %v894
        %v1021 = vpop.f32.mrf.mxu0
        %v1022 = vadd.f32 0.0, %v1021
        %1023 = vmatmul.f32.gmra.mxu0 %v897
        %v1024 = vpop.f32.mrf.mxu0
        %v1025 = vadd.f32 0.0, %v1024
        %1026 = vmatmul.f32.gmra.mxu0 %v900
        %v1027 = vpop.f32.mrf.mxu0
        %v1028 = vadd.f32 0.0, %v1027
        %1029 = vmatmul.f32.gmra.mxu0 %v903
        %v1030 = vpop.f32.mrf.mxu0
        %v1031 = vadd.f32 0.0, %v1030
        %1032 = vmatmul.f32.gmra.mxu0 %v906
        %v1033 = vpop.f32.mrf.mxu0
        %v1034 = vadd.f32 0.0, %v1033
        %1035 = vmatmul.f32.gmra.mxu0 %v909
        %v1036 = vpop.f32.mrf.mxu0
        %v1037 = vadd.f32 0.0, %v1036
        %1038 = vmatmul.f32.gmra.mxu0 %v912
        %v1039 = vpop.f32.mrf.mxu0
        %v1040 = vadd.f32 0.0, %v1039
        %1041 = vmatmul.f32.gmra.mxu0 %v915
        %v1042 = vpop.f32.mrf.mxu0
        %v1043 = vadd.f32 0.0, %v1042
        %1044 = vmatmul.f32.gmra.mxu0 %v918
        %v1045 = vpop.f32.mrf.mxu0
        %v1046 = vadd.f32 0.0, %v1045
        %1047 = vmatmul.f32.gmra.mxu0 %v921
        %v1048 = vpop.f32.mrf.mxu0
        %v1049 = vadd.f32 0.0, %v1048
        %1050 = vmatmul.f32.gmra.mxu0 %v924
        %v1051 = vpop.f32.mrf.mxu0
        %v1052 = vadd.f32 0.0, %v1051
        %1053 = vmatmul.f32.gmra.mxu0 %v927
        %v1054 = vpop.f32.mrf.mxu0
        %v1055 = vadd.f32 0.0, %v1054
        %1056 = vmatmul.f32.gmra.mxu0 %v930
        %v1057 = vpop.f32.mrf.mxu0
        %v1058 = vadd.f32 0.0, %v1057
        %1059 = vmatmul.f32.gmra.mxu0 %v933
        %v1060 = vpop.f32.mrf.mxu0
        %v1061 = vadd.f32 0.0, %v1060
        %1062 = vdwg.mxu0
        %v1063 = vadd.f32 %v682, %v956
        %v1064 = vadd.f32 %v685, %v959
        %v1065 = vadd.f32 %v688, %v962
        %v1066 = vadd.f32 %v691, %v965
        %v1067 = vadd.f32 %v694, %v968
        %v1068 = vadd.f32 %v697, %v971
        %v1069 = vadd.f32 %v700, %v974
        %v1070 = vadd.f32 %v703, %v977
        %v1071 = vadd.f32 %v706, %v980
        %v1072 = vadd.f32 %v709, %v983
        %v1073 = vadd.f32 %v712, %v986
        %v1074 = vadd.f32 %v715, %v989
        %v1075 = vadd.f32 %v718, %v992
        %v1076 = vadd.f32 %v721, %v995
        %v1077 = vadd.f32 %v724, %v998
        %v1078 = vadd.f32 %v727, %v1001
        %v1079 = vadd.f32 %v730, %v1004
        %v1080 = vadd.f32 %v733, %v1007
        %v1081 = vadd.f32 %v736, %v1010
        %v1082 = vadd.f32 %v739, %v1013
        %v1083 = vadd.f32 %v742, %v1016
        %v1084 = vadd.f32 %v745, %v1019
        %v1085 = vadd.f32 %v748, %v1022
        %v1086 = vadd.f32 %v751, %v1025
        %v1087 = vadd.f32 %v754, %v1028
        %v1088 = vadd.f32 %v757, %v1031
        %v1089 = vadd.f32 %v760, %v1034
        %v1090 = vadd.f32 %v763, %v1037
        %v1091 = vadd.f32 %v766, %v1040
        %v1092 = vadd.f32 %v769, %v1043
        %v1093 = vadd.f32 %v772, %v1046
        %v1094 = vadd.f32 %v775, %v1049
        %v1095 = vadd.f32 %v778, %v1052
        %v1096 = vadd.f32 %v781, %v1055
        %v1097 = vadd.f32 %v784, %v1058
        %v1098 = vadd.f32 %v787, %v1061
        %v1099 = vld [vmem:[%s239 + $0x12] sm:$0xff]
        %v1100 = vld [vmem:[%s239 + $0x1a] sm:$0xff]
        %v1101 = vld [vmem:[%s239 + $0x22] sm:$0xff]
        %v1102 = vld [vmem:[%s239 + $0x2a] sm:$0xff]
        %v1103 = vld [vmem:[%s239 + $0x32] sm:$0xff]
        %v1104 = vld [vmem:[%s239 + $0x3a] sm:$0xff]
        %v1105 = vld [vmem:[%s239 + $0x42] sm:$0xff]
        %v1106 = vld [vmem:[%s239 + $0x4a] sm:$0xff]
        %v1107 = vld [vmem:[%s239 + $0x52] sm:$0xff]
        %v1108 = vld [vmem:[%s239 + $0x5a] sm:$0xff]
        %v1109 = vld [vmem:[%s239 + $0x62] sm:$0xff]
        %v1110 = vld [vmem:[%s239 + $0x6a] sm:$0xff]
        %v1111 = vld [vmem:[%s239 + $0x72] sm:$0xff]
        %v1112 = vld [vmem:[%s239 + $0x7a] sm:$0xff]
        %v1113 = vld [vmem:[%s239 + $0x82] sm:$0xff]
        %v1114 = vld [vmem:[%s239 + $0x8a] sm:$0xff]
        %v1115 = vld [vmem:[%s239 + $0x92] sm:$0xff]
        %v1116 = vld [vmem:[%s239 + $0x9a] sm:$0xff]
        %v1117 = vld [vmem:[%s239 + $0xa2] sm:$0xff]
        %v1118 = vld [vmem:[%s239 + $0xaa] sm:$0xff]
        %v1119 = vld [vmem:[%s239 + $0xb2] sm:$0xff]
        %v1120 = vld [vmem:[%s239 + $0xba] sm:$0xff]
        %v1121 = vld [vmem:[%s239 + $0xc2] sm:$0xff]
        %v1122 = vld [vmem:[%s239 + $0xca] sm:$0xff]
        %v1123 = vld [vmem:[%s239 + $0xd2] sm:$0xff]
        %v1124 = vld [vmem:[%s239 + $0xda] sm:$0xff]
        %v1125 = vld [vmem:[%s239 + $0xe2] sm:$0xff]
        %v1126 = vld [vmem:[%s239 + $0xea] sm:$0xff]
        %v1127 = vld [vmem:[%s239 + $0xf2] sm:$0xff]
        %v1128 = vld [vmem:[%s239 + $0xfa] sm:$0xff]
        %v1129 = vld [vmem:[%s239 + $0x102] sm:$0xff]
        %v1130 = vld [vmem:[%s239 + $0x10a] sm:$0xff]
        %v1131 = vld [vmem:[%s239 + $0x112] sm:$0xff]
        %v1132 = vld [vmem:[%s239 + $0x11a] sm:$0xff]
        %v1133 = vld [vmem:[%s239 + $0x122] sm:$0xff]
        %v1134 = vld [vmem:[%s239 + $0x12a] sm:$0xff]
        %s1135 = scalar_lea.vmem %s1, 12
        %v1136 = vld [vmem:[%s1135] sm:$0xf]
        %v1138 = vsel %vm315, %v1099, 0
        %v1141 = vsel %vm315, %v1100, 0
        %v1144 = vsel %vm315, %v1101, 0
        %v1147 = vsel %vm315, %v1102, 0
        %v1150 = vsel %vm315, %v1103, 0
        %v1153 = vsel %vm315, %v1104, 0
        %v1156 = vsel %vm315, %v1105, 0
        %v1159 = vsel %vm315, %v1106, 0
        %v1162 = vsel %vm315, %v1107, 0
        %v1165 = vsel %vm315, %v1108, 0
        %v1168 = vsel %vm315, %v1109, 0
        %v1171 = vsel %vm315, %v1110, 0
        %v1174 = vsel %vm315, %v1111, 0
        %v1177 = vsel %vm315, %v1112, 0
        %v1180 = vsel %vm315, %v1113, 0
        %v1183 = vsel %vm315, %v1114, 0
        %v1186 = vsel %vm315, %v1115, 0
        %v1189 = vsel %vm315, %v1116, 0
        %v1192 = vsel %vm315, %v1117, 0
        %v1195 = vsel %vm315, %v1118, 0
        %v1198 = vsel %vm315, %v1119, 0
        %v1201 = vsel %vm315, %v1120, 0
        %v1204 = vsel %vm315, %v1121, 0
        %v1207 = vsel %vm315, %v1122, 0
        %v1210 = vsel %vm315, %v1123, 0
        %v1213 = vsel %vm315, %v1124, 0
        %v1216 = vsel %vm315, %v1125, 0
        %v1219 = vsel %vm315, %v1126, 0
        %v1222 = vsel %vm315, %v1127, 0
        %v1225 = vsel %vm315, %v1128, 0
        %v1228 = vsel %vm315, %v1129, 0
        %v1231 = vsel %vm315, %v1130, 0
        %v1234 = vsel %vm315, %v1131, 0
        %v1237 = vsel %vm315, %v1132, 0
        %v1240 = vsel %vm315, %v1133, 0
        %v1243 = vsel %vm315, %v1134, 0
        %v1246 = vsel %vm424, %v1136, 0
        %1248 = vmatpush.msra.mxu0 0.0
        %1249 = vmatpush.msra.mxu0 0.0
        %1250 = vmatpush.msra.mxu0 0.0
        %1251 = vmatpush.msra.mxu0 0.0
        %1252 = vmatpush.msra.mxu0 0.0
        %1253 = vmatpush.msra.mxu0 0.0
        %1254 = vmatpush.msra.mxu0 0.0
        %1255 = vmatpush.msra.mxu0 0.0
        %1256 = vmatpush.msra.mxu0 0.0
        %1257 = vmatpush.msra.mxu0 0.0
        %1258 = vmatpush.msra.mxu0 0.0
        %1259 = vmatpush.msra.mxu0 0.0
        %1260 = vmatpush.msra.mxu0 0.0
        %1261 = vmatpush.msra.mxu0 0.0
        %1262 = vmatpush.msra.mxu0 0.0
        %1263 = vmatpush.msra.mxu0 %v1246
        %1264 = vmatmul.f32.gmra.mxu0 %v1138
        %v1265 = vpop.f32.mrf.mxu0
        %v1266 = vadd.f32 0.0, %v1265
        %1267 = vmatmul.f32.gmra.mxu0 %v1141
        %v1268 = vpop.f32.mrf.mxu0
        %v1269 = vadd.f32 0.0, %v1268
        %1270 = vmatmul.f32.gmra.mxu0 %v1144
        %v1271 = vpop.f32.mrf.mxu0
        %v1272 = vadd.f32 0.0, %v1271
        %1273 = vmatmul.f32.gmra.mxu0 %v1147
        %v1274 = vpop.f32.mrf.mxu0
        %v1275 = vadd.f32 0.0, %v1274
        %1276 = vmatmul.f32.gmra.mxu0 %v1150
        %v1277 = vpop.f32.mrf.mxu0
        %v1278 = vadd.f32 0.0, %v1277
        %1279 = vmatmul.f32.gmra.mxu0 %v1153
        %v1280 = vpop.f32.mrf.mxu0
        %v1281 = vadd.f32 0.0, %v1280
        %1282 = vmatmul.f32.gmra.mxu0 %v1156
        %v1283 = vpop.f32.mrf.mxu0
        %v1284 = vadd.f32 0.0, %v1283
        %1285 = vmatmul.f32.gmra.mxu0 %v1159
        %v1286 = vpop.f32.mrf.mxu0
        %v1287 = vadd.f32 0.0, %v1286
        %1288 = vmatmul.f32.gmra.mxu0 %v1162
        %v1289 = vpop.f32.mrf.mxu0
        %v1290 = vadd.f32 0.0, %v1289
        %1291 = vmatmul.f32.gmra.mxu0 %v1165
        %v1292 = vpop.f32.mrf.mxu0
        %v1293 = vadd.f32 0.0, %v1292
        %1294 = vmatmul.f32.gmra.mxu0 %v1168
        %v1295 = vpop.f32.mrf.mxu0
        %v1296 = vadd.f32 0.0, %v1295
        %1297 = vmatmul.f32.gmra.mxu0 %v1171
        %v1298 = vpop.f32.mrf.mxu0
        %v1299 = vadd.f32 0.0, %v1298
        %1300 = vmatmul.f32.gmra.mxu0 %v1174
        %v1301 = vpop.f32.mrf.mxu0
        %v1302 = vadd.f32 0.0, %v1301
        %1303 = vmatmul.f32.gmra.mxu0 %v1177
        %v1304 = vpop.f32.mrf.mxu0
        %v1305 = vadd.f32 0.0, %v1304
        %1306 = vmatmul.f32.gmra.mxu0 %v1180
        %v1307 = vpop.f32.mrf.mxu0
        %v1308 = vadd.f32 0.0, %v1307
        %1309 = vmatmul.f32.gmra.mxu0 %v1183
        %v1310 = vpop.f32.mrf.mxu0
        %v1311 = vadd.f32 0.0, %v1310
        %1312 = vmatmul.f32.gmra.mxu0 %v1186
        %v1313 = vpop.f32.mrf.mxu0
        %v1314 = vadd.f32 0.0, %v1313
        %1315 = vmatmul.f32.gmra.mxu0 %v1189
        %v1316 = vpop.f32.mrf.mxu0
        %v1317 = vadd.f32 0.0, %v1316
        %1318 = vmatmul.f32.gmra.mxu0 %v1192
        %v1319 = vpop.f32.mrf.mxu0
        %v1320 = vadd.f32 0.0, %v1319
        %1321 = vmatmul.f32.gmra.mxu0 %v1195
        %v1322 = vpop.f32.mrf.mxu0
        %v1323 = vadd.f32 0.0, %v1322
        %1324 = vmatmul.f32.gmra.mxu0 %v1198
        %v1325 = vpop.f32.mrf.mxu0
        %v1326 = vadd.f32 0.0, %v1325
        %1327 = vmatmul.f32.gmra.mxu0 %v1201
        %v1328 = vpop.f32.mrf.mxu0
        %v1329 = vadd.f32 0.0, %v1328
        %1330 = vmatmul.f32.gmra.mxu0 %v1204
        %v1331 = vpop.f32.mrf.mxu0
        %v1332 = vadd.f32 0.0, %v1331
        %1333 = vmatmul.f32.gmra.mxu0 %v1207
        %v1334 = vpop.f32.mrf.mxu0
        %v1335 = vadd.f32 0.0, %v1334
        %1336 = vmatmul.f32.gmra.mxu0 %v1210
        %v1337 = vpop.f32.mrf.mxu0
        %v1338 = vadd.f32 0.0, %v1337
        %1339 = vmatmul.f32.gmra.mxu0 %v1213
        %v1340 = vpop.f32.mrf.mxu0
        %v1341 = vadd.f32 0.0, %v1340
        %1342 = vmatmul.f32.gmra.mxu0 %v1216
        %v1343 = vpop.f32.mrf.mxu0
        %v1344 = vadd.f32 0.0, %v1343
        %1345 = vmatmul.f32.gmra.mxu0 %v1219
        %v1346 = vpop.f32.mrf.mxu0
        %v1347 = vadd.f32 0.0, %v1346
        %1348 = vmatmul.f32.gmra.mxu0 %v1222
        %v1349 = vpop.f32.mrf.mxu0
        %v1350 = vadd.f32 0.0, %v1349
        %1351 = vmatmul.f32.gmra.mxu0 %v1225
        %v1352 = vpop.f32.mrf.mxu0
        %v1353 = vadd.f32 0.0, %v1352
        %1354 = vmatmul.f32.gmra.mxu0 %v1228
        %v1355 = vpop.f32.mrf.mxu0
        %v1356 = vadd.f32 0.0, %v1355
        %1357 = vmatmul.f32.gmra.mxu0 %v1231
        %v1358 = vpop.f32.mrf.mxu0
        %v1359 = vadd.f32 0.0, %v1358
        %1360 = vmatmul.f32.gmra.mxu0 %v1234
        %v1361 = vpop.f32.mrf.mxu0
        %v1362 = vadd.f32 0.0, %v1361
        %1363 = vmatmul.f32.gmra.mxu0 %v1237
        %v1364 = vpop.f32.mrf.mxu0
        %v1365 = vadd.f32 0.0, %v1364
        %1366 = vmatmul.f32.gmra.mxu0 %v1240
        %v1367 = vpop.f32.mrf.mxu0
        %v1368 = vadd.f32 0.0, %v1367
        %1369 = vmatmul.f32.gmra.mxu0 %v1243
        %v1370 = vpop.f32.mrf.mxu0
        %v1371 = vadd.f32 0.0, %v1370
        %1372 = vdwg.mxu0
        %v1373 = vadd.f32 %v1063, %v1266
        %v1374 = vadd.f32 %v1064, %v1269
        %v1375 = vadd.f32 %v1065, %v1272
        %v1376 = vadd.f32 %v1066, %v1275
        %v1377 = vadd.f32 %v1067, %v1278
        %v1378 = vadd.f32 %v1068, %v1281
        %v1379 = vadd.f32 %v1069, %v1284
        %v1380 = vadd.f32 %v1070, %v1287
        %v1381 = vadd.f32 %v1071, %v1290
        %v1382 = vadd.f32 %v1072, %v1293
        %v1383 = vadd.f32 %v1073, %v1296
        %v1384 = vadd.f32 %v1074, %v1299
        %v1385 = vadd.f32 %v1075, %v1302
        %v1386 = vadd.f32 %v1076, %v1305
        %v1387 = vadd.f32 %v1077, %v1308
        %v1388 = vadd.f32 %v1078, %v1311
        %v1389 = vadd.f32 %v1079, %v1314
        %v1390 = vadd.f32 %v1080, %v1317
        %v1391 = vadd.f32 %v1081, %v1320
        %v1392 = vadd.f32 %v1082, %v1323
        %v1393 = vadd.f32 %v1083, %v1326
        %v1394 = vadd.f32 %v1084, %v1329
        %v1395 = vadd.f32 %v1085, %v1332
        %v1396 = vadd.f32 %v1086, %v1335
        %v1397 = vadd.f32 %v1087, %v1338
        %v1398 = vadd.f32 %v1088, %v1341
        %v1399 = vadd.f32 %v1089, %v1344
        %v1400 = vadd.f32 %v1090, %v1347
        %v1401 = vadd.f32 %v1091, %v1350
        %v1402 = vadd.f32 %v1092, %v1353
        %v1403 = vadd.f32 %v1093, %v1356
        %v1404 = vadd.f32 %v1094, %v1359
        %v1405 = vadd.f32 %v1095, %v1362
        %v1406 = vadd.f32 %v1096, %v1365
        %v1407 = vadd.f32 %v1097, %v1368
        %v1408 = vadd.f32 %v1098, %v1371
        %v1409 = vld [vmem:[%s239 + $0x13] sm:$0xff]
        %v1410 = vld [vmem:[%s239 + $0x1b] sm:$0xff]
        %v1411 = vld [vmem:[%s239 + $0x23] sm:$0xff]
        %v1412 = vld [vmem:[%s239 + $0x2b] sm:$0xff]
        %v1413 = vld [vmem:[%s239 + $0x33] sm:$0xff]
        %v1414 = vld [vmem:[%s239 + $0x3b] sm:$0xff]
        %v1415 = vld [vmem:[%s239 + $0x43] sm:$0xff]
        %v1416 = vld [vmem:[%s239 + $0x4b] sm:$0xff]
        %v1417 = vld [vmem:[%s239 + $0x53] sm:$0xff]
        %v1418 = vld [vmem:[%s239 + $0x5b] sm:$0xff]
        %v1419 = vld [vmem:[%s239 + $0x63] sm:$0xff]
        %v1420 = vld [vmem:[%s239 + $0x6b] sm:$0xff]
        %v1421 = vld [vmem:[%s239 + $0x73] sm:$0xff]
        %v1422 = vld [vmem:[%s239 + $0x7b] sm:$0xff]
        %v1423 = vld [vmem:[%s239 + $0x83] sm:$0xff]
        %v1424 = vld [vmem:[%s239 + $0x8b] sm:$0xff]
        %v1425 = vld [vmem:[%s239 + $0x93] sm:$0xff]
        %v1426 = vld [vmem:[%s239 + $0x9b] sm:$0xff]
        %v1427 = vld [vmem:[%s239 + $0xa3] sm:$0xff]
        %v1428 = vld [vmem:[%s239 + $0xab] sm:$0xff]
        %v1429 = vld [vmem:[%s239 + $0xb3] sm:$0xff]
        %v1430 = vld [vmem:[%s239 + $0xbb] sm:$0xff]
        %v1431 = vld [vmem:[%s239 + $0xc3] sm:$0xff]
        %v1432 = vld [vmem:[%s239 + $0xcb] sm:$0xff]
        %v1433 = vld [vmem:[%s239 + $0xd3] sm:$0xff]
        %v1434 = vld [vmem:[%s239 + $0xdb] sm:$0xff]
        %v1435 = vld [vmem:[%s239 + $0xe3] sm:$0xff]
        %v1436 = vld [vmem:[%s239 + $0xeb] sm:$0xff]
        %v1437 = vld [vmem:[%s239 + $0xf3] sm:$0xff]
        %v1438 = vld [vmem:[%s239 + $0xfb] sm:$0xff]
        %v1439 = vld [vmem:[%s239 + $0x103] sm:$0xff]
        %v1440 = vld [vmem:[%s239 + $0x10b] sm:$0xff]
        %v1441 = vld [vmem:[%s239 + $0x113] sm:$0xff]
        %v1442 = vld [vmem:[%s239 + $0x11b] sm:$0xff]
        %v1443 = vld [vmem:[%s239 + $0x123] sm:$0xff]
        %v1444 = vld [vmem:[%s239 + $0x12b] sm:$0xff]
        %s1445 = scalar_lea.vmem %s1, 16
        %v1446 = vld [vmem:[%s1445] sm:$0xf]
        %v1448 = vsel %vm315, %v1409, 0
        %v1451 = vsel %vm315, %v1410, 0
        %v1454 = vsel %vm315, %v1411, 0
        %v1457 = vsel %vm315, %v1412, 0
        %v1460 = vsel %vm315, %v1413, 0
        %v1463 = vsel %vm315, %v1414, 0
        %v1466 = vsel %vm315, %v1415, 0
        %v1469 = vsel %vm315, %v1416, 0
        %v1472 = vsel %vm315, %v1417, 0
        %v1475 = vsel %vm315, %v1418, 0
        %v1478 = vsel %vm315, %v1419, 0
        %v1481 = vsel %vm315, %v1420, 0
        %v1484 = vsel %vm315, %v1421, 0
        %v1487 = vsel %vm315, %v1422, 0
        %v1490 = vsel %vm315, %v1423, 0
        %v1493 = vsel %vm315, %v1424, 0
        %v1496 = vsel %vm315, %v1425, 0
        %v1499 = vsel %vm315, %v1426, 0
        %v1502 = vsel %vm315, %v1427, 0
        %v1505 = vsel %vm315, %v1428, 0
        %v1508 = vsel %vm315, %v1429, 0
        %v1511 = vsel %vm315, %v1430, 0
        %v1514 = vsel %vm315, %v1431, 0
        %v1517 = vsel %vm315, %v1432, 0
        %v1520 = vsel %vm315, %v1433, 0
        %v1523 = vsel %vm315, %v1434, 0
        %v1526 = vsel %vm315, %v1435, 0
        %v1529 = vsel %vm315, %v1436, 0
        %v1532 = vsel %vm315, %v1437, 0
        %v1535 = vsel %vm315, %v1438, 0
        %v1538 = vsel %vm315, %v1439, 0
        %v1541 = vsel %vm315, %v1440, 0
        %v1544 = vsel %vm315, %v1441, 0
        %v1547 = vsel %vm315, %v1442, 0
        %v1550 = vsel %vm315, %v1443, 0
        %v1553 = vsel %vm315, %v1444, 0
        %v1556 = vsel %vm424, %v1446, 0
        %1558 = vmatpush.msra.mxu0 0.0
        %1559 = vmatpush.msra.mxu0 0.0
        %1560 = vmatpush.msra.mxu0 0.0
        %1561 = vmatpush.msra.mxu0 0.0
        %1562 = vmatpush.msra.mxu0 0.0
        %1563 = vmatpush.msra.mxu0 0.0
        %1564 = vmatpush.msra.mxu0 0.0
        %1565 = vmatpush.msra.mxu0 0.0
        %1566 = vmatpush.msra.mxu0 0.0
        %1567 = vmatpush.msra.mxu0 0.0
        %1568 = vmatpush.msra.mxu0 0.0
        %1569 = vmatpush.msra.mxu0 0.0
        %1570 = vmatpush.msra.mxu0 0.0
        %1571 = vmatpush.msra.mxu0 0.0
        %1572 = vmatpush.msra.mxu0 0.0
        %1573 = vmatpush.msra.mxu0 %v1556
        %1574 = vmatmul.f32.gmra.mxu0 %v1448
        %v1575 = vpop.f32.mrf.mxu0
        %v1576 = vadd.f32 0.0, %v1575
        %1577 = vmatmul.f32.gmra.mxu0 %v1451
        %v1578 = vpop.f32.mrf.mxu0
        %v1579 = vadd.f32 0.0, %v1578
        %1580 = vmatmul.f32.gmra.mxu0 %v1454
        %v1581 = vpop.f32.mrf.mxu0
        %v1582 = vadd.f32 0.0, %v1581
        %1583 = vmatmul.f32.gmra.mxu0 %v1457
        %v1584 = vpop.f32.mrf.mxu0
        %v1585 = vadd.f32 0.0, %v1584
        %1586 = vmatmul.f32.gmra.mxu0 %v1460
        %v1587 = vpop.f32.mrf.mxu0
        %v1588 = vadd.f32 0.0, %v1587
        %1589 = vmatmul.f32.gmra.mxu0 %v1463
        %v1590 = vpop.f32.mrf.mxu0
        %v1591 = vadd.f32 0.0, %v1590
        %1592 = vmatmul.f32.gmra.mxu0 %v1466
        %v1593 = vpop.f32.mrf.mxu0
        %v1594 = vadd.f32 0.0, %v1593
        %1595 = vmatmul.f32.gmra.mxu0 %v1469
        %v1596 = vpop.f32.mrf.mxu0
        %v1597 = vadd.f32 0.0, %v1596
        %1598 = vmatmul.f32.gmra.mxu0 %v1472
        %v1599 = vpop.f32.mrf.mxu0
        %v1600 = vadd.f32 0.0, %v1599
        %1601 = vmatmul.f32.gmra.mxu0 %v1475
        %v1602 = vpop.f32.mrf.mxu0
        %v1603 = vadd.f32 0.0, %v1602
        %1604 = vmatmul.f32.gmra.mxu0 %v1478
        %v1605 = vpop.f32.mrf.mxu0
        %v1606 = vadd.f32 0.0, %v1605
        %1607 = vmatmul.f32.gmra.mxu0 %v1481
        %v1608 = vpop.f32.mrf.mxu0
        %v1609 = vadd.f32 0.0, %v1608
        %1610 = vmatmul.f32.gmra.mxu0 %v1484
        %v1611 = vpop.f32.mrf.mxu0
        %v1612 = vadd.f32 0.0, %v1611
        %1613 = vmatmul.f32.gmra.mxu0 %v1487
        %v1614 = vpop.f32.mrf.mxu0
        %v1615 = vadd.f32 0.0, %v1614
        %1616 = vmatmul.f32.gmra.mxu0 %v1490
        %v1617 = vpop.f32.mrf.mxu0
        %v1618 = vadd.f32 0.0, %v1617
        %1619 = vmatmul.f32.gmra.mxu0 %v1493
        %v1620 = vpop.f32.mrf.mxu0
        %v1621 = vadd.f32 0.0, %v1620
        %1622 = vmatmul.f32.gmra.mxu0 %v1496
        %v1623 = vpop.f32.mrf.mxu0
        %v1624 = vadd.f32 0.0, %v1623
        %1625 = vmatmul.f32.gmra.mxu0 %v1499
        %v1626 = vpop.f32.mrf.mxu0
        %v1627 = vadd.f32 0.0, %v1626
        %1628 = vmatmul.f32.gmra.mxu0 %v1502
        %v1629 = vpop.f32.mrf.mxu0
        %v1630 = vadd.f32 0.0, %v1629
        %1631 = vmatmul.f32.gmra.mxu0 %v1505
        %v1632 = vpop.f32.mrf.mxu0
        %v1633 = vadd.f32 0.0, %v1632
        %1634 = vmatmul.f32.gmra.mxu0 %v1508
        %v1635 = vpop.f32.mrf.mxu0
        %v1636 = vadd.f32 0.0, %v1635
        %1637 = vmatmul.f32.gmra.mxu0 %v1511
        %v1638 = vpop.f32.mrf.mxu0
        %v1639 = vadd.f32 0.0, %v1638
        %1640 = vmatmul.f32.gmra.mxu0 %v1514
        %v1641 = vpop.f32.mrf.mxu0
        %v1642 = vadd.f32 0.0, %v1641
        %1643 = vmatmul.f32.gmra.mxu0 %v1517
        %v1644 = vpop.f32.mrf.mxu0
        %v1645 = vadd.f32 0.0, %v1644
        %1646 = vmatmul.f32.gmra.mxu0 %v1520
        %v1647 = vpop.f32.mrf.mxu0
        %v1648 = vadd.f32 0.0, %v1647
        %1649 = vmatmul.f32.gmra.mxu0 %v1523
        %v1650 = vpop.f32.mrf.mxu0
        %v1651 = vadd.f32 0.0, %v1650
        %1652 = vmatmul.f32.gmra.mxu0 %v1526
        %v1653 = vpop.f32.mrf.mxu0
        %v1654 = vadd.f32 0.0, %v1653
        %1655 = vmatmul.f32.gmra.mxu0 %v1529
        %v1656 = vpop.f32.mrf.mxu0
        %v1657 = vadd.f32 0.0, %v1656
        %1658 = vmatmul.f32.gmra.mxu0 %v1532
        %v1659 = vpop.f32.mrf.mxu0
        %v1660 = vadd.f32 0.0, %v1659
        %1661 = vmatmul.f32.gmra.mxu0 %v1535
        %v1662 = vpop.f32.mrf.mxu0
        %v1663 = vadd.f32 0.0, %v1662
        %1664 = vmatmul.f32.gmra.mxu0 %v1538
        %v1665 = vpop.f32.mrf.mxu0
        %v1666 = vadd.f32 0.0, %v1665
        %1667 = vmatmul.f32.gmra.mxu0 %v1541
        %v1668 = vpop.f32.mrf.mxu0
        %v1669 = vadd.f32 0.0, %v1668
        %1670 = vmatmul.f32.gmra.mxu0 %v1544
        %v1671 = vpop.f32.mrf.mxu0
        %v1672 = vadd.f32 0.0, %v1671
        %1673 = vmatmul.f32.gmra.mxu0 %v1547
        %v1674 = vpop.f32.mrf.mxu0
        %v1675 = vadd.f32 0.0, %v1674
        %1676 = vmatmul.f32.gmra.mxu0 %v1550
        %v1677 = vpop.f32.mrf.mxu0
        %v1678 = vadd.f32 0.0, %v1677
        %1679 = vmatmul.f32.gmra.mxu0 %v1553
        %v1680 = vpop.f32.mrf.mxu0
        %v1681 = vadd.f32 0.0, %v1680
        %1682 = vdwg.mxu0
        %v1683 = vadd.f32 %v1373, %v1576
        %v1684 = vadd.f32 %v1374, %v1579
        %v1685 = vadd.f32 %v1375, %v1582
        %v1686 = vadd.f32 %v1376, %v1585
        %v1687 = vadd.f32 %v1377, %v1588
        %v1688 = vadd.f32 %v1378, %v1591
        %v1689 = vadd.f32 %v1379, %v1594
        %v1690 = vadd.f32 %v1380, %v1597
        %v1691 = vadd.f32 %v1381, %v1600
        %v1692 = vadd.f32 %v1382, %v1603
        %v1693 = vadd.f32 %v1383, %v1606
        %v1694 = vadd.f32 %v1384, %v1609
        %v1695 = vadd.f32 %v1385, %v1612
        %v1696 = vadd.f32 %v1386, %v1615
        %v1697 = vadd.f32 %v1387, %v1618
        %v1698 = vadd.f32 %v1388, %v1621
        %v1699 = vadd.f32 %v1389, %v1624
        %v1700 = vadd.f32 %v1390, %v1627
        %v1701 = vadd.f32 %v1391, %v1630
        %v1702 = vadd.f32 %v1392, %v1633
        %v1703 = vadd.f32 %v1393, %v1636
        %v1704 = vadd.f32 %v1394, %v1639
        %v1705 = vadd.f32 %v1395, %v1642
        %v1706 = vadd.f32 %v1396, %v1645
        %v1707 = vadd.f32 %v1397, %v1648
        %v1708 = vadd.f32 %v1398, %v1651
        %v1709 = vadd.f32 %v1399, %v1654
        %v1710 = vadd.f32 %v1400, %v1657
        %v1711 = vadd.f32 %v1401, %v1660
        %v1712 = vadd.f32 %v1402, %v1663
        %v1713 = vadd.f32 %v1403, %v1666
        %v1714 = vadd.f32 %v1404, %v1669
        %v1715 = vadd.f32 %v1405, %v1672
        %v1716 = vadd.f32 %v1406, %v1675
        %v1717 = vadd.f32 %v1407, %v1678
        %v1718 = vadd.f32 %v1408, %v1681
        %v1719 = vld [vmem:[%s239 + $0x14] sm:$0xff]
        %v1720 = vld [vmem:[%s239 + $0x1c] sm:$0xff]
        %v1721 = vld [vmem:[%s239 + $0x24] sm:$0xff]
        %v1722 = vld [vmem:[%s239 + $0x2c] sm:$0xff]
        %v1723 = vld [vmem:[%s239 + $0x34] sm:$0xff]
        %v1724 = vld [vmem:[%s239 + $0x3c] sm:$0xff]
        %v1725 = vld [vmem:[%s239 + $0x44] sm:$0xff]
        %v1726 = vld [vmem:[%s239 + $0x4c] sm:$0xff]
        %v1727 = vld [vmem:[%s239 + $0x54] sm:$0xff]
        %v1728 = vld [vmem:[%s239 + $0x5c] sm:$0xff]
        %v1729 = vld [vmem:[%s239 + $0x64] sm:$0xff]
        %v1730 = vld [vmem:[%s239 + $0x6c] sm:$0xff]
        %v1731 = vld [vmem:[%s239 + $0x74] sm:$0xff]
        %v1732 = vld [vmem:[%s239 + $0x7c] sm:$0xff]
        %v1733 = vld [vmem:[%s239 + $0x84] sm:$0xff]
        %v1734 = vld [vmem:[%s239 + $0x8c] sm:$0xff]
        %v1735 = vld [vmem:[%s239 + $0x94] sm:$0xff]
        %v1736 = vld [vmem:[%s239 + $0x9c] sm:$0xff]
        %v1737 = vld [vmem:[%s239 + $0xa4] sm:$0xff]
        %v1738 = vld [vmem:[%s239 + $0xac] sm:$0xff]
        %v1739 = vld [vmem:[%s239 + $0xb4] sm:$0xff]
        %v1740 = vld [vmem:[%s239 + $0xbc] sm:$0xff]
        %v1741 = vld [vmem:[%s239 + $0xc4] sm:$0xff]
        %v1742 = vld [vmem:[%s239 + $0xcc] sm:$0xff]
        %v1743 = vld [vmem:[%s239 + $0xd4] sm:$0xff]
        %v1744 = vld [vmem:[%s239 + $0xdc] sm:$0xff]
        %v1745 = vld [vmem:[%s239 + $0xe4] sm:$0xff]
        %v1746 = vld [vmem:[%s239 + $0xec] sm:$0xff]
        %v1747 = vld [vmem:[%s239 + $0xf4] sm:$0xff]
        %v1748 = vld [vmem:[%s239 + $0xfc] sm:$0xff]
        %v1749 = vld [vmem:[%s239 + $0x104] sm:$0xff]
        %v1750 = vld [vmem:[%s239 + $0x10c] sm:$0xff]
        %v1751 = vld [vmem:[%s239 + $0x114] sm:$0xff]
        %v1752 = vld [vmem:[%s239 + $0x11c] sm:$0xff]
        %v1753 = vld [vmem:[%s239 + $0x124] sm:$0xff]
        %v1754 = vld [vmem:[%s239 + $0x12c] sm:$0xff]
        %s1755 = scalar_lea.vmem %s1, 20
        %v1756 = vld [vmem:[%s1755] sm:$0xf]
        %v1758 = vsel %vm315, %v1719, 0
        %v1761 = vsel %vm315, %v1720, 0
        %v1764 = vsel %vm315, %v1721, 0
        %v1767 = vsel %vm315, %v1722, 0
        %v1770 = vsel %vm315, %v1723, 0
        %v1773 = vsel %vm315, %v1724, 0
        %v1776 = vsel %vm315, %v1725, 0
        %v1779 = vsel %vm315, %v1726, 0
        %v1782 = vsel %vm315, %v1727, 0
        %v1785 = vsel %vm315, %v1728, 0
        %v1788 = vsel %vm315, %v1729, 0
        %v1791 = vsel %vm315, %v1730, 0
        %v1794 = vsel %vm315, %v1731, 0
        %v1797 = vsel %vm315, %v1732, 0
        %v1800 = vsel %vm315, %v1733, 0
        %v1803 = vsel %vm315, %v1734, 0
        %v1806 = vsel %vm315, %v1735, 0
        %v1809 = vsel %vm315, %v1736, 0
        %v1812 = vsel %vm315, %v1737, 0
        %v1815 = vsel %vm315, %v1738, 0
        %v1818 = vsel %vm315, %v1739, 0
        %v1821 = vsel %vm315, %v1740, 0
        %v1824 = vsel %vm315, %v1741, 0
        %v1827 = vsel %vm315, %v1742, 0
        %v1830 = vsel %vm315, %v1743, 0
        %v1833 = vsel %vm315, %v1744, 0
        %v1836 = vsel %vm315, %v1745, 0
        %v1839 = vsel %vm315, %v1746, 0
        %v1842 = vsel %vm315, %v1747, 0
        %v1845 = vsel %vm315, %v1748, 0
        %v1848 = vsel %vm315, %v1749, 0
        %v1851 = vsel %vm315, %v1750, 0
        %v1854 = vsel %vm315, %v1751, 0
        %v1857 = vsel %vm315, %v1752, 0
        %v1860 = vsel %vm315, %v1753, 0
        %v1863 = vsel %vm315, %v1754, 0
        %v1866 = vsel %vm424, %v1756, 0
        %1868 = vmatpush.msra.mxu0 0.0
        %1869 = vmatpush.msra.mxu0 0.0
        %1870 = vmatpush.msra.mxu0 0.0
        %1871 = vmatpush.msra.mxu0 0.0
        %1872 = vmatpush.msra.mxu0 0.0
        %1873 = vmatpush.msra.mxu0 0.0
        %1874 = vmatpush.msra.mxu0 0.0
        %1875 = vmatpush.msra.mxu0 0.0
        %1876 = vmatpush.msra.mxu0 0.0
        %1877 = vmatpush.msra.mxu0 0.0
        %1878 = vmatpush.msra.mxu0 0.0
        %1879 = vmatpush.msra.mxu0 0.0
        %1880 = vmatpush.msra.mxu0 0.0
        %1881 = vmatpush.msra.mxu0 0.0
        %1882 = vmatpush.msra.mxu0 0.0
        %1883 = vmatpush.msra.mxu0 %v1866
        %1884 = vmatmul.f32.gmra.mxu0 %v1758
        %v1885 = vpop.f32.mrf.mxu0
        %v1886 = vadd.f32 0.0, %v1885
        %1887 = vmatmul.f32.gmra.mxu0 %v1761
        %v1888 = vpop.f32.mrf.mxu0
        %v1889 = vadd.f32 0.0, %v1888
        %1890 = vmatmul.f32.gmra.mxu0 %v1764
        %v1891 = vpop.f32.mrf.mxu0
        %v1892 = vadd.f32 0.0, %v1891
        %1893 = vmatmul.f32.gmra.mxu0 %v1767
        %v1894 = vpop.f32.mrf.mxu0
        %v1895 = vadd.f32 0.0, %v1894
        %1896 = vmatmul.f32.gmra.mxu0 %v1770
        %v1897 = vpop.f32.mrf.mxu0
        %v1898 = vadd.f32 0.0, %v1897
        %1899 = vmatmul.f32.gmra.mxu0 %v1773
        %v1900 = vpop.f32.mrf.mxu0
        %v1901 = vadd.f32 0.0, %v1900
        %1902 = vmatmul.f32.gmra.mxu0 %v1776
        %v1903 = vpop.f32.mrf.mxu0
        %v1904 = vadd.f32 0.0, %v1903
        %1905 = vmatmul.f32.gmra.mxu0 %v1779
        %v1906 = vpop.f32.mrf.mxu0
        %v1907 = vadd.f32 0.0, %v1906
        %1908 = vmatmul.f32.gmra.mxu0 %v1782
        %v1909 = vpop.f32.mrf.mxu0
        %v1910 = vadd.f32 0.0, %v1909
        %1911 = vmatmul.f32.gmra.mxu0 %v1785
        %v1912 = vpop.f32.mrf.mxu0
        %v1913 = vadd.f32 0.0, %v1912
        %1914 = vmatmul.f32.gmra.mxu0 %v1788
        %v1915 = vpop.f32.mrf.mxu0
        %v1916 = vadd.f32 0.0, %v1915
        %1917 = vmatmul.f32.gmra.mxu0 %v1791
        %v1918 = vpop.f32.mrf.mxu0
        %v1919 = vadd.f32 0.0, %v1918
        %1920 = vmatmul.f32.gmra.mxu0 %v1794
        %v1921 = vpop.f32.mrf.mxu0
        %v1922 = vadd.f32 0.0, %v1921
        %1923 = vmatmul.f32.gmra.mxu0 %v1797
        %v1924 = vpop.f32.mrf.mxu0
        %v1925 = vadd.f32 0.0, %v1924
        %1926 = vmatmul.f32.gmra.mxu0 %v1800
        %v1927 = vpop.f32.mrf.mxu0
        %v1928 = vadd.f32 0.0, %v1927
        %1929 = vmatmul.f32.gmra.mxu0 %v1803
        %v1930 = vpop.f32.mrf.mxu0
        %v1931 = vadd.f32 0.0, %v1930
        %1932 = vmatmul.f32.gmra.mxu0 %v1806
        %v1933 = vpop.f32.mrf.mxu0
        %v1934 = vadd.f32 0.0, %v1933
        %1935 = vmatmul.f32.gmra.mxu0 %v1809
        %v1936 = vpop.f32.mrf.mxu0
        %v1937 = vadd.f32 0.0, %v1936
        %1938 = vmatmul.f32.gmra.mxu0 %v1812
        %v1939 = vpop.f32.mrf.mxu0
        %v1940 = vadd.f32 0.0, %v1939
        %1941 = vmatmul.f32.gmra.mxu0 %v1815
        %v1942 = vpop.f32.mrf.mxu0
        %v1943 = vadd.f32 0.0, %v1942
        %1944 = vmatmul.f32.gmra.mxu0 %v1818
        %v1945 = vpop.f32.mrf.mxu0
        %v1946 = vadd.f32 0.0, %v1945
        %1947 = vmatmul.f32.gmra.mxu0 %v1821
        %v1948 = vpop.f32.mrf.mxu0
        %v1949 = vadd.f32 0.0, %v1948
        %1950 = vmatmul.f32.gmra.mxu0 %v1824
        %v1951 = vpop.f32.mrf.mxu0
        %v1952 = vadd.f32 0.0, %v1951
        %1953 = vmatmul.f32.gmra.mxu0 %v1827
        %v1954 = vpop.f32.mrf.mxu0
        %v1955 = vadd.f32 0.0, %v1954
        %1956 = vmatmul.f32.gmra.mxu0 %v1830
        %v1957 = vpop.f32.mrf.mxu0
        %v1958 = vadd.f32 0.0, %v1957
        %1959 = vmatmul.f32.gmra.mxu0 %v1833
        %v1960 = vpop.f32.mrf.mxu0
        %v1961 = vadd.f32 0.0, %v1960
        %1962 = vmatmul.f32.gmra.mxu0 %v1836
        %v1963 = vpop.f32.mrf.mxu0
        %v1964 = vadd.f32 0.0, %v1963
        %1965 = vmatmul.f32.gmra.mxu0 %v1839
        %v1966 = vpop.f32.mrf.mxu0
        %v1967 = vadd.f32 0.0, %v1966
        %1968 = vmatmul.f32.gmra.mxu0 %v1842
        %v1969 = vpop.f32.mrf.mxu0
        %v1970 = vadd.f32 0.0, %v1969
        %1971 = vmatmul.f32.gmra.mxu0 %v1845
        %v1972 = vpop.f32.mrf.mxu0
        %v1973 = vadd.f32 0.0, %v1972
        %1974 = vmatmul.f32.gmra.mxu0 %v1848
        %v1975 = vpop.f32.mrf.mxu0
        %v1976 = vadd.f32 0.0, %v1975
        %1977 = vmatmul.f32.gmra.mxu0 %v1851
        %v1978 = vpop.f32.mrf.mxu0
        %v1979 = vadd.f32 0.0, %v1978
        %1980 = vmatmul.f32.gmra.mxu0 %v1854
        %v1981 = vpop.f32.mrf.mxu0
        %v1982 = vadd.f32 0.0, %v1981
        %1983 = vmatmul.f32.gmra.mxu0 %v1857
        %v1984 = vpop.f32.mrf.mxu0
        %v1985 = vadd.f32 0.0, %v1984
        %1986 = vmatmul.f32.gmra.mxu0 %v1860
        %v1987 = vpop.f32.mrf.mxu0
        %v1988 = vadd.f32 0.0, %v1987
        %1989 = vmatmul.f32.gmra.mxu0 %v1863
        %v1990 = vpop.f32.mrf.mxu0
        %v1991 = vadd.f32 0.0, %v1990
        %1992 = vdwg.mxu0
        %v1993 = vadd.f32 %v1683, %v1886
        %v1994 = vadd.f32 %v1684, %v1889
        %v1995 = vadd.f32 %v1685, %v1892
        %v1996 = vadd.f32 %v1686, %v1895
        %v1997 = vadd.f32 %v1687, %v1898
        %v1998 = vadd.f32 %v1688, %v1901
        %v1999 = vadd.f32 %v1689, %v1904
        %v2000 = vadd.f32 %v1690, %v1907
        %v2001 = vadd.f32 %v1691, %v1910
        %v2002 = vadd.f32 %v1692, %v1913
        %v2003 = vadd.f32 %v1693, %v1916
        %v2004 = vadd.f32 %v1694, %v1919
        %v2005 = vadd.f32 %v1695, %v1922
        %v2006 = vadd.f32 %v1696, %v1925
        %v2007 = vadd.f32 %v1697, %v1928
        %v2008 = vadd.f32 %v1698, %v1931
        %v2009 = vadd.f32 %v1699, %v1934
        %v2010 = vadd.f32 %v1700, %v1937
        %v2011 = vadd.f32 %v1701, %v1940
        %v2012 = vadd.f32 %v1702, %v1943
        %v2013 = vadd.f32 %v1703, %v1946
        %v2014 = vadd.f32 %v1704, %v1949
        %v2015 = vadd.f32 %v1705, %v1952
        %v2016 = vadd.f32 %v1706, %v1955
        %v2017 = vadd.f32 %v1707, %v1958
        %v2018 = vadd.f32 %v1708, %v1961
        %v2019 = vadd.f32 %v1709, %v1964
        %v2020 = vadd.f32 %v1710, %v1967
        %v2021 = vadd.f32 %v1711, %v1970
        %v2022 = vadd.f32 %v1712, %v1973
        %v2023 = vadd.f32 %v1713, %v1976
        %v2024 = vadd.f32 %v1714, %v1979
        %v2025 = vadd.f32 %v1715, %v1982
        %v2026 = vadd.f32 %v1716, %v1985
        %v2027 = vadd.f32 %v1717, %v1988
        %v2028 = vadd.f32 %v1718, %v1991
        %v2029 = vld [vmem:[%s239 + $0x24] sm:$0xff]
        %v2030 = vld [vmem:[%s239 + $0x2c] sm:$0xff]
        %v2031 = vld [vmem:[%s239 + $0x34] sm:$0xff]
        %v2032 = vld [vmem:[%s239 + $0x3c] sm:$0xff]
        %v2033 = vld [vmem:[%s239 + $0x44] sm:$0xff]
        %v2034 = vld [vmem:[%s239 + $0x4c] sm:$0xff]
        %v2035 = vld [vmem:[%s239 + $0x54] sm:$0xff]
        %v2036 = vld [vmem:[%s239 + $0x5c] sm:$0xff]
        %v2037 = vld [vmem:[%s239 + $0x64] sm:$0xff]
        %v2038 = vld [vmem:[%s239 + $0x6c] sm:$0xff]
        %v2039 = vld [vmem:[%s239 + $0x74] sm:$0xff]
        %v2040 = vld [vmem:[%s239 + $0x7c] sm:$0xff]
        %v2041 = vld [vmem:[%s239 + $0x84] sm:$0xff]
        %v2042 = vld [vmem:[%s239 + $0x8c] sm:$0xff]
        %v2043 = vld [vmem:[%s239 + $0x94] sm:$0xff]
        %v2044 = vld [vmem:[%s239 + $0x9c] sm:$0xff]
        %v2045 = vld [vmem:[%s239 + $0xa4] sm:$0xff]
        %v2046 = vld [vmem:[%s239 + $0xac] sm:$0xff]
        %v2047 = vld [vmem:[%s239 + $0xb4] sm:$0xff]
        %v2048 = vld [vmem:[%s239 + $0xbc] sm:$0xff]
        %v2049 = vld [vmem:[%s239 + $0xc4] sm:$0xff]
        %v2050 = vld [vmem:[%s239 + $0xcc] sm:$0xff]
        %v2051 = vld [vmem:[%s239 + $0xd4] sm:$0xff]
        %v2052 = vld [vmem:[%s239 + $0xdc] sm:$0xff]
        %v2053 = vld [vmem:[%s239 + $0xe4] sm:$0xff]
        %v2054 = vld [vmem:[%s239 + $0xec] sm:$0xff]
        %v2055 = vld [vmem:[%s239 + $0xf4] sm:$0xff]
        %v2056 = vld [vmem:[%s239 + $0xfc] sm:$0xff]
        %v2057 = vld [vmem:[%s239 + $0x104] sm:$0xff]
        %v2058 = vld [vmem:[%s239 + $0x10c] sm:$0xff]
        %v2059 = vld [vmem:[%s239 + $0x114] sm:$0xff]
        %v2060 = vld [vmem:[%s239 + $0x11c] sm:$0xff]
        %v2061 = vld [vmem:[%s239 + $0x124] sm:$0xff]
        %v2062 = vld [vmem:[%s239 + $0x12c] sm:$0xff]
        %v2063 = vld [vmem:[%s239 + $0x134] sm:$0xff]
        %v2064 = vld [vmem:[%s239 + $0x13c] sm:$0xff]
        %s2065 = scalar_lea.vmem %s1, 24
        %v2066 = vld [vmem:[%s2065] sm:$0xf]
        %v2068 = vsel %vm315, %v2029, 0
        %v2071 = vsel %vm315, %v2030, 0
        %v2074 = vsel %vm315, %v2031, 0
        %v2077 = vsel %vm315, %v2032, 0
        %v2080 = vsel %vm315, %v2033, 0
        %v2083 = vsel %vm315, %v2034, 0
        %v2086 = vsel %vm315, %v2035, 0
        %v2089 = vsel %vm315, %v2036, 0
        %v2092 = vsel %vm315, %v2037, 0
        %v2095 = vsel %vm315, %v2038, 0
        %v2098 = vsel %vm315, %v2039, 0
        %v2101 = vsel %vm315, %v2040, 0
        %v2104 = vsel %vm315, %v2041, 0
        %v2107 = vsel %vm315, %v2042, 0
        %v2110 = vsel %vm315, %v2043, 0
        %v2113 = vsel %vm315, %v2044, 0
        %v2116 = vsel %vm315, %v2045, 0
        %v2119 = vsel %vm315, %v2046, 0
        %v2122 = vsel %vm315, %v2047, 0
        %v2125 = vsel %vm315, %v2048, 0
        %v2128 = vsel %vm315, %v2049, 0
        %v2131 = vsel %vm315, %v2050, 0
        %v2134 = vsel %vm315, %v2051, 0
        %v2137 = vsel %vm315, %v2052, 0
        %v2140 = vsel %vm315, %v2053, 0
        %v2143 = vsel %vm315, %v2054, 0
        %v2146 = vsel %vm315, %v2055, 0
        %v2149 = vsel %vm315, %v2056, 0
        %v2152 = vsel %vm315, %v2057, 0
        %v2155 = vsel %vm315, %v2058, 0
        %v2158 = vsel %vm315, %v2059, 0
        %v2161 = vsel %vm315, %v2060, 0
        %v2164 = vsel %vm315, %v2061, 0
        %v2167 = vsel %vm315, %v2062, 0
        %v2170 = vsel %vm315, %v2063, 0
        %v2173 = vsel %vm315, %v2064, 0
        %v2176 = vsel %vm424, %v2066, 0
        %2178 = vmatpush.msra.mxu0 0.0
        %2179 = vmatpush.msra.mxu0 0.0
        %2180 = vmatpush.msra.mxu0 0.0
        %2181 = vmatpush.msra.mxu0 0.0
        %2182 = vmatpush.msra.mxu0 0.0
        %2183 = vmatpush.msra.mxu0 0.0
        %2184 = vmatpush.msra.mxu0 0.0
        %2185 = vmatpush.msra.mxu0 0.0
        %2186 = vmatpush.msra.mxu0 0.0
        %2187 = vmatpush.msra.mxu0 0.0
        %2188 = vmatpush.msra.mxu0 0.0
        %2189 = vmatpush.msra.mxu0 0.0
        %2190 = vmatpush.msra.mxu0 0.0
        %2191 = vmatpush.msra.mxu0 0.0
        %2192 = vmatpush.msra.mxu0 0.0
        %2193 = vmatpush.msra.mxu0 %v2176
        %2194 = vmatmul.f32.gmra.mxu0 %v2068
        %v2195 = vpop.f32.mrf.mxu0
        %v2196 = vadd.f32 0.0, %v2195
        %2197 = vmatmul.f32.gmra.mxu0 %v2071
        %v2198 = vpop.f32.mrf.mxu0
        %v2199 = vadd.f32 0.0, %v2198
        %2200 = vmatmul.f32.gmra.mxu0 %v2074
        %v2201 = vpop.f32.mrf.mxu0
        %v2202 = vadd.f32 0.0, %v2201
        %2203 = vmatmul.f32.gmra.mxu0 %v2077
        %v2204 = vpop.f32.mrf.mxu0
        %v2205 = vadd.f32 0.0, %v2204
        %2206 = vmatmul.f32.gmra.mxu0 %v2080
        %v2207 = vpop.f32.mrf.mxu0
        %v2208 = vadd.f32 0.0, %v2207
        %2209 = vmatmul.f32.gmra.mxu0 %v2083
        %v2210 = vpop.f32.mrf.mxu0
        %v2211 = vadd.f32 0.0, %v2210
        %2212 = vmatmul.f32.gmra.mxu0 %v2086
        %v2213 = vpop.f32.mrf.mxu0
        %v2214 = vadd.f32 0.0, %v2213
        %2215 = vmatmul.f32.gmra.mxu0 %v2089
        %v2216 = vpop.f32.mrf.mxu0
        %v2217 = vadd.f32 0.0, %v2216
        %2218 = vmatmul.f32.gmra.mxu0 %v2092
        %v2219 = vpop.f32.mrf.mxu0
        %v2220 = vadd.f32 0.0, %v2219
        %2221 = vmatmul.f32.gmra.mxu0 %v2095
        %v2222 = vpop.f32.mrf.mxu0
        %v2223 = vadd.f32 0.0, %v2222
        %2224 = vmatmul.f32.gmra.mxu0 %v2098
        %v2225 = vpop.f32.mrf.mxu0
        %v2226 = vadd.f32 0.0, %v2225
        %2227 = vmatmul.f32.gmra.mxu0 %v2101
        %v2228 = vpop.f32.mrf.mxu0
        %v2229 = vadd.f32 0.0, %v2228
        %2230 = vmatmul.f32.gmra.mxu0 %v2104
        %v2231 = vpop.f32.mrf.mxu0
        %v2232 = vadd.f32 0.0, %v2231
        %2233 = vmatmul.f32.gmra.mxu0 %v2107
        %v2234 = vpop.f32.mrf.mxu0
        %v2235 = vadd.f32 0.0, %v2234
        %2236 = vmatmul.f32.gmra.mxu0 %v2110
        %v2237 = vpop.f32.mrf.mxu0
        %v2238 = vadd.f32 0.0, %v2237
        %2239 = vmatmul.f32.gmra.mxu0 %v2113
        %v2240 = vpop.f32.mrf.mxu0
        %v2241 = vadd.f32 0.0, %v2240
        %2242 = vmatmul.f32.gmra.mxu0 %v2116
        %v2243 = vpop.f32.mrf.mxu0
        %v2244 = vadd.f32 0.0, %v2243
        %2245 = vmatmul.f32.gmra.mxu0 %v2119
        %v2246 = vpop.f32.mrf.mxu0
        %v2247 = vadd.f32 0.0, %v2246
        %2248 = vmatmul.f32.gmra.mxu0 %v2122
        %v2249 = vpop.f32.mrf.mxu0
        %v2250 = vadd.f32 0.0, %v2249
        %2251 = vmatmul.f32.gmra.mxu0 %v2125
        %v2252 = vpop.f32.mrf.mxu0
        %v2253 = vadd.f32 0.0, %v2252
        %2254 = vmatmul.f32.gmra.mxu0 %v2128
        %v2255 = vpop.f32.mrf.mxu0
        %v2256 = vadd.f32 0.0, %v2255
        %2257 = vmatmul.f32.gmra.mxu0 %v2131
        %v2258 = vpop.f32.mrf.mxu0
        %v2259 = vadd.f32 0.0, %v2258
        %2260 = vmatmul.f32.gmra.mxu0 %v2134
        %v2261 = vpop.f32.mrf.mxu0
        %v2262 = vadd.f32 0.0, %v2261
        %2263 = vmatmul.f32.gmra.mxu0 %v2137
        %v2264 = vpop.f32.mrf.mxu0
        %v2265 = vadd.f32 0.0, %v2264
        %2266 = vmatmul.f32.gmra.mxu0 %v2140
        %v2267 = vpop.f32.mrf.mxu0
        %v2268 = vadd.f32 0.0, %v2267
        %2269 = vmatmul.f32.gmra.mxu0 %v2143
        %v2270 = vpop.f32.mrf.mxu0
        %v2271 = vadd.f32 0.0, %v2270
        %2272 = vmatmul.f32.gmra.mxu0 %v2146
        %v2273 = vpop.f32.mrf.mxu0
        %v2274 = vadd.f32 0.0, %v2273
        %2275 = vmatmul.f32.gmra.mxu0 %v2149
        %v2276 = vpop.f32.mrf.mxu0
        %v2277 = vadd.f32 0.0, %v2276
        %2278 = vmatmul.f32.gmra.mxu0 %v2152
        %v2279 = vpop.f32.mrf.mxu0
        %v2280 = vadd.f32 0.0, %v2279
        %2281 = vmatmul.f32.gmra.mxu0 %v2155
        %v2282 = vpop.f32.mrf.mxu0
        %v2283 = vadd.f32 0.0, %v2282
        %2284 = vmatmul.f32.gmra.mxu0 %v2158
        %v2285 = vpop.f32.mrf.mxu0
        %v2286 = vadd.f32 0.0, %v2285
        %2287 = vmatmul.f32.gmra.mxu0 %v2161
        %v2288 = vpop.f32.mrf.mxu0
        %v2289 = vadd.f32 0.0, %v2288
        %2290 = vmatmul.f32.gmra.mxu0 %v2164
        %v2291 = vpop.f32.mrf.mxu0
        %v2292 = vadd.f32 0.0, %v2291
        %2293 = vmatmul.f32.gmra.mxu0 %v2167
        %v2294 = vpop.f32.mrf.mxu0
        %v2295 = vadd.f32 0.0, %v2294
        %2296 = vmatmul.f32.gmra.mxu0 %v2170
        %v2297 = vpop.f32.mrf.mxu0
        %v2298 = vadd.f32 0.0, %v2297
        %2299 = vmatmul.f32.gmra.mxu0 %v2173
        %v2300 = vpop.f32.mrf.mxu0
        %v2301 = vadd.f32 0.0, %v2300
        %2302 = vdwg.mxu0
        %v2303 = vadd.f32 %v1993, %v2196
        %v2304 = vadd.f32 %v1994, %v2199
        %v2305 = vadd.f32 %v1995, %v2202
        %v2306 = vadd.f32 %v1996, %v2205
        %v2307 = vadd.f32 %v1997, %v2208
        %v2308 = vadd.f32 %v1998, %v2211
        %v2309 = vadd.f32 %v1999, %v2214
        %v2310 = vadd.f32 %v2000, %v2217
        %v2311 = vadd.f32 %v2001, %v2220
        %v2312 = vadd.f32 %v2002, %v2223
        %v2313 = vadd.f32 %v2003, %v2226
        %v2314 = vadd.f32 %v2004, %v2229
        %v2315 = vadd.f32 %v2005, %v2232
        %v2316 = vadd.f32 %v2006, %v2235
        %v2317 = vadd.f32 %v2007, %v2238
        %v2318 = vadd.f32 %v2008, %v2241
        %v2319 = vadd.f32 %v2009, %v2244
        %v2320 = vadd.f32 %v2010, %v2247
        %v2321 = vadd.f32 %v2011, %v2250
        %v2322 = vadd.f32 %v2012, %v2253
        %v2323 = vadd.f32 %v2013, %v2256
        %v2324 = vadd.f32 %v2014, %v2259
        %v2325 = vadd.f32 %v2015, %v2262
        %v2326 = vadd.f32 %v2016, %v2265
        %v2327 = vadd.f32 %v2017, %v2268
        %v2328 = vadd.f32 %v2018, %v2271
        %v2329 = vadd.f32 %v2019, %v2274
        %v2330 = vadd.f32 %v2020, %v2277
        %v2331 = vadd.f32 %v2021, %v2280
        %v2332 = vadd.f32 %v2022, %v2283
        %v2333 = vadd.f32 %v2023, %v2286
        %v2334 = vadd.f32 %v2024, %v2289
        %v2335 = vadd.f32 %v2025, %v2292
        %v2336 = vadd.f32 %v2026, %v2295
        %v2337 = vadd.f32 %v2027, %v2298
        %v2338 = vadd.f32 %v2028, %v2301
        %v2339 = vld [vmem:[%s239 + $0x25] sm:$0xff]
        %v2340 = vld [vmem:[%s239 + $0x2d] sm:$0xff]
        %v2341 = vld [vmem:[%s239 + $0x35] sm:$0xff]
        %v2342 = vld [vmem:[%s239 + $0x3d] sm:$0xff]
        %v2343 = vld [vmem:[%s239 + $0x45] sm:$0xff]
        %v2344 = vld [vmem:[%s239 + $0x4d] sm:$0xff]
        %v2345 = vld [vmem:[%s239 + $0x55] sm:$0xff]
        %v2346 = vld [vmem:[%s239 + $0x5d] sm:$0xff]
        %v2347 = vld [vmem:[%s239 + $0x65] sm:$0xff]
        %v2348 = vld [vmem:[%s239 + $0x6d] sm:$0xff]
        %v2349 = vld [vmem:[%s239 + $0x75] sm:$0xff]
        %v2350 = vld [vmem:[%s239 + $0x7d] sm:$0xff]
        %v2351 = vld [vmem:[%s239 + $0x85] sm:$0xff]
        %v2352 = vld [vmem:[%s239 + $0x8d] sm:$0xff]
        %v2353 = vld [vmem:[%s239 + $0x95] sm:$0xff]
        %v2354 = vld [vmem:[%s239 + $0x9d] sm:$0xff]
        %v2355 = vld [vmem:[%s239 + $0xa5] sm:$0xff]
        %v2356 = vld [vmem:[%s239 + $0xad] sm:$0xff]
        %v2357 = vld [vmem:[%s239 + $0xb5] sm:$0xff]
        %v2358 = vld [vmem:[%s239 + $0xbd] sm:$0xff]
        %v2359 = vld [vmem:[%s239 + $0xc5] sm:$0xff]
        %v2360 = vld [vmem:[%s239 + $0xcd] sm:$0xff]
        %v2361 = vld [vmem:[%s239 + $0xd5] sm:$0xff]
        %v2362 = vld [vmem:[%s239 + $0xdd] sm:$0xff]
        %v2363 = vld [vmem:[%s239 + $0xe5] sm:$0xff]
        %v2364 = vld [vmem:[%s239 + $0xed] sm:$0xff]
        %v2365 = vld [vmem:[%s239 + $0xf5] sm:$0xff]
        %v2366 = vld [vmem:[%s239 + $0xfd] sm:$0xff]
        %v2367 = vld [vmem:[%s239 + $0x105] sm:$0xff]
        %v2368 = vld [vmem:[%s239 + $0x10d] sm:$0xff]
        %v2369 = vld [vmem:[%s239 + $0x115] sm:$0xff]
        %v2370 = vld [vmem:[%s239 + $0x11d] sm:$0xff]
        %v2371 = vld [vmem:[%s239 + $0x125] sm:$0xff]
        %v2372 = vld [vmem:[%s239 + $0x12d] sm:$0xff]
        %v2373 = vld [vmem:[%s239 + $0x135] sm:$0xff]
        %v2374 = vld [vmem:[%s239 + $0x13d] sm:$0xff]
        %s2375 = scalar_lea.vmem %s1, 28
        %v2376 = vld [vmem:[%s2375] sm:$0xf]
        %v2378 = vsel %vm315, %v2339, 0
        %v2381 = vsel %vm315, %v2340, 0
        %v2384 = vsel %vm315, %v2341, 0
        %v2387 = vsel %vm315, %v2342, 0
        %v2390 = vsel %vm315, %v2343, 0
        %v2393 = vsel %vm315, %v2344, 0
        %v2396 = vsel %vm315, %v2345, 0
        %v2399 = vsel %vm315, %v2346, 0
        %v2402 = vsel %vm315, %v2347, 0
        %v2405 = vsel %vm315, %v2348, 0
        %v2408 = vsel %vm315, %v2349, 0
        %v2411 = vsel %vm315, %v2350, 0
        %v2414 = vsel %vm315, %v2351, 0
        %v2417 = vsel %vm315, %v2352, 0
        %v2420 = vsel %vm315, %v2353, 0
        %v2423 = vsel %vm315, %v2354, 0
        %v2426 = vsel %vm315, %v2355, 0
        %v2429 = vsel %vm315, %v2356, 0
        %v2432 = vsel %vm315, %v2357, 0
        %v2435 = vsel %vm315, %v2358, 0
        %v2438 = vsel %vm315, %v2359, 0
        %v2441 = vsel %vm315, %v2360, 0
        %v2444 = vsel %vm315, %v2361, 0
        %v2447 = vsel %vm315, %v2362, 0
        %v2450 = vsel %vm315, %v2363, 0
        %v2453 = vsel %vm315, %v2364, 0
        %v2456 = vsel %vm315, %v2365, 0
        %v2459 = vsel %vm315, %v2366, 0
        %v2462 = vsel %vm315, %v2367, 0
        %v2465 = vsel %vm315, %v2368, 0
        %v2468 = vsel %vm315, %v2369, 0
        %v2471 = vsel %vm315, %v2370, 0
        %v2474 = vsel %vm315, %v2371, 0
        %v2477 = vsel %vm315, %v2372, 0
        %v2480 = vsel %vm315, %v2373, 0
        %v2483 = vsel %vm315, %v2374, 0
        %v2486 = vsel %vm424, %v2376, 0
        %2488 = vmatpush.msra.mxu0 0.0
        %2489 = vmatpush.msra.mxu0 0.0
        %2490 = vmatpush.msra.mxu0 0.0
        %2491 = vmatpush.msra.mxu0 0.0
        %2492 = vmatpush.msra.mxu0 0.0
        %2493 = vmatpush.msra.mxu0 0.0
        %2494 = vmatpush.msra.mxu0 0.0
        %2495 = vmatpush.msra.mxu0 0.0
        %2496 = vmatpush.msra.mxu0 0.0
        %2497 = vmatpush.msra.mxu0 0.0
        %2498 = vmatpush.msra.mxu0 0.0
        %2499 = vmatpush.msra.mxu0 0.0
        %2500 = vmatpush.msra.mxu0 0.0
        %2501 = vmatpush.msra.mxu0 0.0
        %2502 = vmatpush.msra.mxu0 0.0
        %2503 = vmatpush.msra.mxu0 %v2486
        %2504 = vmatmul.f32.gmra.mxu0 %v2378
        %v2505 = vpop.f32.mrf.mxu0
        %v2506 = vadd.f32 0.0, %v2505
        %2507 = vmatmul.f32.gmra.mxu0 %v2381
        %v2508 = vpop.f32.mrf.mxu0
        %v2509 = vadd.f32 0.0, %v2508
        %2510 = vmatmul.f32.gmra.mxu0 %v2384
        %v2511 = vpop.f32.mrf.mxu0
        %v2512 = vadd.f32 0.0, %v2511
        %2513 = vmatmul.f32.gmra.mxu0 %v2387
        %v2514 = vpop.f32.mrf.mxu0
        %v2515 = vadd.f32 0.0, %v2514
        %2516 = vmatmul.f32.gmra.mxu0 %v2390
        %v2517 = vpop.f32.mrf.mxu0
        %v2518 = vadd.f32 0.0, %v2517
        %2519 = vmatmul.f32.gmra.mxu0 %v2393
        %v2520 = vpop.f32.mrf.mxu0
        %v2521 = vadd.f32 0.0, %v2520
        %2522 = vmatmul.f32.gmra.mxu0 %v2396
        %v2523 = vpop.f32.mrf.mxu0
        %v2524 = vadd.f32 0.0, %v2523
        %2525 = vmatmul.f32.gmra.mxu0 %v2399
        %v2526 = vpop.f32.mrf.mxu0
        %v2527 = vadd.f32 0.0, %v2526
        %2528 = vmatmul.f32.gmra.mxu0 %v2402
        %v2529 = vpop.f32.mrf.mxu0
        %v2530 = vadd.f32 0.0, %v2529
        %2531 = vmatmul.f32.gmra.mxu0 %v2405
        %v2532 = vpop.f32.mrf.mxu0
        %v2533 = vadd.f32 0.0, %v2532
        %2534 = vmatmul.f32.gmra.mxu0 %v2408
        %v2535 = vpop.f32.mrf.mxu0
        %v2536 = vadd.f32 0.0, %v2535
        %2537 = vmatmul.f32.gmra.mxu0 %v2411
        %v2538 = vpop.f32.mrf.mxu0
        %v2539 = vadd.f32 0.0, %v2538
        %2540 = vmatmul.f32.gmra.mxu0 %v2414
        %v2541 = vpop.f32.mrf.mxu0
        %v2542 = vadd.f32 0.0, %v2541
        %2543 = vmatmul.f32.gmra.mxu0 %v2417
        %v2544 = vpop.f32.mrf.mxu0
        %v2545 = vadd.f32 0.0, %v2544
        %2546 = vmatmul.f32.gmra.mxu0 %v2420
        %v2547 = vpop.f32.mrf.mxu0
        %v2548 = vadd.f32 0.0, %v2547
        %2549 = vmatmul.f32.gmra.mxu0 %v2423
        %v2550 = vpop.f32.mrf.mxu0
        %v2551 = vadd.f32 0.0, %v2550
        %2552 = vmatmul.f32.gmra.mxu0 %v2426
        %v2553 = vpop.f32.mrf.mxu0
        %v2554 = vadd.f32 0.0, %v2553
        %2555 = vmatmul.f32.gmra.mxu0 %v2429
        %v2556 = vpop.f32.mrf.mxu0
        %v2557 = vadd.f32 0.0, %v2556
        %2558 = vmatmul.f32.gmra.mxu0 %v2432
        %v2559 = vpop.f32.mrf.mxu0
        %v2560 = vadd.f32 0.0, %v2559
        %2561 = vmatmul.f32.gmra.mxu0 %v2435
        %v2562 = vpop.f32.mrf.mxu0
        %v2563 = vadd.f32 0.0, %v2562
        %2564 = vmatmul.f32.gmra.mxu0 %v2438
        %v2565 = vpop.f32.mrf.mxu0
        %v2566 = vadd.f32 0.0, %v2565
        %2567 = vmatmul.f32.gmra.mxu0 %v2441
        %v2568 = vpop.f32.mrf.mxu0
        %v2569 = vadd.f32 0.0, %v2568
        %2570 = vmatmul.f32.gmra.mxu0 %v2444
        %v2571 = vpop.f32.mrf.mxu0
        %v2572 = vadd.f32 0.0, %v2571
        %2573 = vmatmul.f32.gmra.mxu0 %v2447
        %v2574 = vpop.f32.mrf.mxu0
        %v2575 = vadd.f32 0.0, %v2574
        %2576 = vmatmul.f32.gmra.mxu0 %v2450
        %v2577 = vpop.f32.mrf.mxu0
        %v2578 = vadd.f32 0.0, %v2577
        %2579 = vmatmul.f32.gmra.mxu0 %v2453
        %v2580 = vpop.f32.mrf.mxu0
        %v2581 = vadd.f32 0.0, %v2580
        %2582 = vmatmul.f32.gmra.mxu0 %v2456
        %v2583 = vpop.f32.mrf.mxu0
        %v2584 = vadd.f32 0.0, %v2583
        %2585 = vmatmul.f32.gmra.mxu0 %v2459
        %v2586 = vpop.f32.mrf.mxu0
        %v2587 = vadd.f32 0.0, %v2586
        %2588 = vmatmul.f32.gmra.mxu0 %v2462
        %v2589 = vpop.f32.mrf.mxu0
        %v2590 = vadd.f32 0.0, %v2589
        %2591 = vmatmul.f32.gmra.mxu0 %v2465
        %v2592 = vpop.f32.mrf.mxu0
        %v2593 = vadd.f32 0.0, %v2592
        %2594 = vmatmul.f32.gmra.mxu0 %v2468
        %v2595 = vpop.f32.mrf.mxu0
        %v2596 = vadd.f32 0.0, %v2595
        %2597 = vmatmul.f32.gmra.mxu0 %v2471
        %v2598 = vpop.f32.mrf.mxu0
        %v2599 = vadd.f32 0.0, %v2598
        %2600 = vmatmul.f32.gmra.mxu0 %v2474
        %v2601 = vpop.f32.mrf.mxu0
        %v2602 = vadd.f32 0.0, %v2601
        %2603 = vmatmul.f32.gmra.mxu0 %v2477
        %v2604 = vpop.f32.mrf.mxu0
        %v2605 = vadd.f32 0.0, %v2604
        %2606 = vmatmul.f32.gmra.mxu0 %v2480
        %v2607 = vpop.f32.mrf.mxu0
        %v2608 = vadd.f32 0.0, %v2607
        %2609 = vmatmul.f32.gmra.mxu0 %v2483
        %v2610 = vpop.f32.mrf.mxu0
        %v2611 = vadd.f32 0.0, %v2610
        %2612 = vdwg.mxu0
        %v2613 = vadd.f32 %v2303, %v2506
        %v2614 = vadd.f32 %v2304, %v2509
        %v2615 = vadd.f32 %v2305, %v2512
        %v2616 = vadd.f32 %v2306, %v2515
        %v2617 = vadd.f32 %v2307, %v2518
        %v2618 = vadd.f32 %v2308, %v2521
        %v2619 = vadd.f32 %v2309, %v2524
        %v2620 = vadd.f32 %v2310, %v2527
        %v2621 = vadd.f32 %v2311, %v2530
        %v2622 = vadd.f32 %v2312, %v2533
        %v2623 = vadd.f32 %v2313, %v2536
        %v2624 = vadd.f32 %v2314, %v2539
        %v2625 = vadd.f32 %v2315, %v2542
        %v2626 = vadd.f32 %v2316, %v2545
        %v2627 = vadd.f32 %v2317, %v2548
        %v2628 = vadd.f32 %v2318, %v2551
        %v2629 = vadd.f32 %v2319, %v2554
        %v2630 = vadd.f32 %v2320, %v2557
        %v2631 = vadd.f32 %v2321, %v2560
        %v2632 = vadd.f32 %v2322, %v2563
        %v2633 = vadd.f32 %v2323, %v2566
        %v2634 = vadd.f32 %v2324, %v2569
        %v2635 = vadd.f32 %v2325, %v2572
        %v2636 = vadd.f32 %v2326, %v2575
        %v2637 = vadd.f32 %v2327, %v2578
        %v2638 = vadd.f32 %v2328, %v2581
        %v2639 = vadd.f32 %v2329, %v2584
        %v2640 = vadd.f32 %v2330, %v2587
        %v2641 = vadd.f32 %v2331, %v2590
        %v2642 = vadd.f32 %v2332, %v2593
        %v2643 = vadd.f32 %v2333, %v2596
        %v2644 = vadd.f32 %v2334, %v2599
        %v2645 = vadd.f32 %v2335, %v2602
        %v2646 = vadd.f32 %v2336, %v2605
        %v2647 = vadd.f32 %v2337, %v2608
        %v2648 = vadd.f32 %v2338, %v2611
        %v2649 = vld [vmem:[%s239 + $0x26] sm:$0xff]
        %v2650 = vld [vmem:[%s239 + $0x2e] sm:$0xff]
        %v2651 = vld [vmem:[%s239 + $0x36] sm:$0xff]
        %v2652 = vld [vmem:[%s239 + $0x3e] sm:$0xff]
        %v2653 = vld [vmem:[%s239 + $0x46] sm:$0xff]
        %v2654 = vld [vmem:[%s239 + $0x4e] sm:$0xff]
        %v2655 = vld [vmem:[%s239 + $0x56] sm:$0xff]
        %v2656 = vld [vmem:[%s239 + $0x5e] sm:$0xff]
        %v2657 = vld [vmem:[%s239 + $0x66] sm:$0xff]
        %v2658 = vld [vmem:[%s239 + $0x6e] sm:$0xff]
        %v2659 = vld [vmem:[%s239 + $0x76] sm:$0xff]
        %v2660 = vld [vmem:[%s239 + $0x7e] sm:$0xff]
        %v2661 = vld [vmem:[%s239 + $0x86] sm:$0xff]
        %v2662 = vld [vmem:[%s239 + $0x8e] sm:$0xff]
        %v2663 = vld [vmem:[%s239 + $0x96] sm:$0xff]
        %v2664 = vld [vmem:[%s239 + $0x9e] sm:$0xff]
        %v2665 = vld [vmem:[%s239 + $0xa6] sm:$0xff]
        %v2666 = vld [vmem:[%s239 + $0xae] sm:$0xff]
        %v2667 = vld [vmem:[%s239 + $0xb6] sm:$0xff]
        %v2668 = vld [vmem:[%s239 + $0xbe] sm:$0xff]
        %v2669 = vld [vmem:[%s239 + $0xc6] sm:$0xff]
        %v2670 = vld [vmem:[%s239 + $0xce] sm:$0xff]
        %v2671 = vld [vmem:[%s239 + $0xd6] sm:$0xff]
        %v2672 = vld [vmem:[%s239 + $0xde] sm:$0xff]
        %v2673 = vld [vmem:[%s239 + $0xe6] sm:$0xff]
        %v2674 = vld [vmem:[%s239 + $0xee] sm:$0xff]
        %v2675 = vld [vmem:[%s239 + $0xf6] sm:$0xff]
        %v2676 = vld [vmem:[%s239 + $0xfe] sm:$0xff]
        %v2677 = vld [vmem:[%s239 + $0x106] sm:$0xff]
        %v2678 = vld [vmem:[%s239 + $0x10e] sm:$0xff]
        %v2679 = vld [vmem:[%s239 + $0x116] sm:$0xff]
        %v2680 = vld [vmem:[%s239 + $0x11e] sm:$0xff]
        %v2681 = vld [vmem:[%s239 + $0x126] sm:$0xff]
        %v2682 = vld [vmem:[%s239 + $0x12e] sm:$0xff]
        %v2683 = vld [vmem:[%s239 + $0x136] sm:$0xff]
        %v2684 = vld [vmem:[%s239 + $0x13e] sm:$0xff]
        %s2685 = scalar_lea.vmem %s1, 32
        %v2686 = vld [vmem:[%s2685] sm:$0xf]
        %v2688 = vsel %vm315, %v2649, 0
        %v2691 = vsel %vm315, %v2650, 0
        %v2694 = vsel %vm315, %v2651, 0
        %v2697 = vsel %vm315, %v2652, 0
        %v2700 = vsel %vm315, %v2653, 0
        %v2703 = vsel %vm315, %v2654, 0
        %v2706 = vsel %vm315, %v2655, 0
        %v2709 = vsel %vm315, %v2656, 0
        %v2712 = vsel %vm315, %v2657, 0
        %v2715 = vsel %vm315, %v2658, 0
        %v2718 = vsel %vm315, %v2659, 0
        %v2721 = vsel %vm315, %v2660, 0
        %v2724 = vsel %vm315, %v2661, 0
        %v2727 = vsel %vm315, %v2662, 0
        %v2730 = vsel %vm315, %v2663, 0
        %v2733 = vsel %vm315, %v2664, 0
        %v2736 = vsel %vm315, %v2665, 0
        %v2739 = vsel %vm315, %v2666, 0
        %v2742 = vsel %vm315, %v2667, 0
        %v2745 = vsel %vm315, %v2668, 0
        %v2748 = vsel %vm315, %v2669, 0
        %v2751 = vsel %vm315, %v2670, 0
        %v2754 = vsel %vm315, %v2671, 0
        %v2757 = vsel %vm315, %v2672, 0
        %v2760 = vsel %vm315, %v2673, 0
        %v2763 = vsel %vm315, %v2674, 0
        %v2766 = vsel %vm315, %v2675, 0
        %v2769 = vsel %vm315, %v2676, 0
        %v2772 = vsel %vm315, %v2677, 0
        %v2775 = vsel %vm315, %v2678, 0
        %v2778 = vsel %vm315, %v2679, 0
        %v2781 = vsel %vm315, %v2680, 0
        %v2784 = vsel %vm315, %v2681, 0
        %v2787 = vsel %vm315, %v2682, 0
        %v2790 = vsel %vm315, %v2683, 0
        %v2793 = vsel %vm315, %v2684, 0
        %v2796 = vsel %vm424, %v2686, 0
        %2798 = vmatpush.msra.mxu0 0.0
        %2799 = vmatpush.msra.mxu0 0.0
        %2800 = vmatpush.msra.mxu0 0.0
        %2801 = vmatpush.msra.mxu0 0.0
        %2802 = vmatpush.msra.mxu0 0.0
        %2803 = vmatpush.msra.mxu0 0.0
        %2804 = vmatpush.msra.mxu0 0.0
        %2805 = vmatpush.msra.mxu0 0.0
        %2806 = vmatpush.msra.mxu0 0.0
        %2807 = vmatpush.msra.mxu0 0.0
        %2808 = vmatpush.msra.mxu0 0.0
        %2809 = vmatpush.msra.mxu0 0.0
        %2810 = vmatpush.msra.mxu0 0.0
        %2811 = vmatpush.msra.mxu0 0.0
        %2812 = vmatpush.msra.mxu0 0.0
        %2813 = vmatpush.msra.mxu0 %v2796
        %2814 = vmatmul.f32.gmra.mxu0 %v2688
        %v2815 = vpop.f32.mrf.mxu0
        %v2816 = vadd.f32 0.0, %v2815
        %2817 = vmatmul.f32.gmra.mxu0 %v2691
        %v2818 = vpop.f32.mrf.mxu0
        %v2819 = vadd.f32 0.0, %v2818
        %2820 = vmatmul.f32.gmra.mxu0 %v2694
        %v2821 = vpop.f32.mrf.mxu0
        %v2822 = vadd.f32 0.0, %v2821
        %2823 = vmatmul.f32.gmra.mxu0 %v2697
        %v2824 = vpop.f32.mrf.mxu0
        %v2825 = vadd.f32 0.0, %v2824
        %2826 = vmatmul.f32.gmra.mxu0 %v2700
        %v2827 = vpop.f32.mrf.mxu0
        %v2828 = vadd.f32 0.0, %v2827
        %2829 = vmatmul.f32.gmra.mxu0 %v2703
        %v2830 = vpop.f32.mrf.mxu0
        %v2831 = vadd.f32 0.0, %v2830
        %2832 = vmatmul.f32.gmra.mxu0 %v2706
        %v2833 = vpop.f32.mrf.mxu0
        %v2834 = vadd.f32 0.0, %v2833
        %2835 = vmatmul.f32.gmra.mxu0 %v2709
        %v2836 = vpop.f32.mrf.mxu0
        %v2837 = vadd.f32 0.0, %v2836
        %2838 = vmatmul.f32.gmra.mxu0 %v2712
        %v2839 = vpop.f32.mrf.mxu0
        %v2840 = vadd.f32 0.0, %v2839
        %2841 = vmatmul.f32.gmra.mxu0 %v2715
        %v2842 = vpop.f32.mrf.mxu0
        %v2843 = vadd.f32 0.0, %v2842
        %2844 = vmatmul.f32.gmra.mxu0 %v2718
        %v2845 = vpop.f32.mrf.mxu0
        %v2846 = vadd.f32 0.0, %v2845
        %2847 = vmatmul.f32.gmra.mxu0 %v2721
        %v2848 = vpop.f32.mrf.mxu0
        %v2849 = vadd.f32 0.0, %v2848
        %2850 = vmatmul.f32.gmra.mxu0 %v2724
        %v2851 = vpop.f32.mrf.mxu0
        %v2852 = vadd.f32 0.0, %v2851
        %2853 = vmatmul.f32.gmra.mxu0 %v2727
        %v2854 = vpop.f32.mrf.mxu0
        %v2855 = vadd.f32 0.0, %v2854
        %2856 = vmatmul.f32.gmra.mxu0 %v2730
        %v2857 = vpop.f32.mrf.mxu0
        %v2858 = vadd.f32 0.0, %v2857
        %2859 = vmatmul.f32.gmra.mxu0 %v2733
        %v2860 = vpop.f32.mrf.mxu0
        %v2861 = vadd.f32 0.0, %v2860
        %2862 = vmatmul.f32.gmra.mxu0 %v2736
        %v2863 = vpop.f32.mrf.mxu0
        %v2864 = vadd.f32 0.0, %v2863
        %2865 = vmatmul.f32.gmra.mxu0 %v2739
        %v2866 = vpop.f32.mrf.mxu0
        %v2867 = vadd.f32 0.0, %v2866
        %2868 = vmatmul.f32.gmra.mxu0 %v2742
        %v2869 = vpop.f32.mrf.mxu0
        %v2870 = vadd.f32 0.0, %v2869
        %2871 = vmatmul.f32.gmra.mxu0 %v2745
        %v2872 = vpop.f32.mrf.mxu0
        %v2873 = vadd.f32 0.0, %v2872
        %2874 = vmatmul.f32.gmra.mxu0 %v2748
        %v2875 = vpop.f32.mrf.mxu0
        %v2876 = vadd.f32 0.0, %v2875
        %2877 = vmatmul.f32.gmra.mxu0 %v2751
        %v2878 = vpop.f32.mrf.mxu0
        %v2879 = vadd.f32 0.0, %v2878
        %2880 = vmatmul.f32.gmra.mxu0 %v2754
        %v2881 = vpop.f32.mrf.mxu0
        %v2882 = vadd.f32 0.0, %v2881
        %2883 = vmatmul.f32.gmra.mxu0 %v2757
        %v2884 = vpop.f32.mrf.mxu0
        %v2885 = vadd.f32 0.0, %v2884
        %2886 = vmatmul.f32.gmra.mxu0 %v2760
        %v2887 = vpop.f32.mrf.mxu0
        %v2888 = vadd.f32 0.0, %v2887
        %2889 = vmatmul.f32.gmra.mxu0 %v2763
        %v2890 = vpop.f32.mrf.mxu0
        %v2891 = vadd.f32 0.0, %v2890
        %2892 = vmatmul.f32.gmra.mxu0 %v2766
        %v2893 = vpop.f32.mrf.mxu0
        %v2894 = vadd.f32 0.0, %v2893
        %2895 = vmatmul.f32.gmra.mxu0 %v2769
        %v2896 = vpop.f32.mrf.mxu0
        %v2897 = vadd.f32 0.0, %v2896
        %2898 = vmatmul.f32.gmra.mxu0 %v2772
        %v2899 = vpop.f32.mrf.mxu0
        %v2900 = vadd.f32 0.0, %v2899
        %2901 = vmatmul.f32.gmra.mxu0 %v2775
        %v2902 = vpop.f32.mrf.mxu0
        %v2903 = vadd.f32 0.0, %v2902
        %2904 = vmatmul.f32.gmra.mxu0 %v2778
        %v2905 = vpop.f32.mrf.mxu0
        %v2906 = vadd.f32 0.0, %v2905
        %2907 = vmatmul.f32.gmra.mxu0 %v2781
        %v2908 = vpop.f32.mrf.mxu0
        %v2909 = vadd.f32 0.0, %v2908
        %2910 = vmatmul.f32.gmra.mxu0 %v2784
        %v2911 = vpop.f32.mrf.mxu0
        %v2912 = vadd.f32 0.0, %v2911
        %2913 = vmatmul.f32.gmra.mxu0 %v2787
        %v2914 = vpop.f32.mrf.mxu0
        %v2915 = vadd.f32 0.0, %v2914
        %2916 = vmatmul.f32.gmra.mxu0 %v2790
        %v2917 = vpop.f32.mrf.mxu0
        %v2918 = vadd.f32 0.0, %v2917
        %2919 = vmatmul.f32.gmra.mxu0 %v2793
        %v2920 = vpop.f32.mrf.mxu0
        %v2921 = vadd.f32 0.0, %v2920
        %2922 = vdwg.mxu0
        %v2923 = vadd.f32 %v2613, %v2816
        %v2924 = vadd.f32 %v2614, %v2819
        %v2925 = vadd.f32 %v2615, %v2822
        %v2926 = vadd.f32 %v2616, %v2825
        %v2927 = vadd.f32 %v2617, %v2828
        %v2928 = vadd.f32 %v2618, %v2831
        %v2929 = vadd.f32 %v2619, %v2834
        %v2930 = vadd.f32 %v2620, %v2837
        %v2931 = vadd.f32 %v2621, %v2840
        %v2932 = vadd.f32 %v2622, %v2843
        %v2933 = vadd.f32 %v2623, %v2846
        %v2934 = vadd.f32 %v2624, %v2849
        %v2935 = vadd.f32 %v2625, %v2852
        %v2936 = vadd.f32 %v2626, %v2855
        %v2937 = vadd.f32 %v2627, %v2858
        %v2938 = vadd.f32 %v2628, %v2861
        %v2939 = vadd.f32 %v2629, %v2864
        %v2940 = vadd.f32 %v2630, %v2867
        %v2941 = vadd.f32 %v2631, %v2870
        %v2942 = vadd.f32 %v2632, %v2873
        %v2943 = vadd.f32 %v2633, %v2876
        %v2944 = vadd.f32 %v2634, %v2879
        %v2945 = vadd.f32 %v2635, %v2882
        %v2946 = vadd.f32 %v2636, %v2885
        %v2947 = vadd.f32 %v2637, %v2888
        %v2948 = vadd.f32 %v2638, %v2891
        %v2949 = vadd.f32 %v2639, %v2894
        %v2950 = vadd.f32 %v2640, %v2897
        %v2951 = vadd.f32 %v2641, %v2900
        %v2952 = vadd.f32 %v2642, %v2903
        %v2953 = vadd.f32 %v2643, %v2906
        %v2954 = vadd.f32 %v2644, %v2909
        %v2955 = vadd.f32 %v2645, %v2912
        %v2956 = vadd.f32 %v2646, %v2915
        %v2957 = vadd.f32 %v2647, %v2918
        %v2958 = vadd.f32 %v2648, %v2921
        %v2959 = vld [vmem:[%s2] sm:$0x1]
        %v2961 = vperm.slane %v2959, 0
        %v2963 = vadd.f32 %v2923, %v2961
        %v2964 = vadd.f32 %v2924, %v2961
        %v2965 = vadd.f32 %v2925, %v2961
        %v2966 = vadd.f32 %v2926, %v2961
        %v2967 = vadd.f32 %v2927, %v2961
        %v2968 = vadd.f32 %v2928, %v2961
        %v2969 = vadd.f32 %v2929, %v2961
        %v2970 = vadd.f32 %v2930, %v2961
        %v2971 = vadd.f32 %v2931, %v2961
        %v2972 = vadd.f32 %v2932, %v2961
        %v2973 = vadd.f32 %v2933, %v2961
        %v2974 = vadd.f32 %v2934, %v2961
        %v2975 = vadd.f32 %v2935, %v2961
        %v2976 = vadd.f32 %v2936, %v2961
        %v2977 = vadd.f32 %v2937, %v2961
        %v2978 = vadd.f32 %v2938, %v2961
        %v2979 = vadd.f32 %v2939, %v2961
        %v2980 = vadd.f32 %v2940, %v2961
        %v2981 = vadd.f32 %v2941, %v2961
        %v2982 = vadd.f32 %v2942, %v2961
        %v2983 = vadd.f32 %v2943, %v2961
        %v2984 = vadd.f32 %v2944, %v2961
        %v2985 = vadd.f32 %v2945, %v2961
        %v2986 = vadd.f32 %v2946, %v2961
        %v2987 = vadd.f32 %v2947, %v2961
        %v2988 = vadd.f32 %v2948, %v2961
        %v2989 = vadd.f32 %v2949, %v2961
        %v2990 = vadd.f32 %v2950, %v2961
        %v2991 = vadd.f32 %v2951, %v2961
        %v2992 = vadd.f32 %v2952, %v2961
        %v2993 = vadd.f32 %v2953, %v2961
        %v2994 = vadd.f32 %v2954, %v2961
        %v2995 = vadd.f32 %v2955, %v2961
        %v2996 = vadd.f32 %v2956, %v2961
        %v2997 = vadd.f32 %v2957, %v2961
        %v2998 = vadd.f32 %v2958, %v2961
        %v2999 = vmax.f32 %v2963, 0.0
        %v3000 = vmax.f32 %v2964, 0.0
        %v3001 = vmax.f32 %v2965, 0.0
        %v3002 = vmax.f32 %v2966, 0.0
        %v3003 = vmax.f32 %v2967, 0.0
        %v3004 = vmax.f32 %v2968, 0.0
        %v3005 = vmax.f32 %v2969, 0.0
        %v3006 = vmax.f32 %v2970, 0.0
        %v3007 = vmax.f32 %v2971, 0.0
        %v3008 = vmax.f32 %v2972, 0.0
        %v3009 = vmax.f32 %v2973, 0.0
        %v3010 = vmax.f32 %v2974, 0.0
        %v3011 = vmax.f32 %v2975, 0.0
        %v3012 = vmax.f32 %v2976, 0.0
        %v3013 = vmax.f32 %v2977, 0.0
        %v3014 = vmax.f32 %v2978, 0.0
        %v3015 = vmax.f32 %v2979, 0.0
        %v3016 = vmax.f32 %v2980, 0.0
        %v3017 = vmax.f32 %v2981, 0.0
        %v3018 = vmax.f32 %v2982, 0.0
        %v3019 = vmax.f32 %v2983, 0.0
        %v3020 = vmax.f32 %v2984, 0.0
        %v3021 = vmax.f32 %v2985, 0.0
        %v3022 = vmax.f32 %v2986, 0.0
        %v3023 = vmax.f32 %v2987, 0.0
        %v3024 = vmax.f32 %v2988, 0.0
        %v3025 = vmax.f32 %v2989, 0.0
        %v3026 = vmax.f32 %v2990, 0.0
        %v3027 = vmax.f32 %v2991, 0.0
        %v3028 = vmax.f32 %v2992, 0.0
        %v3029 = vmax.f32 %v2993, 0.0
        %v3030 = vmax.f32 %v2994, 0.0
        %v3031 = vmax.f32 %v2995, 0.0
        %v3032 = vmax.f32 %v2996, 0.0
        %v3033 = vmax.f32 %v2997, 0.0
        %v3034 = vmax.f32 %v2998, 0.0
        %v3035 = vlaneseq
        %v3036 = vshrl.u32 %v3035, 7
        %v3037 = vadd.s32 %v3036, 8
        %v3038 = vadd.s32 %v3036, 16
        %v3039 = vadd.s32 %v3036, 24
        %v3040 = vadd.s32 %v3036, 32
        %v3041 = vadd.s32 %v3036, 40
        %v3042 = vadd.s32 %v3036, 48
        %v3043 = vadd.s32 %v3036, 56
        %v3044 = vadd.s32 %v3036, 64
        %v3045 = vadd.s32 %v3036, 72
        %v3046 = vadd.s32 %v3036, 80
        %v3047 = vadd.s32 %v3036, 88
        %v3048 = vadd.s32 %v3036, 96
        %v3049 = vadd.s32 %v3036, 104
        %v3050 = vadd.s32 %v3036, 112
        %v3051 = vadd.s32 %v3036, 120
        %v3052 = vadd.s32 %v3036, 128
        %v3053 = vadd.s32 %v3036, 136
        %v3054 = vadd.s32 %v3036, 144
        %v3055 = vadd.s32 %v3036, 152
        %v3056 = vadd.s32 %v3036, 160
        %v3057 = vadd.s32 %v3036, 168
        %v3058 = vadd.s32 %v3036, 176
        %v3059 = vadd.s32 %v3036, 184
        %v3060 = vadd.s32 %v3036, 192
        %v3061 = vadd.s32 %v3036, 200
        %v3062 = vadd.s32 %v3036, 208
        %v3063 = vadd.s32 %v3036, 216
        %v3064 = vadd.s32 %v3036, 224
        %v3065 = vadd.s32 %v3036, 232
        %v3066 = vadd.s32 %v3036, 240
        %v3067 = vadd.s32 %v3036, 248
        %v3068 = vadd.s32 %v3036, 256
        %v3069 = vadd.s32 %v3036, 264
        %v3070 = vadd.s32 %v3036, 272
        %v3071 = vadd.s32 %v3036, 280
        %vm3072 = vcmp.lt.s32.totalorder %v3036, 0
        %v3073 = vsub.s32 0, %v3036
        %v3074 = vsel %vm3072, %v3073, %v3036
        %v3075 = vand.u32 %v3074, 65535
        %v3076 = vshrl.u32 %v3074, 16
        %v3078 = vmul.u32 %v3075, 14564
        %v3079 = vmul.u32 %v3075, 58254
        %v3080 = vmul.u32 %v3076, 14564
        %v3081 = vmul.u32 %v3076, 58254
        %v3082 = vshll.u32 %v3079, 16
        %v3083 = vshrl.u32 %v3079, 16
        %v3084 = vshll.u32 %v3080, 16
        %v3085 = vshrl.u32 %v3080, 16
        %vm3086 = vc.u32 %v3078, %v3082
        %v3087 = vsel %vm3086, 1, 0
        %v3088 = vadd.s32 %v3078, %v3082
        %v3089 = vadd.s32 %v3081, %v3087
        %vm3090 = vc.u32 %v3088, %v3084
        %v3091 = vsel %vm3090, 1, 0
        %v3092 = vadd.s32 %v3088, %v3084
        %v3093 = vadd.s32 %v3089, %v3091
        %v3094 = vadd.s32 %v3093, %v3083
        %v3095 = vadd.s32 %v3094, %v3085
        %v3096 = vshrl.u32 %v3095, 4
        %v3097 = vmul.u32 %v3096, 18
        %v3098 = vsub.s32 %v3074, %v3097
        %v3099 = vsub.s32 0, %v3098
        %v3100 = vsel %vm3072, %v3099, %v3098
        %vm3101 = vcmp.lt.s32.totalorder %v3037, 0
        %v3102 = vsub.s32 0, %v3037
        %v3103 = vsel %vm3101, %v3102, %v3037
        %v3104 = vand.u32 %v3103, 65535
        %v3105 = vshrl.u32 %v3103, 16
        %v3107 = vmul.u32 %v3104, 14564
        %v3108 = vmul.u32 %v3104, 58254
        %v3109 = vmul.u32 %v3105, 14564
        %v3110 = vmul.u32 %v3105, 58254
        %v3111 = vshll.u32 %v3108, 16
        %v3112 = vshrl.u32 %v3108, 16
        %v3113 = vshll.u32 %v3109, 16
        %v3114 = vshrl.u32 %v3109, 16
        %vm3115 = vc.u32 %v3107, %v3111
        %v3116 = vsel %vm3115, 1, 0
        %v3117 = vadd.s32 %v3107, %v3111
        %v3118 = vadd.s32 %v3110, %v3116
        %vm3119 = vc.u32 %v3117, %v3113
        %v3120 = vsel %vm3119, 1, 0
        %v3121 = vadd.s32 %v3117, %v3113
        %v3122 = vadd.s32 %v3118, %v3120
        %v3123 = vadd.s32 %v3122, %v3112
        %v3124 = vadd.s32 %v3123, %v3114
        %v3125 = vshrl.u32 %v3124, 4
        %v3126 = vmul.u32 %v3125, 18
        %v3127 = vsub.s32 %v3103, %v3126
        %v3128 = vsub.s32 0, %v3127
        %v3129 = vsel %vm3101, %v3128, %v3127
        %vm3130 = vcmp.lt.s32.totalorder %v3038, 0
        %v3131 = vsub.s32 0, %v3038
        %v3132 = vsel %vm3130, %v3131, %v3038
        %v3133 = vand.u32 %v3132, 65535
        %v3134 = vshrl.u32 %v3132, 16
        %v3136 = vmul.u32 %v3133, 14564
        %v3137 = vmul.u32 %v3133, 58254
        %v3138 = vmul.u32 %v3134, 14564
        %v3139 = vmul.u32 %v3134, 58254
        %v3140 = vshll.u32 %v3137, 16
        %v3141 = vshrl.u32 %v3137, 16
        %v3142 = vshll.u32 %v3138, 16
        %v3143 = vshrl.u32 %v3138, 16
        %vm3144 = vc.u32 %v3136, %v3140
        %v3145 = vsel %vm3144, 1, 0
        %v3146 = vadd.s32 %v3136, %v3140
        %v3147 = vadd.s32 %v3139, %v3145
        %vm3148 = vc.u32 %v3146, %v3142
        %v3149 = vsel %vm3148, 1, 0
        %v3150 = vadd.s32 %v3146, %v3142
        %v3151 = vadd.s32 %v3147, %v3149
        %v3152 = vadd.s32 %v3151, %v3141
        %v3153 = vadd.s32 %v3152, %v3143
        %v3154 = vshrl.u32 %v3153, 4
        %v3155 = vmul.u32 %v3154, 18
        %v3156 = vsub.s32 %v3132, %v3155
        %v3157 = vsub.s32 0, %v3156
        %v3158 = vsel %vm3130, %v3157, %v3156
        %vm3159 = vcmp.lt.s32.totalorder %v3039, 0
        %v3160 = vsub.s32 0, %v3039
        %v3161 = vsel %vm3159, %v3160, %v3039
        %v3162 = vand.u32 %v3161, 65535
        %v3163 = vshrl.u32 %v3161, 16
        %v3165 = vmul.u32 %v3162, 14564
        %v3166 = vmul.u32 %v3162, 58254
        %v3167 = vmul.u32 %v3163, 14564
        %v3168 = vmul.u32 %v3163, 58254
        %v3169 = vshll.u32 %v3166, 16
        %v3170 = vshrl.u32 %v3166, 16
        %v3171 = vshll.u32 %v3167, 16
        %v3172 = vshrl.u32 %v3167, 16
        %vm3173 = vc.u32 %v3165, %v3169
        %v3174 = vsel %vm3173, 1, 0
        %v3175 = vadd.s32 %v3165, %v3169
        %v3176 = vadd.s32 %v3168, %v3174
        %vm3177 = vc.u32 %v3175, %v3171
        %v3178 = vsel %vm3177, 1, 0
        %v3179 = vadd.s32 %v3175, %v3171
        %v3180 = vadd.s32 %v3176, %v3178
        %v3181 = vadd.s32 %v3180, %v3170
        %v3182 = vadd.s32 %v3181, %v3172
        %v3183 = vshrl.u32 %v3182, 4
        %v3184 = vmul.u32 %v3183, 18
        %v3185 = vsub.s32 %v3161, %v3184
        %v3186 = vsub.s32 0, %v3185
        %v3187 = vsel %vm3159, %v3186, %v3185
        %vm3188 = vcmp.lt.s32.totalorder %v3040, 0
        %v3189 = vsub.s32 0, %v3040
        %v3190 = vsel %vm3188, %v3189, %v3040
        %v3191 = vand.u32 %v3190, 65535
        %v3192 = vshrl.u32 %v3190, 16
        %v3194 = vmul.u32 %v3191, 14564
        %v3195 = vmul.u32 %v3191, 58254
        %v3196 = vmul.u32 %v3192, 14564
        %v3197 = vmul.u32 %v3192, 58254
        %v3198 = vshll.u32 %v3195, 16
        %v3199 = vshrl.u32 %v3195, 16
        %v3200 = vshll.u32 %v3196, 16
        %v3201 = vshrl.u32 %v3196, 16
        %vm3202 = vc.u32 %v3194, %v3198
        %v3203 = vsel %vm3202, 1, 0
        %v3204 = vadd.s32 %v3194, %v3198
        %v3205 = vadd.s32 %v3197, %v3203
        %vm3206 = vc.u32 %v3204, %v3200
        %v3207 = vsel %vm3206, 1, 0
        %v3208 = vadd.s32 %v3204, %v3200
        %v3209 = vadd.s32 %v3205, %v3207
        %v3210 = vadd.s32 %v3209, %v3199
        %v3211 = vadd.s32 %v3210, %v3201
        %v3212 = vshrl.u32 %v3211, 4
        %v3213 = vmul.u32 %v3212, 18
        %v3214 = vsub.s32 %v3190, %v3213
        %v3215 = vsub.s32 0, %v3214
        %v3216 = vsel %vm3188, %v3215, %v3214
        %vm3217 = vcmp.lt.s32.totalorder %v3041, 0
        %v3218 = vsub.s32 0, %v3041
        %v3219 = vsel %vm3217, %v3218, %v3041
        %v3220 = vand.u32 %v3219, 65535
        %v3221 = vshrl.u32 %v3219, 16
        %v3223 = vmul.u32 %v3220, 14564
        %v3224 = vmul.u32 %v3220, 58254
        %v3225 = vmul.u32 %v3221, 14564
        %v3226 = vmul.u32 %v3221, 58254
        %v3227 = vshll.u32 %v3224, 16
        %v3228 = vshrl.u32 %v3224, 16
        %v3229 = vshll.u32 %v3225, 16
        %v3230 = vshrl.u32 %v3225, 16
        %vm3231 = vc.u32 %v3223, %v3227
        %v3232 = vsel %vm3231, 1, 0
        %v3233 = vadd.s32 %v3223, %v3227
        %v3234 = vadd.s32 %v3226, %v3232
        %vm3235 = vc.u32 %v3233, %v3229
        %v3236 = vsel %vm3235, 1, 0
        %v3237 = vadd.s32 %v3233, %v3229
        %v3238 = vadd.s32 %v3234, %v3236
        %v3239 = vadd.s32 %v3238, %v3228
        %v3240 = vadd.s32 %v3239, %v3230
        %v3241 = vshrl.u32 %v3240, 4
        %v3242 = vmul.u32 %v3241, 18
        %v3243 = vsub.s32 %v3219, %v3242
        %v3244 = vsub.s32 0, %v3243
        %v3245 = vsel %vm3217, %v3244, %v3243
        %vm3246 = vcmp.lt.s32.totalorder %v3042, 0
        %v3247 = vsub.s32 0, %v3042
        %v3248 = vsel %vm3246, %v3247, %v3042
        %v3249 = vand.u32 %v3248, 65535
        %v3250 = vshrl.u32 %v3248, 16
        %v3252 = vmul.u32 %v3249, 14564
        %v3253 = vmul.u32 %v3249, 58254
        %v3254 = vmul.u32 %v3250, 14564
        %v3255 = vmul.u32 %v3250, 58254
        %v3256 = vshll.u32 %v3253, 16
        %v3257 = vshrl.u32 %v3253, 16
        %v3258 = vshll.u32 %v3254, 16
        %v3259 = vshrl.u32 %v3254, 16
        %vm3260 = vc.u32 %v3252, %v3256
        %v3261 = vsel %vm3260, 1, 0
        %v3262 = vadd.s32 %v3252, %v3256
        %v3263 = vadd.s32 %v3255, %v3261
        %vm3264 = vc.u32 %v3262, %v3258
        %v3265 = vsel %vm3264, 1, 0
        %v3266 = vadd.s32 %v3262, %v3258
        %v3267 = vadd.s32 %v3263, %v3265
        %v3268 = vadd.s32 %v3267, %v3257
        %v3269 = vadd.s32 %v3268, %v3259
        %v3270 = vshrl.u32 %v3269, 4
        %v3271 = vmul.u32 %v3270, 18
        %v3272 = vsub.s32 %v3248, %v3271
        %v3273 = vsub.s32 0, %v3272
        %v3274 = vsel %vm3246, %v3273, %v3272
        %vm3275 = vcmp.lt.s32.totalorder %v3043, 0
        %v3276 = vsub.s32 0, %v3043
        %v3277 = vsel %vm3275, %v3276, %v3043
        %v3278 = vand.u32 %v3277, 65535
        %v3279 = vshrl.u32 %v3277, 16
        %v3281 = vmul.u32 %v3278, 14564
        %v3282 = vmul.u32 %v3278, 58254
        %v3283 = vmul.u32 %v3279, 14564
        %v3284 = vmul.u32 %v3279, 58254
        %v3285 = vshll.u32 %v3282, 16
        %v3286 = vshrl.u32 %v3282, 16
        %v3287 = vshll.u32 %v3283, 16
        %v3288 = vshrl.u32 %v3283, 16
        %vm3289 = vc.u32 %v3281, %v3285
        %v3290 = vsel %vm3289, 1, 0
        %v3291 = vadd.s32 %v3281, %v3285
        %v3292 = vadd.s32 %v3284, %v3290
        %vm3293 = vc.u32 %v3291, %v3287
        %v3294 = vsel %vm3293, 1, 0
        %v3295 = vadd.s32 %v3291, %v3287
        %v3296 = vadd.s32 %v3292, %v3294
        %v3297 = vadd.s32 %v3296, %v3286
        %v3298 = vadd.s32 %v3297, %v3288
        %v3299 = vshrl.u32 %v3298, 4
        %v3300 = vmul.u32 %v3299, 18
        %v3301 = vsub.s32 %v3277, %v3300
        %v3302 = vsub.s32 0, %v3301
        %v3303 = vsel %vm3275, %v3302, %v3301
        %vm3304 = vcmp.lt.s32.totalorder %v3044, 0
        %v3305 = vsub.s32 0, %v3044
        %v3306 = vsel %vm3304, %v3305, %v3044
        %v3307 = vand.u32 %v3306, 65535
        %v3308 = vshrl.u32 %v3306, 16
        %v3310 = vmul.u32 %v3307, 14564
        %v3311 = vmul.u32 %v3307, 58254
        %v3312 = vmul.u32 %v3308, 14564
        %v3313 = vmul.u32 %v3308, 58254
        %v3314 = vshll.u32 %v3311, 16
        %v3315 = vshrl.u32 %v3311, 16
        %v3316 = vshll.u32 %v3312, 16
        %v3317 = vshrl.u32 %v3312, 16
        %vm3318 = vc.u32 %v3310, %v3314
        %v3319 = vsel %vm3318, 1, 0
        %v3320 = vadd.s32 %v3310, %v3314
        %v3321 = vadd.s32 %v3313, %v3319
        %vm3322 = vc.u32 %v3320, %v3316
        %v3323 = vsel %vm3322, 1, 0
        %v3324 = vadd.s32 %v3320, %v3316
        %v3325 = vadd.s32 %v3321, %v3323
        %v3326 = vadd.s32 %v3325, %v3315
        %v3327 = vadd.s32 %v3326, %v3317
        %v3328 = vshrl.u32 %v3327, 4
        %v3329 = vmul.u32 %v3328, 18
        %v3330 = vsub.s32 %v3306, %v3329
        %v3331 = vsub.s32 0, %v3330
        %v3332 = vsel %vm3304, %v3331, %v3330
        %vm3333 = vcmp.lt.s32.totalorder %v3045, 0
        %v3334 = vsub.s32 0, %v3045
        %v3335 = vsel %vm3333, %v3334, %v3045
        %v3336 = vand.u32 %v3335, 65535
        %v3337 = vshrl.u32 %v3335, 16
        %v3339 = vmul.u32 %v3336, 14564
        %v3340 = vmul.u32 %v3336, 58254
        %v3341 = vmul.u32 %v3337, 14564
        %v3342 = vmul.u32 %v3337, 58254
        %v3343 = vshll.u32 %v3340, 16
        %v3344 = vshrl.u32 %v3340, 16
        %v3345 = vshll.u32 %v3341, 16
        %v3346 = vshrl.u32 %v3341, 16
        %vm3347 = vc.u32 %v3339, %v3343
        %v3348 = vsel %vm3347, 1, 0
        %v3349 = vadd.s32 %v3339, %v3343
        %v3350 = vadd.s32 %v3342, %v3348
        %vm3351 = vc.u32 %v3349, %v3345
        %v3352 = vsel %vm3351, 1, 0
        %v3353 = vadd.s32 %v3349, %v3345
        %v3354 = vadd.s32 %v3350, %v3352
        %v3355 = vadd.s32 %v3354, %v3344
        %v3356 = vadd.s32 %v3355, %v3346
        %v3357 = vshrl.u32 %v3356, 4
        %v3358 = vmul.u32 %v3357, 18
        %v3359 = vsub.s32 %v3335, %v3358
        %v3360 = vsub.s32 0, %v3359
        %v3361 = vsel %vm3333, %v3360, %v3359
        %vm3362 = vcmp.lt.s32.totalorder %v3046, 0
        %v3363 = vsub.s32 0, %v3046
        %v3364 = vsel %vm3362, %v3363, %v3046
        %v3365 = vand.u32 %v3364, 65535
        %v3366 = vshrl.u32 %v3364, 16
        %v3368 = vmul.u32 %v3365, 14564
        %v3369 = vmul.u32 %v3365, 58254
        %v3370 = vmul.u32 %v3366, 14564
        %v3371 = vmul.u32 %v3366, 58254
        %v3372 = vshll.u32 %v3369, 16
        %v3373 = vshrl.u32 %v3369, 16
        %v3374 = vshll.u32 %v3370, 16
        %v3375 = vshrl.u32 %v3370, 16
        %vm3376 = vc.u32 %v3368, %v3372
        %v3377 = vsel %vm3376, 1, 0
        %v3378 = vadd.s32 %v3368, %v3372
        %v3379 = vadd.s32 %v3371, %v3377
        %vm3380 = vc.u32 %v3378, %v3374
        %v3381 = vsel %vm3380, 1, 0
        %v3382 = vadd.s32 %v3378, %v3374
        %v3383 = vadd.s32 %v3379, %v3381
        %v3384 = vadd.s32 %v3383, %v3373
        %v3385 = vadd.s32 %v3384, %v3375
        %v3386 = vshrl.u32 %v3385, 4
        %v3387 = vmul.u32 %v3386, 18
        %v3388 = vsub.s32 %v3364, %v3387
        %v3389 = vsub.s32 0, %v3388
        %v3390 = vsel %vm3362, %v3389, %v3388
        %vm3391 = vcmp.lt.s32.totalorder %v3047, 0
        %v3392 = vsub.s32 0, %v3047
        %v3393 = vsel %vm3391, %v3392, %v3047
        %v3394 = vand.u32 %v3393, 65535
        %v3395 = vshrl.u32 %v3393, 16
        %v3397 = vmul.u32 %v3394, 14564
        %v3398 = vmul.u32 %v3394, 58254
        %v3399 = vmul.u32 %v3395, 14564
        %v3400 = vmul.u32 %v3395, 58254
        %v3401 = vshll.u32 %v3398, 16
        %v3402 = vshrl.u32 %v3398, 16
        %v3403 = vshll.u32 %v3399, 16
        %v3404 = vshrl.u32 %v3399, 16
        %vm3405 = vc.u32 %v3397, %v3401
        %v3406 = vsel %vm3405, 1, 0
        %v3407 = vadd.s32 %v3397, %v3401
        %v3408 = vadd.s32 %v3400, %v3406
        %vm3409 = vc.u32 %v3407, %v3403
        %v3410 = vsel %vm3409, 1, 0
        %v3411 = vadd.s32 %v3407, %v3403
        %v3412 = vadd.s32 %v3408, %v3410
        %v3413 = vadd.s32 %v3412, %v3402
        %v3414 = vadd.s32 %v3413, %v3404
        %v3415 = vshrl.u32 %v3414, 4
        %v3416 = vmul.u32 %v3415, 18
        %v3417 = vsub.s32 %v3393, %v3416
        %v3418 = vsub.s32 0, %v3417
        %v3419 = vsel %vm3391, %v3418, %v3417
        %vm3420 = vcmp.lt.s32.totalorder %v3048, 0
        %v3421 = vsub.s32 0, %v3048
        %v3422 = vsel %vm3420, %v3421, %v3048
        %v3423 = vand.u32 %v3422, 65535
        %v3424 = vshrl.u32 %v3422, 16
        %v3426 = vmul.u32 %v3423, 14564
        %v3427 = vmul.u32 %v3423, 58254
        %v3428 = vmul.u32 %v3424, 14564
        %v3429 = vmul.u32 %v3424, 58254
        %v3430 = vshll.u32 %v3427, 16
        %v3431 = vshrl.u32 %v3427, 16
        %v3432 = vshll.u32 %v3428, 16
        %v3433 = vshrl.u32 %v3428, 16
        %vm3434 = vc.u32 %v3426, %v3430
        %v3435 = vsel %vm3434, 1, 0
        %v3436 = vadd.s32 %v3426, %v3430
        %v3437 = vadd.s32 %v3429, %v3435
        %vm3438 = vc.u32 %v3436, %v3432
        %v3439 = vsel %vm3438, 1, 0
        %v3440 = vadd.s32 %v3436, %v3432
        %v3441 = vadd.s32 %v3437, %v3439
        %v3442 = vadd.s32 %v3441, %v3431
        %v3443 = vadd.s32 %v3442, %v3433
        %v3444 = vshrl.u32 %v3443, 4
        %v3445 = vmul.u32 %v3444, 18
        %v3446 = vsub.s32 %v3422, %v3445
        %v3447 = vsub.s32 0, %v3446
        %v3448 = vsel %vm3420, %v3447, %v3446
        %vm3449 = vcmp.lt.s32.totalorder %v3049, 0
        %v3450 = vsub.s32 0, %v3049
        %v3451 = vsel %vm3449, %v3450, %v3049
        %v3452 = vand.u32 %v3451, 65535
        %v3453 = vshrl.u32 %v3451, 16
        %v3455 = vmul.u32 %v3452, 14564
        %v3456 = vmul.u32 %v3452, 58254
        %v3457 = vmul.u32 %v3453, 14564
        %v3458 = vmul.u32 %v3453, 58254
        %v3459 = vshll.u32 %v3456, 16
        %v3460 = vshrl.u32 %v3456, 16
        %v3461 = vshll.u32 %v3457, 16
        %v3462 = vshrl.u32 %v3457, 16
        %vm3463 = vc.u32 %v3455, %v3459
        %v3464 = vsel %vm3463, 1, 0
        %v3465 = vadd.s32 %v3455, %v3459
        %v3466 = vadd.s32 %v3458, %v3464
        %vm3467 = vc.u32 %v3465, %v3461
        %v3468 = vsel %vm3467, 1, 0
        %v3469 = vadd.s32 %v3465, %v3461
        %v3470 = vadd.s32 %v3466, %v3468
        %v3471 = vadd.s32 %v3470, %v3460
        %v3472 = vadd.s32 %v3471, %v3462
        %v3473 = vshrl.u32 %v3472, 4
        %v3474 = vmul.u32 %v3473, 18
        %v3475 = vsub.s32 %v3451, %v3474
        %v3476 = vsub.s32 0, %v3475
        %v3477 = vsel %vm3449, %v3476, %v3475
        %vm3478 = vcmp.lt.s32.totalorder %v3050, 0
        %v3479 = vsub.s32 0, %v3050
        %v3480 = vsel %vm3478, %v3479, %v3050
        %v3481 = vand.u32 %v3480, 65535
        %v3482 = vshrl.u32 %v3480, 16
        %v3484 = vmul.u32 %v3481, 14564
        %v3485 = vmul.u32 %v3481, 58254
        %v3486 = vmul.u32 %v3482, 14564
        %v3487 = vmul.u32 %v3482, 58254
        %v3488 = vshll.u32 %v3485, 16
        %v3489 = vshrl.u32 %v3485, 16
        %v3490 = vshll.u32 %v3486, 16
        %v3491 = vshrl.u32 %v3486, 16
        %vm3492 = vc.u32 %v3484, %v3488
        %v3493 = vsel %vm3492, 1, 0
        %v3494 = vadd.s32 %v3484, %v3488
        %v3495 = vadd.s32 %v3487, %v3493
        %vm3496 = vc.u32 %v3494, %v3490
        %v3497 = vsel %vm3496, 1, 0
        %v3498 = vadd.s32 %v3494, %v3490
        %v3499 = vadd.s32 %v3495, %v3497
        %v3500 = vadd.s32 %v3499, %v3489
        %v3501 = vadd.s32 %v3500, %v3491
        %v3502 = vshrl.u32 %v3501, 4
        %v3503 = vmul.u32 %v3502, 18
        %v3504 = vsub.s32 %v3480, %v3503
        %v3505 = vsub.s32 0, %v3504
        %v3506 = vsel %vm3478, %v3505, %v3504
        %vm3507 = vcmp.lt.s32.totalorder %v3051, 0
        %v3508 = vsub.s32 0, %v3051
        %v3509 = vsel %vm3507, %v3508, %v3051
        %v3510 = vand.u32 %v3509, 65535
        %v3511 = vshrl.u32 %v3509, 16
        %v3513 = vmul.u32 %v3510, 14564
        %v3514 = vmul.u32 %v3510, 58254
        %v3515 = vmul.u32 %v3511, 14564
        %v3516 = vmul.u32 %v3511, 58254
        %v3517 = vshll.u32 %v3514, 16
        %v3518 = vshrl.u32 %v3514, 16
        %v3519 = vshll.u32 %v3515, 16
        %v3520 = vshrl.u32 %v3515, 16
        %vm3521 = vc.u32 %v3513, %v3517
        %v3522 = vsel %vm3521, 1, 0
        %v3523 = vadd.s32 %v3513, %v3517
        %v3524 = vadd.s32 %v3516, %v3522
        %vm3525 = vc.u32 %v3523, %v3519
        %v3526 = vsel %vm3525, 1, 0
        %v3527 = vadd.s32 %v3523, %v3519
        %v3528 = vadd.s32 %v3524, %v3526
        %v3529 = vadd.s32 %v3528, %v3518
        %v3530 = vadd.s32 %v3529, %v3520
        %v3531 = vshrl.u32 %v3530, 4
        %v3532 = vmul.u32 %v3531, 18
        %v3533 = vsub.s32 %v3509, %v3532
        %v3534 = vsub.s32 0, %v3533
        %v3535 = vsel %vm3507, %v3534, %v3533
        %vm3536 = vcmp.lt.s32.totalorder %v3052, 0
        %v3537 = vsub.s32 0, %v3052
        %v3538 = vsel %vm3536, %v3537, %v3052
        %v3539 = vand.u32 %v3538, 65535
        %v3540 = vshrl.u32 %v3538, 16
        %v3542 = vmul.u32 %v3539, 14564
        %v3543 = vmul.u32 %v3539, 58254
        %v3544 = vmul.u32 %v3540, 14564
        %v3545 = vmul.u32 %v3540, 58254
        %v3546 = vshll.u32 %v3543, 16
        %v3547 = vshrl.u32 %v3543, 16
        %v3548 = vshll.u32 %v3544, 16
        %v3549 = vshrl.u32 %v3544, 16
        %vm3550 = vc.u32 %v3542, %v3546
        %v3551 = vsel %vm3550, 1, 0
        %v3552 = vadd.s32 %v3542, %v3546
        %v3553 = vadd.s32 %v3545, %v3551
        %vm3554 = vc.u32 %v3552, %v3548
        %v3555 = vsel %vm3554, 1, 0
        %v3556 = vadd.s32 %v3552, %v3548
        %v3557 = vadd.s32 %v3553, %v3555
        %v3558 = vadd.s32 %v3557, %v3547
        %v3559 = vadd.s32 %v3558, %v3549
        %v3560 = vshrl.u32 %v3559, 4
        %v3561 = vmul.u32 %v3560, 18
        %v3562 = vsub.s32 %v3538, %v3561
        %v3563 = vsub.s32 0, %v3562
        %v3564 = vsel %vm3536, %v3563, %v3562
        %vm3565 = vcmp.lt.s32.totalorder %v3053, 0
        %v3566 = vsub.s32 0, %v3053
        %v3567 = vsel %vm3565, %v3566, %v3053
        %v3568 = vand.u32 %v3567, 65535
        %v3569 = vshrl.u32 %v3567, 16
        %v3571 = vmul.u32 %v3568, 14564
        %v3572 = vmul.u32 %v3568, 58254
        %v3573 = vmul.u32 %v3569, 14564
        %v3574 = vmul.u32 %v3569, 58254
        %v3575 = vshll.u32 %v3572, 16
        %v3576 = vshrl.u32 %v3572, 16
        %v3577 = vshll.u32 %v3573, 16
        %v3578 = vshrl.u32 %v3573, 16
        %vm3579 = vc.u32 %v3571, %v3575
        %v3580 = vsel %vm3579, 1, 0
        %v3581 = vadd.s32 %v3571, %v3575
        %v3582 = vadd.s32 %v3574, %v3580
        %vm3583 = vc.u32 %v3581, %v3577
        %v3584 = vsel %vm3583, 1, 0
        %v3585 = vadd.s32 %v3581, %v3577
        %v3586 = vadd.s32 %v3582, %v3584
        %v3587 = vadd.s32 %v3586, %v3576
        %v3588 = vadd.s32 %v3587, %v3578
        %v3589 = vshrl.u32 %v3588, 4
        %v3590 = vmul.u32 %v3589, 18
        %v3591 = vsub.s32 %v3567, %v3590
        %v3592 = vsub.s32 0, %v3591
        %v3593 = vsel %vm3565, %v3592, %v3591
        %vm3594 = vcmp.lt.s32.totalorder %v3054, 0
        %v3595 = vsub.s32 0, %v3054
        %v3596 = vsel %vm3594, %v3595, %v3054
        %v3597 = vand.u32 %v3596, 65535
        %v3598 = vshrl.u32 %v3596, 16
        %v3600 = vmul.u32 %v3597, 14564
        %v3601 = vmul.u32 %v3597, 58254
        %v3602 = vmul.u32 %v3598, 14564
        %v3603 = vmul.u32 %v3598, 58254
        %v3604 = vshll.u32 %v3601, 16
        %v3605 = vshrl.u32 %v3601, 16
        %v3606 = vshll.u32 %v3602, 16
        %v3607 = vshrl.u32 %v3602, 16
        %vm3608 = vc.u32 %v3600, %v3604
        %v3609 = vsel %vm3608, 1, 0
        %v3610 = vadd.s32 %v3600, %v3604
        %v3611 = vadd.s32 %v3603, %v3609
        %vm3612 = vc.u32 %v3610, %v3606
        %v3613 = vsel %vm3612, 1, 0
        %v3614 = vadd.s32 %v3610, %v3606
        %v3615 = vadd.s32 %v3611, %v3613
        %v3616 = vadd.s32 %v3615, %v3605
        %v3617 = vadd.s32 %v3616, %v3607
        %v3618 = vshrl.u32 %v3617, 4
        %v3619 = vmul.u32 %v3618, 18
        %v3620 = vsub.s32 %v3596, %v3619
        %v3621 = vsub.s32 0, %v3620
        %v3622 = vsel %vm3594, %v3621, %v3620
        %vm3623 = vcmp.lt.s32.totalorder %v3055, 0
        %v3624 = vsub.s32 0, %v3055
        %v3625 = vsel %vm3623, %v3624, %v3055
        %v3626 = vand.u32 %v3625, 65535
        %v3627 = vshrl.u32 %v3625, 16
        %v3629 = vmul.u32 %v3626, 14564
        %v3630 = vmul.u32 %v3626, 58254
        %v3631 = vmul.u32 %v3627, 14564
        %v3632 = vmul.u32 %v3627, 58254
        %v3633 = vshll.u32 %v3630, 16
        %v3634 = vshrl.u32 %v3630, 16
        %v3635 = vshll.u32 %v3631, 16
        %v3636 = vshrl.u32 %v3631, 16
        %vm3637 = vc.u32 %v3629, %v3633
        %v3638 = vsel %vm3637, 1, 0
        %v3639 = vadd.s32 %v3629, %v3633
        %v3640 = vadd.s32 %v3632, %v3638
        %vm3641 = vc.u32 %v3639, %v3635
        %v3642 = vsel %vm3641, 1, 0
        %v3643 = vadd.s32 %v3639, %v3635
        %v3644 = vadd.s32 %v3640, %v3642
        %v3645 = vadd.s32 %v3644, %v3634
        %v3646 = vadd.s32 %v3645, %v3636
        %v3647 = vshrl.u32 %v3646, 4
        %v3648 = vmul.u32 %v3647, 18
        %v3649 = vsub.s32 %v3625, %v3648
        %v3650 = vsub.s32 0, %v3649
        %v3651 = vsel %vm3623, %v3650, %v3649
        %vm3652 = vcmp.lt.s32.totalorder %v3056, 0
        %v3653 = vsub.s32 0, %v3056
        %v3654 = vsel %vm3652, %v3653, %v3056
        %v3655 = vand.u32 %v3654, 65535
        %v3656 = vshrl.u32 %v3654, 16
        %v3658 = vmul.u32 %v3655, 14564
        %v3659 = vmul.u32 %v3655, 58254
        %v3660 = vmul.u32 %v3656, 14564
        %v3661 = vmul.u32 %v3656, 58254
        %v3662 = vshll.u32 %v3659, 16
        %v3663 = vshrl.u32 %v3659, 16
        %v3664 = vshll.u32 %v3660, 16
        %v3665 = vshrl.u32 %v3660, 16
        %vm3666 = vc.u32 %v3658, %v3662
        %v3667 = vsel %vm3666, 1, 0
        %v3668 = vadd.s32 %v3658, %v3662
        %v3669 = vadd.s32 %v3661, %v3667
        %vm3670 = vc.u32 %v3668, %v3664
        %v3671 = vsel %vm3670, 1, 0
        %v3672 = vadd.s32 %v3668, %v3664
        %v3673 = vadd.s32 %v3669, %v3671
        %v3674 = vadd.s32 %v3673, %v3663
        %v3675 = vadd.s32 %v3674, %v3665
        %v3676 = vshrl.u32 %v3675, 4
        %v3677 = vmul.u32 %v3676, 18
        %v3678 = vsub.s32 %v3654, %v3677
        %v3679 = vsub.s32 0, %v3678
        %v3680 = vsel %vm3652, %v3679, %v3678
        %vm3681 = vcmp.lt.s32.totalorder %v3057, 0
        %v3682 = vsub.s32 0, %v3057
        %v3683 = vsel %vm3681, %v3682, %v3057
        %v3684 = vand.u32 %v3683, 65535
        %v3685 = vshrl.u32 %v3683, 16
        %v3687 = vmul.u32 %v3684, 14564
        %v3688 = vmul.u32 %v3684, 58254
        %v3689 = vmul.u32 %v3685, 14564
        %v3690 = vmul.u32 %v3685, 58254
        %v3691 = vshll.u32 %v3688, 16
        %v3692 = vshrl.u32 %v3688, 16
        %v3693 = vshll.u32 %v3689, 16
        %v3694 = vshrl.u32 %v3689, 16
        %vm3695 = vc.u32 %v3687, %v3691
        %v3696 = vsel %vm3695, 1, 0
        %v3697 = vadd.s32 %v3687, %v3691
        %v3698 = vadd.s32 %v3690, %v3696
        %vm3699 = vc.u32 %v3697, %v3693
        %v3700 = vsel %vm3699, 1, 0
        %v3701 = vadd.s32 %v3697, %v3693
        %v3702 = vadd.s32 %v3698, %v3700
        %v3703 = vadd.s32 %v3702, %v3692
        %v3704 = vadd.s32 %v3703, %v3694
        %v3705 = vshrl.u32 %v3704, 4
        %v3706 = vmul.u32 %v3705, 18
        %v3707 = vsub.s32 %v3683, %v3706
        %v3708 = vsub.s32 0, %v3707
        %v3709 = vsel %vm3681, %v3708, %v3707
        %vm3710 = vcmp.lt.s32.totalorder %v3058, 0
        %v3711 = vsub.s32 0, %v3058
        %v3712 = vsel %vm3710, %v3711, %v3058
        %v3713 = vand.u32 %v3712, 65535
        %v3714 = vshrl.u32 %v3712, 16
        %v3716 = vmul.u32 %v3713, 14564
        %v3717 = vmul.u32 %v3713, 58254
        %v3718 = vmul.u32 %v3714, 14564
        %v3719 = vmul.u32 %v3714, 58254
        %v3720 = vshll.u32 %v3717, 16
        %v3721 = vshrl.u32 %v3717, 16
        %v3722 = vshll.u32 %v3718, 16
        %v3723 = vshrl.u32 %v3718, 16
        %vm3724 = vc.u32 %v3716, %v3720
        %v3725 = vsel %vm3724, 1, 0
        %v3726 = vadd.s32 %v3716, %v3720
        %v3727 = vadd.s32 %v3719, %v3725
        %vm3728 = vc.u32 %v3726, %v3722
        %v3729 = vsel %vm3728, 1, 0
        %v3730 = vadd.s32 %v3726, %v3722
        %v3731 = vadd.s32 %v3727, %v3729
        %v3732 = vadd.s32 %v3731, %v3721
        %v3733 = vadd.s32 %v3732, %v3723
        %v3734 = vshrl.u32 %v3733, 4
        %v3735 = vmul.u32 %v3734, 18
        %v3736 = vsub.s32 %v3712, %v3735
        %v3737 = vsub.s32 0, %v3736
        %v3738 = vsel %vm3710, %v3737, %v3736
        %vm3739 = vcmp.lt.s32.totalorder %v3059, 0
        %v3740 = vsub.s32 0, %v3059
        %v3741 = vsel %vm3739, %v3740, %v3059
        %v3742 = vand.u32 %v3741, 65535
        %v3743 = vshrl.u32 %v3741, 16
        %v3745 = vmul.u32 %v3742, 14564
        %v3746 = vmul.u32 %v3742, 58254
        %v3747 = vmul.u32 %v3743, 14564
        %v3748 = vmul.u32 %v3743, 58254
        %v3749 = vshll.u32 %v3746, 16
        %v3750 = vshrl.u32 %v3746, 16
        %v3751 = vshll.u32 %v3747, 16
        %v3752 = vshrl.u32 %v3747, 16
        %vm3753 = vc.u32 %v3745, %v3749
        %v3754 = vsel %vm3753, 1, 0
        %v3755 = vadd.s32 %v3745, %v3749
        %v3756 = vadd.s32 %v3748, %v3754
        %vm3757 = vc.u32 %v3755, %v3751
        %v3758 = vsel %vm3757, 1, 0
        %v3759 = vadd.s32 %v3755, %v3751
        %v3760 = vadd.s32 %v3756, %v3758
        %v3761 = vadd.s32 %v3760, %v3750
        %v3762 = vadd.s32 %v3761, %v3752
        %v3763 = vshrl.u32 %v3762, 4
        %v3764 = vmul.u32 %v3763, 18
        %v3765 = vsub.s32 %v3741, %v3764
        %v3766 = vsub.s32 0, %v3765
        %v3767 = vsel %vm3739, %v3766, %v3765
        %vm3768 = vcmp.lt.s32.totalorder %v3060, 0
        %v3769 = vsub.s32 0, %v3060
        %v3770 = vsel %vm3768, %v3769, %v3060
        %v3771 = vand.u32 %v3770, 65535
        %v3772 = vshrl.u32 %v3770, 16
        %v3774 = vmul.u32 %v3771, 14564
        %v3775 = vmul.u32 %v3771, 58254
        %v3776 = vmul.u32 %v3772, 14564
        %v3777 = vmul.u32 %v3772, 58254
        %v3778 = vshll.u32 %v3775, 16
        %v3779 = vshrl.u32 %v3775, 16
        %v3780 = vshll.u32 %v3776, 16
        %v3781 = vshrl.u32 %v3776, 16
        %vm3782 = vc.u32 %v3774, %v3778
        %v3783 = vsel %vm3782, 1, 0
        %v3784 = vadd.s32 %v3774, %v3778
        %v3785 = vadd.s32 %v3777, %v3783
        %vm3786 = vc.u32 %v3784, %v3780
        %v3787 = vsel %vm3786, 1, 0
        %v3788 = vadd.s32 %v3784, %v3780
        %v3789 = vadd.s32 %v3785, %v3787
        %v3790 = vadd.s32 %v3789, %v3779
        %v3791 = vadd.s32 %v3790, %v3781
        %v3792 = vshrl.u32 %v3791, 4
        %v3793 = vmul.u32 %v3792, 18
        %v3794 = vsub.s32 %v3770, %v3793
        %v3795 = vsub.s32 0, %v3794
        %v3796 = vsel %vm3768, %v3795, %v3794
        %vm3797 = vcmp.lt.s32.totalorder %v3061, 0
        %v3798 = vsub.s32 0, %v3061
        %v3799 = vsel %vm3797, %v3798, %v3061
        %v3800 = vand.u32 %v3799, 65535
        %v3801 = vshrl.u32 %v3799, 16
        %v3803 = vmul.u32 %v3800, 14564
        %v3804 = vmul.u32 %v3800, 58254
        %v3805 = vmul.u32 %v3801, 14564
        %v3806 = vmul.u32 %v3801, 58254
        %v3807 = vshll.u32 %v3804, 16
        %v3808 = vshrl.u32 %v3804, 16
        %v3809 = vshll.u32 %v3805, 16
        %v3810 = vshrl.u32 %v3805, 16
        %vm3811 = vc.u32 %v3803, %v3807
        %v3812 = vsel %vm3811, 1, 0
        %v3813 = vadd.s32 %v3803, %v3807
        %v3814 = vadd.s32 %v3806, %v3812
        %vm3815 = vc.u32 %v3813, %v3809
        %v3816 = vsel %vm3815, 1, 0
        %v3817 = vadd.s32 %v3813, %v3809
        %v3818 = vadd.s32 %v3814, %v3816
        %v3819 = vadd.s32 %v3818, %v3808
        %v3820 = vadd.s32 %v3819, %v3810
        %v3821 = vshrl.u32 %v3820, 4
        %v3822 = vmul.u32 %v3821, 18
        %v3823 = vsub.s32 %v3799, %v3822
        %v3824 = vsub.s32 0, %v3823
        %v3825 = vsel %vm3797, %v3824, %v3823
        %vm3826 = vcmp.lt.s32.totalorder %v3062, 0
        %v3827 = vsub.s32 0, %v3062
        %v3828 = vsel %vm3826, %v3827, %v3062
        %v3829 = vand.u32 %v3828, 65535
        %v3830 = vshrl.u32 %v3828, 16
        %v3832 = vmul.u32 %v3829, 14564
        %v3833 = vmul.u32 %v3829, 58254
        %v3834 = vmul.u32 %v3830, 14564
        %v3835 = vmul.u32 %v3830, 58254
        %v3836 = vshll.u32 %v3833, 16
        %v3837 = vshrl.u32 %v3833, 16
        %v3838 = vshll.u32 %v3834, 16
        %v3839 = vshrl.u32 %v3834, 16
        %vm3840 = vc.u32 %v3832, %v3836
        %v3841 = vsel %vm3840, 1, 0
        %v3842 = vadd.s32 %v3832, %v3836
        %v3843 = vadd.s32 %v3835, %v3841
        %vm3844 = vc.u32 %v3842, %v3838
        %v3845 = vsel %vm3844, 1, 0
        %v3846 = vadd.s32 %v3842, %v3838
        %v3847 = vadd.s32 %v3843, %v3845
        %v3848 = vadd.s32 %v3847, %v3837
        %v3849 = vadd.s32 %v3848, %v3839
        %v3850 = vshrl.u32 %v3849, 4
        %v3851 = vmul.u32 %v3850, 18
        %v3852 = vsub.s32 %v3828, %v3851
        %v3853 = vsub.s32 0, %v3852
        %v3854 = vsel %vm3826, %v3853, %v3852
        %vm3855 = vcmp.lt.s32.totalorder %v3063, 0
        %v3856 = vsub.s32 0, %v3063
        %v3857 = vsel %vm3855, %v3856, %v3063
        %v3858 = vand.u32 %v3857, 65535
        %v3859 = vshrl.u32 %v3857, 16
        %v3861 = vmul.u32 %v3858, 14564
        %v3862 = vmul.u32 %v3858, 58254
        %v3863 = vmul.u32 %v3859, 14564
        %v3864 = vmul.u32 %v3859, 58254
        %v3865 = vshll.u32 %v3862, 16
        %v3866 = vshrl.u32 %v3862, 16
        %v3867 = vshll.u32 %v3863, 16
        %v3868 = vshrl.u32 %v3863, 16
        %vm3869 = vc.u32 %v3861, %v3865
        %v3870 = vsel %vm3869, 1, 0
        %v3871 = vadd.s32 %v3861, %v3865
        %v3872 = vadd.s32 %v3864, %v3870
        %vm3873 = vc.u32 %v3871, %v3867
        %v3874 = vsel %vm3873, 1, 0
        %v3875 = vadd.s32 %v3871, %v3867
        %v3876 = vadd.s32 %v3872, %v3874
        %v3877 = vadd.s32 %v3876, %v3866
        %v3878 = vadd.s32 %v3877, %v3868
        %v3879 = vshrl.u32 %v3878, 4
        %v3880 = vmul.u32 %v3879, 18
        %v3881 = vsub.s32 %v3857, %v3880
        %v3882 = vsub.s32 0, %v3881
        %v3883 = vsel %vm3855, %v3882, %v3881
        %vm3884 = vcmp.lt.s32.totalorder %v3064, 0
        %v3885 = vsub.s32 0, %v3064
        %v3886 = vsel %vm3884, %v3885, %v3064
        %v3887 = vand.u32 %v3886, 65535
        %v3888 = vshrl.u32 %v3886, 16
        %v3890 = vmul.u32 %v3887, 14564
        %v3891 = vmul.u32 %v3887, 58254
        %v3892 = vmul.u32 %v3888, 14564
        %v3893 = vmul.u32 %v3888, 58254
        %v3894 = vshll.u32 %v3891, 16
        %v3895 = vshrl.u32 %v3891, 16
        %v3896 = vshll.u32 %v3892, 16
        %v3897 = vshrl.u32 %v3892, 16
        %vm3898 = vc.u32 %v3890, %v3894
        %v3899 = vsel %vm3898, 1, 0
        %v3900 = vadd.s32 %v3890, %v3894
        %v3901 = vadd.s32 %v3893, %v3899
        %vm3902 = vc.u32 %v3900, %v3896
        %v3903 = vsel %vm3902, 1, 0
        %v3904 = vadd.s32 %v3900, %v3896
        %v3905 = vadd.s32 %v3901, %v3903
        %v3906 = vadd.s32 %v3905, %v3895
        %v3907 = vadd.s32 %v3906, %v3897
        %v3908 = vshrl.u32 %v3907, 4
        %v3909 = vmul.u32 %v3908, 18
        %v3910 = vsub.s32 %v3886, %v3909
        %v3911 = vsub.s32 0, %v3910
        %v3912 = vsel %vm3884, %v3911, %v3910
        %vm3913 = vcmp.lt.s32.totalorder %v3065, 0
        %v3914 = vsub.s32 0, %v3065
        %v3915 = vsel %vm3913, %v3914, %v3065
        %v3916 = vand.u32 %v3915, 65535
        %v3917 = vshrl.u32 %v3915, 16
        %v3919 = vmul.u32 %v3916, 14564
        %v3920 = vmul.u32 %v3916, 58254
        %v3921 = vmul.u32 %v3917, 14564
        %v3922 = vmul.u32 %v3917, 58254
        %v3923 = vshll.u32 %v3920, 16
        %v3924 = vshrl.u32 %v3920, 16
        %v3925 = vshll.u32 %v3921, 16
        %v3926 = vshrl.u32 %v3921, 16
        %vm3927 = vc.u32 %v3919, %v3923
        %v3928 = vsel %vm3927, 1, 0
        %v3929 = vadd.s32 %v3919, %v3923
        %v3930 = vadd.s32 %v3922, %v3928
        %vm3931 = vc.u32 %v3929, %v3925
        %v3932 = vsel %vm3931, 1, 0
        %v3933 = vadd.s32 %v3929, %v3925
        %v3934 = vadd.s32 %v3930, %v3932
        %v3935 = vadd.s32 %v3934, %v3924
        %v3936 = vadd.s32 %v3935, %v3926
        %v3937 = vshrl.u32 %v3936, 4
        %v3938 = vmul.u32 %v3937, 18
        %v3939 = vsub.s32 %v3915, %v3938
        %v3940 = vsub.s32 0, %v3939
        %v3941 = vsel %vm3913, %v3940, %v3939
        %vm3942 = vcmp.lt.s32.totalorder %v3066, 0
        %v3943 = vsub.s32 0, %v3066
        %v3944 = vsel %vm3942, %v3943, %v3066
        %v3945 = vand.u32 %v3944, 65535
        %v3946 = vshrl.u32 %v3944, 16
        %v3948 = vmul.u32 %v3945, 14564
        %v3949 = vmul.u32 %v3945, 58254
        %v3950 = vmul.u32 %v3946, 14564
        %v3951 = vmul.u32 %v3946, 58254
        %v3952 = vshll.u32 %v3949, 16
        %v3953 = vshrl.u32 %v3949, 16
        %v3954 = vshll.u32 %v3950, 16
        %v3955 = vshrl.u32 %v3950, 16
        %vm3956 = vc.u32 %v3948, %v3952
        %v3957 = vsel %vm3956, 1, 0
        %v3958 = vadd.s32 %v3948, %v3952
        %v3959 = vadd.s32 %v3951, %v3957
        %vm3960 = vc.u32 %v3958, %v3954
        %v3961 = vsel %vm3960, 1, 0
        %v3962 = vadd.s32 %v3958, %v3954
        %v3963 = vadd.s32 %v3959, %v3961
        %v3964 = vadd.s32 %v3963, %v3953
        %v3965 = vadd.s32 %v3964, %v3955
        %v3966 = vshrl.u32 %v3965, 4
        %v3967 = vmul.u32 %v3966, 18
        %v3968 = vsub.s32 %v3944, %v3967
        %v3969 = vsub.s32 0, %v3968
        %v3970 = vsel %vm3942, %v3969, %v3968
        %vm3971 = vcmp.lt.s32.totalorder %v3067, 0
        %v3972 = vsub.s32 0, %v3067
        %v3973 = vsel %vm3971, %v3972, %v3067
        %v3974 = vand.u32 %v3973, 65535
        %v3975 = vshrl.u32 %v3973, 16
        %v3977 = vmul.u32 %v3974, 14564
        %v3978 = vmul.u32 %v3974, 58254
        %v3979 = vmul.u32 %v3975, 14564
        %v3980 = vmul.u32 %v3975, 58254
        %v3981 = vshll.u32 %v3978, 16
        %v3982 = vshrl.u32 %v3978, 16
        %v3983 = vshll.u32 %v3979, 16
        %v3984 = vshrl.u32 %v3979, 16
        %vm3985 = vc.u32 %v3977, %v3981
        %v3986 = vsel %vm3985, 1, 0
        %v3987 = vadd.s32 %v3977, %v3981
        %v3988 = vadd.s32 %v3980, %v3986
        %vm3989 = vc.u32 %v3987, %v3983
        %v3990 = vsel %vm3989, 1, 0
        %v3991 = vadd.s32 %v3987, %v3983
        %v3992 = vadd.s32 %v3988, %v3990
        %v3993 = vadd.s32 %v3992, %v3982
        %v3994 = vadd.s32 %v3993, %v3984
        %v3995 = vshrl.u32 %v3994, 4
        %v3996 = vmul.u32 %v3995, 18
        %v3997 = vsub.s32 %v3973, %v3996
        %v3998 = vsub.s32 0, %v3997
        %v3999 = vsel %vm3971, %v3998, %v3997
        %vm4000 = vcmp.lt.s32.totalorder %v3068, 0
        %v4001 = vsub.s32 0, %v3068
        %v4002 = vsel %vm4000, %v4001, %v3068
        %v4003 = vand.u32 %v4002, 65535
        %v4004 = vshrl.u32 %v4002, 16
        %v4006 = vmul.u32 %v4003, 14564
        %v4007 = vmul.u32 %v4003, 58254
        %v4008 = vmul.u32 %v4004, 14564
        %v4009 = vmul.u32 %v4004, 58254
        %v4010 = vshll.u32 %v4007, 16
        %v4011 = vshrl.u32 %v4007, 16
        %v4012 = vshll.u32 %v4008, 16
        %v4013 = vshrl.u32 %v4008, 16
        %vm4014 = vc.u32 %v4006, %v4010
        %v4015 = vsel %vm4014, 1, 0
        %v4016 = vadd.s32 %v4006, %v4010
        %v4017 = vadd.s32 %v4009, %v4015
        %vm4018 = vc.u32 %v4016, %v4012
        %v4019 = vsel %vm4018, 1, 0
        %v4020 = vadd.s32 %v4016, %v4012
        %v4021 = vadd.s32 %v4017, %v4019
        %v4022 = vadd.s32 %v4021, %v4011
        %v4023 = vadd.s32 %v4022, %v4013
        %v4024 = vshrl.u32 %v4023, 4
        %v4025 = vmul.u32 %v4024, 18
        %v4026 = vsub.s32 %v4002, %v4025
        %v4027 = vsub.s32 0, %v4026
        %v4028 = vsel %vm4000, %v4027, %v4026
        %vm4029 = vcmp.lt.s32.totalorder %v3069, 0
        %v4030 = vsub.s32 0, %v3069
        %v4031 = vsel %vm4029, %v4030, %v3069
        %v4032 = vand.u32 %v4031, 65535
        %v4033 = vshrl.u32 %v4031, 16
        %v4035 = vmul.u32 %v4032, 14564
        %v4036 = vmul.u32 %v4032, 58254
        %v4037 = vmul.u32 %v4033, 14564
        %v4038 = vmul.u32 %v4033, 58254
        %v4039 = vshll.u32 %v4036, 16
        %v4040 = vshrl.u32 %v4036, 16
        %v4041 = vshll.u32 %v4037, 16
        %v4042 = vshrl.u32 %v4037, 16
        %vm4043 = vc.u32 %v4035, %v4039
        %v4044 = vsel %vm4043, 1, 0
        %v4045 = vadd.s32 %v4035, %v4039
        %v4046 = vadd.s32 %v4038, %v4044
        %vm4047 = vc.u32 %v4045, %v4041
        %v4048 = vsel %vm4047, 1, 0
        %v4049 = vadd.s32 %v4045, %v4041
        %v4050 = vadd.s32 %v4046, %v4048
        %v4051 = vadd.s32 %v4050, %v4040
        %v4052 = vadd.s32 %v4051, %v4042
        %v4053 = vshrl.u32 %v4052, 4
        %v4054 = vmul.u32 %v4053, 18
        %v4055 = vsub.s32 %v4031, %v4054
        %v4056 = vsub.s32 0, %v4055
        %v4057 = vsel %vm4029, %v4056, %v4055
        %vm4058 = vcmp.lt.s32.totalorder %v3070, 0
        %v4059 = vsub.s32 0, %v3070
        %v4060 = vsel %vm4058, %v4059, %v3070
        %v4061 = vand.u32 %v4060, 65535
        %v4062 = vshrl.u32 %v4060, 16
        %v4064 = vmul.u32 %v4061, 14564
        %v4065 = vmul.u32 %v4061, 58254
        %v4066 = vmul.u32 %v4062, 14564
        %v4067 = vmul.u32 %v4062, 58254
        %v4068 = vshll.u32 %v4065, 16
        %v4069 = vshrl.u32 %v4065, 16
        %v4070 = vshll.u32 %v4066, 16
        %v4071 = vshrl.u32 %v4066, 16
        %vm4072 = vc.u32 %v4064, %v4068
        %v4073 = vsel %vm4072, 1, 0
        %v4074 = vadd.s32 %v4064, %v4068
        %v4075 = vadd.s32 %v4067, %v4073
        %vm4076 = vc.u32 %v4074, %v4070
        %v4077 = vsel %vm4076, 1, 0
        %v4078 = vadd.s32 %v4074, %v4070
        %v4079 = vadd.s32 %v4075, %v4077
        %v4080 = vadd.s32 %v4079, %v4069
        %v4081 = vadd.s32 %v4080, %v4071
        %v4082 = vshrl.u32 %v4081, 4
        %v4083 = vmul.u32 %v4082, 18
        %v4084 = vsub.s32 %v4060, %v4083
        %v4085 = vsub.s32 0, %v4084
        %v4086 = vsel %vm4058, %v4085, %v4084
        %vm4087 = vcmp.lt.s32.totalorder %v3071, 0
        %v4088 = vsub.s32 0, %v3071
        %v4089 = vsel %vm4087, %v4088, %v3071
        %v4090 = vand.u32 %v4089, 65535
        %v4091 = vshrl.u32 %v4089, 16
        %v4093 = vmul.u32 %v4090, 14564
        %v4094 = vmul.u32 %v4090, 58254
        %v4095 = vmul.u32 %v4091, 14564
        %v4096 = vmul.u32 %v4091, 58254
        %v4097 = vshll.u32 %v4094, 16
        %v4098 = vshrl.u32 %v4094, 16
        %v4099 = vshll.u32 %v4095, 16
        %v4100 = vshrl.u32 %v4095, 16
        %vm4101 = vc.u32 %v4093, %v4097
        %v4102 = vsel %vm4101, 1, 0
        %v4103 = vadd.s32 %v4093, %v4097
        %v4104 = vadd.s32 %v4096, %v4102
        %vm4105 = vc.u32 %v4103, %v4099
        %v4106 = vsel %vm4105, 1, 0
        %v4107 = vadd.s32 %v4103, %v4099
        %v4108 = vadd.s32 %v4104, %v4106
        %v4109 = vadd.s32 %v4108, %v4098
        %v4110 = vadd.s32 %v4109, %v4100
        %v4111 = vshrl.u32 %v4110, 4
        %v4112 = vmul.u32 %v4111, 18
        %v4113 = vsub.s32 %v4089, %v4112
        %v4114 = vsub.s32 0, %v4113
        %v4115 = vsel %vm4087, %v4114, %v4113
        %vm4116 = vcmp.ne.s32.totalorder %v3100, 0
        %vm4117 = vcmp.ne.s32.totalorder %v3129, 0
        %vm4118 = vcmp.ne.s32.totalorder %v3158, 0
        %vm4119 = vcmp.ne.s32.totalorder %v3187, 0
        %vm4120 = vcmp.ne.s32.totalorder %v3216, 0
        %vm4121 = vcmp.ne.s32.totalorder %v3245, 0
        %vm4122 = vcmp.ne.s32.totalorder %v3274, 0
        %vm4123 = vcmp.ne.s32.totalorder %v3303, 0
        %vm4124 = vcmp.ne.s32.totalorder %v3332, 0
        %vm4125 = vcmp.ne.s32.totalorder %v3361, 0
        %vm4126 = vcmp.ne.s32.totalorder %v3390, 0
        %vm4127 = vcmp.ne.s32.totalorder %v3419, 0
        %vm4128 = vcmp.ne.s32.totalorder %v3448, 0
        %vm4129 = vcmp.ne.s32.totalorder %v3477, 0
        %vm4130 = vcmp.ne.s32.totalorder %v3506, 0
        %vm4131 = vcmp.ne.s32.totalorder %v3535, 0
        %vm4132 = vcmp.ne.s32.totalorder %v3564, 0
        %vm4133 = vcmp.ne.s32.totalorder %v3593, 0
        %vm4134 = vcmp.ne.s32.totalorder %v3622, 0
        %vm4135 = vcmp.ne.s32.totalorder %v3651, 0
        %vm4136 = vcmp.ne.s32.totalorder %v3680, 0
        %vm4137 = vcmp.ne.s32.totalorder %v3709, 0
        %vm4138 = vcmp.ne.s32.totalorder %v3738, 0
        %vm4139 = vcmp.ne.s32.totalorder %v3767, 0
        %vm4140 = vcmp.ne.s32.totalorder %v3796, 0
        %vm4141 = vcmp.ne.s32.totalorder %v3825, 0
        %vm4142 = vcmp.ne.s32.totalorder %v3854, 0
        %vm4143 = vcmp.ne.s32.totalorder %v3883, 0
        %vm4144 = vcmp.ne.s32.totalorder %v3912, 0
        %vm4145 = vcmp.ne.s32.totalorder %v3941, 0
        %vm4146 = vcmp.ne.s32.totalorder %v3970, 0
        %vm4147 = vcmp.ne.s32.totalorder %v3999, 0
        %vm4148 = vcmp.ne.s32.totalorder %v4028, 0
        %vm4149 = vcmp.ne.s32.totalorder %v4057, 0
        %vm4150 = vcmp.ne.s32.totalorder %v4086, 0
        %vm4151 = vcmp.ne.s32.totalorder %v4115, 0
        %vm4152 = vcmp.lt.s32.totalorder %v3100, 0
        %vm4153 = vcmp.lt.s32.totalorder %v3129, 0
        %vm4154 = vcmp.lt.s32.totalorder %v3158, 0
        %vm4155 = vcmp.lt.s32.totalorder %v3187, 0
        %vm4156 = vcmp.lt.s32.totalorder %v3216, 0
        %vm4157 = vcmp.lt.s32.totalorder %v3245, 0
        %vm4158 = vcmp.lt.s32.totalorder %v3274, 0
        %vm4159 = vcmp.lt.s32.totalorder %v3303, 0
        %vm4160 = vcmp.lt.s32.totalorder %v3332, 0
        %vm4161 = vcmp.lt.s32.totalorder %v3361, 0
        %vm4162 = vcmp.lt.s32.totalorder %v3390, 0
        %vm4163 = vcmp.lt.s32.totalorder %v3419, 0
        %vm4164 = vcmp.lt.s32.totalorder %v3448, 0
        %vm4165 = vcmp.lt.s32.totalorder %v3477, 0
        %vm4166 = vcmp.lt.s32.totalorder %v3506, 0
        %vm4167 = vcmp.lt.s32.totalorder %v3535, 0
        %vm4168 = vcmp.lt.s32.totalorder %v3564, 0
        %vm4169 = vcmp.lt.s32.totalorder %v3593, 0
        %vm4170 = vcmp.lt.s32.totalorder %v3622, 0
        %vm4171 = vcmp.lt.s32.totalorder %v3651, 0
        %vm4172 = vcmp.lt.s32.totalorder %v3680, 0
        %vm4173 = vcmp.lt.s32.totalorder %v3709, 0
        %vm4174 = vcmp.lt.s32.totalorder %v3738, 0
        %vm4175 = vcmp.lt.s32.totalorder %v3767, 0
        %vm4176 = vcmp.lt.s32.totalorder %v3796, 0
        %vm4177 = vcmp.lt.s32.totalorder %v3825, 0
        %vm4178 = vcmp.lt.s32.totalorder %v3854, 0
        %vm4179 = vcmp.lt.s32.totalorder %v3883, 0
        %vm4180 = vcmp.lt.s32.totalorder %v3912, 0
        %vm4181 = vcmp.lt.s32.totalorder %v3941, 0
        %vm4182 = vcmp.lt.s32.totalorder %v3970, 0
        %vm4183 = vcmp.lt.s32.totalorder %v3999, 0
        %vm4184 = vcmp.lt.s32.totalorder %v4028, 0
        %vm4185 = vcmp.lt.s32.totalorder %v4057, 0
        %vm4186 = vcmp.lt.s32.totalorder %v4086, 0
        %vm4187 = vcmp.lt.s32.totalorder %v4115, 0
        %vm4188 = vmand %vm4152, %vm4116
        %vm4189 = vmand %vm4153, %vm4117
        %vm4190 = vmand %vm4154, %vm4118
        %vm4191 = vmand %vm4155, %vm4119
        %vm4192 = vmand %vm4156, %vm4120
        %vm4193 = vmand %vm4157, %vm4121
        %vm4194 = vmand %vm4158, %vm4122
        %vm4195 = vmand %vm4159, %vm4123
        %vm4196 = vmand %vm4160, %vm4124
        %vm4197 = vmand %vm4161, %vm4125
        %vm4198 = vmand %vm4162, %vm4126
        %vm4199 = vmand %vm4163, %vm4127
        %vm4200 = vmand %vm4164, %vm4128
        %vm4201 = vmand %vm4165, %vm4129
        %vm4202 = vmand %vm4166, %vm4130
        %vm4203 = vmand %vm4167, %vm4131
        %vm4204 = vmand %vm4168, %vm4132
        %vm4205 = vmand %vm4169, %vm4133
        %vm4206 = vmand %vm4170, %vm4134
        %vm4207 = vmand %vm4171, %vm4135
        %vm4208 = vmand %vm4172, %vm4136
        %vm4209 = vmand %vm4173, %vm4137
        %vm4210 = vmand %vm4174, %vm4138
        %vm4211 = vmand %vm4175, %vm4139
        %vm4212 = vmand %vm4176, %vm4140
        %vm4213 = vmand %vm4177, %vm4141
        %vm4214 = vmand %vm4178, %vm4142
        %vm4215 = vmand %vm4179, %vm4143
        %vm4216 = vmand %vm4180, %vm4144
        %vm4217 = vmand %vm4181, %vm4145
        %vm4218 = vmand %vm4182, %vm4146
        %vm4219 = vmand %vm4183, %vm4147
        %vm4220 = vmand %vm4184, %vm4148
        %vm4221 = vmand %vm4185, %vm4149
        %vm4222 = vmand %vm4186, %vm4150
        %vm4223 = vmand %vm4187, %vm4151
        %v4224 = vadd.s32 %v3100, 18
        %v4225 = vadd.s32 %v3129, 18
        %v4226 = vadd.s32 %v3158, 18
        %v4227 = vadd.s32 %v3187, 18
        %v4228 = vadd.s32 %v3216, 18
        %v4229 = vadd.s32 %v3245, 18
        %v4230 = vadd.s32 %v3274, 18
        %v4231 = vadd.s32 %v3303, 18
        %v4232 = vadd.s32 %v3332, 18
        %v4233 = vadd.s32 %v3361, 18
        %v4234 = vadd.s32 %v3390, 18
        %v4235 = vadd.s32 %v3419, 18
        %v4236 = vadd.s32 %v3448, 18
        %v4237 = vadd.s32 %v3477, 18
        %v4238 = vadd.s32 %v3506, 18
        %v4239 = vadd.s32 %v3535, 18
        %v4240 = vadd.s32 %v3564, 18
        %v4241 = vadd.s32 %v3593, 18
        %v4242 = vadd.s32 %v3622, 18
        %v4243 = vadd.s32 %v3651, 18
        %v4244 = vadd.s32 %v3680, 18
        %v4245 = vadd.s32 %v3709, 18
        %v4246 = vadd.s32 %v3738, 18
        %v4247 = vadd.s32 %v3767, 18
        %v4248 = vadd.s32 %v3796, 18
        %v4249 = vadd.s32 %v3825, 18
        %v4250 = vadd.s32 %v3854, 18
        %v4251 = vadd.s32 %v3883, 18
        %v4252 = vadd.s32 %v3912, 18
        %v4253 = vadd.s32 %v3941, 18
        %v4254 = vadd.s32 %v3970, 18
        %v4255 = vadd.s32 %v3999, 18
        %v4256 = vadd.s32 %v4028, 18
        %v4257 = vadd.s32 %v4057, 18
        %v4258 = vadd.s32 %v4086, 18
        %v4259 = vadd.s32 %v4115, 18
        %v4260 = vsel %vm4188, %v4224, %v3100
        %v4261 = vsel %vm4189, %v4225, %v3129
        %v4262 = vsel %vm4190, %v4226, %v3158
        %v4263 = vsel %vm4191, %v4227, %v3187
        %v4264 = vsel %vm4192, %v4228, %v3216
        %v4265 = vsel %vm4193, %v4229, %v3245
        %v4266 = vsel %vm4194, %v4230, %v3274
        %v4267 = vsel %vm4195, %v4231, %v3303
        %v4268 = vsel %vm4196, %v4232, %v3332
        %v4269 = vsel %vm4197, %v4233, %v3361
        %v4270 = vsel %vm4198, %v4234, %v3390
        %v4271 = vsel %vm4199, %v4235, %v3419
        %v4272 = vsel %vm4200, %v4236, %v3448
        %v4273 = vsel %vm4201, %v4237, %v3477
        %v4274 = vsel %vm4202, %v4238, %v3506
        %v4275 = vsel %vm4203, %v4239, %v3535
        %v4276 = vsel %vm4204, %v4240, %v3564
        %v4277 = vsel %vm4205, %v4241, %v3593
        %v4278 = vsel %vm4206, %v4242, %v3622
        %v4279 = vsel %vm4207, %v4243, %v3651
        %v4280 = vsel %vm4208, %v4244, %v3680
        %v4281 = vsel %vm4209, %v4245, %v3709
        %v4282 = vsel %vm4210, %v4246, %v3738
        %v4283 = vsel %vm4211, %v4247, %v3767
        %v4284 = vsel %vm4212, %v4248, %v3796
        %v4285 = vsel %vm4213, %v4249, %v3825
        %v4286 = vsel %vm4214, %v4250, %v3854
        %v4287 = vsel %vm4215, %v4251, %v3883
        %v4288 = vsel %vm4216, %v4252, %v3912
        %v4289 = vsel %vm4217, %v4253, %v3941
        %v4290 = vsel %vm4218, %v4254, %v3970
        %v4291 = vsel %vm4219, %v4255, %v3999
        %v4292 = vsel %vm4220, %v4256, %v4028
        %v4293 = vsel %vm4221, %v4257, %v4057
        %v4294 = vsel %vm4222, %v4258, %v4086
        %v4295 = vsel %vm4223, %v4259, %v4115
        %vm4296 = vcmp.lt.s32.totalorder %v4260, 16
        %vm4297 = vcmp.lt.s32.totalorder %v4261, 16
        %vm4298 = vcmp.lt.s32.totalorder %v4262, 16
        %vm4299 = vcmp.lt.s32.totalorder %v4263, 16
        %vm4300 = vcmp.lt.s32.totalorder %v4264, 16
        %vm4301 = vcmp.lt.s32.totalorder %v4265, 16
        %vm4302 = vcmp.lt.s32.totalorder %v4266, 16
        %vm4303 = vcmp.lt.s32.totalorder %v4267, 16
        %vm4304 = vcmp.lt.s32.totalorder %v4268, 16
        %vm4305 = vcmp.lt.s32.totalorder %v4269, 16
        %vm4306 = vcmp.lt.s32.totalorder %v4270, 16
        %vm4307 = vcmp.lt.s32.totalorder %v4271, 16
        %vm4308 = vcmp.lt.s32.totalorder %v4272, 16
        %vm4309 = vcmp.lt.s32.totalorder %v4273, 16
        %vm4310 = vcmp.lt.s32.totalorder %v4274, 16
        %vm4311 = vcmp.lt.s32.totalorder %v4275, 16
        %vm4312 = vcmp.lt.s32.totalorder %v4276, 16
        %vm4313 = vcmp.lt.s32.totalorder %v4277, 16
        %vm4314 = vcmp.lt.s32.totalorder %v4278, 16
        %vm4315 = vcmp.lt.s32.totalorder %v4279, 16
        %vm4316 = vcmp.lt.s32.totalorder %v4280, 16
        %vm4317 = vcmp.lt.s32.totalorder %v4281, 16
        %vm4318 = vcmp.lt.s32.totalorder %v4282, 16
        %vm4319 = vcmp.lt.s32.totalorder %v4283, 16
        %vm4320 = vcmp.lt.s32.totalorder %v4284, 16
        %vm4321 = vcmp.lt.s32.totalorder %v4285, 16
        %vm4322 = vcmp.lt.s32.totalorder %v4286, 16
        %vm4323 = vcmp.lt.s32.totalorder %v4287, 16
        %vm4324 = vcmp.lt.s32.totalorder %v4288, 16
        %vm4325 = vcmp.lt.s32.totalorder %v4289, 16
        %vm4326 = vcmp.lt.s32.totalorder %v4290, 16
        %vm4327 = vcmp.lt.s32.totalorder %v4291, 16
        %vm4328 = vcmp.lt.s32.totalorder %v4292, 16
        %vm4329 = vcmp.lt.s32.totalorder %v4293, 16
        %vm4330 = vcmp.lt.s32.totalorder %v4294, 16
        %vm4331 = vcmp.lt.s32.totalorder %v4295, 16
        %v4332 = vsel %vm4296, 1, 0
        %v4333 = vsel %vm4297, 1, 0
        %v4334 = vsel %vm4298, 1, 0
        %v4335 = vsel %vm4299, 1, 0
        %v4336 = vsel %vm4300, 1, 0
        %v4337 = vsel %vm4301, 1, 0
        %v4338 = vsel %vm4302, 1, 0
        %v4339 = vsel %vm4303, 1, 0
        %v4340 = vsel %vm4304, 1, 0
        %v4341 = vsel %vm4305, 1, 0
        %v4342 = vsel %vm4306, 1, 0
        %v4343 = vsel %vm4307, 1, 0
        %v4344 = vsel %vm4308, 1, 0
        %v4345 = vsel %vm4309, 1, 0
        %v4346 = vsel %vm4310, 1, 0
        %v4347 = vsel %vm4311, 1, 0
        %v4348 = vsel %vm4312, 1, 0
        %v4349 = vsel %vm4313, 1, 0
        %v4350 = vsel %vm4314, 1, 0
        %v4351 = vsel %vm4315, 1, 0
        %v4352 = vsel %vm4316, 1, 0
        %v4353 = vsel %vm4317, 1, 0
        %v4354 = vsel %vm4318, 1, 0
        %v4355 = vsel %vm4319, 1, 0
        %v4356 = vsel %vm4320, 1, 0
        %v4357 = vsel %vm4321, 1, 0
        %v4358 = vsel %vm4322, 1, 0
        %v4359 = vsel %vm4323, 1, 0
        %v4360 = vsel %vm4324, 1, 0
        %v4361 = vsel %vm4325, 1, 0
        %v4362 = vsel %vm4326, 1, 0
        %v4363 = vsel %vm4327, 1, 0
        %v4364 = vsel %vm4328, 1, 0
        %v4365 = vsel %vm4329, 1, 0
        %v4366 = vsel %vm4330, 1, 0
        %v4367 = vsel %vm4331, 1, 0
        %vm4368 = vcmp.eq.s32.totalorder %v4332, 1
        %vm4369 = vcmp.eq.s32.totalorder %v4333, 1
        %vm4370 = vcmp.eq.s32.totalorder %v4334, 1
        %vm4371 = vcmp.eq.s32.totalorder %v4335, 1
        %vm4372 = vcmp.eq.s32.totalorder %v4336, 1
        %vm4373 = vcmp.eq.s32.totalorder %v4337, 1
        %vm4374 = vcmp.eq.s32.totalorder %v4338, 1
        %vm4375 = vcmp.eq.s32.totalorder %v4339, 1
        %vm4376 = vcmp.eq.s32.totalorder %v4340, 1
        %vm4377 = vcmp.eq.s32.totalorder %v4341, 1
        %vm4378 = vcmp.eq.s32.totalorder %v4342, 1
        %vm4379 = vcmp.eq.s32.totalorder %v4343, 1
        %vm4380 = vcmp.eq.s32.totalorder %v4344, 1
        %vm4381 = vcmp.eq.s32.totalorder %v4345, 1
        %vm4382 = vcmp.eq.s32.totalorder %v4346, 1
        %vm4383 = vcmp.eq.s32.totalorder %v4347, 1
        %vm4384 = vcmp.eq.s32.totalorder %v4348, 1
        %vm4385 = vcmp.eq.s32.totalorder %v4349, 1
        %vm4386 = vcmp.eq.s32.totalorder %v4350, 1
        %vm4387 = vcmp.eq.s32.totalorder %v4351, 1
        %vm4388 = vcmp.eq.s32.totalorder %v4352, 1
        %vm4389 = vcmp.eq.s32.totalorder %v4353, 1
        %vm4390 = vcmp.eq.s32.totalorder %v4354, 1
        %vm4391 = vcmp.eq.s32.totalorder %v4355, 1
        %vm4392 = vcmp.eq.s32.totalorder %v4356, 1
        %vm4393 = vcmp.eq.s32.totalorder %v4357, 1
        %vm4394 = vcmp.eq.s32.totalorder %v4358, 1
        %vm4395 = vcmp.eq.s32.totalorder %v4359, 1
        %vm4396 = vcmp.eq.s32.totalorder %v4360, 1
        %vm4397 = vcmp.eq.s32.totalorder %v4361, 1
        %vm4398 = vcmp.eq.s32.totalorder %v4362, 1
        %vm4399 = vcmp.eq.s32.totalorder %v4363, 1
        %vm4400 = vcmp.eq.s32.totalorder %v4364, 1
        %vm4401 = vcmp.eq.s32.totalorder %v4365, 1
        %vm4402 = vcmp.eq.s32.totalorder %v4366, 1
        %vm4403 = vcmp.eq.s32.totalorder %v4367, 1
        %v4404 = vsel %vm4368, %v2999, 0.0
        %v4405 = vsel %vm4369, %v3000, 0.0
        %v4406 = vsel %vm4370, %v3001, 0.0
        %v4407 = vsel %vm4371, %v3002, 0.0
        %v4408 = vsel %vm4372, %v3003, 0.0
        %v4409 = vsel %vm4373, %v3004, 0.0
        %v4410 = vsel %vm4374, %v3005, 0.0
        %v4411 = vsel %vm4375, %v3006, 0.0
        %v4412 = vsel %vm4376, %v3007, 0.0
        %v4413 = vsel %vm4377, %v3008, 0.0
        %v4414 = vsel %vm4378, %v3009, 0.0
        %v4415 = vsel %vm4379, %v3010, 0.0
        %v4416 = vsel %vm4380, %v3011, 0.0
        %v4417 = vsel %vm4381, %v3012, 0.0
        %v4418 = vsel %vm4382, %v3013, 0.0
        %v4419 = vsel %vm4383, %v3014, 0.0
        %v4420 = vsel %vm4384, %v3015, 0.0
        %v4421 = vsel %vm4385, %v3016, 0.0
        %v4422 = vsel %vm4386, %v3017, 0.0
        %v4423 = vsel %vm4387, %v3018, 0.0
        %v4424 = vsel %vm4388, %v3019, 0.0
        %v4425 = vsel %vm4389, %v3020, 0.0
        %v4426 = vsel %vm4390, %v3021, 0.0
        %v4427 = vsel %vm4391, %v3022, 0.0
        %v4428 = vsel %vm4392, %v3023, 0.0
        %v4429 = vsel %vm4393, %v3024, 0.0
        %v4430 = vsel %vm4394, %v3025, 0.0
        %v4431 = vsel %vm4395, %v3026, 0.0
        %v4432 = vsel %vm4396, %v3027, 0.0
        %v4433 = vsel %vm4397, %v3028, 0.0
        %v4434 = vsel %vm4398, %v3029, 0.0
        %v4435 = vsel %vm4399, %v3030, 0.0
        %v4436 = vsel %vm4400, %v3031, 0.0
        %v4437 = vsel %vm4401, %v3032, 0.0
        %v4438 = vsel %vm4402, %v3033, 0.0
        %v4439 = vsel %vm4403, %v3034, 0.0
        %4440 = vst [vmem:[#allocation2] sm:$0xff] 0.0
        %4441 = vst [vmem:[#allocation2 + $0x8] sm:$0xff] 0.0
        %4442 = vst [vmem:[#allocation2 + $0x10] sm:$0x7] 0.0
        %4443 = vst [vmem:[#allocation2 + $0x13] sm:$0xff] %v4404
        %4444 = vst [vmem:[#allocation2 + $0x1b] sm:$0xff] %v4405
        %4445 = vst [vmem:[#allocation2 + $0x23] sm:$0xff] %v4406
        %4446 = vst [vmem:[#allocation2 + $0x2b] sm:$0xff] %v4407
        %4447 = vst [vmem:[#allocation2 + $0x33] sm:$0xff] %v4408
        %4448 = vst [vmem:[#allocation2 + $0x3b] sm:$0xff] %v4409
        %4449 = vst [vmem:[#allocation2 + $0x43] sm:$0xff] %v4410
        %4450 = vst [vmem:[#allocation2 + $0x4b] sm:$0xff] %v4411
        %4451 = vst [vmem:[#allocation2 + $0x53] sm:$0xff] %v4412
        %4452 = vst [vmem:[#allocation2 + $0x5b] sm:$0xff] %v4413
        %4453 = vst [vmem:[#allocation2 + $0x63] sm:$0xff] %v4414
        %4454 = vst [vmem:[#allocation2 + $0x6b] sm:$0xff] %v4415
        %4455 = vst [vmem:[#allocation2 + $0x73] sm:$0xff] %v4416
        %4456 = vst [vmem:[#allocation2 + $0x7b] sm:$0xff] %v4417
        %4457 = vst [vmem:[#allocation2 + $0x83] sm:$0xff] %v4418
        %4458 = vst [vmem:[#allocation2 + $0x8b] sm:$0xff] %v4419
        %4459 = vst [vmem:[#allocation2 + $0x93] sm:$0xff] %v4420
        %4460 = vst [vmem:[#allocation2 + $0x9b] sm:$0xff] %v4421
        %4461 = vst [vmem:[#allocation2 + $0xa3] sm:$0xff] %v4422
        %4462 = vst [vmem:[#allocation2 + $0xab] sm:$0xff] %v4423
        %4463 = vst [vmem:[#allocation2 + $0xb3] sm:$0xff] %v4424
        %4464 = vst [vmem:[#allocation2 + $0xbb] sm:$0xff] %v4425
        %4465 = vst [vmem:[#allocation2 + $0xc3] sm:$0xff] %v4426
        %4466 = vst [vmem:[#allocation2 + $0xcb] sm:$0xff] %v4427
        %4467 = vst [vmem:[#allocation2 + $0xd3] sm:$0xff] %v4428
        %4468 = vst [vmem:[#allocation2 + $0xdb] sm:$0xff] %v4429
        %4469 = vst [vmem:[#allocation2 + $0xe3] sm:$0xff] %v4430
        %4470 = vst [vmem:[#allocation2 + $0xeb] sm:$0xff] %v4431
        %4471 = vst [vmem:[#allocation2 + $0xf3] sm:$0xff] %v4432
        %4472 = vst [vmem:[#allocation2 + $0xfb] sm:$0xff] %v4433
        %4473 = vst [vmem:[#allocation2 + $0x103] sm:$0xff] %v4434
        %4474 = vst [vmem:[#allocation2 + $0x10b] sm:$0xff] %v4435
        %4475 = vst [vmem:[#allocation2 + $0x113] sm:$0xff] %v4436
        %4476 = vst [vmem:[#allocation2 + $0x11b] sm:$0xff] %v4437
        %4477 = vst [vmem:[#allocation2 + $0x123] sm:$0xff] %v4438
        %4478 = vst [vmem:[#allocation2 + $0x12b] sm:$0xff] %v4439
        %4479 = vst [vmem:[#allocation2 + $0x133] sm:$0xff] 0.0
        %4480 = vst [vmem:[#allocation2 + $0x13b] sm:$0xff] 0.0
        %4481 = vst [vmem:[#allocation2 + $0x143] sm:$0x7] 0.0
        %v4482 = vld [vmem:[#allocation2] sm:$0xff]
        %v4483 = vld [vmem:[#allocation2 + $0x8] sm:$0xff]
        %v4484 = vld [vmem:[#allocation2 + $0x10] sm:$0xff]
        %v4485 = vld [vmem:[#allocation2 + $0x18] sm:$0xff]
        %v4486 = vld [vmem:[#allocation2 + $0x20] sm:$0xff]
        %v4487 = vld [vmem:[#allocation2 + $0x28] sm:$0xff]
        %v4488 = vld [vmem:[#allocation2 + $0x30] sm:$0xff]
        %v4489 = vld [vmem:[#allocation2 + $0x38] sm:$0xff]
        %v4490 = vld [vmem:[#allocation2 + $0x40] sm:$0xff]
        %v4491 = vld [vmem:[#allocation2 + $0x48] sm:$0xff]
        %v4492 = vld [vmem:[#allocation2 + $0x50] sm:$0xff]
        %v4493 = vld [vmem:[#allocation2 + $0x58] sm:$0xff]
        %v4494 = vld [vmem:[#allocation2 + $0x60] sm:$0xff]
        %v4495 = vld [vmem:[#allocation2 + $0x68] sm:$0xff]
        %v4496 = vld [vmem:[#allocation2 + $0x70] sm:$0xff]
        %v4497 = vld [vmem:[#allocation2 + $0x78] sm:$0xff]
        %v4498 = vld [vmem:[#allocation2 + $0x80] sm:$0xff]
        %v4499 = vld [vmem:[#allocation2 + $0x88] sm:$0xff]
        %v4500 = vld [vmem:[#allocation2 + $0x90] sm:$0xff]
        %v4501 = vld [vmem:[#allocation2 + $0x98] sm:$0xff]
        %v4502 = vld [vmem:[#allocation2 + $0xa0] sm:$0xff]
        %v4503 = vld [vmem:[#allocation2 + $0xa8] sm:$0xff]
        %v4504 = vld [vmem:[#allocation2 + $0xb0] sm:$0xff]
        %v4505 = vld [vmem:[#allocation2 + $0xb8] sm:$0xff]
        %v4506 = vld [vmem:[#allocation2 + $0xc0] sm:$0xff]
        %v4507 = vld [vmem:[#allocation2 + $0xc8] sm:$0xff]
        %v4508 = vld [vmem:[#allocation2 + $0xd0] sm:$0xff]
        %v4509 = vld [vmem:[#allocation2 + $0xd8] sm:$0xff]
        %v4510 = vld [vmem:[#allocation2 + $0xe0] sm:$0xff]
        %v4511 = vld [vmem:[#allocation2 + $0xe8] sm:$0xff]
        %v4512 = vld [vmem:[#allocation2 + $0xf0] sm:$0xff]
        %v4513 = vld [vmem:[#allocation2 + $0xf8] sm:$0xff]
        %v4514 = vld [vmem:[#allocation2 + $0x100] sm:$0xff]
        %v4515 = vld [vmem:[#allocation2 + $0x108] sm:$0xff]
        %v4516 = vld [vmem:[#allocation2 + $0x110] sm:$0xff]
        %v4517 = vld [vmem:[#allocation2 + $0x118] sm:$0xff]
        %v4518 = vld [vmem:[#allocation3] sm:$0xff]
        %v4519 = vld [vmem:[#allocation3 + $0x8] sm:$0xff]
        %v4520 = vld [vmem:[#allocation3 + $0x10] sm:$0xff]
        %v4521 = vld [vmem:[#allocation3 + $0x18] sm:$0xff]
        %v4522 = vld [vmem:[#allocation3 + $0x20] sm:$0xff]
        %v4523 = vld [vmem:[#allocation3 + $0x28] sm:$0xff]
        %v4524 = vld [vmem:[#allocation3 + $0x30] sm:$0xff]
        %v4525 = vld [vmem:[#allocation3 + $0x38] sm:$0xff]
        %v4526 = vld [vmem:[#allocation3 + $0x40] sm:$0xff]
        %v4527 = vld [vmem:[#allocation3 + $0x48] sm:$0xff]
        %v4528 = vld [vmem:[#allocation3 + $0x50] sm:$0xff]
        %v4529 = vld [vmem:[#allocation3 + $0x58] sm:$0xff]
        %v4530 = vld [vmem:[#allocation3 + $0x60] sm:$0xff]
        %v4531 = vld [vmem:[#allocation3 + $0x68] sm:$0xff]
        %v4532 = vld [vmem:[#allocation3 + $0x70] sm:$0xff]
        %v4533 = vld [vmem:[#allocation3 + $0x78] sm:$0xff]
        %v4534 = vld [vmem:[#allocation2 + $0x1] sm:$0xff]
        %v4535 = vld [vmem:[#allocation2 + $0x9] sm:$0xff]
        %v4536 = vld [vmem:[#allocation2 + $0x11] sm:$0xff]
        %v4537 = vld [vmem:[#allocation2 + $0x19] sm:$0xff]
        %v4538 = vld [vmem:[#allocation2 + $0x21] sm:$0xff]
        %v4539 = vld [vmem:[#allocation2 + $0x29] sm:$0xff]
        %v4540 = vld [vmem:[#allocation2 + $0x31] sm:$0xff]
        %v4541 = vld [vmem:[#allocation2 + $0x39] sm:$0xff]
        %v4542 = vld [vmem:[#allocation2 + $0x41] sm:$0xff]
        %v4543 = vld [vmem:[#allocation2 + $0x49] sm:$0xff]
        %v4544 = vld [vmem:[#allocation2 + $0x51] sm:$0xff]
        %v4545 = vld [vmem:[#allocation2 + $0x59] sm:$0xff]
        %v4546 = vld [vmem:[#allocation2 + $0x61] sm:$0xff]
        %v4547 = vld [vmem:[#allocation2 + $0x69] sm:$0xff]
        %v4548 = vld [vmem:[#allocation2 + $0x71] sm:$0xff]
        %v4549 = vld [vmem:[#allocation2 + $0x79] sm:$0xff]
        %v4550 = vld [vmem:[#allocation2 + $0x81] sm:$0xff]
        %v4551 = vld [vmem:[#allocation2 + $0x89] sm:$0xff]
        %v4552 = vld [vmem:[#allocation2 + $0x91] sm:$0xff]
        %v4553 = vld [vmem:[#allocation2 + $0x99] sm:$0xff]
        %v4554 = vld [vmem:[#allocation2 + $0xa1] sm:$0xff]
        %v4555 = vld [vmem:[#allocation2 + $0xa9] sm:$0xff]
        %v4556 = vld [vmem:[#allocation2 + $0xb1] sm:$0xff]
        %v4557 = vld [vmem:[#allocation2 + $0xb9] sm:$0xff]
        %v4558 = vld [vmem:[#allocation2 + $0xc1] sm:$0xff]
        %v4559 = vld [vmem:[#allocation2 + $0xc9] sm:$0xff]
        %v4560 = vld [vmem:[#allocation2 + $0xd1] sm:$0xff]
        %v4561 = vld [vmem:[#allocation2 + $0xd9] sm:$0xff]
        %v4562 = vld [vmem:[#allocation2 + $0xe1] sm:$0xff]
        %v4563 = vld [vmem:[#allocation2 + $0xe9] sm:$0xff]
        %v4564 = vld [vmem:[#allocation2 + $0xf1] sm:$0xff]
        %v4565 = vld [vmem:[#allocation2 + $0xf9] sm:$0xff]
        %v4566 = vld [vmem:[#allocation2 + $0x101] sm:$0xff]
        %v4567 = vld [vmem:[#allocation2 + $0x109] sm:$0xff]
        %v4568 = vld [vmem:[#allocation2 + $0x111] sm:$0xff]
        %v4569 = vld [vmem:[#allocation2 + $0x119] sm:$0xff]
        %s4570 = scalar_lea.vmem [#allocation3], 128
        %v4571 = vld [vmem:[%s4570] sm:$0xff]
        %v4572 = vld [vmem:[%s4570 + $0x8] sm:$0xff]
        %v4573 = vld [vmem:[%s4570 + $0x10] sm:$0xff]
        %v4574 = vld [vmem:[%s4570 + $0x18] sm:$0xff]
        %v4575 = vld [vmem:[%s4570 + $0x20] sm:$0xff]
        %v4576 = vld [vmem:[%s4570 + $0x28] sm:$0xff]
        %v4577 = vld [vmem:[%s4570 + $0x30] sm:$0xff]
        %v4578 = vld [vmem:[%s4570 + $0x38] sm:$0xff]
        %v4579 = vld [vmem:[%s4570 + $0x40] sm:$0xff]
        %v4580 = vld [vmem:[%s4570 + $0x48] sm:$0xff]
        %v4581 = vld [vmem:[%s4570 + $0x50] sm:$0xff]
        %v4582 = vld [vmem:[%s4570 + $0x58] sm:$0xff]
        %v4583 = vld [vmem:[%s4570 + $0x60] sm:$0xff]
        %v4584 = vld [vmem:[%s4570 + $0x68] sm:$0xff]
        %v4585 = vld [vmem:[%s4570 + $0x70] sm:$0xff]
        %v4586 = vld [vmem:[%s4570 + $0x78] sm:$0xff]
        %4587 = vmatpush.msra.mxu0 %v4586
        %4588 = vmatpush.msra.mxu0 %v4585
        %4589 = vmatpush.msra.mxu0 %v4584
        %4590 = vmatpush.msra.mxu0 %v4583
        %4591 = vmatpush.msra.mxu0 %v4582
        %4592 = vmatpush.msra.mxu0 %v4581
        %4593 = vmatpush.msra.mxu0 %v4580
        %4594 = vmatpush.msra.mxu0 %v4579
        %4595 = vmatpush.msra.mxu0 %v4578
        %4596 = vmatpush.msra.mxu0 %v4577
        %4597 = vmatpush.msra.mxu0 %v4576
        %4598 = vmatpush.msra.mxu0 %v4575
        %4599 = vmatpush.msra.mxu0 %v4574
        %4600 = vmatpush.msra.mxu0 %v4573
        %4601 = vmatpush.msra.mxu0 %v4572
        %4602 = vmatpush.msra.mxu0 %v4571
        %4603 = vmatmul.f32.gmra.mxu0 %v4534
        %v4604 = vpop.f32.mrf.mxu0
        %v4605 = vadd.f32 0.0, %v4604
        %4606 = vmatmul.f32.gmra.mxu0 %v4535
        %v4607 = vpop.f32.mrf.mxu0
        %v4608 = vadd.f32 0.0, %v4607
        %4609 = vmatmul.f32.gmra.mxu0 %v4536
        %v4610 = vpop.f32.mrf.mxu0
        %v4611 = vadd.f32 0.0, %v4610
        %4612 = vmatmul.f32.gmra.mxu0 %v4537
        %v4613 = vpop.f32.mrf.mxu0
        %v4614 = vadd.f32 0.0, %v4613
        %4615 = vmatmul.f32.gmra.mxu0 %v4538
        %v4616 = vpop.f32.mrf.mxu0
        %v4617 = vadd.f32 0.0, %v4616
        %4618 = vmatmul.f32.gmra.mxu0 %v4539
        %v4619 = vpop.f32.mrf.mxu0
        %v4620 = vadd.f32 0.0, %v4619
        %4621 = vmatmul.f32.gmra.mxu0 %v4540
        %v4622 = vpop.f32.mrf.mxu0
        %v4623 = vadd.f32 0.0, %v4622
        %4624 = vmatmul.f32.gmra.mxu0 %v4541
        %v4625 = vpop.f32.mrf.mxu0
        %v4626 = vadd.f32 0.0, %v4625
        %4627 = vmatmul.f32.gmra.mxu0 %v4542
        %v4628 = vpop.f32.mrf.mxu0
        %v4629 = vadd.f32 0.0, %v4628
        %4630 = vmatmul.f32.gmra.mxu0 %v4543
        %v4631 = vpop.f32.mrf.mxu0
        %v4632 = vadd.f32 0.0, %v4631
        %4633 = vmatmul.f32.gmra.mxu0 %v4544
        %v4634 = vpop.f32.mrf.mxu0
        %v4635 = vadd.f32 0.0, %v4634
        %4636 = vmatmul.f32.gmra.mxu0 %v4545
        %v4637 = vpop.f32.mrf.mxu0
        %v4638 = vadd.f32 0.0, %v4637
        %4639 = vmatmul.f32.gmra.mxu0 %v4546
        %v4640 = vpop.f32.mrf.mxu0
        %v4641 = vadd.f32 0.0, %v4640
        %4642 = vmatmul.f32.gmra.mxu0 %v4547
        %v4643 = vpop.f32.mrf.mxu0
        %v4644 = vadd.f32 0.0, %v4643
        %4645 = vmatmul.f32.gmra.mxu0 %v4548
        %v4646 = vpop.f32.mrf.mxu0
        %v4647 = vadd.f32 0.0, %v4646
        %4648 = vmatmul.f32.gmra.mxu0 %v4549
        %v4649 = vpop.f32.mrf.mxu0
        %v4650 = vadd.f32 0.0, %v4649
        %4651 = vmatmul.f32.gmra.mxu0 %v4550
        %v4652 = vpop.f32.mrf.mxu0
        %v4653 = vadd.f32 0.0, %v4652
        %4654 = vmatmul.f32.gmra.mxu0 %v4551
        %v4655 = vpop.f32.mrf.mxu0
        %v4656 = vadd.f32 0.0, %v4655
        %4657 = vmatmul.f32.gmra.mxu0 %v4552
        %v4658 = vpop.f32.mrf.mxu0
        %v4659 = vadd.f32 0.0, %v4658
        %4660 = vmatmul.f32.gmra.mxu0 %v4553
        %v4661 = vpop.f32.mrf.mxu0
        %v4662 = vadd.f32 0.0, %v4661
        %4663 = vmatmul.f32.gmra.mxu0 %v4554
        %v4664 = vpop.f32.mrf.mxu0
        %v4665 = vadd.f32 0.0, %v4664
        %4666 = vmatmul.f32.gmra.mxu0 %v4555
        %v4667 = vpop.f32.mrf.mxu0
        %v4668 = vadd.f32 0.0, %v4667
        %4669 = vmatmul.f32.gmra.mxu0 %v4556
        %v4670 = vpop.f32.mrf.mxu0
        %v4671 = vadd.f32 0.0, %v4670
        %4672 = vmatmul.f32.gmra.mxu0 %v4557
        %v4673 = vpop.f32.mrf.mxu0
        %v4674 = vadd.f32 0.0, %v4673
        %4675 = vmatmul.f32.gmra.mxu0 %v4558
        %v4676 = vpop.f32.mrf.mxu0
        %v4677 = vadd.f32 0.0, %v4676
        %4678 = vmatmul.f32.gmra.mxu0 %v4559
        %v4679 = vpop.f32.mrf.mxu0
        %v4680 = vadd.f32 0.0, %v4679
        %4681 = vmatmul.f32.gmra.mxu0 %v4560
        %v4682 = vpop.f32.mrf.mxu0
        %v4683 = vadd.f32 0.0, %v4682
        %4684 = vmatmul.f32.gmra.mxu0 %v4561
        %v4685 = vpop.f32.mrf.mxu0
        %v4686 = vadd.f32 0.0, %v4685
        %4687 = vmatmul.f32.gmra.mxu0 %v4562
        %v4688 = vpop.f32.mrf.mxu0
        %v4689 = vadd.f32 0.0, %v4688
        %4690 = vmatmul.f32.gmra.mxu0 %v4563
        %v4691 = vpop.f32.mrf.mxu0
        %v4692 = vadd.f32 0.0, %v4691
        %4693 = vmatmul.f32.gmra.mxu0 %v4564
        %v4694 = vpop.f32.mrf.mxu0
        %v4695 = vadd.f32 0.0, %v4694
        %4696 = vmatmul.f32.gmra.mxu0 %v4565
        %v4697 = vpop.f32.mrf.mxu0
        %v4698 = vadd.f32 0.0, %v4697
        %4699 = vmatmul.f32.gmra.mxu0 %v4566
        %v4700 = vpop.f32.mrf.mxu0
        %v4701 = vadd.f32 0.0, %v4700
        %4702 = vmatmul.f32.gmra.mxu0 %v4567
        %v4703 = vpop.f32.mrf.mxu0
        %v4704 = vadd.f32 0.0, %v4703
        %4705 = vmatmul.f32.gmra.mxu0 %v4568
        %v4706 = vpop.f32.mrf.mxu0
        %v4707 = vadd.f32 0.0, %v4706
        %4708 = vmatmul.f32.gmra.mxu0 %v4569
        %v4709 = vpop.f32.mrf.mxu0
        %v4710 = vadd.f32 0.0, %v4709
        %4711 = vdwg.mxu0
        %4712 = vmatpush.msra.mxu0 %v4533
        %4713 = vmatpush.msra.mxu0 %v4532
        %4714 = vmatpush.msra.mxu0 %v4531
        %4715 = vmatpush.msra.mxu0 %v4530
        %4716 = vmatpush.msra.mxu0 %v4529
        %4717 = vmatpush.msra.mxu0 %v4528
        %4718 = vmatpush.msra.mxu0 %v4527
        %4719 = vmatpush.msra.mxu0 %v4526
        %4720 = vmatpush.msra.mxu0 %v4525
        %4721 = vmatpush.msra.mxu0 %v4524
        %4722 = vmatpush.msra.mxu0 %v4523
        %4723 = vmatpush.msra.mxu0 %v4522
        %4724 = vmatpush.msra.mxu0 %v4521
        %4725 = vmatpush.msra.mxu0 %v4520
        %4726 = vmatpush.msra.mxu0 %v4519
        %4727 = vmatpush.msra.mxu0 %v4518
        %4728 = vmatmul.f32.gmra.mxu0 %v4482
        %v4729 = vpop.f32.mrf.mxu0
        %v4730 = vadd.f32 %v4605, %v4729
        %4731 = vmatmul.f32.gmra.mxu0 %v4483
        %v4732 = vpop.f32.mrf.mxu0
        %v4733 = vadd.f32 %v4608, %v4732
        %4734 = vmatmul.f32.gmra.mxu0 %v4484
        %v4735 = vpop.f32.mrf.mxu0
        %v4736 = vadd.f32 %v4611, %v4735
        %4737 = vmatmul.f32.gmra.mxu0 %v4485
        %v4738 = vpop.f32.mrf.mxu0
        %v4739 = vadd.f32 %v4614, %v4738
        %4740 = vmatmul.f32.gmra.mxu0 %v4486
        %v4741 = vpop.f32.mrf.mxu0
        %v4742 = vadd.f32 %v4617, %v4741
        %4743 = vmatmul.f32.gmra.mxu0 %v4487
        %v4744 = vpop.f32.mrf.mxu0
        %v4745 = vadd.f32 %v4620, %v4744
        %4746 = vmatmul.f32.gmra.mxu0 %v4488
        %v4747 = vpop.f32.mrf.mxu0
        %v4748 = vadd.f32 %v4623, %v4747
        %4749 = vmatmul.f32.gmra.mxu0 %v4489
        %v4750 = vpop.f32.mrf.mxu0
        %v4751 = vadd.f32 %v4626, %v4750
        %4752 = vmatmul.f32.gmra.mxu0 %v4490
        %v4753 = vpop.f32.mrf.mxu0
        %v4754 = vadd.f32 %v4629, %v4753
        %4755 = vmatmul.f32.gmra.mxu0 %v4491
        %v4756 = vpop.f32.mrf.mxu0
        %v4757 = vadd.f32 %v4632, %v4756
        %4758 = vmatmul.f32.gmra.mxu0 %v4492
        %v4759 = vpop.f32.mrf.mxu0
        %v4760 = vadd.f32 %v4635, %v4759
        %4761 = vmatmul.f32.gmra.mxu0 %v4493
        %v4762 = vpop.f32.mrf.mxu0
        %v4763 = vadd.f32 %v4638, %v4762
        %4764 = vmatmul.f32.gmra.mxu0 %v4494
        %v4765 = vpop.f32.mrf.mxu0
        %v4766 = vadd.f32 %v4641, %v4765
        %4767 = vmatmul.f32.gmra.mxu0 %v4495
        %v4768 = vpop.f32.mrf.mxu0
        %v4769 = vadd.f32 %v4644, %v4768
        %4770 = vmatmul.f32.gmra.mxu0 %v4496
        %v4771 = vpop.f32.mrf.mxu0
        %v4772 = vadd.f32 %v4647, %v4771
        %4773 = vmatmul.f32.gmra.mxu0 %v4497
        %v4774 = vpop.f32.mrf.mxu0
        %v4775 = vadd.f32 %v4650, %v4774
        %4776 = vmatmul.f32.gmra.mxu0 %v4498
        %v4777 = vpop.f32.mrf.mxu0
        %v4778 = vadd.f32 %v4653, %v4777
        %4779 = vmatmul.f32.gmra.mxu0 %v4499
        %v4780 = vpop.f32.mrf.mxu0
        %v4781 = vadd.f32 %v4656, %v4780
        %4782 = vmatmul.f32.gmra.mxu0 %v4500
        %v4783 = vpop.f32.mrf.mxu0
        %v4784 = vadd.f32 %v4659, %v4783
        %4785 = vmatmul.f32.gmra.mxu0 %v4501
        %v4786 = vpop.f32.mrf.mxu0
        %v4787 = vadd.f32 %v4662, %v4786
        %4788 = vmatmul.f32.gmra.mxu0 %v4502
        %v4789 = vpop.f32.mrf.mxu0
        %v4790 = vadd.f32 %v4665, %v4789
        %4791 = vmatmul.f32.gmra.mxu0 %v4503
        %v4792 = vpop.f32.mrf.mxu0
        %v4793 = vadd.f32 %v4668, %v4792
        %4794 = vmatmul.f32.gmra.mxu0 %v4504
        %v4795 = vpop.f32.mrf.mxu0
        %v4796 = vadd.f32 %v4671, %v4795
        %4797 = vmatmul.f32.gmra.mxu0 %v4505
        %v4798 = vpop.f32.mrf.mxu0
        %v4799 = vadd.f32 %v4674, %v4798
        %4800 = vmatmul.f32.gmra.mxu0 %v4506
        %v4801 = vpop.f32.mrf.mxu0
        %v4802 = vadd.f32 %v4677, %v4801
        %4803 = vmatmul.f32.gmra.mxu0 %v4507
        %v4804 = vpop.f32.mrf.mxu0
        %v4805 = vadd.f32 %v4680, %v4804
        %4806 = vmatmul.f32.gmra.mxu0 %v4508
        %v4807 = vpop.f32.mrf.mxu0
        %v4808 = vadd.f32 %v4683, %v4807
        %4809 = vmatmul.f32.gmra.mxu0 %v4509
        %v4810 = vpop.f32.mrf.mxu0
        %v4811 = vadd.f32 %v4686, %v4810
        %4812 = vmatmul.f32.gmra.mxu0 %v4510
        %v4813 = vpop.f32.mrf.mxu0
        %v4814 = vadd.f32 %v4689, %v4813
        %4815 = vmatmul.f32.gmra.mxu0 %v4511
        %v4816 = vpop.f32.mrf.mxu0
        %v4817 = vadd.f32 %v4692, %v4816
        %4818 = vmatmul.f32.gmra.mxu0 %v4512
        %v4819 = vpop.f32.mrf.mxu0
        %v4820 = vadd.f32 %v4695, %v4819
        %4821 = vmatmul.f32.gmra.mxu0 %v4513
        %v4822 = vpop.f32.mrf.mxu0
        %v4823 = vadd.f32 %v4698, %v4822
        %4824 = vmatmul.f32.gmra.mxu0 %v4514
        %v4825 = vpop.f32.mrf.mxu0
        %v4826 = vadd.f32 %v4701, %v4825
        %4827 = vmatmul.f32.gmra.mxu0 %v4515
        %v4828 = vpop.f32.mrf.mxu0
        %v4829 = vadd.f32 %v4704, %v4828
        %4830 = vmatmul.f32.gmra.mxu0 %v4516
        %v4831 = vpop.f32.mrf.mxu0
        %v4832 = vadd.f32 %v4707, %v4831
        %4833 = vmatmul.f32.gmra.mxu0 %v4517
        %v4834 = vpop.f32.mrf.mxu0
        %v4835 = vadd.f32 %v4710, %v4834
        %4836 = vdwg.mxu0
        %v4837 = vld [vmem:[#allocation2 + $0x2] sm:$0xff]
        %v4838 = vld [vmem:[#allocation2 + $0xa] sm:$0xff]
        %v4839 = vld [vmem:[#allocation2 + $0x12] sm:$0xff]
        %v4840 = vld [vmem:[#allocation2 + $0x1a] sm:$0xff]
        %v4841 = vld [vmem:[#allocation2 + $0x22] sm:$0xff]
        %v4842 = vld [vmem:[#allocation2 + $0x2a] sm:$0xff]
        %v4843 = vld [vmem:[#allocation2 + $0x32] sm:$0xff]
        %v4844 = vld [vmem:[#allocation2 + $0x3a] sm:$0xff]
        %v4845 = vld [vmem:[#allocation2 + $0x42] sm:$0xff]
        %v4846 = vld [vmem:[#allocation2 + $0x4a] sm:$0xff]
        %v4847 = vld [vmem:[#allocation2 + $0x52] sm:$0xff]
        %v4848 = vld [vmem:[#allocation2 + $0x5a] sm:$0xff]
        %v4849 = vld [vmem:[#allocation2 + $0x62] sm:$0xff]
        %v4850 = vld [vmem:[#allocation2 + $0x6a] sm:$0xff]
        %v4851 = vld [vmem:[#allocation2 + $0x72] sm:$0xff]
        %v4852 = vld [vmem:[#allocation2 + $0x7a] sm:$0xff]
        %v4853 = vld [vmem:[#allocation2 + $0x82] sm:$0xff]
        %v4854 = vld [vmem:[#allocation2 + $0x8a] sm:$0xff]
        %v4855 = vld [vmem:[#allocation2 + $0x92] sm:$0xff]
        %v4856 = vld [vmem:[#allocation2 + $0x9a] sm:$0xff]
        %v4857 = vld [vmem:[#allocation2 + $0xa2] sm:$0xff]
        %v4858 = vld [vmem:[#allocation2 + $0xaa] sm:$0xff]
        %v4859 = vld [vmem:[#allocation2 + $0xb2] sm:$0xff]
        %v4860 = vld [vmem:[#allocation2 + $0xba] sm:$0xff]
        %v4861 = vld [vmem:[#allocation2 + $0xc2] sm:$0xff]
        %v4862 = vld [vmem:[#allocation2 + $0xca] sm:$0xff]
        %v4863 = vld [vmem:[#allocation2 + $0xd2] sm:$0xff]
        %v4864 = vld [vmem:[#allocation2 + $0xda] sm:$0xff]
        %v4865 = vld [vmem:[#allocation2 + $0xe2] sm:$0xff]
        %v4866 = vld [vmem:[#allocation2 + $0xea] sm:$0xff]
        %v4867 = vld [vmem:[#allocation2 + $0xf2] sm:$0xff]
        %v4868 = vld [vmem:[#allocation2 + $0xfa] sm:$0xff]
        %v4869 = vld [vmem:[#allocation2 + $0x102] sm:$0xff]
        %v4870 = vld [vmem:[#allocation2 + $0x10a] sm:$0xff]
        %v4871 = vld [vmem:[#allocation2 + $0x112] sm:$0xff]
        %v4872 = vld [vmem:[#allocation2 + $0x11a] sm:$0xff]
        %s4873 = scalar_lea.vmem [#allocation3], 256
        %v4874 = vld [vmem:[%s4873] sm:$0xff]
        %v4875 = vld [vmem:[%s4873 + $0x8] sm:$0xff]
        %v4876 = vld [vmem:[%s4873 + $0x10] sm:$0xff]
        %v4877 = vld [vmem:[%s4873 + $0x18] sm:$0xff]
        %v4878 = vld [vmem:[%s4873 + $0x20] sm:$0xff]
        %v4879 = vld [vmem:[%s4873 + $0x28] sm:$0xff]
        %v4880 = vld [vmem:[%s4873 + $0x30] sm:$0xff]
        %v4881 = vld [vmem:[%s4873 + $0x38] sm:$0xff]
        %v4882 = vld [vmem:[%s4873 + $0x40] sm:$0xff]
        %v4883 = vld [vmem:[%s4873 + $0x48] sm:$0xff]
        %v4884 = vld [vmem:[%s4873 + $0x50] sm:$0xff]
        %v4885 = vld [vmem:[%s4873 + $0x58] sm:$0xff]
        %v4886 = vld [vmem:[%s4873 + $0x60] sm:$0xff]
        %v4887 = vld [vmem:[%s4873 + $0x68] sm:$0xff]
        %v4888 = vld [vmem:[%s4873 + $0x70] sm:$0xff]
        %v4889 = vld [vmem:[%s4873 + $0x78] sm:$0xff]
        %4890 = vmatpush.msra.mxu0 %v4889
        %4891 = vmatpush.msra.mxu0 %v4888
        %4892 = vmatpush.msra.mxu0 %v4887
        %4893 = vmatpush.msra.mxu0 %v4886
        %4894 = vmatpush.msra.mxu0 %v4885
        %4895 = vmatpush.msra.mxu0 %v4884
        %4896 = vmatpush.msra.mxu0 %v4883
        %4897 = vmatpush.msra.mxu0 %v4882
        %4898 = vmatpush.msra.mxu0 %v4881
        %4899 = vmatpush.msra.mxu0 %v4880
        %4900 = vmatpush.msra.mxu0 %v4879
        %4901 = vmatpush.msra.mxu0 %v4878
        %4902 = vmatpush.msra.mxu0 %v4877
        %4903 = vmatpush.msra.mxu0 %v4876
        %4904 = vmatpush.msra.mxu0 %v4875
        %4905 = vmatpush.msra.mxu0 %v4874
        %4906 = vmatmul.f32.gmra.mxu0 %v4837
        %v4907 = vpop.f32.mrf.mxu0
        %v4908 = vadd.f32 0.0, %v4907
        %4909 = vmatmul.f32.gmra.mxu0 %v4838
        %v4910 = vpop.f32.mrf.mxu0
        %v4911 = vadd.f32 0.0, %v4910
        %4912 = vmatmul.f32.gmra.mxu0 %v4839
        %v4913 = vpop.f32.mrf.mxu0
        %v4914 = vadd.f32 0.0, %v4913
        %4915 = vmatmul.f32.gmra.mxu0 %v4840
        %v4916 = vpop.f32.mrf.mxu0
        %v4917 = vadd.f32 0.0, %v4916
        %4918 = vmatmul.f32.gmra.mxu0 %v4841
        %v4919 = vpop.f32.mrf.mxu0
        %v4920 = vadd.f32 0.0, %v4919
        %4921 = vmatmul.f32.gmra.mxu0 %v4842
        %v4922 = vpop.f32.mrf.mxu0
        %v4923 = vadd.f32 0.0, %v4922
        %4924 = vmatmul.f32.gmra.mxu0 %v4843
        %v4925 = vpop.f32.mrf.mxu0
        %v4926 = vadd.f32 0.0, %v4925
        %4927 = vmatmul.f32.gmra.mxu0 %v4844
        %v4928 = vpop.f32.mrf.mxu0
        %v4929 = vadd.f32 0.0, %v4928
        %4930 = vmatmul.f32.gmra.mxu0 %v4845
        %v4931 = vpop.f32.mrf.mxu0
        %v4932 = vadd.f32 0.0, %v4931
        %4933 = vmatmul.f32.gmra.mxu0 %v4846
        %v4934 = vpop.f32.mrf.mxu0
        %v4935 = vadd.f32 0.0, %v4934
        %4936 = vmatmul.f32.gmra.mxu0 %v4847
        %v4937 = vpop.f32.mrf.mxu0
        %v4938 = vadd.f32 0.0, %v4937
        %4939 = vmatmul.f32.gmra.mxu0 %v4848
        %v4940 = vpop.f32.mrf.mxu0
        %v4941 = vadd.f32 0.0, %v4940
        %4942 = vmatmul.f32.gmra.mxu0 %v4849
        %v4943 = vpop.f32.mrf.mxu0
        %v4944 = vadd.f32 0.0, %v4943
        %4945 = vmatmul.f32.gmra.mxu0 %v4850
        %v4946 = vpop.f32.mrf.mxu0
        %v4947 = vadd.f32 0.0, %v4946
        %4948 = vmatmul.f32.gmra.mxu0 %v4851
        %v4949 = vpop.f32.mrf.mxu0
        %v4950 = vadd.f32 0.0, %v4949
        %4951 = vmatmul.f32.gmra.mxu0 %v4852
        %v4952 = vpop.f32.mrf.mxu0
        %v4953 = vadd.f32 0.0, %v4952
        %4954 = vmatmul.f32.gmra.mxu0 %v4853
        %v4955 = vpop.f32.mrf.mxu0
        %v4956 = vadd.f32 0.0, %v4955
        %4957 = vmatmul.f32.gmra.mxu0 %v4854
        %v4958 = vpop.f32.mrf.mxu0
        %v4959 = vadd.f32 0.0, %v4958
        %4960 = vmatmul.f32.gmra.mxu0 %v4855
        %v4961 = vpop.f32.mrf.mxu0
        %v4962 = vadd.f32 0.0, %v4961
        %4963 = vmatmul.f32.gmra.mxu0 %v4856
        %v4964 = vpop.f32.mrf.mxu0
        %v4965 = vadd.f32 0.0, %v4964
        %4966 = vmatmul.f32.gmra.mxu0 %v4857
        %v4967 = vpop.f32.mrf.mxu0
        %v4968 = vadd.f32 0.0, %v4967
        %4969 = vmatmul.f32.gmra.mxu0 %v4858
        %v4970 = vpop.f32.mrf.mxu0
        %v4971 = vadd.f32 0.0, %v4970
        %4972 = vmatmul.f32.gmra.mxu0 %v4859
        %v4973 = vpop.f32.mrf.mxu0
        %v4974 = vadd.f32 0.0, %v4973
        %4975 = vmatmul.f32.gmra.mxu0 %v4860
        %v4976 = vpop.f32.mrf.mxu0
        %v4977 = vadd.f32 0.0, %v4976
        %4978 = vmatmul.f32.gmra.mxu0 %v4861
        %v4979 = vpop.f32.mrf.mxu0
        %v4980 = vadd.f32 0.0, %v4979
        %4981 = vmatmul.f32.gmra.mxu0 %v4862
        %v4982 = vpop.f32.mrf.mxu0
        %v4983 = vadd.f32 0.0, %v4982
        %4984 = vmatmul.f32.gmra.mxu0 %v4863
        %v4985 = vpop.f32.mrf.mxu0
        %v4986 = vadd.f32 0.0, %v4985
        %4987 = vmatmul.f32.gmra.mxu0 %v4864
        %v4988 = vpop.f32.mrf.mxu0
        %v4989 = vadd.f32 0.0, %v4988
        %4990 = vmatmul.f32.gmra.mxu0 %v4865
        %v4991 = vpop.f32.mrf.mxu0
        %v4992 = vadd.f32 0.0, %v4991
        %4993 = vmatmul.f32.gmra.mxu0 %v4866
        %v4994 = vpop.f32.mrf.mxu0
        %v4995 = vadd.f32 0.0, %v4994
        %4996 = vmatmul.f32.gmra.mxu0 %v4867
        %v4997 = vpop.f32.mrf.mxu0
        %v4998 = vadd.f32 0.0, %v4997
        %4999 = vmatmul.f32.gmra.mxu0 %v4868
        %v5000 = vpop.f32.mrf.mxu0
        %v5001 = vadd.f32 0.0, %v5000
        %5002 = vmatmul.f32.gmra.mxu0 %v4869
        %v5003 = vpop.f32.mrf.mxu0
        %v5004 = vadd.f32 0.0, %v5003
        %5005 = vmatmul.f32.gmra.mxu0 %v4870
        %v5006 = vpop.f32.mrf.mxu0
        %v5007 = vadd.f32 0.0, %v5006
        %5008 = vmatmul.f32.gmra.mxu0 %v4871
        %v5009 = vpop.f32.mrf.mxu0
        %v5010 = vadd.f32 0.0, %v5009
        %5011 = vmatmul.f32.gmra.mxu0 %v4872
        %v5012 = vpop.f32.mrf.mxu0
        %v5013 = vadd.f32 0.0, %v5012
        %5014 = vdwg.mxu0
        %v5015 = vadd.f32 %v4730, %v4908
        %v5016 = vadd.f32 %v4733, %v4911
        %v5017 = vadd.f32 %v4736, %v4914
        %v5018 = vadd.f32 %v4739, %v4917
        %v5019 = vadd.f32 %v4742, %v4920
        %v5020 = vadd.f32 %v4745, %v4923
        %v5021 = vadd.f32 %v4748, %v4926
        %v5022 = vadd.f32 %v4751, %v4929
        %v5023 = vadd.f32 %v4754, %v4932
        %v5024 = vadd.f32 %v4757, %v4935
        %v5025 = vadd.f32 %v4760, %v4938
        %v5026 = vadd.f32 %v4763, %v4941
        %v5027 = vadd.f32 %v4766, %v4944
        %v5028 = vadd.f32 %v4769, %v4947
        %v5029 = vadd.f32 %v4772, %v4950
        %v5030 = vadd.f32 %v4775, %v4953
        %v5031 = vadd.f32 %v4778, %v4956
        %v5032 = vadd.f32 %v4781, %v4959
        %v5033 = vadd.f32 %v4784, %v4962
        %v5034 = vadd.f32 %v4787, %v4965
        %v5035 = vadd.f32 %v4790, %v4968
        %v5036 = vadd.f32 %v4793, %v4971
        %v5037 = vadd.f32 %v4796, %v4974
        %v5038 = vadd.f32 %v4799, %v4977
        %v5039 = vadd.f32 %v4802, %v4980
        %v5040 = vadd.f32 %v4805, %v4983
        %v5041 = vadd.f32 %v4808, %v4986
        %v5042 = vadd.f32 %v4811, %v4989
        %v5043 = vadd.f32 %v4814, %v4992
        %v5044 = vadd.f32 %v4817, %v4995
        %v5045 = vadd.f32 %v4820, %v4998
        %v5046 = vadd.f32 %v4823, %v5001
        %v5047 = vadd.f32 %v4826, %v5004
        %v5048 = vadd.f32 %v4829, %v5007
        %v5049 = vadd.f32 %v4832, %v5010
        %v5050 = vadd.f32 %v4835, %v5013
        %v5051 = vld [vmem:[#allocation2 + $0x12] sm:$0xff]
        %v5052 = vld [vmem:[#allocation2 + $0x1a] sm:$0xff]
        %v5053 = vld [vmem:[#allocation2 + $0x22] sm:$0xff]
        %v5054 = vld [vmem:[#allocation2 + $0x2a] sm:$0xff]
        %v5055 = vld [vmem:[#allocation2 + $0x32] sm:$0xff]
        %v5056 = vld [vmem:[#allocation2 + $0x3a] sm:$0xff]
        %v5057 = vld [vmem:[#allocation2 + $0x42] sm:$0xff]
        %v5058 = vld [vmem:[#allocation2 + $0x4a] sm:$0xff]
        %v5059 = vld [vmem:[#allocation2 + $0x52] sm:$0xff]
        %v5060 = vld [vmem:[#allocation2 + $0x5a] sm:$0xff]
        %v5061 = vld [vmem:[#allocation2 + $0x62] sm:$0xff]
        %v5062 = vld [vmem:[#allocation2 + $0x6a] sm:$0xff]
        %v5063 = vld [vmem:[#allocation2 + $0x72] sm:$0xff]
        %v5064 = vld [vmem:[#allocation2 + $0x7a] sm:$0xff]
        %v5065 = vld [vmem:[#allocation2 + $0x82] sm:$0xff]
        %v5066 = vld [vmem:[#allocation2 + $0x8a] sm:$0xff]
        %v5067 = vld [vmem:[#allocation2 + $0x92] sm:$0xff]
        %v5068 = vld [vmem:[#allocation2 + $0x9a] sm:$0xff]
        %v5069 = vld [vmem:[#allocation2 + $0xa2] sm:$0xff]
        %v5070 = vld [vmem:[#allocation2 + $0xaa] sm:$0xff]
        %v5071 = vld [vmem:[#allocation2 + $0xb2] sm:$0xff]
        %v5072 = vld [vmem:[#allocation2 + $0xba] sm:$0xff]
        %v5073 = vld [vmem:[#allocation2 + $0xc2] sm:$0xff]
        %v5074 = vld [vmem:[#allocation2 + $0xca] sm:$0xff]
        %v5075 = vld [vmem:[#allocation2 + $0xd2] sm:$0xff]
        %v5076 = vld [vmem:[#allocation2 + $0xda] sm:$0xff]
        %v5077 = vld [vmem:[#allocation2 + $0xe2] sm:$0xff]
        %v5078 = vld [vmem:[#allocation2 + $0xea] sm:$0xff]
        %v5079 = vld [vmem:[#allocation2 + $0xf2] sm:$0xff]
        %v5080 = vld [vmem:[#allocation2 + $0xfa] sm:$0xff]
        %v5081 = vld [vmem:[#allocation2 + $0x102] sm:$0xff]
        %v5082 = vld [vmem:[#allocation2 + $0x10a] sm:$0xff]
        %v5083 = vld [vmem:[#allocation2 + $0x112] sm:$0xff]
        %v5084 = vld [vmem:[#allocation2 + $0x11a] sm:$0xff]
        %v5085 = vld [vmem:[#allocation2 + $0x122] sm:$0xff]
        %v5086 = vld [vmem:[#allocation2 + $0x12a] sm:$0xff]
        %s5087 = scalar_lea.vmem [#allocation3], 384
        %v5088 = vld [vmem:[%s5087] sm:$0xff]
        %v5089 = vld [vmem:[%s5087 + $0x8] sm:$0xff]
        %v5090 = vld [vmem:[%s5087 + $0x10] sm:$0xff]
        %v5091 = vld [vmem:[%s5087 + $0x18] sm:$0xff]
        %v5092 = vld [vmem:[%s5087 + $0x20] sm:$0xff]
        %v5093 = vld [vmem:[%s5087 + $0x28] sm:$0xff]
        %v5094 = vld [vmem:[%s5087 + $0x30] sm:$0xff]
        %v5095 = vld [vmem:[%s5087 + $0x38] sm:$0xff]
        %v5096 = vld [vmem:[%s5087 + $0x40] sm:$0xff]
        %v5097 = vld [vmem:[%s5087 + $0x48] sm:$0xff]
        %v5098 = vld [vmem:[%s5087 + $0x50] sm:$0xff]
        %v5099 = vld [vmem:[%s5087 + $0x58] sm:$0xff]
        %v5100 = vld [vmem:[%s5087 + $0x60] sm:$0xff]
        %v5101 = vld [vmem:[%s5087 + $0x68] sm:$0xff]
        %v5102 = vld [vmem:[%s5087 + $0x70] sm:$0xff]
        %v5103 = vld [vmem:[%s5087 + $0x78] sm:$0xff]
        %5104 = vmatpush.msra.mxu0 %v5103
        %5105 = vmatpush.msra.mxu0 %v5102
        %5106 = vmatpush.msra.mxu0 %v5101
        %5107 = vmatpush.msra.mxu0 %v5100
        %5108 = vmatpush.msra.mxu0 %v5099
        %5109 = vmatpush.msra.mxu0 %v5098
        %5110 = vmatpush.msra.mxu0 %v5097
        %5111 = vmatpush.msra.mxu0 %v5096
        %5112 = vmatpush.msra.mxu0 %v5095
        %5113 = vmatpush.msra.mxu0 %v5094
        %5114 = vmatpush.msra.mxu0 %v5093
        %5115 = vmatpush.msra.mxu0 %v5092
        %5116 = vmatpush.msra.mxu0 %v5091
        %5117 = vmatpush.msra.mxu0 %v5090
        %5118 = vmatpush.msra.mxu0 %v5089
        %5119 = vmatpush.msra.mxu0 %v5088
        %5120 = vmatmul.f32.gmra.mxu0 %v5051
        %v5121 = vpop.f32.mrf.mxu0
        %v5122 = vadd.f32 0.0, %v5121
        %5123 = vmatmul.f32.gmra.mxu0 %v5052
        %v5124 = vpop.f32.mrf.mxu0
        %v5125 = vadd.f32 0.0, %v5124
        %5126 = vmatmul.f32.gmra.mxu0 %v5053
        %v5127 = vpop.f32.mrf.mxu0
        %v5128 = vadd.f32 0.0, %v5127
        %5129 = vmatmul.f32.gmra.mxu0 %v5054
        %v5130 = vpop.f32.mrf.mxu0
        %v5131 = vadd.f32 0.0, %v5130
        %5132 = vmatmul.f32.gmra.mxu0 %v5055
        %v5133 = vpop.f32.mrf.mxu0
        %v5134 = vadd.f32 0.0, %v5133
        %5135 = vmatmul.f32.gmra.mxu0 %v5056
        %v5136 = vpop.f32.mrf.mxu0
        %v5137 = vadd.f32 0.0, %v5136
        %5138 = vmatmul.f32.gmra.mxu0 %v5057
        %v5139 = vpop.f32.mrf.mxu0
        %v5140 = vadd.f32 0.0, %v5139
        %5141 = vmatmul.f32.gmra.mxu0 %v5058
        %v5142 = vpop.f32.mrf.mxu0
        %v5143 = vadd.f32 0.0, %v5142
        %5144 = vmatmul.f32.gmra.mxu0 %v5059
        %v5145 = vpop.f32.mrf.mxu0
        %v5146 = vadd.f32 0.0, %v5145
        %5147 = vmatmul.f32.gmra.mxu0 %v5060
        %v5148 = vpop.f32.mrf.mxu0
        %v5149 = vadd.f32 0.0, %v5148
        %5150 = vmatmul.f32.gmra.mxu0 %v5061
        %v5151 = vpop.f32.mrf.mxu0
        %v5152 = vadd.f32 0.0, %v5151
        %5153 = vmatmul.f32.gmra.mxu0 %v5062
        %v5154 = vpop.f32.mrf.mxu0
        %v5155 = vadd.f32 0.0, %v5154
        %5156 = vmatmul.f32.gmra.mxu0 %v5063
        %v5157 = vpop.f32.mrf.mxu0
        %v5158 = vadd.f32 0.0, %v5157
        %5159 = vmatmul.f32.gmra.mxu0 %v5064
        %v5160 = vpop.f32.mrf.mxu0
        %v5161 = vadd.f32 0.0, %v5160
        %5162 = vmatmul.f32.gmra.mxu0 %v5065
        %v5163 = vpop.f32.mrf.mxu0
        %v5164 = vadd.f32 0.0, %v5163
        %5165 = vmatmul.f32.gmra.mxu0 %v5066
        %v5166 = vpop.f32.mrf.mxu0
        %v5167 = vadd.f32 0.0, %v5166
        %5168 = vmatmul.f32.gmra.mxu0 %v5067
        %v5169 = vpop.f32.mrf.mxu0
        %v5170 = vadd.f32 0.0, %v5169
        %5171 = vmatmul.f32.gmra.mxu0 %v5068
        %v5172 = vpop.f32.mrf.mxu0
        %v5173 = vadd.f32 0.0, %v5172
        %5174 = vmatmul.f32.gmra.mxu0 %v5069
        %v5175 = vpop.f32.mrf.mxu0
        %v5176 = vadd.f32 0.0, %v5175
        %5177 = vmatmul.f32.gmra.mxu0 %v5070
        %v5178 = vpop.f32.mrf.mxu0
        %v5179 = vadd.f32 0.0, %v5178
        %5180 = vmatmul.f32.gmra.mxu0 %v5071
        %v5181 = vpop.f32.mrf.mxu0
        %v5182 = vadd.f32 0.0, %v5181
        %5183 = vmatmul.f32.gmra.mxu0 %v5072
        %v5184 = vpop.f32.mrf.mxu0
        %v5185 = vadd.f32 0.0, %v5184
        %5186 = vmatmul.f32.gmra.mxu0 %v5073
        %v5187 = vpop.f32.mrf.mxu0
        %v5188 = vadd.f32 0.0, %v5187
        %5189 = vmatmul.f32.gmra.mxu0 %v5074
        %v5190 = vpop.f32.mrf.mxu0
        %v5191 = vadd.f32 0.0, %v5190
        %5192 = vmatmul.f32.gmra.mxu0 %v5075
        %v5193 = vpop.f32.mrf.mxu0
        %v5194 = vadd.f32 0.0, %v5193
        %5195 = vmatmul.f32.gmra.mxu0 %v5076
        %v5196 = vpop.f32.mrf.mxu0
        %v5197 = vadd.f32 0.0, %v5196
        %5198 = vmatmul.f32.gmra.mxu0 %v5077
        %v5199 = vpop.f32.mrf.mxu0
        %v5200 = vadd.f32 0.0, %v5199
        %5201 = vmatmul.f32.gmra.mxu0 %v5078
        %v5202 = vpop.f32.mrf.mxu0
        %v5203 = vadd.f32 0.0, %v5202
        %5204 = vmatmul.f32.gmra.mxu0 %v5079
        %v5205 = vpop.f32.mrf.mxu0
        %v5206 = vadd.f32 0.0, %v5205
        %5207 = vmatmul.f32.gmra.mxu0 %v5080
        %v5208 = vpop.f32.mrf.mxu0
        %v5209 = vadd.f32 0.0, %v5208
        %5210 = vmatmul.f32.gmra.mxu0 %v5081
        %v5211 = vpop.f32.mrf.mxu0
        %v5212 = vadd.f32 0.0, %v5211
        %5213 = vmatmul.f32.gmra.mxu0 %v5082
        %v5214 = vpop.f32.mrf.mxu0
        %v5215 = vadd.f32 0.0, %v5214
        %5216 = vmatmul.f32.gmra.mxu0 %v5083
        %v5217 = vpop.f32.mrf.mxu0
        %v5218 = vadd.f32 0.0, %v5217
        %5219 = vmatmul.f32.gmra.mxu0 %v5084
        %v5220 = vpop.f32.mrf.mxu0
        %v5221 = vadd.f32 0.0, %v5220
        %5222 = vmatmul.f32.gmra.mxu0 %v5085
        %v5223 = vpop.f32.mrf.mxu0
        %v5224 = vadd.f32 0.0, %v5223
        %5225 = vmatmul.f32.gmra.mxu0 %v5086
        %v5226 = vpop.f32.mrf.mxu0
        %v5227 = vadd.f32 0.0, %v5226
        %5228 = vdwg.mxu0
        %v5229 = vadd.f32 %v5015, %v5122
        %v5230 = vadd.f32 %v5016, %v5125
        %v5231 = vadd.f32 %v5017, %v5128
        %v5232 = vadd.f32 %v5018, %v5131
        %v5233 = vadd.f32 %v5019, %v5134
        %v5234 = vadd.f32 %v5020, %v5137
        %v5235 = vadd.f32 %v5021, %v5140
        %v5236 = vadd.f32 %v5022, %v5143
        %v5237 = vadd.f32 %v5023, %v5146
        %v5238 = vadd.f32 %v5024, %v5149
        %v5239 = vadd.f32 %v5025, %v5152
        %v5240 = vadd.f32 %v5026, %v5155
        %v5241 = vadd.f32 %v5027, %v5158
        %v5242 = vadd.f32 %v5028, %v5161
        %v5243 = vadd.f32 %v5029, %v5164
        %v5244 = vadd.f32 %v5030, %v5167
        %v5245 = vadd.f32 %v5031, %v5170
        %v5246 = vadd.f32 %v5032, %v5173
        %v5247 = vadd.f32 %v5033, %v5176
        %v5248 = vadd.f32 %v5034, %v5179
        %v5249 = vadd.f32 %v5035, %v5182
        %v5250 = vadd.f32 %v5036, %v5185
        %v5251 = vadd.f32 %v5037, %v5188
        %v5252 = vadd.f32 %v5038, %v5191
        %v5253 = vadd.f32 %v5039, %v5194
        %v5254 = vadd.f32 %v5040, %v5197
        %v5255 = vadd.f32 %v5041, %v5200
        %v5256 = vadd.f32 %v5042, %v5203
        %v5257 = vadd.f32 %v5043, %v5206
        %v5258 = vadd.f32 %v5044, %v5209
        %v5259 = vadd.f32 %v5045, %v5212
        %v5260 = vadd.f32 %v5046, %v5215
        %v5261 = vadd.f32 %v5047, %v5218
        %v5262 = vadd.f32 %v5048, %v5221
        %v5263 = vadd.f32 %v5049, %v5224
        %v5264 = vadd.f32 %v5050, %v5227
        %v5265 = vld [vmem:[#allocation2 + $0x13] sm:$0xff]
        %v5266 = vld [vmem:[#allocation2 + $0x1b] sm:$0xff]
        %v5267 = vld [vmem:[#allocation2 + $0x23] sm:$0xff]
        %v5268 = vld [vmem:[#allocation2 + $0x2b] sm:$0xff]
        %v5269 = vld [vmem:[#allocation2 + $0x33] sm:$0xff]
        %v5270 = vld [vmem:[#allocation2 + $0x3b] sm:$0xff]
        %v5271 = vld [vmem:[#allocation2 + $0x43] sm:$0xff]
        %v5272 = vld [vmem:[#allocation2 + $0x4b] sm:$0xff]
        %v5273 = vld [vmem:[#allocation2 + $0x53] sm:$0xff]
        %v5274 = vld [vmem:[#allocation2 + $0x5b] sm:$0xff]
        %v5275 = vld [vmem:[#allocation2 + $0x63] sm:$0xff]
        %v5276 = vld [vmem:[#allocation2 + $0x6b] sm:$0xff]
        %v5277 = vld [vmem:[#allocation2 + $0x73] sm:$0xff]
        %v5278 = vld [vmem:[#allocation2 + $0x7b] sm:$0xff]
        %v5279 = vld [vmem:[#allocation2 + $0x83] sm:$0xff]
        %v5280 = vld [vmem:[#allocation2 + $0x8b] sm:$0xff]
        %v5281 = vld [vmem:[#allocation2 + $0x93] sm:$0xff]
        %v5282 = vld [vmem:[#allocation2 + $0x9b] sm:$0xff]
        %v5283 = vld [vmem:[#allocation2 + $0xa3] sm:$0xff]
        %v5284 = vld [vmem:[#allocation2 + $0xab] sm:$0xff]
        %v5285 = vld [vmem:[#allocation2 + $0xb3] sm:$0xff]
        %v5286 = vld [vmem:[#allocation2 + $0xbb] sm:$0xff]
        %v5287 = vld [vmem:[#allocation2 + $0xc3] sm:$0xff]
        %v5288 = vld [vmem:[#allocation2 + $0xcb] sm:$0xff]
        %v5289 = vld [vmem:[#allocation2 + $0xd3] sm:$0xff]
        %v5290 = vld [vmem:[#allocation2 + $0xdb] sm:$0xff]
        %v5291 = vld [vmem:[#allocation2 + $0xe3] sm:$0xff]
        %v5292 = vld [vmem:[#allocation2 + $0xeb] sm:$0xff]
        %v5293 = vld [vmem:[#allocation2 + $0xf3] sm:$0xff]
        %v5294 = vld [vmem:[#allocation2 + $0xfb] sm:$0xff]
        %v5295 = vld [vmem:[#allocation2 + $0x103] sm:$0xff]
        %v5296 = vld [vmem:[#allocation2 + $0x10b] sm:$0xff]
        %v5297 = vld [vmem:[#allocation2 + $0x113] sm:$0xff]
        %v5298 = vld [vmem:[#allocation2 + $0x11b] sm:$0xff]
        %v5299 = vld [vmem:[#allocation2 + $0x123] sm:$0xff]
        %v5300 = vld [vmem:[#allocation2 + $0x12b] sm:$0xff]
        %s5301 = scalar_lea.vmem [#allocation3], 512
        %v5302 = vld [vmem:[%s5301] sm:$0xff]
        %v5303 = vld [vmem:[%s5301 + $0x8] sm:$0xff]
        %v5304 = vld [vmem:[%s5301 + $0x10] sm:$0xff]
        %v5305 = vld [vmem:[%s5301 + $0x18] sm:$0xff]
        %v5306 = vld [vmem:[%s5301 + $0x20] sm:$0xff]
        %v5307 = vld [vmem:[%s5301 + $0x28] sm:$0xff]
        %v5308 = vld [vmem:[%s5301 + $0x30] sm:$0xff]
        %v5309 = vld [vmem:[%s5301 + $0x38] sm:$0xff]
        %v5310 = vld [vmem:[%s5301 + $0x40] sm:$0xff]
        %v5311 = vld [vmem:[%s5301 + $0x48] sm:$0xff]
        %v5312 = vld [vmem:[%s5301 + $0x50] sm:$0xff]
        %v5313 = vld [vmem:[%s5301 + $0x58] sm:$0xff]
        %v5314 = vld [vmem:[%s5301 + $0x60] sm:$0xff]
        %v5315 = vld [vmem:[%s5301 + $0x68] sm:$0xff]
        %v5316 = vld [vmem:[%s5301 + $0x70] sm:$0xff]
        %v5317 = vld [vmem:[%s5301 + $0x78] sm:$0xff]
        %5318 = vmatpush.msra.mxu0 %v5317
        %5319 = vmatpush.msra.mxu0 %v5316
        %5320 = vmatpush.msra.mxu0 %v5315
        %5321 = vmatpush.msra.mxu0 %v5314
        %5322 = vmatpush.msra.mxu0 %v5313
        %5323 = vmatpush.msra.mxu0 %v5312
        %5324 = vmatpush.msra.mxu0 %v5311
        %5325 = vmatpush.msra.mxu0 %v5310
        %5326 = vmatpush.msra.mxu0 %v5309
        %5327 = vmatpush.msra.mxu0 %v5308
        %5328 = vmatpush.msra.mxu0 %v5307
        %5329 = vmatpush.msra.mxu0 %v5306
        %5330 = vmatpush.msra.mxu0 %v5305
        %5331 = vmatpush.msra.mxu0 %v5304
        %5332 = vmatpush.msra.mxu0 %v5303
        %5333 = vmatpush.msra.mxu0 %v5302
        %5334 = vmatmul.f32.gmra.mxu0 %v5265
        %v5335 = vpop.f32.mrf.mxu0
        %v5336 = vadd.f32 0.0, %v5335
        %5337 = vmatmul.f32.gmra.mxu0 %v5266
        %v5338 = vpop.f32.mrf.mxu0
        %v5339 = vadd.f32 0.0, %v5338
        %5340 = vmatmul.f32.gmra.mxu0 %v5267
        %v5341 = vpop.f32.mrf.mxu0
        %v5342 = vadd.f32 0.0, %v5341
        %5343 = vmatmul.f32.gmra.mxu0 %v5268
        %v5344 = vpop.f32.mrf.mxu0
        %v5345 = vadd.f32 0.0, %v5344
        %5346 = vmatmul.f32.gmra.mxu0 %v5269
        %v5347 = vpop.f32.mrf.mxu0
        %v5348 = vadd.f32 0.0, %v5347
        %5349 = vmatmul.f32.gmra.mxu0 %v5270
        %v5350 = vpop.f32.mrf.mxu0
        %v5351 = vadd.f32 0.0, %v5350
        %5352 = vmatmul.f32.gmra.mxu0 %v5271
        %v5353 = vpop.f32.mrf.mxu0
        %v5354 = vadd.f32 0.0, %v5353
        %5355 = vmatmul.f32.gmra.mxu0 %v5272
        %v5356 = vpop.f32.mrf.mxu0
        %v5357 = vadd.f32 0.0, %v5356
        %5358 = vmatmul.f32.gmra.mxu0 %v5273
        %v5359 = vpop.f32.mrf.mxu0
        %v5360 = vadd.f32 0.0, %v5359
        %5361 = vmatmul.f32.gmra.mxu0 %v5274
        %v5362 = vpop.f32.mrf.mxu0
        %v5363 = vadd.f32 0.0, %v5362
        %5364 = vmatmul.f32.gmra.mxu0 %v5275
        %v5365 = vpop.f32.mrf.mxu0
        %v5366 = vadd.f32 0.0, %v5365
        %5367 = vmatmul.f32.gmra.mxu0 %v5276
        %v5368 = vpop.f32.mrf.mxu0
        %v5369 = vadd.f32 0.0, %v5368
        %5370 = vmatmul.f32.gmra.mxu0 %v5277
        %v5371 = vpop.f32.mrf.mxu0
        %v5372 = vadd.f32 0.0, %v5371
        %5373 = vmatmul.f32.gmra.mxu0 %v5278
        %v5374 = vpop.f32.mrf.mxu0
        %v5375 = vadd.f32 0.0, %v5374
        %5376 = vmatmul.f32.gmra.mxu0 %v5279
        %v5377 = vpop.f32.mrf.mxu0
        %v5378 = vadd.f32 0.0, %v5377
        %5379 = vmatmul.f32.gmra.mxu0 %v5280
        %v5380 = vpop.f32.mrf.mxu0
        %v5381 = vadd.f32 0.0, %v5380
        %5382 = vmatmul.f32.gmra.mxu0 %v5281
        %v5383 = vpop.f32.mrf.mxu0
        %v5384 = vadd.f32 0.0, %v5383
        %5385 = vmatmul.f32.gmra.mxu0 %v5282
        %v5386 = vpop.f32.mrf.mxu0
        %v5387 = vadd.f32 0.0, %v5386
        %5388 = vmatmul.f32.gmra.mxu0 %v5283
        %v5389 = vpop.f32.mrf.mxu0
        %v5390 = vadd.f32 0.0, %v5389
        %5391 = vmatmul.f32.gmra.mxu0 %v5284
        %v5392 = vpop.f32.mrf.mxu0
        %v5393 = vadd.f32 0.0, %v5392
        %5394 = vmatmul.f32.gmra.mxu0 %v5285
        %v5395 = vpop.f32.mrf.mxu0
        %v5396 = vadd.f32 0.0, %v5395
        %5397 = vmatmul.f32.gmra.mxu0 %v5286
        %v5398 = vpop.f32.mrf.mxu0
        %v5399 = vadd.f32 0.0, %v5398
        %5400 = vmatmul.f32.gmra.mxu0 %v5287
        %v5401 = vpop.f32.mrf.mxu0
        %v5402 = vadd.f32 0.0, %v5401
        %5403 = vmatmul.f32.gmra.mxu0 %v5288
        %v5404 = vpop.f32.mrf.mxu0
        %v5405 = vadd.f32 0.0, %v5404
        %5406 = vmatmul.f32.gmra.mxu0 %v5289
        %v5407 = vpop.f32.mrf.mxu0
        %v5408 = vadd.f32 0.0, %v5407
        %5409 = vmatmul.f32.gmra.mxu0 %v5290
        %v5410 = vpop.f32.mrf.mxu0
        %v5411 = vadd.f32 0.0, %v5410
        %5412 = vmatmul.f32.gmra.mxu0 %v5291
        %v5413 = vpop.f32.mrf.mxu0
        %v5414 = vadd.f32 0.0, %v5413
        %5415 = vmatmul.f32.gmra.mxu0 %v5292
        %v5416 = vpop.f32.mrf.mxu0
        %v5417 = vadd.f32 0.0, %v5416
        %5418 = vmatmul.f32.gmra.mxu0 %v5293
        %v5419 = vpop.f32.mrf.mxu0
        %v5420 = vadd.f32 0.0, %v5419
        %5421 = vmatmul.f32.gmra.mxu0 %v5294
        %v5422 = vpop.f32.mrf.mxu0
        %v5423 = vadd.f32 0.0, %v5422
        %5424 = vmatmul.f32.gmra.mxu0 %v5295
        %v5425 = vpop.f32.mrf.mxu0
        %v5426 = vadd.f32 0.0, %v5425
        %5427 = vmatmul.f32.gmra.mxu0 %v5296
        %v5428 = vpop.f32.mrf.mxu0
        %v5429 = vadd.f32 0.0, %v5428
        %5430 = vmatmul.f32.gmra.mxu0 %v5297
        %v5431 = vpop.f32.mrf.mxu0
        %v5432 = vadd.f32 0.0, %v5431
        %5433 = vmatmul.f32.gmra.mxu0 %v5298
        %v5434 = vpop.f32.mrf.mxu0
        %v5435 = vadd.f32 0.0, %v5434
        %5436 = vmatmul.f32.gmra.mxu0 %v5299
        %v5437 = vpop.f32.mrf.mxu0
        %v5438 = vadd.f32 0.0, %v5437
        %5439 = vmatmul.f32.gmra.mxu0 %v5300
        %v5440 = vpop.f32.mrf.mxu0
        %v5441 = vadd.f32 0.0, %v5440
        %5442 = vdwg.mxu0
        %v5443 = vadd.f32 %v5229, %v5336
        %v5444 = vadd.f32 %v5230, %v5339
        %v5445 = vadd.f32 %v5231, %v5342
        %v5446 = vadd.f32 %v5232, %v5345
        %v5447 = vadd.f32 %v5233, %v5348
        %v5448 = vadd.f32 %v5234, %v5351
        %v5449 = vadd.f32 %v5235, %v5354
        %v5450 = vadd.f32 %v5236, %v5357
        %v5451 = vadd.f32 %v5237, %v5360
        %v5452 = vadd.f32 %v5238, %v5363
        %v5453 = vadd.f32 %v5239, %v5366
        %v5454 = vadd.f32 %v5240, %v5369
        %v5455 = vadd.f32 %v5241, %v5372
        %v5456 = vadd.f32 %v5242, %v5375
        %v5457 = vadd.f32 %v5243, %v5378
        %v5458 = vadd.f32 %v5244, %v5381
        %v5459 = vadd.f32 %v5245, %v5384
        %v5460 = vadd.f32 %v5246, %v5387
        %v5461 = vadd.f32 %v5247, %v5390
        %v5462 = vadd.f32 %v5248, %v5393
        %v5463 = vadd.f32 %v5249, %v5396
        %v5464 = vadd.f32 %v5250, %v5399
        %v5465 = vadd.f32 %v5251, %v5402
        %v5466 = vadd.f32 %v5252, %v5405
        %v5467 = vadd.f32 %v5253, %v5408
        %v5468 = vadd.f32 %v5254, %v5411
        %v5469 = vadd.f32 %v5255, %v5414
        %v5470 = vadd.f32 %v5256, %v5417
        %v5471 = vadd.f32 %v5257, %v5420
        %v5472 = vadd.f32 %v5258, %v5423
        %v5473 = vadd.f32 %v5259, %v5426
        %v5474 = vadd.f32 %v5260, %v5429
        %v5475 = vadd.f32 %v5261, %v5432
        %v5476 = vadd.f32 %v5262, %v5435
        %v5477 = vadd.f32 %v5263, %v5438
        %v5478 = vadd.f32 %v5264, %v5441
        %v5479 = vld [vmem:[#allocation2 + $0x14] sm:$0xff]
        %v5480 = vld [vmem:[#allocation2 + $0x1c] sm:$0xff]
        %v5481 = vld [vmem:[#allocation2 + $0x24] sm:$0xff]
        %v5482 = vld [vmem:[#allocation2 + $0x2c] sm:$0xff]
        %v5483 = vld [vmem:[#allocation2 + $0x34] sm:$0xff]
        %v5484 = vld [vmem:[#allocation2 + $0x3c] sm:$0xff]
        %v5485 = vld [vmem:[#allocation2 + $0x44] sm:$0xff]
        %v5486 = vld [vmem:[#allocation2 + $0x4c] sm:$0xff]
        %v5487 = vld [vmem:[#allocation2 + $0x54] sm:$0xff]
        %v5488 = vld [vmem:[#allocation2 + $0x5c] sm:$0xff]
        %v5489 = vld [vmem:[#allocation2 + $0x64] sm:$0xff]
        %v5490 = vld [vmem:[#allocation2 + $0x6c] sm:$0xff]
        %v5491 = vld [vmem:[#allocation2 + $0x74] sm:$0xff]
        %v5492 = vld [vmem:[#allocation2 + $0x7c] sm:$0xff]
        %v5493 = vld [vmem:[#allocation2 + $0x84] sm:$0xff]
        %v5494 = vld [vmem:[#allocation2 + $0x8c] sm:$0xff]
        %v5495 = vld [vmem:[#allocation2 + $0x94] sm:$0xff]
        %v5496 = vld [vmem:[#allocation2 + $0x9c] sm:$0xff]
        %v5497 = vld [vmem:[#allocation2 + $0xa4] sm:$0xff]
        %v5498 = vld [vmem:[#allocation2 + $0xac] sm:$0xff]
        %v5499 = vld [vmem:[#allocation2 + $0xb4] sm:$0xff]
        %v5500 = vld [vmem:[#allocation2 + $0xbc] sm:$0xff]
        %v5501 = vld [vmem:[#allocation2 + $0xc4] sm:$0xff]
        %v5502 = vld [vmem:[#allocation2 + $0xcc] sm:$0xff]
        %v5503 = vld [vmem:[#allocation2 + $0xd4] sm:$0xff]
        %v5504 = vld [vmem:[#allocation2 + $0xdc] sm:$0xff]
        %v5505 = vld [vmem:[#allocation2 + $0xe4] sm:$0xff]
        %v5506 = vld [vmem:[#allocation2 + $0xec] sm:$0xff]
        %v5507 = vld [vmem:[#allocation2 + $0xf4] sm:$0xff]
        %v5508 = vld [vmem:[#allocation2 + $0xfc] sm:$0xff]
        %v5509 = vld [vmem:[#allocation2 + $0x104] sm:$0xff]
        %v5510 = vld [vmem:[#allocation2 + $0x10c] sm:$0xff]
        %v5511 = vld [vmem:[#allocation2 + $0x114] sm:$0xff]
        %v5512 = vld [vmem:[#allocation2 + $0x11c] sm:$0xff]
        %v5513 = vld [vmem:[#allocation2 + $0x124] sm:$0xff]
        %v5514 = vld [vmem:[#allocation2 + $0x12c] sm:$0xff]
        %s5515 = scalar_lea.vmem [#allocation3], 640
        %v5516 = vld [vmem:[%s5515] sm:$0xff]
        %v5517 = vld [vmem:[%s5515 + $0x8] sm:$0xff]
        %v5518 = vld [vmem:[%s5515 + $0x10] sm:$0xff]
        %v5519 = vld [vmem:[%s5515 + $0x18] sm:$0xff]
        %v5520 = vld [vmem:[%s5515 + $0x20] sm:$0xff]
        %v5521 = vld [vmem:[%s5515 + $0x28] sm:$0xff]
        %v5522 = vld [vmem:[%s5515 + $0x30] sm:$0xff]
        %v5523 = vld [vmem:[%s5515 + $0x38] sm:$0xff]
        %v5524 = vld [vmem:[%s5515 + $0x40] sm:$0xff]
        %v5525 = vld [vmem:[%s5515 + $0x48] sm:$0xff]
        %v5526 = vld [vmem:[%s5515 + $0x50] sm:$0xff]
        %v5527 = vld [vmem:[%s5515 + $0x58] sm:$0xff]
        %v5528 = vld [vmem:[%s5515 + $0x60] sm:$0xff]
        %v5529 = vld [vmem:[%s5515 + $0x68] sm:$0xff]
        %v5530 = vld [vmem:[%s5515 + $0x70] sm:$0xff]
        %v5531 = vld [vmem:[%s5515 + $0x78] sm:$0xff]
        %5532 = vmatpush.msra.mxu0 %v5531
        %5533 = vmatpush.msra.mxu0 %v5530
        %5534 = vmatpush.msra.mxu0 %v5529
        %5535 = vmatpush.msra.mxu0 %v5528
        %5536 = vmatpush.msra.mxu0 %v5527
        %5537 = vmatpush.msra.mxu0 %v5526
        %5538 = vmatpush.msra.mxu0 %v5525
        %5539 = vmatpush.msra.mxu0 %v5524
        %5540 = vmatpush.msra.mxu0 %v5523
        %5541 = vmatpush.msra.mxu0 %v5522
        %5542 = vmatpush.msra.mxu0 %v5521
        %5543 = vmatpush.msra.mxu0 %v5520
        %5544 = vmatpush.msra.mxu0 %v5519
        %5545 = vmatpush.msra.mxu0 %v5518
        %5546 = vmatpush.msra.mxu0 %v5517
        %5547 = vmatpush.msra.mxu0 %v5516
        %5548 = vmatmul.f32.gmra.mxu0 %v5479
        %v5549 = vpop.f32.mrf.mxu0
        %v5550 = vadd.f32 0.0, %v5549
        %5551 = vmatmul.f32.gmra.mxu0 %v5480
        %v5552 = vpop.f32.mrf.mxu0
        %v5553 = vadd.f32 0.0, %v5552
        %5554 = vmatmul.f32.gmra.mxu0 %v5481
        %v5555 = vpop.f32.mrf.mxu0
        %v5556 = vadd.f32 0.0, %v5555
        %5557 = vmatmul.f32.gmra.mxu0 %v5482
        %v5558 = vpop.f32.mrf.mxu0
        %v5559 = vadd.f32 0.0, %v5558
        %5560 = vmatmul.f32.gmra.mxu0 %v5483
        %v5561 = vpop.f32.mrf.mxu0
        %v5562 = vadd.f32 0.0, %v5561
        %5563 = vmatmul.f32.gmra.mxu0 %v5484
        %v5564 = vpop.f32.mrf.mxu0
        %v5565 = vadd.f32 0.0, %v5564
        %5566 = vmatmul.f32.gmra.mxu0 %v5485
        %v5567 = vpop.f32.mrf.mxu0
        %v5568 = vadd.f32 0.0, %v5567
        %5569 = vmatmul.f32.gmra.mxu0 %v5486
        %v5570 = vpop.f32.mrf.mxu0
        %v5571 = vadd.f32 0.0, %v5570
        %5572 = vmatmul.f32.gmra.mxu0 %v5487
        %v5573 = vpop.f32.mrf.mxu0
        %v5574 = vadd.f32 0.0, %v5573
        %5575 = vmatmul.f32.gmra.mxu0 %v5488
        %v5576 = vpop.f32.mrf.mxu0
        %v5577 = vadd.f32 0.0, %v5576
        %5578 = vmatmul.f32.gmra.mxu0 %v5489
        %v5579 = vpop.f32.mrf.mxu0
        %v5580 = vadd.f32 0.0, %v5579
        %5581 = vmatmul.f32.gmra.mxu0 %v5490
        %v5582 = vpop.f32.mrf.mxu0
        %v5583 = vadd.f32 0.0, %v5582
        %5584 = vmatmul.f32.gmra.mxu0 %v5491
        %v5585 = vpop.f32.mrf.mxu0
        %v5586 = vadd.f32 0.0, %v5585
        %5587 = vmatmul.f32.gmra.mxu0 %v5492
        %v5588 = vpop.f32.mrf.mxu0
        %v5589 = vadd.f32 0.0, %v5588
        %5590 = vmatmul.f32.gmra.mxu0 %v5493
        %v5591 = vpop.f32.mrf.mxu0
        %v5592 = vadd.f32 0.0, %v5591
        %5593 = vmatmul.f32.gmra.mxu0 %v5494
        %v5594 = vpop.f32.mrf.mxu0
        %v5595 = vadd.f32 0.0, %v5594
        %5596 = vmatmul.f32.gmra.mxu0 %v5495
        %v5597 = vpop.f32.mrf.mxu0
        %v5598 = vadd.f32 0.0, %v5597
        %5599 = vmatmul.f32.gmra.mxu0 %v5496
        %v5600 = vpop.f32.mrf.mxu0
        %v5601 = vadd.f32 0.0, %v5600
        %5602 = vmatmul.f32.gmra.mxu0 %v5497
        %v5603 = vpop.f32.mrf.mxu0
        %v5604 = vadd.f32 0.0, %v5603
        %5605 = vmatmul.f32.gmra.mxu0 %v5498
        %v5606 = vpop.f32.mrf.mxu0
        %v5607 = vadd.f32 0.0, %v5606
        %5608 = vmatmul.f32.gmra.mxu0 %v5499
        %v5609 = vpop.f32.mrf.mxu0
        %v5610 = vadd.f32 0.0, %v5609
        %5611 = vmatmul.f32.gmra.mxu0 %v5500
        %v5612 = vpop.f32.mrf.mxu0
        %v5613 = vadd.f32 0.0, %v5612
        %5614 = vmatmul.f32.gmra.mxu0 %v5501
        %v5615 = vpop.f32.mrf.mxu0
        %v5616 = vadd.f32 0.0, %v5615
        %5617 = vmatmul.f32.gmra.mxu0 %v5502
        %v5618 = vpop.f32.mrf.mxu0
        %v5619 = vadd.f32 0.0, %v5618
        %5620 = vmatmul.f32.gmra.mxu0 %v5503
        %v5621 = vpop.f32.mrf.mxu0
        %v5622 = vadd.f32 0.0, %v5621
        %5623 = vmatmul.f32.gmra.mxu0 %v5504
        %v5624 = vpop.f32.mrf.mxu0
        %v5625 = vadd.f32 0.0, %v5624
        %5626 = vmatmul.f32.gmra.mxu0 %v5505
        %v5627 = vpop.f32.mrf.mxu0
        %v5628 = vadd.f32 0.0, %v5627
        %5629 = vmatmul.f32.gmra.mxu0 %v5506
        %v5630 = vpop.f32.mrf.mxu0
        %v5631 = vadd.f32 0.0, %v5630
        %5632 = vmatmul.f32.gmra.mxu0 %v5507
        %v5633 = vpop.f32.mrf.mxu0
        %v5634 = vadd.f32 0.0, %v5633
        %5635 = vmatmul.f32.gmra.mxu0 %v5508
        %v5636 = vpop.f32.mrf.mxu0
        %v5637 = vadd.f32 0.0, %v5636
        %5638 = vmatmul.f32.gmra.mxu0 %v5509
        %v5639 = vpop.f32.mrf.mxu0
        %v5640 = vadd.f32 0.0, %v5639
        %5641 = vmatmul.f32.gmra.mxu0 %v5510
        %v5642 = vpop.f32.mrf.mxu0
        %v5643 = vadd.f32 0.0, %v5642
        %5644 = vmatmul.f32.gmra.mxu0 %v5511
        %v5645 = vpop.f32.mrf.mxu0
        %v5646 = vadd.f32 0.0, %v5645
        %5647 = vmatmul.f32.gmra.mxu0 %v5512
        %v5648 = vpop.f32.mrf.mxu0
        %v5649 = vadd.f32 0.0, %v5648
        %5650 = vmatmul.f32.gmra.mxu0 %v5513
        %v5651 = vpop.f32.mrf.mxu0
        %v5652 = vadd.f32 0.0, %v5651
        %5653 = vmatmul.f32.gmra.mxu0 %v5514
        %v5654 = vpop.f32.mrf.mxu0
        %v5655 = vadd.f32 0.0, %v5654
        %5656 = vdwg.mxu0
        %v5657 = vadd.f32 %v5443, %v5550
        %v5658 = vadd.f32 %v5444, %v5553
        %v5659 = vadd.f32 %v5445, %v5556
        %v5660 = vadd.f32 %v5446, %v5559
        %v5661 = vadd.f32 %v5447, %v5562
        %v5662 = vadd.f32 %v5448, %v5565
        %v5663 = vadd.f32 %v5449, %v5568
        %v5664 = vadd.f32 %v5450, %v5571
        %v5665 = vadd.f32 %v5451, %v5574
        %v5666 = vadd.f32 %v5452, %v5577
        %v5667 = vadd.f32 %v5453, %v5580
        %v5668 = vadd.f32 %v5454, %v5583
        %v5669 = vadd.f32 %v5455, %v5586
        %v5670 = vadd.f32 %v5456, %v5589
        %v5671 = vadd.f32 %v5457, %v5592
        %v5672 = vadd.f32 %v5458, %v5595
        %v5673 = vadd.f32 %v5459, %v5598
        %v5674 = vadd.f32 %v5460, %v5601
        %v5675 = vadd.f32 %v5461, %v5604
        %v5676 = vadd.f32 %v5462, %v5607
        %v5677 = vadd.f32 %v5463, %v5610
        %v5678 = vadd.f32 %v5464, %v5613
        %v5679 = vadd.f32 %v5465, %v5616
        %v5680 = vadd.f32 %v5466, %v5619
        %v5681 = vadd.f32 %v5467, %v5622
        %v5682 = vadd.f32 %v5468, %v5625
        %v5683 = vadd.f32 %v5469, %v5628
        %v5684 = vadd.f32 %v5470, %v5631
        %v5685 = vadd.f32 %v5471, %v5634
        %v5686 = vadd.f32 %v5472, %v5637
        %v5687 = vadd.f32 %v5473, %v5640
        %v5688 = vadd.f32 %v5474, %v5643
        %v5689 = vadd.f32 %v5475, %v5646
        %v5690 = vadd.f32 %v5476, %v5649
        %v5691 = vadd.f32 %v5477, %v5652
        %v5692 = vadd.f32 %v5478, %v5655
        %v5693 = vld [vmem:[#allocation2 + $0x24] sm:$0xff]
        %v5694 = vld [vmem:[#allocation2 + $0x2c] sm:$0xff]
        %v5695 = vld [vmem:[#allocation2 + $0x34] sm:$0xff]
        %v5696 = vld [vmem:[#allocation2 + $0x3c] sm:$0xff]
        %v5697 = vld [vmem:[#allocation2 + $0x44] sm:$0xff]
        %v5698 = vld [vmem:[#allocation2 + $0x4c] sm:$0xff]
        %v5699 = vld [vmem:[#allocation2 + $0x54] sm:$0xff]
        %v5700 = vld [vmem:[#allocation2 + $0x5c] sm:$0xff]
        %v5701 = vld [vmem:[#allocation2 + $0x64] sm:$0xff]
        %v5702 = vld [vmem:[#allocation2 + $0x6c] sm:$0xff]
        %v5703 = vld [vmem:[#allocation2 + $0x74] sm:$0xff]
        %v5704 = vld [vmem:[#allocation2 + $0x7c] sm:$0xff]
        %v5705 = vld [vmem:[#allocation2 + $0x84] sm:$0xff]
        %v5706 = vld [vmem:[#allocation2 + $0x8c] sm:$0xff]
        %v5707 = vld [vmem:[#allocation2 + $0x94] sm:$0xff]
        %v5708 = vld [vmem:[#allocation2 + $0x9c] sm:$0xff]
        %v5709 = vld [vmem:[#allocation2 + $0xa4] sm:$0xff]
        %v5710 = vld [vmem:[#allocation2 + $0xac] sm:$0xff]
        %v5711 = vld [vmem:[#allocation2 + $0xb4] sm:$0xff]
        %v5712 = vld [vmem:[#allocation2 + $0xbc] sm:$0xff]
        %v5713 = vld [vmem:[#allocation2 + $0xc4] sm:$0xff]
        %v5714 = vld [vmem:[#allocation2 + $0xcc] sm:$0xff]
        %v5715 = vld [vmem:[#allocation2 + $0xd4] sm:$0xff]
        %v5716 = vld [vmem:[#allocation2 + $0xdc] sm:$0xff]
        %v5717 = vld [vmem:[#allocation2 + $0xe4] sm:$0xff]
        %v5718 = vld [vmem:[#allocation2 + $0xec] sm:$0xff]
        %v5719 = vld [vmem:[#allocation2 + $0xf4] sm:$0xff]
        %v5720 = vld [vmem:[#allocation2 + $0xfc] sm:$0xff]
        %v5721 = vld [vmem:[#allocation2 + $0x104] sm:$0xff]
        %v5722 = vld [vmem:[#allocation2 + $0x10c] sm:$0xff]
        %v5723 = vld [vmem:[#allocation2 + $0x114] sm:$0xff]
        %v5724 = vld [vmem:[#allocation2 + $0x11c] sm:$0xff]
        %v5725 = vld [vmem:[#allocation2 + $0x124] sm:$0xff]
        %v5726 = vld [vmem:[#allocation2 + $0x12c] sm:$0xff]
        %v5727 = vld [vmem:[#allocation2 + $0x134] sm:$0xff]
        %v5728 = vld [vmem:[#allocation2 + $0x13c] sm:$0xff]
        %s5729 = scalar_lea.vmem [#allocation3], 768
        %v5730 = vld [vmem:[%s5729] sm:$0xff]
        %v5731 = vld [vmem:[%s5729 + $0x8] sm:$0xff]
        %v5732 = vld [vmem:[%s5729 + $0x10] sm:$0xff]
        %v5733 = vld [vmem:[%s5729 + $0x18] sm:$0xff]
        %v5734 = vld [vmem:[%s5729 + $0x20] sm:$0xff]
        %v5735 = vld [vmem:[%s5729 + $0x28] sm:$0xff]
        %v5736 = vld [vmem:[%s5729 + $0x30] sm:$0xff]
        %v5737 = vld [vmem:[%s5729 + $0x38] sm:$0xff]
        %v5738 = vld [vmem:[%s5729 + $0x40] sm:$0xff]
        %v5739 = vld [vmem:[%s5729 + $0x48] sm:$0xff]
        %v5740 = vld [vmem:[%s5729 + $0x50] sm:$0xff]
        %v5741 = vld [vmem:[%s5729 + $0x58] sm:$0xff]
        %v5742 = vld [vmem:[%s5729 + $0x60] sm:$0xff]
        %v5743 = vld [vmem:[%s5729 + $0x68] sm:$0xff]
        %v5744 = vld [vmem:[%s5729 + $0x70] sm:$0xff]
        %v5745 = vld [vmem:[%s5729 + $0x78] sm:$0xff]
        %5746 = vmatpush.msra.mxu0 %v5745
        %5747 = vmatpush.msra.mxu0 %v5744
        %5748 = vmatpush.msra.mxu0 %v5743
        %5749 = vmatpush.msra.mxu0 %v5742
        %5750 = vmatpush.msra.mxu0 %v5741
        %5751 = vmatpush.msra.mxu0 %v5740
        %5752 = vmatpush.msra.mxu0 %v5739
        %5753 = vmatpush.msra.mxu0 %v5738
        %5754 = vmatpush.msra.mxu0 %v5737
        %5755 = vmatpush.msra.mxu0 %v5736
        %5756 = vmatpush.msra.mxu0 %v5735
        %5757 = vmatpush.msra.mxu0 %v5734
        %5758 = vmatpush.msra.mxu0 %v5733
        %5759 = vmatpush.msra.mxu0 %v5732
        %5760 = vmatpush.msra.mxu0 %v5731
        %5761 = vmatpush.msra.mxu0 %v5730
        %5762 = vmatmul.f32.gmra.mxu0 %v5693
        %v5763 = vpop.f32.mrf.mxu0
        %v5764 = vadd.f32 0.0, %v5763
        %5765 = vmatmul.f32.gmra.mxu0 %v5694
        %v5766 = vpop.f32.mrf.mxu0
        %v5767 = vadd.f32 0.0, %v5766
        %5768 = vmatmul.f32.gmra.mxu0 %v5695
        %v5769 = vpop.f32.mrf.mxu0
        %v5770 = vadd.f32 0.0, %v5769
        %5771 = vmatmul.f32.gmra.mxu0 %v5696
        %v5772 = vpop.f32.mrf.mxu0
        %v5773 = vadd.f32 0.0, %v5772
        %5774 = vmatmul.f32.gmra.mxu0 %v5697
        %v5775 = vpop.f32.mrf.mxu0
        %v5776 = vadd.f32 0.0, %v5775
        %5777 = vmatmul.f32.gmra.mxu0 %v5698
        %v5778 = vpop.f32.mrf.mxu0
        %v5779 = vadd.f32 0.0, %v5778
        %5780 = vmatmul.f32.gmra.mxu0 %v5699
        %v5781 = vpop.f32.mrf.mxu0
        %v5782 = vadd.f32 0.0, %v5781
        %5783 = vmatmul.f32.gmra.mxu0 %v5700
        %v5784 = vpop.f32.mrf.mxu0
        %v5785 = vadd.f32 0.0, %v5784
        %5786 = vmatmul.f32.gmra.mxu0 %v5701
        %v5787 = vpop.f32.mrf.mxu0
        %v5788 = vadd.f32 0.0, %v5787
        %5789 = vmatmul.f32.gmra.mxu0 %v5702
        %v5790 = vpop.f32.mrf.mxu0
        %v5791 = vadd.f32 0.0, %v5790
        %5792 = vmatmul.f32.gmra.mxu0 %v5703
        %v5793 = vpop.f32.mrf.mxu0
        %v5794 = vadd.f32 0.0, %v5793
        %5795 = vmatmul.f32.gmra.mxu0 %v5704
        %v5796 = vpop.f32.mrf.mxu0
        %v5797 = vadd.f32 0.0, %v5796
        %5798 = vmatmul.f32.gmra.mxu0 %v5705
        %v5799 = vpop.f32.mrf.mxu0
        %v5800 = vadd.f32 0.0, %v5799
        %5801 = vmatmul.f32.gmra.mxu0 %v5706
        %v5802 = vpop.f32.mrf.mxu0
        %v5803 = vadd.f32 0.0, %v5802
        %5804 = vmatmul.f32.gmra.mxu0 %v5707
        %v5805 = vpop.f32.mrf.mxu0
        %v5806 = vadd.f32 0.0, %v5805
        %5807 = vmatmul.f32.gmra.mxu0 %v5708
        %v5808 = vpop.f32.mrf.mxu0
        %v5809 = vadd.f32 0.0, %v5808
        %5810 = vmatmul.f32.gmra.mxu0 %v5709
        %v5811 = vpop.f32.mrf.mxu0
        %v5812 = vadd.f32 0.0, %v5811
        %5813 = vmatmul.f32.gmra.mxu0 %v5710
        %v5814 = vpop.f32.mrf.mxu0
        %v5815 = vadd.f32 0.0, %v5814
        %5816 = vmatmul.f32.gmra.mxu0 %v5711
        %v5817 = vpop.f32.mrf.mxu0
        %v5818 = vadd.f32 0.0, %v5817
        %5819 = vmatmul.f32.gmra.mxu0 %v5712
        %v5820 = vpop.f32.mrf.mxu0
        %v5821 = vadd.f32 0.0, %v5820
        %5822 = vmatmul.f32.gmra.mxu0 %v5713
        %v5823 = vpop.f32.mrf.mxu0
        %v5824 = vadd.f32 0.0, %v5823
        %5825 = vmatmul.f32.gmra.mxu0 %v5714
        %v5826 = vpop.f32.mrf.mxu0
        %v5827 = vadd.f32 0.0, %v5826
        %5828 = vmatmul.f32.gmra.mxu0 %v5715
        %v5829 = vpop.f32.mrf.mxu0
        %v5830 = vadd.f32 0.0, %v5829
        %5831 = vmatmul.f32.gmra.mxu0 %v5716
        %v5832 = vpop.f32.mrf.mxu0
        %v5833 = vadd.f32 0.0, %v5832
        %5834 = vmatmul.f32.gmra.mxu0 %v5717
        %v5835 = vpop.f32.mrf.mxu0
        %v5836 = vadd.f32 0.0, %v5835
        %5837 = vmatmul.f32.gmra.mxu0 %v5718
        %v5838 = vpop.f32.mrf.mxu0
        %v5839 = vadd.f32 0.0, %v5838
        %5840 = vmatmul.f32.gmra.mxu0 %v5719
        %v5841 = vpop.f32.mrf.mxu0
        %v5842 = vadd.f32 0.0, %v5841
        %5843 = vmatmul.f32.gmra.mxu0 %v5720
        %v5844 = vpop.f32.mrf.mxu0
        %v5845 = vadd.f32 0.0, %v5844
        %5846 = vmatmul.f32.gmra.mxu0 %v5721
        %v5847 = vpop.f32.mrf.mxu0
        %v5848 = vadd.f32 0.0, %v5847
        %5849 = vmatmul.f32.gmra.mxu0 %v5722
        %v5850 = vpop.f32.mrf.mxu0
        %v5851 = vadd.f32 0.0, %v5850
        %5852 = vmatmul.f32.gmra.mxu0 %v5723
        %v5853 = vpop.f32.mrf.mxu0
        %v5854 = vadd.f32 0.0, %v5853
        %5855 = vmatmul.f32.gmra.mxu0 %v5724
        %v5856 = vpop.f32.mrf.mxu0
        %v5857 = vadd.f32 0.0, %v5856
        %5858 = vmatmul.f32.gmra.mxu0 %v5725
        %v5859 = vpop.f32.mrf.mxu0
        %v5860 = vadd.f32 0.0, %v5859
        %5861 = vmatmul.f32.gmra.mxu0 %v5726
        %v5862 = vpop.f32.mrf.mxu0
        %v5863 = vadd.f32 0.0, %v5862
        %5864 = vmatmul.f32.gmra.mxu0 %v5727
        %v5865 = vpop.f32.mrf.mxu0
        %v5866 = vadd.f32 0.0, %v5865
        %5867 = vmatmul.f32.gmra.mxu0 %v5728
        %v5868 = vpop.f32.mrf.mxu0
        %v5869 = vadd.f32 0.0, %v5868
        %5870 = vdwg.mxu0
        %v5871 = vadd.f32 %v5657, %v5764
        %v5872 = vadd.f32 %v5658, %v5767
        %v5873 = vadd.f32 %v5659, %v5770
        %v5874 = vadd.f32 %v5660, %v5773
        %v5875 = vadd.f32 %v5661, %v5776
        %v5876 = vadd.f32 %v5662, %v5779
        %v5877 = vadd.f32 %v5663, %v5782
        %v5878 = vadd.f32 %v5664, %v5785
        %v5879 = vadd.f32 %v5665, %v5788
        %v5880 = vadd.f32 %v5666, %v5791
        %v5881 = vadd.f32 %v5667, %v5794
        %v5882 = vadd.f32 %v5668, %v5797
        %v5883 = vadd.f32 %v5669, %v5800
        %v5884 = vadd.f32 %v5670, %v5803
        %v5885 = vadd.f32 %v5671, %v5806
        %v5886 = vadd.f32 %v5672, %v5809
        %v5887 = vadd.f32 %v5673, %v5812
        %v5888 = vadd.f32 %v5674, %v5815
        %v5889 = vadd.f32 %v5675, %v5818
        %v5890 = vadd.f32 %v5676, %v5821
        %v5891 = vadd.f32 %v5677, %v5824
        %v5892 = vadd.f32 %v5678, %v5827
        %v5893 = vadd.f32 %v5679, %v5830
        %v5894 = vadd.f32 %v5680, %v5833
        %v5895 = vadd.f32 %v5681, %v5836
        %v5896 = vadd.f32 %v5682, %v5839
        %v5897 = vadd.f32 %v5683, %v5842
        %v5898 = vadd.f32 %v5684, %v5845
        %v5899 = vadd.f32 %v5685, %v5848
        %v5900 = vadd.f32 %v5686, %v5851
        %v5901 = vadd.f32 %v5687, %v5854
        %v5902 = vadd.f32 %v5688, %v5857
        %v5903 = vadd.f32 %v5689, %v5860
        %v5904 = vadd.f32 %v5690, %v5863
        %v5905 = vadd.f32 %v5691, %v5866
        %v5906 = vadd.f32 %v5692, %v5869
        %v5907 = vld [vmem:[#allocation2 + $0x25] sm:$0xff]
        %v5908 = vld [vmem:[#allocation2 + $0x2d] sm:$0xff]
        %v5909 = vld [vmem:[#allocation2 + $0x35] sm:$0xff]
        %v5910 = vld [vmem:[#allocation2 + $0x3d] sm:$0xff]
        %v5911 = vld [vmem:[#allocation2 + $0x45] sm:$0xff]
        %v5912 = vld [vmem:[#allocation2 + $0x4d] sm:$0xff]
        %v5913 = vld [vmem:[#allocation2 + $0x55] sm:$0xff]
        %v5914 = vld [vmem:[#allocation2 + $0x5d] sm:$0xff]
        %v5915 = vld [vmem:[#allocation2 + $0x65] sm:$0xff]
        %v5916 = vld [vmem:[#allocation2 + $0x6d] sm:$0xff]
        %v5917 = vld [vmem:[#allocation2 + $0x75] sm:$0xff]
        %v5918 = vld [vmem:[#allocation2 + $0x7d] sm:$0xff]
        %v5919 = vld [vmem:[#allocation2 + $0x85] sm:$0xff]
        %v5920 = vld [vmem:[#allocation2 + $0x8d] sm:$0xff]
        %v5921 = vld [vmem:[#allocation2 + $0x95] sm:$0xff]
        %v5922 = vld [vmem:[#allocation2 + $0x9d] sm:$0xff]
        %v5923 = vld [vmem:[#allocation2 + $0xa5] sm:$0xff]
        %v5924 = vld [vmem:[#allocation2 + $0xad] sm:$0xff]
        %v5925 = vld [vmem:[#allocation2 + $0xb5] sm:$0xff]
        %v5926 = vld [vmem:[#allocation2 + $0xbd] sm:$0xff]
        %v5927 = vld [vmem:[#allocation2 + $0xc5] sm:$0xff]
        %v5928 = vld [vmem:[#allocation2 + $0xcd] sm:$0xff]
        %v5929 = vld [vmem:[#allocation2 + $0xd5] sm:$0xff]
        %v5930 = vld [vmem:[#allocation2 + $0xdd] sm:$0xff]
        %v5931 = vld [vmem:[#allocation2 + $0xe5] sm:$0xff]
        %v5932 = vld [vmem:[#allocation2 + $0xed] sm:$0xff]
        %v5933 = vld [vmem:[#allocation2 + $0xf5] sm:$0xff]
        %v5934 = vld [vmem:[#allocation2 + $0xfd] sm:$0xff]
        %v5935 = vld [vmem:[#allocation2 + $0x105] sm:$0xff]
        %v5936 = vld [vmem:[#allocation2 + $0x10d] sm:$0xff]
        %v5937 = vld [vmem:[#allocation2 + $0x115] sm:$0xff]
        %v5938 = vld [vmem:[#allocation2 + $0x11d] sm:$0xff]
        %v5939 = vld [vmem:[#allocation2 + $0x125] sm:$0xff]
        %v5940 = vld [vmem:[#allocation2 + $0x12d] sm:$0xff]
        %v5941 = vld [vmem:[#allocation2 + $0x135] sm:$0xff]
        %v5942 = vld [vmem:[#allocation2 + $0x13d] sm:$0xff]
        %s5943 = scalar_lea.vmem [#allocation3], 896
        %v5944 = vld [vmem:[%s5943] sm:$0xff]
        %v5945 = vld [vmem:[%s5943 + $0x8] sm:$0xff]
        %v5946 = vld [vmem:[%s5943 + $0x10] sm:$0xff]
        %v5947 = vld [vmem:[%s5943 + $0x18] sm:$0xff]
        %v5948 = vld [vmem:[%s5943 + $0x20] sm:$0xff]
        %v5949 = vld [vmem:[%s5943 + $0x28] sm:$0xff]
        %v5950 = vld [vmem:[%s5943 + $0x30] sm:$0xff]
        %v5951 = vld [vmem:[%s5943 + $0x38] sm:$0xff]
        %v5952 = vld [vmem:[%s5943 + $0x40] sm:$0xff]
        %v5953 = vld [vmem:[%s5943 + $0x48] sm:$0xff]
        %v5954 = vld [vmem:[%s5943 + $0x50] sm:$0xff]
        %v5955 = vld [vmem:[%s5943 + $0x58] sm:$0xff]
        %v5956 = vld [vmem:[%s5943 + $0x60] sm:$0xff]
        %v5957 = vld [vmem:[%s5943 + $0x68] sm:$0xff]
        %v5958 = vld [vmem:[%s5943 + $0x70] sm:$0xff]
        %v5959 = vld [vmem:[%s5943 + $0x78] sm:$0xff]
        %5960 = vmatpush.msra.mxu0 %v5959
        %5961 = vmatpush.msra.mxu0 %v5958
        %5962 = vmatpush.msra.mxu0 %v5957
        %5963 = vmatpush.msra.mxu0 %v5956
        %5964 = vmatpush.msra.mxu0 %v5955
        %5965 = vmatpush.msra.mxu0 %v5954
        %5966 = vmatpush.msra.mxu0 %v5953
        %5967 = vmatpush.msra.mxu0 %v5952
        %5968 = vmatpush.msra.mxu0 %v5951
        %5969 = vmatpush.msra.mxu0 %v5950
        %5970 = vmatpush.msra.mxu0 %v5949
        %5971 = vmatpush.msra.mxu0 %v5948
        %5972 = vmatpush.msra.mxu0 %v5947
        %5973 = vmatpush.msra.mxu0 %v5946
        %5974 = vmatpush.msra.mxu0 %v5945
        %5975 = vmatpush.msra.mxu0 %v5944
        %5976 = vmatmul.f32.gmra.mxu0 %v5907
        %v5977 = vpop.f32.mrf.mxu0
        %v5978 = vadd.f32 0.0, %v5977
        %5979 = vmatmul.f32.gmra.mxu0 %v5908
        %v5980 = vpop.f32.mrf.mxu0
        %v5981 = vadd.f32 0.0, %v5980
        %5982 = vmatmul.f32.gmra.mxu0 %v5909
        %v5983 = vpop.f32.mrf.mxu0
        %v5984 = vadd.f32 0.0, %v5983
        %5985 = vmatmul.f32.gmra.mxu0 %v5910
        %v5986 = vpop.f32.mrf.mxu0
        %v5987 = vadd.f32 0.0, %v5986
        %5988 = vmatmul.f32.gmra.mxu0 %v5911
        %v5989 = vpop.f32.mrf.mxu0
        %v5990 = vadd.f32 0.0, %v5989
        %5991 = vmatmul.f32.gmra.mxu0 %v5912
        %v5992 = vpop.f32.mrf.mxu0
        %v5993 = vadd.f32 0.0, %v5992
        %5994 = vmatmul.f32.gmra.mxu0 %v5913
        %v5995 = vpop.f32.mrf.mxu0
        %v5996 = vadd.f32 0.0, %v5995
        %5997 = vmatmul.f32.gmra.mxu0 %v5914
        %v5998 = vpop.f32.mrf.mxu0
        %v5999 = vadd.f32 0.0, %v5998
        %6000 = vmatmul.f32.gmra.mxu0 %v5915
        %v6001 = vpop.f32.mrf.mxu0
        %v6002 = vadd.f32 0.0, %v6001
        %6003 = vmatmul.f32.gmra.mxu0 %v5916
        %v6004 = vpop.f32.mrf.mxu0
        %v6005 = vadd.f32 0.0, %v6004
        %6006 = vmatmul.f32.gmra.mxu0 %v5917
        %v6007 = vpop.f32.mrf.mxu0
        %v6008 = vadd.f32 0.0, %v6007
        %6009 = vmatmul.f32.gmra.mxu0 %v5918
        %v6010 = vpop.f32.mrf.mxu0
        %v6011 = vadd.f32 0.0, %v6010
        %6012 = vmatmul.f32.gmra.mxu0 %v5919
        %v6013 = vpop.f32.mrf.mxu0
        %v6014 = vadd.f32 0.0, %v6013
        %6015 = vmatmul.f32.gmra.mxu0 %v5920
        %v6016 = vpop.f32.mrf.mxu0
        %v6017 = vadd.f32 0.0, %v6016
        %6018 = vmatmul.f32.gmra.mxu0 %v5921
        %v6019 = vpop.f32.mrf.mxu0
        %v6020 = vadd.f32 0.0, %v6019
        %6021 = vmatmul.f32.gmra.mxu0 %v5922
        %v6022 = vpop.f32.mrf.mxu0
        %v6023 = vadd.f32 0.0, %v6022
        %6024 = vmatmul.f32.gmra.mxu0 %v5923
        %v6025 = vpop.f32.mrf.mxu0
        %v6026 = vadd.f32 0.0, %v6025
        %6027 = vmatmul.f32.gmra.mxu0 %v5924
        %v6028 = vpop.f32.mrf.mxu0
        %v6029 = vadd.f32 0.0, %v6028
        %6030 = vmatmul.f32.gmra.mxu0 %v5925
        %v6031 = vpop.f32.mrf.mxu0
        %v6032 = vadd.f32 0.0, %v6031
        %6033 = vmatmul.f32.gmra.mxu0 %v5926
        %v6034 = vpop.f32.mrf.mxu0
        %v6035 = vadd.f32 0.0, %v6034
        %6036 = vmatmul.f32.gmra.mxu0 %v5927
        %v6037 = vpop.f32.mrf.mxu0
        %v6038 = vadd.f32 0.0, %v6037
        %6039 = vmatmul.f32.gmra.mxu0 %v5928
        %v6040 = vpop.f32.mrf.mxu0
        %v6041 = vadd.f32 0.0, %v6040
        %6042 = vmatmul.f32.gmra.mxu0 %v5929
        %v6043 = vpop.f32.mrf.mxu0
        %v6044 = vadd.f32 0.0, %v6043
        %6045 = vmatmul.f32.gmra.mxu0 %v5930
        %v6046 = vpop.f32.mrf.mxu0
        %v6047 = vadd.f32 0.0, %v6046
        %6048 = vmatmul.f32.gmra.mxu0 %v5931
        %v6049 = vpop.f32.mrf.mxu0
        %v6050 = vadd.f32 0.0, %v6049
        %6051 = vmatmul.f32.gmra.mxu0 %v5932
        %v6052 = vpop.f32.mrf.mxu0
        %v6053 = vadd.f32 0.0, %v6052
        %6054 = vmatmul.f32.gmra.mxu0 %v5933
        %v6055 = vpop.f32.mrf.mxu0
        %v6056 = vadd.f32 0.0, %v6055
        %6057 = vmatmul.f32.gmra.mxu0 %v5934
        %v6058 = vpop.f32.mrf.mxu0
        %v6059 = vadd.f32 0.0, %v6058
        %6060 = vmatmul.f32.gmra.mxu0 %v5935
        %v6061 = vpop.f32.mrf.mxu0
        %v6062 = vadd.f32 0.0, %v6061
        %6063 = vmatmul.f32.gmra.mxu0 %v5936
        %v6064 = vpop.f32.mrf.mxu0
        %v6065 = vadd.f32 0.0, %v6064
        %6066 = vmatmul.f32.gmra.mxu0 %v5937
        %v6067 = vpop.f32.mrf.mxu0
        %v6068 = vadd.f32 0.0, %v6067
        %6069 = vmatmul.f32.gmra.mxu0 %v5938
        %v6070 = vpop.f32.mrf.mxu0
        %v6071 = vadd.f32 0.0, %v6070
        %6072 = vmatmul.f32.gmra.mxu0 %v5939
        %v6073 = vpop.f32.mrf.mxu0
        %v6074 = vadd.f32 0.0, %v6073
        %6075 = vmatmul.f32.gmra.mxu0 %v5940
        %v6076 = vpop.f32.mrf.mxu0
        %v6077 = vadd.f32 0.0, %v6076
        %6078 = vmatmul.f32.gmra.mxu0 %v5941
        %v6079 = vpop.f32.mrf.mxu0
        %v6080 = vadd.f32 0.0, %v6079
        %6081 = vmatmul.f32.gmra.mxu0 %v5942
        %v6082 = vpop.f32.mrf.mxu0
        %v6083 = vadd.f32 0.0, %v6082
        %6084 = vdwg.mxu0
        %v6085 = vadd.f32 %v5871, %v5978
        %v6086 = vadd.f32 %v5872, %v5981
        %v6087 = vadd.f32 %v5873, %v5984
        %v6088 = vadd.f32 %v5874, %v5987
        %v6089 = vadd.f32 %v5875, %v5990
        %v6090 = vadd.f32 %v5876, %v5993
        %v6091 = vadd.f32 %v5877, %v5996
        %v6092 = vadd.f32 %v5878, %v5999
        %v6093 = vadd.f32 %v5879, %v6002
        %v6094 = vadd.f32 %v5880, %v6005
        %v6095 = vadd.f32 %v5881, %v6008
        %v6096 = vadd.f32 %v5882, %v6011
        %v6097 = vadd.f32 %v5883, %v6014
        %v6098 = vadd.f32 %v5884, %v6017
        %v6099 = vadd.f32 %v5885, %v6020
        %v6100 = vadd.f32 %v5886, %v6023
        %v6101 = vadd.f32 %v5887, %v6026
        %v6102 = vadd.f32 %v5888, %v6029
        %v6103 = vadd.f32 %v5889, %v6032
        %v6104 = vadd.f32 %v5890, %v6035
        %v6105 = vadd.f32 %v5891, %v6038
        %v6106 = vadd.f32 %v5892, %v6041
        %v6107 = vadd.f32 %v5893, %v6044
        %v6108 = vadd.f32 %v5894, %v6047
        %v6109 = vadd.f32 %v5895, %v6050
        %v6110 = vadd.f32 %v5896, %v6053
        %v6111 = vadd.f32 %v5897, %v6056
        %v6112 = vadd.f32 %v5898, %v6059
        %v6113 = vadd.f32 %v5899, %v6062
        %v6114 = vadd.f32 %v5900, %v6065
        %v6115 = vadd.f32 %v5901, %v6068
        %v6116 = vadd.f32 %v5902, %v6071
        %v6117 = vadd.f32 %v5903, %v6074
        %v6118 = vadd.f32 %v5904, %v6077
        %v6119 = vadd.f32 %v5905, %v6080
        %v6120 = vadd.f32 %v5906, %v6083
        %v6121 = vld [vmem:[#allocation2 + $0x26] sm:$0xff]
        %v6122 = vld [vmem:[#allocation2 + $0x2e] sm:$0xff]
        %v6123 = vld [vmem:[#allocation2 + $0x36] sm:$0xff]
        %v6124 = vld [vmem:[#allocation2 + $0x3e] sm:$0xff]
        %v6125 = vld [vmem:[#allocation2 + $0x46] sm:$0xff]
        %v6126 = vld [vmem:[#allocation2 + $0x4e] sm:$0xff]
        %v6127 = vld [vmem:[#allocation2 + $0x56] sm:$0xff]
        %v6128 = vld [vmem:[#allocation2 + $0x5e] sm:$0xff]
        %v6129 = vld [vmem:[#allocation2 + $0x66] sm:$0xff]
        %v6130 = vld [vmem:[#allocation2 + $0x6e] sm:$0xff]
        %v6131 = vld [vmem:[#allocation2 + $0x76] sm:$0xff]
        %v6132 = vld [vmem:[#allocation2 + $0x7e] sm:$0xff]
        %v6133 = vld [vmem:[#allocation2 + $0x86] sm:$0xff]
        %v6134 = vld [vmem:[#allocation2 + $0x8e] sm:$0xff]
        %v6135 = vld [vmem:[#allocation2 + $0x96] sm:$0xff]
        %v6136 = vld [vmem:[#allocation2 + $0x9e] sm:$0xff]
        %v6137 = vld [vmem:[#allocation2 + $0xa6] sm:$0xff]
        %v6138 = vld [vmem:[#allocation2 + $0xae] sm:$0xff]
        %v6139 = vld [vmem:[#allocation2 + $0xb6] sm:$0xff]
        %v6140 = vld [vmem:[#allocation2 + $0xbe] sm:$0xff]
        %v6141 = vld [vmem:[#allocation2 + $0xc6] sm:$0xff]
        %v6142 = vld [vmem:[#allocation2 + $0xce] sm:$0xff]
        %v6143 = vld [vmem:[#allocation2 + $0xd6] sm:$0xff]
        %v6144 = vld [vmem:[#allocation2 + $0xde] sm:$0xff]
        %v6145 = vld [vmem:[#allocation2 + $0xe6] sm:$0xff]
        %v6146 = vld [vmem:[#allocation2 + $0xee] sm:$0xff]
        %v6147 = vld [vmem:[#allocation2 + $0xf6] sm:$0xff]
        %v6148 = vld [vmem:[#allocation2 + $0xfe] sm:$0xff]
        %v6149 = vld [vmem:[#allocation2 + $0x106] sm:$0xff]
        %v6150 = vld [vmem:[#allocation2 + $0x10e] sm:$0xff]
        %v6151 = vld [vmem:[#allocation2 + $0x116] sm:$0xff]
        %v6152 = vld [vmem:[#allocation2 + $0x11e] sm:$0xff]
        %v6153 = vld [vmem:[#allocation2 + $0x126] sm:$0xff]
        %v6154 = vld [vmem:[#allocation2 + $0x12e] sm:$0xff]
        %v6155 = vld [vmem:[#allocation2 + $0x136] sm:$0xff]
        %v6156 = vld [vmem:[#allocation2 + $0x13e] sm:$0xff]
        %s6157 = scalar_lea.vmem [#allocation3], 1024
        %v6158 = vld [vmem:[%s6157] sm:$0xff]
        %v6159 = vld [vmem:[%s6157 + $0x8] sm:$0xff]
        %v6160 = vld [vmem:[%s6157 + $0x10] sm:$0xff]
        %v6161 = vld [vmem:[%s6157 + $0x18] sm:$0xff]
        %v6162 = vld [vmem:[%s6157 + $0x20] sm:$0xff]
        %v6163 = vld [vmem:[%s6157 + $0x28] sm:$0xff]
        %v6164 = vld [vmem:[%s6157 + $0x30] sm:$0xff]
        %v6165 = vld [vmem:[%s6157 + $0x38] sm:$0xff]
        %v6166 = vld [vmem:[%s6157 + $0x40] sm:$0xff]
        %v6167 = vld [vmem:[%s6157 + $0x48] sm:$0xff]
        %v6168 = vld [vmem:[%s6157 + $0x50] sm:$0xff]
        %v6169 = vld [vmem:[%s6157 + $0x58] sm:$0xff]
        %v6170 = vld [vmem:[%s6157 + $0x60] sm:$0xff]
        %v6171 = vld [vmem:[%s6157 + $0x68] sm:$0xff]
        %v6172 = vld [vmem:[%s6157 + $0x70] sm:$0xff]
        %v6173 = vld [vmem:[%s6157 + $0x78] sm:$0xff]
        %6174 = vmatpush.msra.mxu0 %v6173
        %6175 = vmatpush.msra.mxu0 %v6172
        %6176 = vmatpush.msra.mxu0 %v6171
        %6177 = vmatpush.msra.mxu0 %v6170
        %6178 = vmatpush.msra.mxu0 %v6169
        %6179 = vmatpush.msra.mxu0 %v6168
        %6180 = vmatpush.msra.mxu0 %v6167
        %6181 = vmatpush.msra.mxu0 %v6166
        %6182 = vmatpush.msra.mxu0 %v6165
        %6183 = vmatpush.msra.mxu0 %v6164
        %6184 = vmatpush.msra.mxu0 %v6163
        %6185 = vmatpush.msra.mxu0 %v6162
        %6186 = vmatpush.msra.mxu0 %v6161
        %6187 = vmatpush.msra.mxu0 %v6160
        %6188 = vmatpush.msra.mxu0 %v6159
        %6189 = vmatpush.msra.mxu0 %v6158
        %6190 = vmatmul.f32.gmra.mxu0 %v6121
        %v6191 = vpop.f32.mrf.mxu0
        %v6192 = vadd.f32 0.0, %v6191
        %6193 = vmatmul.f32.gmra.mxu0 %v6122
        %v6194 = vpop.f32.mrf.mxu0
        %v6195 = vadd.f32 0.0, %v6194
        %6196 = vmatmul.f32.gmra.mxu0 %v6123
        %v6197 = vpop.f32.mrf.mxu0
        %v6198 = vadd.f32 0.0, %v6197
        %6199 = vmatmul.f32.gmra.mxu0 %v6124
        %v6200 = vpop.f32.mrf.mxu0
        %v6201 = vadd.f32 0.0, %v6200
        %6202 = vmatmul.f32.gmra.mxu0 %v6125
        %v6203 = vpop.f32.mrf.mxu0
        %v6204 = vadd.f32 0.0, %v6203
        %6205 = vmatmul.f32.gmra.mxu0 %v6126
        %v6206 = vpop.f32.mrf.mxu0
        %v6207 = vadd.f32 0.0, %v6206
        %6208 = vmatmul.f32.gmra.mxu0 %v6127
        %v6209 = vpop.f32.mrf.mxu0
        %v6210 = vadd.f32 0.0, %v6209
        %6211 = vmatmul.f32.gmra.mxu0 %v6128
        %v6212 = vpop.f32.mrf.mxu0
        %v6213 = vadd.f32 0.0, %v6212
        %6214 = vmatmul.f32.gmra.mxu0 %v6129
        %v6215 = vpop.f32.mrf.mxu0
        %v6216 = vadd.f32 0.0, %v6215
        %6217 = vmatmul.f32.gmra.mxu0 %v6130
        %v6218 = vpop.f32.mrf.mxu0
        %v6219 = vadd.f32 0.0, %v6218
        %6220 = vmatmul.f32.gmra.mxu0 %v6131
        %v6221 = vpop.f32.mrf.mxu0
        %v6222 = vadd.f32 0.0, %v6221
        %6223 = vmatmul.f32.gmra.mxu0 %v6132
        %v6224 = vpop.f32.mrf.mxu0
        %v6225 = vadd.f32 0.0, %v6224
        %6226 = vmatmul.f32.gmra.mxu0 %v6133
        %v6227 = vpop.f32.mrf.mxu0
        %v6228 = vadd.f32 0.0, %v6227
        %6229 = vmatmul.f32.gmra.mxu0 %v6134
        %v6230 = vpop.f32.mrf.mxu0
        %v6231 = vadd.f32 0.0, %v6230
        %6232 = vmatmul.f32.gmra.mxu0 %v6135
        %v6233 = vpop.f32.mrf.mxu0
        %v6234 = vadd.f32 0.0, %v6233
        %6235 = vmatmul.f32.gmra.mxu0 %v6136
        %v6236 = vpop.f32.mrf.mxu0
        %v6237 = vadd.f32 0.0, %v6236
        %6238 = vmatmul.f32.gmra.mxu0 %v6137
        %v6239 = vpop.f32.mrf.mxu0
        %v6240 = vadd.f32 0.0, %v6239
        %6241 = vmatmul.f32.gmra.mxu0 %v6138
        %v6242 = vpop.f32.mrf.mxu0
        %v6243 = vadd.f32 0.0, %v6242
        %6244 = vmatmul.f32.gmra.mxu0 %v6139
        %v6245 = vpop.f32.mrf.mxu0
        %v6246 = vadd.f32 0.0, %v6245
        %6247 = vmatmul.f32.gmra.mxu0 %v6140
        %v6248 = vpop.f32.mrf.mxu0
        %v6249 = vadd.f32 0.0, %v6248
        %6250 = vmatmul.f32.gmra.mxu0 %v6141
        %v6251 = vpop.f32.mrf.mxu0
        %v6252 = vadd.f32 0.0, %v6251
        %6253 = vmatmul.f32.gmra.mxu0 %v6142
        %v6254 = vpop.f32.mrf.mxu0
        %v6255 = vadd.f32 0.0, %v6254
        %6256 = vmatmul.f32.gmra.mxu0 %v6143
        %v6257 = vpop.f32.mrf.mxu0
        %v6258 = vadd.f32 0.0, %v6257
        %6259 = vmatmul.f32.gmra.mxu0 %v6144
        %v6260 = vpop.f32.mrf.mxu0
        %v6261 = vadd.f32 0.0, %v6260
        %6262 = vmatmul.f32.gmra.mxu0 %v6145
        %v6263 = vpop.f32.mrf.mxu0
        %v6264 = vadd.f32 0.0, %v6263
        %6265 = vmatmul.f32.gmra.mxu0 %v6146
        %v6266 = vpop.f32.mrf.mxu0
        %v6267 = vadd.f32 0.0, %v6266
        %6268 = vmatmul.f32.gmra.mxu0 %v6147
        %v6269 = vpop.f32.mrf.mxu0
        %v6270 = vadd.f32 0.0, %v6269
        %6271 = vmatmul.f32.gmra.mxu0 %v6148
        %v6272 = vpop.f32.mrf.mxu0
        %v6273 = vadd.f32 0.0, %v6272
        %6274 = vmatmul.f32.gmra.mxu0 %v6149
        %v6275 = vpop.f32.mrf.mxu0
        %v6276 = vadd.f32 0.0, %v6275
        %6277 = vmatmul.f32.gmra.mxu0 %v6150
        %v6278 = vpop.f32.mrf.mxu0
        %v6279 = vadd.f32 0.0, %v6278
        %6280 = vmatmul.f32.gmra.mxu0 %v6151
        %v6281 = vpop.f32.mrf.mxu0
        %v6282 = vadd.f32 0.0, %v6281
        %6283 = vmatmul.f32.gmra.mxu0 %v6152
        %v6284 = vpop.f32.mrf.mxu0
        %v6285 = vadd.f32 0.0, %v6284
        %6286 = vmatmul.f32.gmra.mxu0 %v6153
        %v6287 = vpop.f32.mrf.mxu0
        %v6288 = vadd.f32 0.0, %v6287
        %6289 = vmatmul.f32.gmra.mxu0 %v6154
        %v6290 = vpop.f32.mrf.mxu0
        %v6291 = vadd.f32 0.0, %v6290
        %6292 = vmatmul.f32.gmra.mxu0 %v6155
        %v6293 = vpop.f32.mrf.mxu0
        %v6294 = vadd.f32 0.0, %v6293
        %6295 = vmatmul.f32.gmra.mxu0 %v6156
        %v6296 = vpop.f32.mrf.mxu0
        %v6297 = vadd.f32 0.0, %v6296
        %6298 = vdwg.mxu0
        %v6299 = vadd.f32 %v6085, %v6192
        %v6300 = vadd.f32 %v6086, %v6195
        %v6301 = vadd.f32 %v6087, %v6198
        %v6302 = vadd.f32 %v6088, %v6201
        %v6303 = vadd.f32 %v6089, %v6204
        %v6304 = vadd.f32 %v6090, %v6207
        %v6305 = vadd.f32 %v6091, %v6210
        %v6306 = vadd.f32 %v6092, %v6213
        %v6307 = vadd.f32 %v6093, %v6216
        %v6308 = vadd.f32 %v6094, %v6219
        %v6309 = vadd.f32 %v6095, %v6222
        %v6310 = vadd.f32 %v6096, %v6225
        %v6311 = vadd.f32 %v6097, %v6228
        %v6312 = vadd.f32 %v6098, %v6231
        %v6313 = vadd.f32 %v6099, %v6234
        %v6314 = vadd.f32 %v6100, %v6237
        %v6315 = vadd.f32 %v6101, %v6240
        %v6316 = vadd.f32 %v6102, %v6243
        %v6317 = vadd.f32 %v6103, %v6246
        %v6318 = vadd.f32 %v6104, %v6249
        %v6319 = vadd.f32 %v6105, %v6252
        %v6320 = vadd.f32 %v6106, %v6255
        %v6321 = vadd.f32 %v6107, %v6258
        %v6322 = vadd.f32 %v6108, %v6261
        %v6323 = vadd.f32 %v6109, %v6264
        %v6324 = vadd.f32 %v6110, %v6267
        %v6325 = vadd.f32 %v6111, %v6270
        %v6326 = vadd.f32 %v6112, %v6273
        %v6327 = vadd.f32 %v6113, %v6276
        %v6328 = vadd.f32 %v6114, %v6279
        %v6329 = vadd.f32 %v6115, %v6282
        %v6330 = vadd.f32 %v6116, %v6285
        %v6331 = vadd.f32 %v6117, %v6288
        %v6332 = vadd.f32 %v6118, %v6291
        %v6333 = vadd.f32 %v6119, %v6294
        %v6334 = vadd.f32 %v6120, %v6297
        %v6335 = vlaneseq
        %v6336 = vand.u32 %v6335, 127
        %vm6337 = vcmp.eq.s32.totalorder %v3036, %v6336
        %v6338 = vsel %vm6337, 1, 0
        %v6339 = vcvt.s32.f32 %v6338
        %v6340 = vld [vmem:[%s239 + $0x13] sm:$0xff]
        %v6341 = vld [vmem:[%s239 + $0x1b] sm:$0xff]
        %v6342 = vld [vmem:[%s239 + $0x23] sm:$0xff]
        %v6343 = vld [vmem:[%s239 + $0x2b] sm:$0xff]
        %v6344 = vld [vmem:[%s239 + $0x33] sm:$0xff]
        %v6345 = vld [vmem:[%s239 + $0x3b] sm:$0xff]
        %v6346 = vld [vmem:[%s239 + $0x43] sm:$0xff]
        %v6347 = vld [vmem:[%s239 + $0x4b] sm:$0xff]
        %v6348 = vld [vmem:[%s239 + $0x53] sm:$0xff]
        %v6349 = vld [vmem:[%s239 + $0x5b] sm:$0xff]
        %v6350 = vld [vmem:[%s239 + $0x63] sm:$0xff]
        %v6351 = vld [vmem:[%s239 + $0x6b] sm:$0xff]
        %v6352 = vld [vmem:[%s239 + $0x73] sm:$0xff]
        %v6353 = vld [vmem:[%s239 + $0x7b] sm:$0xff]
        %v6354 = vld [vmem:[%s239 + $0x83] sm:$0xff]
        %v6355 = vld [vmem:[%s239 + $0x8b] sm:$0xff]
        %v6356 = vld [vmem:[%s239 + $0x93] sm:$0xff]
        %v6357 = vld [vmem:[%s239 + $0x9b] sm:$0xff]
        %v6358 = vld [vmem:[%s239 + $0xa3] sm:$0xff]
        %v6359 = vld [vmem:[%s239 + $0xab] sm:$0xff]
        %v6360 = vld [vmem:[%s239 + $0xb3] sm:$0xff]
        %v6361 = vld [vmem:[%s239 + $0xbb] sm:$0xff]
        %v6362 = vld [vmem:[%s239 + $0xc3] sm:$0xff]
        %v6363 = vld [vmem:[%s239 + $0xcb] sm:$0xff]
        %v6364 = vld [vmem:[%s239 + $0xd3] sm:$0xff]
        %v6365 = vld [vmem:[%s239 + $0xdb] sm:$0xff]
        %v6366 = vld [vmem:[%s239 + $0xe3] sm:$0xff]
        %v6367 = vld [vmem:[%s239 + $0xeb] sm:$0xff]
        %v6368 = vld [vmem:[%s239 + $0xf3] sm:$0xff]
        %v6369 = vld [vmem:[%s239 + $0xfb] sm:$0xff]
        %v6370 = vld [vmem:[%s239 + $0x103] sm:$0xff]
        %v6371 = vld [vmem:[%s239 + $0x10b] sm:$0xff]
        %v6372 = vld [vmem:[%s239 + $0x113] sm:$0xff]
        %v6373 = vld [vmem:[%s239 + $0x11b] sm:$0xff]
        %v6374 = vld [vmem:[%s239 + $0x123] sm:$0xff]
        %v6375 = vld [vmem:[%s239 + $0x12b] sm:$0xff]
        %v6377 = vsel %vm315, %v6340, 0
        %v6380 = vsel %vm315, %v6341, 0
        %v6383 = vsel %vm315, %v6342, 0
        %v6386 = vsel %vm315, %v6343, 0
        %v6389 = vsel %vm315, %v6344, 0
        %v6392 = vsel %vm315, %v6345, 0
        %v6395 = vsel %vm315, %v6346, 0
        %v6398 = vsel %vm315, %v6347, 0
        %v6401 = vsel %vm315, %v6348, 0
        %v6404 = vsel %vm315, %v6349, 0
        %v6407 = vsel %vm315, %v6350, 0
        %v6410 = vsel %vm315, %v6351, 0
        %v6413 = vsel %vm315, %v6352, 0
        %v6416 = vsel %vm315, %v6353, 0
        %v6419 = vsel %vm315, %v6354, 0
        %v6422 = vsel %vm315, %v6355, 0
        %v6425 = vsel %vm315, %v6356, 0
        %v6428 = vsel %vm315, %v6357, 0
        %v6431 = vsel %vm315, %v6358, 0
        %v6434 = vsel %vm315, %v6359, 0
        %v6437 = vsel %vm315, %v6360, 0
        %v6440 = vsel %vm315, %v6361, 0
        %v6443 = vsel %vm315, %v6362, 0
        %v6446 = vsel %vm315, %v6363, 0
        %v6449 = vsel %vm315, %v6364, 0
        %v6452 = vsel %vm315, %v6365, 0
        %v6455 = vsel %vm315, %v6366, 0
        %v6458 = vsel %vm315, %v6367, 0
        %v6461 = vsel %vm315, %v6368, 0
        %v6464 = vsel %vm315, %v6369, 0
        %v6467 = vsel %vm315, %v6370, 0
        %v6470 = vsel %vm315, %v6371, 0
        %v6473 = vsel %vm315, %v6372, 0
        %v6476 = vsel %vm315, %v6373, 0
        %v6479 = vsel %vm315, %v6374, 0
        %v6482 = vsel %vm315, %v6375, 0
        %v6485 = vsel %vm424, %v6339, 0
        %6487 = vmatpush.msra.mxu0 0.0
        %6488 = vmatpush.msra.mxu0 0.0
        %6489 = vmatpush.msra.mxu0 0.0
        %6490 = vmatpush.msra.mxu0 0.0
        %6491 = vmatpush.msra.mxu0 0.0
        %6492 = vmatpush.msra.mxu0 0.0
        %6493 = vmatpush.msra.mxu0 0.0
        %6494 = vmatpush.msra.mxu0 0.0
        %6495 = vmatpush.msra.mxu0 0.0
        %6496 = vmatpush.msra.mxu0 0.0
        %6497 = vmatpush.msra.mxu0 0.0
        %6498 = vmatpush.msra.mxu0 0.0
        %6499 = vmatpush.msra.mxu0 0.0
        %6500 = vmatpush.msra.mxu0 0.0
        %6501 = vmatpush.msra.mxu0 0.0
        %6502 = vmatpush.msra.mxu0 %v6485
        %6503 = vmatmul.f32.gmra.mxu0 %v6377
        %v6504 = vpop.f32.mrf.mxu0
        %v6505 = vadd.f32 0.0, %v6504
        %6506 = vmatmul.f32.gmra.mxu0 %v6380
        %v6507 = vpop.f32.mrf.mxu0
        %v6508 = vadd.f32 0.0, %v6507
        %6509 = vmatmul.f32.gmra.mxu0 %v6383
        %v6510 = vpop.f32.mrf.mxu0
        %v6511 = vadd.f32 0.0, %v6510
        %6512 = vmatmul.f32.gmra.mxu0 %v6386
        %v6513 = vpop.f32.mrf.mxu0
        %v6514 = vadd.f32 0.0, %v6513
        %6515 = vmatmul.f32.gmra.mxu0 %v6389
        %v6516 = vpop.f32.mrf.mxu0
        %v6517 = vadd.f32 0.0, %v6516
        %6518 = vmatmul.f32.gmra.mxu0 %v6392
        %v6519 = vpop.f32.mrf.mxu0
        %v6520 = vadd.f32 0.0, %v6519
        %6521 = vmatmul.f32.gmra.mxu0 %v6395
        %v6522 = vpop.f32.mrf.mxu0
        %v6523 = vadd.f32 0.0, %v6522
        %6524 = vmatmul.f32.gmra.mxu0 %v6398
        %v6525 = vpop.f32.mrf.mxu0
        %v6526 = vadd.f32 0.0, %v6525
        %6527 = vmatmul.f32.gmra.mxu0 %v6401
        %v6528 = vpop.f32.mrf.mxu0
        %v6529 = vadd.f32 0.0, %v6528
        %6530 = vmatmul.f32.gmra.mxu0 %v6404
        %v6531 = vpop.f32.mrf.mxu0
        %v6532 = vadd.f32 0.0, %v6531
        %6533 = vmatmul.f32.gmra.mxu0 %v6407
        %v6534 = vpop.f32.mrf.mxu0
        %v6535 = vadd.f32 0.0, %v6534
        %6536 = vmatmul.f32.gmra.mxu0 %v6410
        %v6537 = vpop.f32.mrf.mxu0
        %v6538 = vadd.f32 0.0, %v6537
        %6539 = vmatmul.f32.gmra.mxu0 %v6413
        %v6540 = vpop.f32.mrf.mxu0
        %v6541 = vadd.f32 0.0, %v6540
        %6542 = vmatmul.f32.gmra.mxu0 %v6416
        %v6543 = vpop.f32.mrf.mxu0
        %v6544 = vadd.f32 0.0, %v6543
        %6545 = vmatmul.f32.gmra.mxu0 %v6419
        %v6546 = vpop.f32.mrf.mxu0
        %v6547 = vadd.f32 0.0, %v6546
        %6548 = vmatmul.f32.gmra.mxu0 %v6422
        %v6549 = vpop.f32.mrf.mxu0
        %v6550 = vadd.f32 0.0, %v6549
        %6551 = vmatmul.f32.gmra.mxu0 %v6425
        %v6552 = vpop.f32.mrf.mxu0
        %v6553 = vadd.f32 0.0, %v6552
        %6554 = vmatmul.f32.gmra.mxu0 %v6428
        %v6555 = vpop.f32.mrf.mxu0
        %v6556 = vadd.f32 0.0, %v6555
        %6557 = vmatmul.f32.gmra.mxu0 %v6431
        %v6558 = vpop.f32.mrf.mxu0
        %v6559 = vadd.f32 0.0, %v6558
        %6560 = vmatmul.f32.gmra.mxu0 %v6434
        %v6561 = vpop.f32.mrf.mxu0
        %v6562 = vadd.f32 0.0, %v6561
        %6563 = vmatmul.f32.gmra.mxu0 %v6437
        %v6564 = vpop.f32.mrf.mxu0
        %v6565 = vadd.f32 0.0, %v6564
        %6566 = vmatmul.f32.gmra.mxu0 %v6440
        %v6567 = vpop.f32.mrf.mxu0
        %v6568 = vadd.f32 0.0, %v6567
        %6569 = vmatmul.f32.gmra.mxu0 %v6443
        %v6570 = vpop.f32.mrf.mxu0
        %v6571 = vadd.f32 0.0, %v6570
        %6572 = vmatmul.f32.gmra.mxu0 %v6446
        %v6573 = vpop.f32.mrf.mxu0
        %v6574 = vadd.f32 0.0, %v6573
        %6575 = vmatmul.f32.gmra.mxu0 %v6449
        %v6576 = vpop.f32.mrf.mxu0
        %v6577 = vadd.f32 0.0, %v6576
        %6578 = vmatmul.f32.gmra.mxu0 %v6452
        %v6579 = vpop.f32.mrf.mxu0
        %v6580 = vadd.f32 0.0, %v6579
        %6581 = vmatmul.f32.gmra.mxu0 %v6455
        %v6582 = vpop.f32.mrf.mxu0
        %v6583 = vadd.f32 0.0, %v6582
        %6584 = vmatmul.f32.gmra.mxu0 %v6458
        %v6585 = vpop.f32.mrf.mxu0
        %v6586 = vadd.f32 0.0, %v6585
        %6587 = vmatmul.f32.gmra.mxu0 %v6461
        %v6588 = vpop.f32.mrf.mxu0
        %v6589 = vadd.f32 0.0, %v6588
        %6590 = vmatmul.f32.gmra.mxu0 %v6464
        %v6591 = vpop.f32.mrf.mxu0
        %v6592 = vadd.f32 0.0, %v6591
        %6593 = vmatmul.f32.gmra.mxu0 %v6467
        %v6594 = vpop.f32.mrf.mxu0
        %v6595 = vadd.f32 0.0, %v6594
        %6596 = vmatmul.f32.gmra.mxu0 %v6470
        %v6597 = vpop.f32.mrf.mxu0
        %v6598 = vadd.f32 0.0, %v6597
        %6599 = vmatmul.f32.gmra.mxu0 %v6473
        %v6600 = vpop.f32.mrf.mxu0
        %v6601 = vadd.f32 0.0, %v6600
        %6602 = vmatmul.f32.gmra.mxu0 %v6476
        %v6603 = vpop.f32.mrf.mxu0
        %v6604 = vadd.f32 0.0, %v6603
        %6605 = vmatmul.f32.gmra.mxu0 %v6479
        %v6606 = vpop.f32.mrf.mxu0
        %v6607 = vadd.f32 0.0, %v6606
        %6608 = vmatmul.f32.gmra.mxu0 %v6482
        %v6609 = vpop.f32.mrf.mxu0
        %v6610 = vadd.f32 0.0, %v6609
        %6611 = vdwg.mxu0
        %v6612 = vadd.f32 %v6299, %v6505
        %v6613 = vadd.f32 %v6300, %v6508
        %v6614 = vadd.f32 %v6301, %v6511
        %v6615 = vadd.f32 %v6302, %v6514
        %v6616 = vadd.f32 %v6303, %v6517
        %v6617 = vadd.f32 %v6304, %v6520
        %v6618 = vadd.f32 %v6305, %v6523
        %v6619 = vadd.f32 %v6306, %v6526
        %v6620 = vadd.f32 %v6307, %v6529
        %v6621 = vadd.f32 %v6308, %v6532
        %v6622 = vadd.f32 %v6309, %v6535
        %v6623 = vadd.f32 %v6310, %v6538
        %v6624 = vadd.f32 %v6311, %v6541
        %v6625 = vadd.f32 %v6312, %v6544
        %v6626 = vadd.f32 %v6313, %v6547
        %v6627 = vadd.f32 %v6314, %v6550
        %v6628 = vadd.f32 %v6315, %v6553
        %v6629 = vadd.f32 %v6316, %v6556
        %v6630 = vadd.f32 %v6317, %v6559
        %v6631 = vadd.f32 %v6318, %v6562
        %v6632 = vadd.f32 %v6319, %v6565
        %v6633 = vadd.f32 %v6320, %v6568
        %v6634 = vadd.f32 %v6321, %v6571
        %v6635 = vadd.f32 %v6322, %v6574
        %v6636 = vadd.f32 %v6323, %v6577
        %v6637 = vadd.f32 %v6324, %v6580
        %v6638 = vadd.f32 %v6325, %v6583
        %v6639 = vadd.f32 %v6326, %v6586
        %v6640 = vadd.f32 %v6327, %v6589
        %v6641 = vadd.f32 %v6328, %v6592
        %v6642 = vadd.f32 %v6329, %v6595
        %v6643 = vadd.f32 %v6330, %v6598
        %v6644 = vadd.f32 %v6331, %v6601
        %v6645 = vadd.f32 %v6332, %v6604
        %v6646 = vadd.f32 %v6333, %v6607
        %v6647 = vadd.f32 %v6334, %v6610
        %v6648 = vld [vmem:[%s4] sm:$0x1]
        %v6650 = vperm.slane %v6648, 0
        %v6652 = vadd.f32 %v6612, %v6650
        %v6653 = vadd.f32 %v6613, %v6650
        %v6654 = vadd.f32 %v6614, %v6650
        %v6655 = vadd.f32 %v6615, %v6650
        %v6656 = vadd.f32 %v6616, %v6650
        %v6657 = vadd.f32 %v6617, %v6650
        %v6658 = vadd.f32 %v6618, %v6650
        %v6659 = vadd.f32 %v6619, %v6650
        %v6660 = vadd.f32 %v6620, %v6650
        %v6661 = vadd.f32 %v6621, %v6650
        %v6662 = vadd.f32 %v6622, %v6650
        %v6663 = vadd.f32 %v6623, %v6650
        %v6664 = vadd.f32 %v6624, %v6650
        %v6665 = vadd.f32 %v6625, %v6650
        %v6666 = vadd.f32 %v6626, %v6650
        %v6667 = vadd.f32 %v6627, %v6650
        %v6668 = vadd.f32 %v6628, %v6650
        %v6669 = vadd.f32 %v6629, %v6650
        %v6670 = vadd.f32 %v6630, %v6650
        %v6671 = vadd.f32 %v6631, %v6650
        %v6672 = vadd.f32 %v6632, %v6650
        %v6673 = vadd.f32 %v6633, %v6650
        %v6674 = vadd.f32 %v6634, %v6650
        %v6675 = vadd.f32 %v6635, %v6650
        %v6676 = vadd.f32 %v6636, %v6650
        %v6677 = vadd.f32 %v6637, %v6650
        %v6678 = vadd.f32 %v6638, %v6650
        %v6679 = vadd.f32 %v6639, %v6650
        %v6680 = vadd.f32 %v6640, %v6650
        %v6681 = vadd.f32 %v6641, %v6650
        %v6682 = vadd.f32 %v6642, %v6650
        %v6683 = vadd.f32 %v6643, %v6650
        %v6684 = vadd.f32 %v6644, %v6650
        %v6685 = vadd.f32 %v6645, %v6650
        %v6686 = vadd.f32 %v6646, %v6650
        %v6687 = vadd.f32 %v6647, %v6650
        %v6688 = vmax.f32 %v6652, 0.0
        %v6689 = vmax.f32 %v6653, 0.0
        %v6690 = vmax.f32 %v6654, 0.0
        %v6691 = vmax.f32 %v6655, 0.0
        %v6692 = vmax.f32 %v6656, 0.0
        %v6693 = vmax.f32 %v6657, 0.0
        %v6694 = vmax.f32 %v6658, 0.0
        %v6695 = vmax.f32 %v6659, 0.0
        %v6696 = vmax.f32 %v6660, 0.0
        %v6697 = vmax.f32 %v6661, 0.0
        %v6698 = vmax.f32 %v6662, 0.0
        %v6699 = vmax.f32 %v6663, 0.0
        %v6700 = vmax.f32 %v6664, 0.0
        %v6701 = vmax.f32 %v6665, 0.0
        %v6702 = vmax.f32 %v6666, 0.0
        %v6703 = vmax.f32 %v6667, 0.0
        %v6704 = vmax.f32 %v6668, 0.0
        %v6705 = vmax.f32 %v6669, 0.0
        %v6706 = vmax.f32 %v6670, 0.0
        %v6707 = vmax.f32 %v6671, 0.0
        %v6708 = vmax.f32 %v6672, 0.0
        %v6709 = vmax.f32 %v6673, 0.0
        %v6710 = vmax.f32 %v6674, 0.0
        %v6711 = vmax.f32 %v6675, 0.0
        %v6712 = vmax.f32 %v6676, 0.0
        %v6713 = vmax.f32 %v6677, 0.0
        %v6714 = vmax.f32 %v6678, 0.0
        %v6715 = vmax.f32 %v6679, 0.0
        %v6716 = vmax.f32 %v6680, 0.0
        %v6717 = vmax.f32 %v6681, 0.0
        %v6718 = vmax.f32 %v6682, 0.0
        %v6719 = vmax.f32 %v6683, 0.0
        %v6720 = vmax.f32 %v6684, 0.0
        %v6721 = vmax.f32 %v6685, 0.0
        %v6722 = vmax.f32 %v6686, 0.0
        %v6723 = vmax.f32 %v6687, 0.0
        %6724 = vst [vmem:[%s234] sm:$0xff] %v6688
        %6725 = vst [vmem:[%s234 + $0x8] sm:$0xff] %v6689
        %6726 = vst [vmem:[%s234 + $0x10] sm:$0xff] %v6690
        %6727 = vst [vmem:[%s234 + $0x18] sm:$0xff] %v6691
        %6728 = vst [vmem:[%s234 + $0x20] sm:$0xff] %v6692
        %6729 = vst [vmem:[%s234 + $0x28] sm:$0xff] %v6693
        %6730 = vst [vmem:[%s234 + $0x30] sm:$0xff] %v6694
        %6731 = vst [vmem:[%s234 + $0x38] sm:$0xff] %v6695
        %6732 = vst [vmem:[%s234 + $0x40] sm:$0xff] %v6696
        %6733 = vst [vmem:[%s234 + $0x48] sm:$0xff] %v6697
        %6734 = vst [vmem:[%s234 + $0x50] sm:$0xff] %v6698
        %6735 = vst [vmem:[%s234 + $0x58] sm:$0xff] %v6699
        %6736 = vst [vmem:[%s234 + $0x60] sm:$0xff] %v6700
        %6737 = vst [vmem:[%s234 + $0x68] sm:$0xff] %v6701
        %6738 = vst [vmem:[%s234 + $0x70] sm:$0xff] %v6702
        %6739 = vst [vmem:[%s234 + $0x78] sm:$0xff] %v6703
        %6740 = vst [vmem:[%s234 + $0x80] sm:$0xff] %v6704
        %6741 = vst [vmem:[%s234 + $0x88] sm:$0xff] %v6705
        %6742 = vst [vmem:[%s234 + $0x90] sm:$0xff] %v6706
        %6743 = vst [vmem:[%s234 + $0x98] sm:$0xff] %v6707
        %6744 = vst [vmem:[%s234 + $0xa0] sm:$0xff] %v6708
        %6745 = vst [vmem:[%s234 + $0xa8] sm:$0xff] %v6709
        %6746 = vst [vmem:[%s234 + $0xb0] sm:$0xff] %v6710
        %6747 = vst [vmem:[%s234 + $0xb8] sm:$0xff] %v6711
        %6748 = vst [vmem:[%s234 + $0xc0] sm:$0xff] %v6712
        %6749 = vst [vmem:[%s234 + $0xc8] sm:$0xff] %v6713
        %6750 = vst [vmem:[%s234 + $0xd0] sm:$0xff] %v6714
        %6751 = vst [vmem:[%s234 + $0xd8] sm:$0xff] %v6715
        %6752 = vst [vmem:[%s234 + $0xe0] sm:$0xff] %v6716
        %6753 = vst [vmem:[%s234 + $0xe8] sm:$0xff] %v6717
        %6754 = vst [vmem:[%s234 + $0xf0] sm:$0xff] %v6718
        %6755 = vst [vmem:[%s234 + $0xf8] sm:$0xff] %v6719
        %6756 = vst [vmem:[%s234 + $0x100] sm:$0xff] %v6720
        %6757 = vst [vmem:[%s234 + $0x108] sm:$0xff] %v6721
        %6758 = vst [vmem:[%s234 + $0x110] sm:$0xff] %v6722
        %6759 = vst [vmem:[%s234 + $0x118] sm:$0xff] %v6723
        %s6760 = sand.u32 %s138, 1
        %s6761 = scalar_lea.sflag [#allocation5], %s6760
        %s6762 = sand.u32 %s138, 1
        %s6763 = smul.addr %s6762, 288
        %s6764 = scalar_lea.vmem [#allocation6], %s6763
        // Predicated region
        $region45: #{tpu_custom_call.1} parent=39 // pred_check
          %p6765 = pneg %p148
        $region46: #{tpu_custom_call.1} parent=39 // pred_check_branch
          %6767 = sbr.rel (%p6765) target = $region48
        $region47: #{tpu_custom_call.1} parent=39 // pred_region
          %6769 = vsyncadd %s6761, 0
          %s6770 = smul.addr %s20, 36
          %s6771 = smul.addr %s6770, 8
          %s6772 = scalar_lea.hbm %s5, %s6771
          %s6773 = sshll.u32 %s6764, 4
          %s6774 = int_to_ptr.vmem [resolvable:$true] %s6773
          %s6775 = sshll.u32 %s6772, 4
          %s6776 = int_to_ptr.hbm [resolvable:$true] %s6775
          %6781 = dma.vmem_to_hbm [thread:$0]  %s6774, 4608, %s6776, %s6761, 128, 128, 8
        $region48: #{tpu_custom_call.1} parent=39 // pred_fallthru
          _
      $region40: #{tpu_custom_call.1} parent=5 // pred_fallthru
        _
      %p6782 = scmp.le.s32.totalorder 2, %s15
      // Predicated region
      $region49: #{tpu_custom_call.1} parent=5 // pred_check
        %p6783 = pneg %p6782
      $region50: #{tpu_custom_call.1} parent=5 // pred_check_branch
        %6785 = sbr.rel (%p6783) target = $region52
      $region51: #{tpu_custom_call.1} parent=5 // pred_region
        %s6786 = ssub.s32 %s15, 2
        // Predicated region
        $region53: #{tpu_custom_call.1} parent=51 // pred_check
          %p6787 = pneg %p154
        $region54: #{tpu_custom_call.1} parent=51 // pred_check_branch
          %6789 = sbr.rel (%p6787) target = $region56
        $region55: #{tpu_custom_call.1} parent=51 // pred_region
          %s6790 = sand.u32 %s139, 1
          %s6791 = scalar_lea.sflag [#allocation5], %s6790
          %s6792 = sand.u32 %s139, 1
          %s6793 = smul.addr %s6792, 288
          %s6794 = scalar_lea.vmem [#allocation6], %s6793
          %6796 = dma.done %s6791, 4608
        $region56: #{tpu_custom_call.1} parent=51 // pred_fallthru
          _
      $region52: #{tpu_custom_call.1} parent=5 // pred_fallthru
        _
    $region6: #{tpu_custom_call.1} parent=1 // loop_footer
      %s19 = sadd.s32 1, %s15
    $region7: #{tpu_custom_call.1} parent=1 // loop_footer_branch
      %14 = sbr.rel target = $region3
    $region8: #{tpu_custom_call.1} parent=1 // loop_exit
      _
    %6797 = vsyncpa [#allocation4], 1
    %s6798 = scalar_lea.sflag [#allocation4], 1
    %6799 = vsyncpa %s6798, 1
    %6800 = vsyncpa [#allocation5], 1
    %s6801 = scalar_lea.sflag [#allocation5], 1
    %6802 = vsyncpa %s6801, 1

</llo_original>
